<compile_context>
chip_gen: v7x
topology: tpu7x:2x2x1
jax: 0.10.0
libtpu: 0.0.40
codegen_flags: <defaults>
</compile_context>

<pallas_src>
import functools

import jax
import jax.numpy as jnp
from jax.experimental import pallas as pl
from jax.experimental.pallas import tpu as pltpu

HIDDEN = 256  # fixed by the module (self.hidden_size = 256)

_FULL = lambda i: (0, 0)  # weights/biases: same (only) block for every tile


def _use_bf16_activations():
    """bf16 VPU/EUP exists on v6e/v7x; v5e and older must use the f32 path."""
    try:
        kind = jax.devices()[0].device_kind.lower()
    except Exception:
        return False
    return ("v6" in kind) or ("v7" in kind)


def _mlp_kernel(x_ref, w1_ref, b1_ref, w2_ref, b2_ref, w3_ref, b3_ref,
                w4_ref, b4_ref, o_ref, *, act_dtype):
    # Layer 1: f32 operands (K = input_size is tiny -> near-free MXU pass).
    h = jnp.dot(x_ref[...], w1_ref[...],
                preferred_element_type=jnp.float32) + b1_ref[...]
    h = jnp.tanh(h.astype(act_dtype))          # bf16 tanh on v6e/v7x, f32 on v5e

    # Layers 2-3: bf16 MXU operands, f32 accumulation, tanh in act_dtype.
    h = jnp.dot(h.astype(jnp.bfloat16), w2_ref[...],
                preferred_element_type=jnp.float32) + b2_ref[...]
    h = jnp.tanh(h.astype(act_dtype))
    h = jnp.dot(h.astype(jnp.bfloat16), w3_ref[...],
                preferred_element_type=jnp.float32) + b3_ref[...]
    h = jnp.tanh(h.astype(act_dtype))

    # Layer 4 (256 -> 1): contract the hidden dim of w4_row (1, 256) against
    # the hidden dim of h (tile, 256) -> (1, tile).  This is the transposed-RHS
    # matmul pattern (same as q @ k^T); M = 1 so MXU cost is tiny, and the
    # result is lane-dense, matching the (1, tile_rows) output block.
    logits = jax.lax.dot_general(
        w4_ref[...], h.astype(jnp.bfloat16),
        dimension_numbers=(((1,), (1,)), ((), ())),
        preferred_element_type=jnp.float32) + b4_ref[...]
    o_ref[...] = jax.nn.sigmoid(logits)


@functools.partial(jax.jit, static_argnames=("tile_rows",))
def gnn_forward(x, edge_index, edge_attr, params, *, tile_rows=2048):
    """Pallas implementation of GNN.forward(data).

    x and edge_index are unused by the reference computation (aggregate
    ignores the scatter index) but kept for interface parity.
    """
    del x, edge_index  # not used by the reference forward pass
    w1, b1, w2, b2, w3, b3, w4, b4 = params

    e, input_size = edge_attr.shape
    n_tiles = pl.cdiv(e, tile_rows)

    ea = edge_attr.astype(jnp.float32)
    # Weights for layers 2-4 pre-cast to bf16 outside the hot loop; layer 1 and
    # all biases stay f32.
    w1f = w1.astype(jnp.float32)
    w2b = w2.astype(jnp.bfloat16)
    w3b = w3.astype(jnp.bfloat16)
    w4_row = w4.astype(jnp.bfloat16).reshape(1, HIDDEN)

    act_dtype = jnp.bfloat16 if _use_bf16_activations() else jnp.float32
    kernel = functools.partial(_mlp_kernel, act_dtype=act_dtype)

    # Lane-dense output: one (1, tile_rows) block per grid step.  The ragged
    # rows of the final input tile produce garbage in the padded output lanes;
    # rows are independent through the MLP, so valid rows are unaffected and
    # the padding is sliced off below.
    out = pl.pallas_call(
        kernel,
        out_shape=jax.ShapeDtypeStruct((1, n_tiles * tile_rows), jnp.float32),
        grid_spec=pltpu.PrefetchScalarGridSpec(
            num_scalar_prefetch=0,
            grid=(n_tiles,),
            in_specs=[
                pl.BlockSpec((tile_rows, input_size), lambda i: (i, 0)),  # edge_attr tile
                pl.BlockSpec((input_size, HIDDEN), _FULL),                # W1 (f32)
                pl.BlockSpec((1, HIDDEN), _FULL),                         # b1
                pl.BlockSpec((HIDDEN, HIDDEN), _FULL),                    # W2 (bf16)
                pl.BlockSpec((1, HIDDEN), _FULL),                         # b2
                pl.BlockSpec((HIDDEN, HIDDEN), _FULL),                    # W3 (bf16)
                pl.BlockSpec((1, HIDDEN), _FULL),                         # b3
                pl.BlockSpec((1, HIDDEN), _FULL),                         # W4 row (bf16)
                pl.BlockSpec((1, 1), _FULL),                              # b4
            ],
            out_specs=pl.BlockSpec((1, tile_rows), lambda i: (0, i)),
        ),
        compiler_params=pltpu.CompilerParams(
            dimension_semantics=("parallel",),
            vmem_limit_bytes=32 * 1024 * 1024),
    )(ea, w1f, b1, w2b, b2, w3b, b3, w4_row, b4)

    # squeeze(out, 1) from the PyTorch wrapper, then drop the tile padding.
    return out[0, :e]


def init_params(key, input_size):
    """Deterministic synthetic init matching nn.Linear shapes."""
    ks = jax.random.split(key, 8)

    def lin(kw, kb, fan_in, fan_out):
        bound = 1.0 / jnp.sqrt(jnp.float32(fan_in))
        w = jax.random.uniform(kw, (fan_in, fan_out), jnp.float32, -bound, bound)
        b = jax.random.uniform(kb, (1, fan_out), jnp.float32, -bound, bound)
        return w, b

    w1, b1 = lin(ks[0], ks[1], input_size, HIDDEN)
    w2, b2 = lin(ks[2], ks[3], HIDDEN, HIDDEN)
    w3, b3 = lin(ks[4], ks[5], HIDDEN, HIDDEN)
    w4, b4 = lin(ks[6], ks[7], HIDDEN, 1)
    return (w1, b1, w2, b2, w3, b3, w4, b4)


def _reference(edge_attr, params):
    """Pure-JAX f32 reference of the same MLP for a sanity check."""
    w1, b1, w2, b2, w3, b3, w4, b4 = params
    h = jnp.tanh(edge_attr @ w1 + b1)
    h = jnp.tanh(h @ w2 + b2)
    h = jnp.tanh(h @ w3 + b3)
    return jax.nn.sigmoid(h @ w4 + b4)[:, 0]


if __name__ == "__main__":
    key = jax.random.PRNGKey(0)
    k_param, k_x, k_ea, k_ei = jax.random.split(key, 4)

    input_size = 8
    num_nodes = 16
    num_edges = 32
    k_neighbors = 4  # the module's `k`; unused by the computation

    params = init_params(k_param, input_size)

    x = jax.random.normal(k_x, (num_nodes, input_size), jnp.float32)
    edge_attr = jax.random.normal(k_ea, (num_edges, input_size), jnp.float32)
    edge_index = jax.random.randint(k_ei, (2, num_edges), 0, num_nodes,
                                    dtype=jnp.int32)

    out = gnn_forward(x, edge_index, edge_attr, params)
    out = jax.block_until_ready(out)

    ref = _reference(edge_attr, params)
    assert out.shape == (num_edges,)
    assert bool(jnp.all(jnp.isfinite(out)))
    # bf16 matmul operands (and bf16 tanh on v6e/v7x) vs. the pure-f32
    # reference -> loosened tolerance (sigmoid outputs lie in (0, 1)).
    assert jnp.allclose(out, ref, atol=2e-2, rtol=2e-2), float(
        jnp.max(jnp.abs(out - ref)))

    print("KERNEL_OK")
</pallas_src>

<mosaic_0001>
module attributes {stable_mosaic.version = 11 : i64} {
  func.func @_mlp_kernel(%arg0: i32, %arg1: memref<2048x8xf32, #tpu.memory_space<vmem>>, %arg2: memref<8x256xf32, #tpu.memory_space<vmem>>, %arg3: memref<1x256xf32, #tpu.memory_space<vmem>>, %arg4: memref<256x256xbf16, #tpu.memory_space<vmem>>, %arg5: memref<1x256xf32, #tpu.memory_space<vmem>>, %arg6: memref<256x256xbf16, #tpu.memory_space<vmem>>, %arg7: memref<1x256xf32, #tpu.memory_space<vmem>>, %arg8: memref<1x256xbf16, #tpu.memory_space<vmem>>, %arg9: memref<1x1xf32, #tpu.memory_space<vmem>>, %arg10: memref<1x2048xf32, #tpu.memory_space<vmem>>) attributes {dimension_semantics = [#tpu.dimension_semantics<parallel>], iteration_bounds = array<i64: 1>, scalar_prefetch = 0 : i64, scratch_operands = 0 : i64, tpu.core_type = #tpu.core_type<tc>, window_params = [{transform_indices = @transform_0, window_bounds = array<i64: 2048, 8>}, {pipeline_mode = #tpu.pipeline_mode<synchronous>, transform_indices = @transform_1, window_bounds = array<i64: 8, 256>}, {pipeline_mode = #tpu.pipeline_mode<synchronous>, transform_indices = @transform_2, window_bounds = array<i64: 1, 256>}, {pipeline_mode = #tpu.pipeline_mode<synchronous>, transform_indices = @transform_3, window_bounds = array<i64: 256, 256>}, {pipeline_mode = #tpu.pipeline_mode<synchronous>, transform_indices = @transform_4, window_bounds = array<i64: 1, 256>}, {pipeline_mode = #tpu.pipeline_mode<synchronous>, transform_indices = @transform_5, window_bounds = array<i64: 256, 256>}, {pipeline_mode = #tpu.pipeline_mode<synchronous>, transform_indices = @transform_6, window_bounds = array<i64: 1, 256>}, {pipeline_mode = #tpu.pipeline_mode<synchronous>, transform_indices = @transform_7, window_bounds = array<i64: 1, 256>}, {pipeline_mode = #tpu.pipeline_mode<synchronous>, transform_indices = @transform_8, window_bounds = array<i64: 1, 1>}, {transform_indices = @transform_9, window_bounds = array<i64: 1, 2048>}]} {
    %c0 = arith.constant 0 : index
    %c0_0 = arith.constant 0 : index
    %0 = vector.load %arg1[%c0, %c0_0] : memref<2048x8xf32, #tpu.memory_space<vmem>>, vector<2048x8xf32>
    %c0_1 = arith.constant 0 : index
    %c0_2 = arith.constant 0 : index
    %1 = vector.load %arg2[%c0_1, %c0_2] : memref<8x256xf32, #tpu.memory_space<vmem>>, vector<8x256xf32>
    %cst = arith.constant dense<0.000000e+00> : vector<2048x256xf32>
    %2 = tpu.matmul %0, %1, %cst {dimension_numbers = #tpu.dot_dimension_numbers<[1], [0], [0], [1], [0, 0, 1, 1], [], []>} : vector<2048x8xf32>, vector<8x256xf32>, vector<2048x256xf32> -> vector<2048x256xf32>
    %c0_3 = arith.constant 0 : index
    %c0_4 = arith.constant 0 : index
    %3 = vector.load %arg3[%c0_3, %c0_4] : memref<1x256xf32, #tpu.memory_space<vmem>>, vector<1x256xf32>
    %4 = vector.broadcast %3 : vector<1x256xf32> to vector<2048x256xf32>
    %5 = arith.addf %2, %4 : vector<2048x256xf32>
    %6 = math.tanh %5 : vector<2048x256xf32>
    %7 = arith.truncf %6 : vector<2048x256xf32> to vector<2048x256xbf16>
    %c0_5 = arith.constant 0 : index
    %c0_6 = arith.constant 0 : index
    %8 = vector.load %arg4[%c0_5, %c0_6] : memref<256x256xbf16, #tpu.memory_space<vmem>>, vector<256x256xbf16>
    %cst_7 = arith.constant dense<0.000000e+00> : vector<2048x256xf32>
    %9 = tpu.matmul %7, %8, %cst_7 {dimension_numbers = #tpu.dot_dimension_numbers<[1], [0], [0], [1], [0, 0, 1, 1], [], []>} : vector<2048x256xbf16>, vector<256x256xbf16>, vector<2048x256xf32> -> vector<2048x256xf32>
    %c0_8 = arith.constant 0 : index
    %c0_9 = arith.constant 0 : index
    %10 = vector.load %arg5[%c0_8, %c0_9] : memref<1x256xf32, #tpu.memory_space<vmem>>, vector<1x256xf32>
    %11 = vector.broadcast %10 : vector<1x256xf32> to vector<2048x256xf32>
    %12 = arith.addf %9, %11 : vector<2048x256xf32>
    %13 = math.tanh %12 : vector<2048x256xf32>
    %14 = arith.truncf %13 : vector<2048x256xf32> to vector<2048x256xbf16>
    %c0_10 = arith.constant 0 : index
    %c0_11 = arith.constant 0 : index
    %15 = vector.load %arg6[%c0_10, %c0_11] : memref<256x256xbf16, #tpu.memory_space<vmem>>, vector<256x256xbf16>
    %cst_12 = arith.constant dense<0.000000e+00> : vector<2048x256xf32>
    %16 = tpu.matmul %14, %15, %cst_12 {dimension_numbers = #tpu.dot_dimension_numbers<[1], [0], [0], [1], [0, 0, 1, 1], [], []>} : vector<2048x256xbf16>, vector<256x256xbf16>, vector<2048x256xf32> -> vector<2048x256xf32>
    %c0_13 = arith.constant 0 : index
    %c0_14 = arith.constant 0 : index
    %17 = vector.load %arg7[%c0_13, %c0_14] : memref<1x256xf32, #tpu.memory_space<vmem>>, vector<1x256xf32>
    %18 = vector.broadcast %17 : vector<1x256xf32> to vector<2048x256xf32>
    %19 = arith.addf %16, %18 : vector<2048x256xf32>
    %20 = math.tanh %19 : vector<2048x256xf32>
    %c0_15 = arith.constant 0 : index
    %c0_16 = arith.constant 0 : index
    %21 = vector.load %arg8[%c0_15, %c0_16] : memref<1x256xbf16, #tpu.memory_space<vmem>>, vector<1x256xbf16>
    %22 = arith.truncf %20 : vector<2048x256xf32> to vector<2048x256xbf16>
    %cst_17 = arith.constant dense<0.000000e+00> : vector<1x2048xf32>
    %23 = tpu.matmul %21, %22, %cst_17 {dimension_numbers = #tpu.dot_dimension_numbers<[1], [1], [0], [0], [0, 0, 1, 0], [], []>} : vector<1x256xbf16>, vector<2048x256xbf16>, vector<1x2048xf32> -> vector<1x2048xf32>
    %c0_18 = arith.constant 0 : index
    %c0_19 = arith.constant 0 : index
    %24 = vector.load %arg9[%c0_18, %c0_19] : memref<1x1xf32, #tpu.memory_space<vmem>>, vector<1x1xf32>
    %25 = vector.broadcast %24 : vector<1x1xf32> to vector<1x2048xf32>
    %26 = arith.addf %23, %25 : vector<1x2048xf32>
    %27 = arith.negf %26 : vector<1x2048xf32>
    %28 = math.exp %27 : vector<1x2048xf32>
    %cst_20 = arith.constant 1.000000e+00 : f32
    %29 = vector.broadcast %cst_20 : f32 to vector<1x2048xf32>
    %30 = arith.addf %29, %28 : vector<1x2048xf32>
    %31 = arith.divf %29, %30 : vector<1x2048xf32>
    %c0_21 = arith.constant 0 : index
    %c0_22 = arith.constant 0 : index
    %32 = vector.load %arg10[%c0_21, %c0_22] : memref<1x2048xf32, #tpu.memory_space<vmem>>, vector<1x2048xf32>
    tpu.vector_store %arg10[%c0_21, %c0_22], %31 {strides = array<i32>} : memref<1x2048xf32, #tpu.memory_space<vmem>>, vector<1x2048xf32>,
    return
  }
  func.func @transform_0(%arg0: i32) -> (i32, i32) {
    %c0_i32 = arith.constant 0 : i32
    %c0_i32_0 = arith.constant 0 : i32
    return %arg0, %c0_i32 : i32, i32
  }
  func.func @transform_1(%arg0: i32) -> (i32, i32) {
    %c0_i32 = arith.constant 0 : i32
    %c0_i32_0 = arith.constant 0 : i32
    %c0_i32_1 = arith.constant 0 : i32
    return %c0_i32, %c0_i32_0 : i32, i32
  }
  func.func @transform_2(%arg0: i32) -> (i32, i32) {
    %c0_i32 = arith.constant 0 : i32
    %c0_i32_0 = arith.constant 0 : i32
    %c0_i32_1 = arith.constant 0 : i32
    return %c0_i32, %c0_i32_0 : i32, i32
  }
  func.func @transform_3(%arg0: i32) -> (i32, i32) {
    %c0_i32 = arith.constant 0 : i32
    %c0_i32_0 = arith.constant 0 : i32
    %c0_i32_1 = arith.constant 0 : i32
    return %c0_i32, %c0_i32_0 : i32, i32
  }
  func.func @transform_4(%arg0: i32) -> (i32, i32) {
    %c0_i32 = arith.constant 0 : i32
    %c0_i32_0 = arith.constant 0 : i32
    %c0_i32_1 = arith.constant 0 : i32
    return %c0_i32, %c0_i32_0 : i32, i32
  }
  func.func @transform_5(%arg0: i32) -> (i32, i32) {
    %c0_i32 = arith.constant 0 : i32
    %c0_i32_0 = arith.constant 0 : i32
    %c0_i32_1 = arith.constant 0 : i32
    return %c0_i32, %c0_i32_0 : i32, i32
  }
  func.func @transform_6(%arg0: i32) -> (i32, i32) {
    %c0_i32 = arith.constant 0 : i32
    %c0_i32_0 = arith.constant 0 : i32
    %c0_i32_1 = arith.constant 0 : i32
    return %c0_i32, %c0_i32_0 : i32, i32
  }
  func.func @transform_7(%arg0: i32) -> (i32, i32) {
    %c0_i32 = arith.constant 0 : i32
    %c0_i32_0 = arith.constant 0 : i32
    %c0_i32_1 = arith.constant 0 : i32
    return %c0_i32, %c0_i32_0 : i32, i32
  }
  func.func @transform_8(%arg0: i32) -> (i32, i32) {
    %c0_i32 = arith.constant 0 : i32
    %c0_i32_0 = arith.constant 0 : i32
    %c0_i32_1 = arith.constant 0 : i32
    return %c0_i32, %c0_i32_0 : i32, i32
  }
  func.func @transform_9(%arg0: i32) -> (i32, i32) {
    %c0_i32 = arith.constant 0 : i32
    %c0_i32_0 = arith.constant 0 : i32
    return %c0_i32, %arg0 : i32, i32
  }
}

</mosaic_0001>

<llo_original>
// kernel: gnn_forward.1
$region0: #{gnn_forward.1}
  #allocation0 [shape = 'u32[]', space=smem, size = 0x4, offset = 0x4, fixed_abs, tag = 'smem constant byte address 0x4 - core index']
  #allocation1 [shape = 'u32[144,128]{1,0:T(1,128)}', space=vmem, size = 0x12000, scoped, tag = 'internal scratch']
  #allocation2 [shape = 'f32[1,1]{1,0:T(1,128)S(1)}', space=vmem, size = 0x200, scoped, tag = 'scoped memory for gnn_forward.1']
  %s0 = inlined_call_operand.vmem [shape: f32[32,8], index: 0, kind: input, shape index: {}]
  %s1 = inlined_call_operand.vmem [shape: f32[8,256], index: 1, kind: input, shape index: {}]
  %s2 = inlined_call_operand.vmem [shape: f32[1,256], index: 2, kind: input, shape index: {}]
  %s3 = inlined_call_operand.vmem [shape: bf16[256,256], index: 3, kind: input, shape index: {}]
  %s4 = inlined_call_operand.vmem [shape: f32[1,256], index: 4, kind: input, shape index: {}]
  %s5 = inlined_call_operand.vmem [shape: bf16[256,256], index: 5, kind: input, shape index: {}]
  %s6 = inlined_call_operand.vmem [shape: f32[1,256], index: 6, kind: input, shape index: {}]
  %s7 = inlined_call_operand.vmem [shape: bf16[1,256], index: 7, kind: input, shape index: {}]
  %s8 = inlined_call_operand.<no memory space> [shape: f32[1,1], index: 8, kind: input, shape index: {}]
  %s9 = inlined_call_operand.vmem [shape: f32[1,2048], index: 9, kind: output, shape index: {}]
  %s10 = sld [smem:[#allocation0]]
  $region46: #{gnn_forward.1} parent=0
    _
  %s12 = ssub.s32 1, %s10
  %s13 = scalar_select 0, %s12, %s10
  %v14 = vstv %s8
  %15 = vst [vmem:[#allocation2] sm:$0x1] %v14
  // Predicated region
  $region2: #{gnn_forward.1} parent=0 // pred_check
    _
  $region3: #{gnn_forward.1} parent=0 // pred_check_branch
    %17 = sbr.rel (0) target = $region5
  $region4: #{gnn_forward.1} parent=0 // pred_region
    _
  $region5: #{gnn_forward.1} parent=0 // pred_fallthru
    _
  // Predicated region
  $region6: #{gnn_forward.1} parent=0 // pred_check
    _
  $region7: #{gnn_forward.1} parent=0 // pred_check_branch
    %19 = sbr.rel (0) target = $region9
  $region8: #{gnn_forward.1} parent=0 // pred_region
    _
  $region9: #{gnn_forward.1} parent=0 // pred_fallthru
    _
  // Predicated region
  $region10: #{gnn_forward.1} parent=0 // pred_check
    _
  $region11: #{gnn_forward.1} parent=0 // pred_check_branch
    %21 = sbr.rel (0) target = $region13
  $region12: #{gnn_forward.1} parent=0 // pred_region
    _
  $region13: #{gnn_forward.1} parent=0 // pred_fallthru
    _
  // Predicated region
  $region14: #{gnn_forward.1} parent=0 // pred_check
    _
  $region15: #{gnn_forward.1} parent=0 // pred_check_branch
    %23 = sbr.rel (0) target = $region17
  $region16: #{gnn_forward.1} parent=0 // pred_region
    _
  $region17: #{gnn_forward.1} parent=0 // pred_fallthru
    _
  // Predicated region
  $region18: #{gnn_forward.1} parent=0 // pred_check
    _
  $region19: #{gnn_forward.1} parent=0 // pred_check_branch
    %25 = sbr.rel (0) target = $region21
  $region20: #{gnn_forward.1} parent=0 // pred_region
    _
  $region21: #{gnn_forward.1} parent=0 // pred_fallthru
    _
  // Predicated region
  $region22: #{gnn_forward.1} parent=0 // pred_check
    _
  $region23: #{gnn_forward.1} parent=0 // pred_check_branch
    %27 = sbr.rel (0) target = $region25
  $region24: #{gnn_forward.1} parent=0 // pred_region
    _
  $region25: #{gnn_forward.1} parent=0 // pred_fallthru
    _
  // Predicated region
  $region26: #{gnn_forward.1} parent=0 // pred_check
    _
  $region27: #{gnn_forward.1} parent=0 // pred_check_branch
    %29 = sbr.rel (0) target = $region29
  $region28: #{gnn_forward.1} parent=0 // pred_region
    _
  $region29: #{gnn_forward.1} parent=0 // pred_fallthru
    _
  // Predicated region
  $region30: #{gnn_forward.1} parent=0 // pred_check
    _
  $region31: #{gnn_forward.1} parent=0 // pred_check_branch
    %31 = sbr.rel (0) target = $region33
  $region32: #{gnn_forward.1} parent=0 // pred_region
    _
  $region33: #{gnn_forward.1} parent=0 // pred_fallthru
    _
  // Predicated region
  $region34: #{gnn_forward.1} parent=0 // pred_check
    _
  $region35: #{gnn_forward.1} parent=0 // pred_check_branch
    %33 = sbr.rel (0) target = $region37
  $region36: #{gnn_forward.1} parent=0 // pred_region
    _
  $region37: #{gnn_forward.1} parent=0 // pred_fallthru
    _
  %v34 = vld [vmem:[%s0] sm:$0xff]
  %v35 = vld [vmem:[%s0 + $0x8] sm:$0xff]
  %v36 = vld [vmem:[%s0 + $0x10] sm:$0xff]
  %v37 = vld [vmem:[%s0 + $0x18] sm:$0xff]
  %v38 = vld [vmem:[%s0 + $0x20] sm:$0xff]
  %v39 = vld [vmem:[%s0 + $0x28] sm:$0xff]
  %v40 = vld [vmem:[%s0 + $0x30] sm:$0xff]
  %v41 = vld [vmem:[%s0 + $0x38] sm:$0xff]
  %v42 = vld [vmem:[%s0 + $0x40] sm:$0xff]
  %v43 = vld [vmem:[%s0 + $0x48] sm:$0xff]
  %v44 = vld [vmem:[%s0 + $0x50] sm:$0xff]
  %v45 = vld [vmem:[%s0 + $0x58] sm:$0xff]
  %v46 = vld [vmem:[%s0 + $0x60] sm:$0xff]
  %v47 = vld [vmem:[%s0 + $0x68] sm:$0xff]
  %v48 = vld [vmem:[%s0 + $0x70] sm:$0xff]
  %v49 = vld [vmem:[%s0 + $0x78] sm:$0xff]
  %v50 = vld [vmem:[%s0 + $0x80] sm:$0xff]
  %v51 = vld [vmem:[%s0 + $0x88] sm:$0xff]
  %v52 = vld [vmem:[%s0 + $0x90] sm:$0xff]
  %v53 = vld [vmem:[%s0 + $0x98] sm:$0xff]
  %v54 = vld [vmem:[%s0 + $0xa0] sm:$0xff]
  %v55 = vld [vmem:[%s0 + $0xa8] sm:$0xff]
  %v56 = vld [vmem:[%s0 + $0xb0] sm:$0xff]
  %v57 = vld [vmem:[%s0 + $0xb8] sm:$0xff]
  %v58 = vld [vmem:[%s0 + $0xc0] sm:$0xff]
  %v59 = vld [vmem:[%s0 + $0xc8] sm:$0xff]
  %v60 = vld [vmem:[%s0 + $0xd0] sm:$0xff]
  %v61 = vld [vmem:[%s0 + $0xd8] sm:$0xff]
  %v62 = vld [vmem:[%s0 + $0xe0] sm:$0xff]
  %v63 = vld [vmem:[%s0 + $0xe8] sm:$0xff]
  %v64 = vld [vmem:[%s0 + $0xf0] sm:$0xff]
  %v65 = vld [vmem:[%s0 + $0xf8] sm:$0xff]
  %v66 = vld [vmem:[%s0 + $0x100] sm:$0xff]
  %v67 = vld [vmem:[%s0 + $0x108] sm:$0xff]
  %v68 = vld [vmem:[%s0 + $0x110] sm:$0xff]
  %v69 = vld [vmem:[%s0 + $0x118] sm:$0xff]
  %v70 = vld [vmem:[%s0 + $0x120] sm:$0xff]
  %v71 = vld [vmem:[%s0 + $0x128] sm:$0xff]
  %v72 = vld [vmem:[%s0 + $0x130] sm:$0xff]
  %v73 = vld [vmem:[%s0 + $0x138] sm:$0xff]
  %v74 = vld [vmem:[%s0 + $0x140] sm:$0xff]
  %v75 = vld [vmem:[%s0 + $0x148] sm:$0xff]
  %v76 = vld [vmem:[%s0 + $0x150] sm:$0xff]
  %v77 = vld [vmem:[%s0 + $0x158] sm:$0xff]
  %v78 = vld [vmem:[%s0 + $0x160] sm:$0xff]
  %v79 = vld [vmem:[%s0 + $0x168] sm:$0xff]
  %v80 = vld [vmem:[%s0 + $0x170] sm:$0xff]
  %v81 = vld [vmem:[%s0 + $0x178] sm:$0xff]
  %v82 = vld [vmem:[%s0 + $0x180] sm:$0xff]
  %v83 = vld [vmem:[%s0 + $0x188] sm:$0xff]
  %v84 = vld [vmem:[%s0 + $0x190] sm:$0xff]
  %v85 = vld [vmem:[%s0 + $0x198] sm:$0xff]
  %v86 = vld [vmem:[%s0 + $0x1a0] sm:$0xff]
  %v87 = vld [vmem:[%s0 + $0x1a8] sm:$0xff]
  %v88 = vld [vmem:[%s0 + $0x1b0] sm:$0xff]
  %v89 = vld [vmem:[%s0 + $0x1b8] sm:$0xff]
  %v90 = vld [vmem:[%s0 + $0x1c0] sm:$0xff]
  %v91 = vld [vmem:[%s0 + $0x1c8] sm:$0xff]
  %v92 = vld [vmem:[%s0 + $0x1d0] sm:$0xff]
  %v93 = vld [vmem:[%s0 + $0x1d8] sm:$0xff]
  %v94 = vld [vmem:[%s0 + $0x1e0] sm:$0xff]
  %v95 = vld [vmem:[%s0 + $0x1e8] sm:$0xff]
  %v96 = vld [vmem:[%s0 + $0x1f0] sm:$0xff]
  %v97 = vld [vmem:[%s0 + $0x1f8] sm:$0xff]
  %v98 = vld [vmem:[%s0 + $0x200] sm:$0xff]
  %v99 = vld [vmem:[%s0 + $0x208] sm:$0xff]
  %v100 = vld [vmem:[%s0 + $0x210] sm:$0xff]
  %v101 = vld [vmem:[%s0 + $0x218] sm:$0xff]
  %v102 = vld [vmem:[%s0 + $0x220] sm:$0xff]
  %v103 = vld [vmem:[%s0 + $0x228] sm:$0xff]
  %v104 = vld [vmem:[%s0 + $0x230] sm:$0xff]
  %v105 = vld [vmem:[%s0 + $0x238] sm:$0xff]
  %v106 = vld [vmem:[%s0 + $0x240] sm:$0xff]
  %v107 = vld [vmem:[%s0 + $0x248] sm:$0xff]
  %v108 = vld [vmem:[%s0 + $0x250] sm:$0xff]
  %v109 = vld [vmem:[%s0 + $0x258] sm:$0xff]
  %v110 = vld [vmem:[%s0 + $0x260] sm:$0xff]
  %v111 = vld [vmem:[%s0 + $0x268] sm:$0xff]
  %v112 = vld [vmem:[%s0 + $0x270] sm:$0xff]
  %v113 = vld [vmem:[%s0 + $0x278] sm:$0xff]
  %v114 = vld [vmem:[%s0 + $0x280] sm:$0xff]
  %v115 = vld [vmem:[%s0 + $0x288] sm:$0xff]
  %v116 = vld [vmem:[%s0 + $0x290] sm:$0xff]
  %v117 = vld [vmem:[%s0 + $0x298] sm:$0xff]
  %v118 = vld [vmem:[%s0 + $0x2a0] sm:$0xff]
  %v119 = vld [vmem:[%s0 + $0x2a8] sm:$0xff]
  %v120 = vld [vmem:[%s0 + $0x2b0] sm:$0xff]
  %v121 = vld [vmem:[%s0 + $0x2b8] sm:$0xff]
  %v122 = vld [vmem:[%s0 + $0x2c0] sm:$0xff]
  %v123 = vld [vmem:[%s0 + $0x2c8] sm:$0xff]
  %v124 = vld [vmem:[%s0 + $0x2d0] sm:$0xff]
  %v125 = vld [vmem:[%s0 + $0x2d8] sm:$0xff]
  %v126 = vld [vmem:[%s0 + $0x2e0] sm:$0xff]
  %v127 = vld [vmem:[%s0 + $0x2e8] sm:$0xff]
  %v128 = vld [vmem:[%s0 + $0x2f0] sm:$0xff]
  %v129 = vld [vmem:[%s0 + $0x2f8] sm:$0xff]
  %v130 = vld [vmem:[%s0 + $0x300] sm:$0xff]
  %v131 = vld [vmem:[%s0 + $0x308] sm:$0xff]
  %v132 = vld [vmem:[%s0 + $0x310] sm:$0xff]
  %v133 = vld [vmem:[%s0 + $0x318] sm:$0xff]
  %v134 = vld [vmem:[%s0 + $0x320] sm:$0xff]
  %v135 = vld [vmem:[%s0 + $0x328] sm:$0xff]
  %v136 = vld [vmem:[%s0 + $0x330] sm:$0xff]
  %v137 = vld [vmem:[%s0 + $0x338] sm:$0xff]
  %v138 = vld [vmem:[%s0 + $0x340] sm:$0xff]
  %v139 = vld [vmem:[%s0 + $0x348] sm:$0xff]
  %v140 = vld [vmem:[%s0 + $0x350] sm:$0xff]
  %v141 = vld [vmem:[%s0 + $0x358] sm:$0xff]
  %v142 = vld [vmem:[%s0 + $0x360] sm:$0xff]
  %v143 = vld [vmem:[%s0 + $0x368] sm:$0xff]
  %v144 = vld [vmem:[%s0 + $0x370] sm:$0xff]
  %v145 = vld [vmem:[%s0 + $0x378] sm:$0xff]
  %v146 = vld [vmem:[%s0 + $0x380] sm:$0xff]
  %v147 = vld [vmem:[%s0 + $0x388] sm:$0xff]
  %v148 = vld [vmem:[%s0 + $0x390] sm:$0xff]
  %v149 = vld [vmem:[%s0 + $0x398] sm:$0xff]
  %v150 = vld [vmem:[%s0 + $0x3a0] sm:$0xff]
  %v151 = vld [vmem:[%s0 + $0x3a8] sm:$0xff]
  %v152 = vld [vmem:[%s0 + $0x3b0] sm:$0xff]
  %v153 = vld [vmem:[%s0 + $0x3b8] sm:$0xff]
  %v154 = vld [vmem:[%s0 + $0x3c0] sm:$0xff]
  %v155 = vld [vmem:[%s0 + $0x3c8] sm:$0xff]
  %v156 = vld [vmem:[%s0 + $0x3d0] sm:$0xff]
  %v157 = vld [vmem:[%s0 + $0x3d8] sm:$0xff]
  %v158 = vld [vmem:[%s0 + $0x3e0] sm:$0xff]
  %v159 = vld [vmem:[%s0 + $0x3e8] sm:$0xff]
  %v160 = vld [vmem:[%s0 + $0x3f0] sm:$0xff]
  %v161 = vld [vmem:[%s0 + $0x3f8] sm:$0xff]
  %v162 = vld [vmem:[%s0 + $0x400] sm:$0xff]
  %v163 = vld [vmem:[%s0 + $0x408] sm:$0xff]
  %v164 = vld [vmem:[%s0 + $0x410] sm:$0xff]
  %v165 = vld [vmem:[%s0 + $0x418] sm:$0xff]
  %v166 = vld [vmem:[%s0 + $0x420] sm:$0xff]
  %v167 = vld [vmem:[%s0 + $0x428] sm:$0xff]
  %v168 = vld [vmem:[%s0 + $0x430] sm:$0xff]
  %v169 = vld [vmem:[%s0 + $0x438] sm:$0xff]
  %v170 = vld [vmem:[%s0 + $0x440] sm:$0xff]
  %v171 = vld [vmem:[%s0 + $0x448] sm:$0xff]
  %v172 = vld [vmem:[%s0 + $0x450] sm:$0xff]
  %v173 = vld [vmem:[%s0 + $0x458] sm:$0xff]
  %v174 = vld [vmem:[%s0 + $0x460] sm:$0xff]
  %v175 = vld [vmem:[%s0 + $0x468] sm:$0xff]
  %v176 = vld [vmem:[%s0 + $0x470] sm:$0xff]
  %v177 = vld [vmem:[%s0 + $0x478] sm:$0xff]
  %v178 = vld [vmem:[%s0 + $0x480] sm:$0xff]
  %v179 = vld [vmem:[%s0 + $0x488] sm:$0xff]
  %v180 = vld [vmem:[%s0 + $0x490] sm:$0xff]
  %v181 = vld [vmem:[%s0 + $0x498] sm:$0xff]
  %v182 = vld [vmem:[%s0 + $0x4a0] sm:$0xff]
  %v183 = vld [vmem:[%s0 + $0x4a8] sm:$0xff]
  %v184 = vld [vmem:[%s0 + $0x4b0] sm:$0xff]
  %v185 = vld [vmem:[%s0 + $0x4b8] sm:$0xff]
  %v186 = vld [vmem:[%s0 + $0x4c0] sm:$0xff]
  %v187 = vld [vmem:[%s0 + $0x4c8] sm:$0xff]
  %v188 = vld [vmem:[%s0 + $0x4d0] sm:$0xff]
  %v189 = vld [vmem:[%s0 + $0x4d8] sm:$0xff]
  %v190 = vld [vmem:[%s0 + $0x4e0] sm:$0xff]
  %v191 = vld [vmem:[%s0 + $0x4e8] sm:$0xff]
  %v192 = vld [vmem:[%s0 + $0x4f0] sm:$0xff]
  %v193 = vld [vmem:[%s0 + $0x4f8] sm:$0xff]
  %v194 = vld [vmem:[%s0 + $0x500] sm:$0xff]
  %v195 = vld [vmem:[%s0 + $0x508] sm:$0xff]
  %v196 = vld [vmem:[%s0 + $0x510] sm:$0xff]
  %v197 = vld [vmem:[%s0 + $0x518] sm:$0xff]
  %v198 = vld [vmem:[%s0 + $0x520] sm:$0xff]
  %v199 = vld [vmem:[%s0 + $0x528] sm:$0xff]
  %v200 = vld [vmem:[%s0 + $0x530] sm:$0xff]
  %v201 = vld [vmem:[%s0 + $0x538] sm:$0xff]
  %v202 = vld [vmem:[%s0 + $0x540] sm:$0xff]
  %v203 = vld [vmem:[%s0 + $0x548] sm:$0xff]
  %v204 = vld [vmem:[%s0 + $0x550] sm:$0xff]
  %v205 = vld [vmem:[%s0 + $0x558] sm:$0xff]
  %v206 = vld [vmem:[%s0 + $0x560] sm:$0xff]
  %v207 = vld [vmem:[%s0 + $0x568] sm:$0xff]
  %v208 = vld [vmem:[%s0 + $0x570] sm:$0xff]
  %v209 = vld [vmem:[%s0 + $0x578] sm:$0xff]
  %v210 = vld [vmem:[%s0 + $0x580] sm:$0xff]
  %v211 = vld [vmem:[%s0 + $0x588] sm:$0xff]
  %v212 = vld [vmem:[%s0 + $0x590] sm:$0xff]
  %v213 = vld [vmem:[%s0 + $0x598] sm:$0xff]
  %v214 = vld [vmem:[%s0 + $0x5a0] sm:$0xff]
  %v215 = vld [vmem:[%s0 + $0x5a8] sm:$0xff]
  %v216 = vld [vmem:[%s0 + $0x5b0] sm:$0xff]
  %v217 = vld [vmem:[%s0 + $0x5b8] sm:$0xff]
  %v218 = vld [vmem:[%s0 + $0x5c0] sm:$0xff]
  %v219 = vld [vmem:[%s0 + $0x5c8] sm:$0xff]
  %v220 = vld [vmem:[%s0 + $0x5d0] sm:$0xff]
  %v221 = vld [vmem:[%s0 + $0x5d8] sm:$0xff]
  %v222 = vld [vmem:[%s0 + $0x5e0] sm:$0xff]
  %v223 = vld [vmem:[%s0 + $0x5e8] sm:$0xff]
  %v224 = vld [vmem:[%s0 + $0x5f0] sm:$0xff]
  %v225 = vld [vmem:[%s0 + $0x5f8] sm:$0xff]
  %v226 = vld [vmem:[%s0 + $0x600] sm:$0xff]
  %v227 = vld [vmem:[%s0 + $0x608] sm:$0xff]
  %v228 = vld [vmem:[%s0 + $0x610] sm:$0xff]
  %v229 = vld [vmem:[%s0 + $0x618] sm:$0xff]
  %v230 = vld [vmem:[%s0 + $0x620] sm:$0xff]
  %v231 = vld [vmem:[%s0 + $0x628] sm:$0xff]
  %v232 = vld [vmem:[%s0 + $0x630] sm:$0xff]
  %v233 = vld [vmem:[%s0 + $0x638] sm:$0xff]
  %v234 = vld [vmem:[%s0 + $0x640] sm:$0xff]
  %v235 = vld [vmem:[%s0 + $0x648] sm:$0xff]
  %v236 = vld [vmem:[%s0 + $0x650] sm:$0xff]
  %v237 = vld [vmem:[%s0 + $0x658] sm:$0xff]
  %v238 = vld [vmem:[%s0 + $0x660] sm:$0xff]
  %v239 = vld [vmem:[%s0 + $0x668] sm:$0xff]
  %v240 = vld [vmem:[%s0 + $0x670] sm:$0xff]
  %v241 = vld [vmem:[%s0 + $0x678] sm:$0xff]
  %v242 = vld [vmem:[%s0 + $0x680] sm:$0xff]
  %v243 = vld [vmem:[%s0 + $0x688] sm:$0xff]
  %v244 = vld [vmem:[%s0 + $0x690] sm:$0xff]
  %v245 = vld [vmem:[%s0 + $0x698] sm:$0xff]
  %v246 = vld [vmem:[%s0 + $0x6a0] sm:$0xff]
  %v247 = vld [vmem:[%s0 + $0x6a8] sm:$0xff]
  %v248 = vld [vmem:[%s0 + $0x6b0] sm:$0xff]
  %v249 = vld [vmem:[%s0 + $0x6b8] sm:$0xff]
  %v250 = vld [vmem:[%s0 + $0x6c0] sm:$0xff]
  %v251 = vld [vmem:[%s0 + $0x6c8] sm:$0xff]
  %v252 = vld [vmem:[%s0 + $0x6d0] sm:$0xff]
  %v253 = vld [vmem:[%s0 + $0x6d8] sm:$0xff]
  %v254 = vld [vmem:[%s0 + $0x6e0] sm:$0xff]
  %v255 = vld [vmem:[%s0 + $0x6e8] sm:$0xff]
  %v256 = vld [vmem:[%s0 + $0x6f0] sm:$0xff]
  %v257 = vld [vmem:[%s0 + $0x6f8] sm:$0xff]
  %v258 = vld [vmem:[%s0 + $0x700] sm:$0xff]
  %v259 = vld [vmem:[%s0 + $0x708] sm:$0xff]
  %v260 = vld [vmem:[%s0 + $0x710] sm:$0xff]
  %v261 = vld [vmem:[%s0 + $0x718] sm:$0xff]
  %v262 = vld [vmem:[%s0 + $0x720] sm:$0xff]
  %v263 = vld [vmem:[%s0 + $0x728] sm:$0xff]
  %v264 = vld [vmem:[%s0 + $0x730] sm:$0xff]
  %v265 = vld [vmem:[%s0 + $0x738] sm:$0xff]
  %v266 = vld [vmem:[%s0 + $0x740] sm:$0xff]
  %v267 = vld [vmem:[%s0 + $0x748] sm:$0xff]
  %v268 = vld [vmem:[%s0 + $0x750] sm:$0xff]
  %v269 = vld [vmem:[%s0 + $0x758] sm:$0xff]
  %v270 = vld [vmem:[%s0 + $0x760] sm:$0xff]
  %v271 = vld [vmem:[%s0 + $0x768] sm:$0xff]
  %v272 = vld [vmem:[%s0 + $0x770] sm:$0xff]
  %v273 = vld [vmem:[%s0 + $0x778] sm:$0xff]
  %v274 = vld [vmem:[%s0 + $0x780] sm:$0xff]
  %v275 = vld [vmem:[%s0 + $0x788] sm:$0xff]
  %v276 = vld [vmem:[%s0 + $0x790] sm:$0xff]
  %v277 = vld [vmem:[%s0 + $0x798] sm:$0xff]
  %v278 = vld [vmem:[%s0 + $0x7a0] sm:$0xff]
  %v279 = vld [vmem:[%s0 + $0x7a8] sm:$0xff]
  %v280 = vld [vmem:[%s0 + $0x7b0] sm:$0xff]
  %v281 = vld [vmem:[%s0 + $0x7b8] sm:$0xff]
  %v282 = vld [vmem:[%s0 + $0x7c0] sm:$0xff]
  %v283 = vld [vmem:[%s0 + $0x7c8] sm:$0xff]
  %v284 = vld [vmem:[%s0 + $0x7d0] sm:$0xff]
  %v285 = vld [vmem:[%s0 + $0x7d8] sm:$0xff]
  %v286 = vld [vmem:[%s0 + $0x7e0] sm:$0xff]
  %v287 = vld [vmem:[%s0 + $0x7e8] sm:$0xff]
  %v288 = vld [vmem:[%s0 + $0x7f0] sm:$0xff]
  %v289 = vld [vmem:[%s0 + $0x7f8] sm:$0xff]
  %v290 = vld [vmem:[%s1] sm:$0xff]
  %v291 = vld [vmem:[%s1 + $0x8] sm:$0xff]
  %v292 = vld [vmem:[%s2] sm:$0x3]
  %v294 = vlaneseq
  %v295 = vshrl.u32 %v294, 7
  %v296 = vsub.s32 0, %v295
  %v297 = vrot.slane %v292, %v296
  %v298 = vlaneseq
  %v299 = vshrl.u32 %v298, 7
  %v300 = vsub.s32 1, %v299
  %v301 = vrot.slane %v292, %v300
  %vm304 = vcmask 64512
  %v306 = vsel %vm304, %v34, 0
  %v309 = vsel %vm304, %v35, 0
  %v312 = vsel %vm304, %v36, 0
  %v315 = vsel %vm304, %v37, 0
  %v318 = vsel %vm304, %v38, 0
  %v321 = vsel %vm304, %v39, 0
  %v324 = vsel %vm304, %v40, 0
  %v327 = vsel %vm304, %v41, 0
  %v330 = vsel %vm304, %v42, 0
  %v333 = vsel %vm304, %v43, 0
  %v336 = vsel %vm304, %v44, 0
  %v339 = vsel %vm304, %v45, 0
  %v342 = vsel %vm304, %v46, 0
  %v345 = vsel %vm304, %v47, 0
  %v348 = vsel %vm304, %v48, 0
  %v351 = vsel %vm304, %v49, 0
  %v354 = vsel %vm304, %v50, 0
  %v357 = vsel %vm304, %v51, 0
  %v360 = vsel %vm304, %v52, 0
  %v363 = vsel %vm304, %v53, 0
  %v366 = vsel %vm304, %v54, 0
  %v369 = vsel %vm304, %v55, 0
  %v372 = vsel %vm304, %v56, 0
  %v375 = vsel %vm304, %v57, 0
  %v378 = vsel %vm304, %v58, 0
  %v381 = vsel %vm304, %v59, 0
  %v384 = vsel %vm304, %v60, 0
  %v387 = vsel %vm304, %v61, 0
  %v390 = vsel %vm304, %v62, 0
  %v393 = vsel %vm304, %v63, 0
  %v396 = vsel %vm304, %v64, 0
  %v399 = vsel %vm304, %v65, 0
  %v402 = vsel %vm304, %v66, 0
  %v405 = vsel %vm304, %v67, 0
  %v408 = vsel %vm304, %v68, 0
  %v411 = vsel %vm304, %v69, 0
  %v414 = vsel %vm304, %v70, 0
  %v417 = vsel %vm304, %v71, 0
  %v420 = vsel %vm304, %v72, 0
  %v423 = vsel %vm304, %v73, 0
  %v426 = vsel %vm304, %v74, 0
  %v429 = vsel %vm304, %v75, 0
  %v432 = vsel %vm304, %v76, 0
  %v435 = vsel %vm304, %v77, 0
  %v438 = vsel %vm304, %v78, 0
  %v441 = vsel %vm304, %v79, 0
  %v444 = vsel %vm304, %v80, 0
  %v447 = vsel %vm304, %v81, 0
  %v450 = vsel %vm304, %v82, 0
  %v453 = vsel %vm304, %v83, 0
  %v456 = vsel %vm304, %v84, 0
  %v459 = vsel %vm304, %v85, 0
  %v462 = vsel %vm304, %v86, 0
  %v465 = vsel %vm304, %v87, 0
  %v468 = vsel %vm304, %v88, 0
  %v471 = vsel %vm304, %v89, 0
  %v474 = vsel %vm304, %v90, 0
  %v477 = vsel %vm304, %v91, 0
  %v480 = vsel %vm304, %v92, 0
  %v483 = vsel %vm304, %v93, 0
  %v486 = vsel %vm304, %v94, 0
  %v489 = vsel %vm304, %v95, 0
  %v492 = vsel %vm304, %v96, 0
  %v495 = vsel %vm304, %v97, 0
  %v498 = vsel %vm304, %v98, 0
  %v501 = vsel %vm304, %v99, 0
  %v504 = vsel %vm304, %v100, 0
  %v507 = vsel %vm304, %v101, 0
  %v510 = vsel %vm304, %v102, 0
  %v513 = vsel %vm304, %v103, 0
  %v516 = vsel %vm304, %v104, 0
  %v519 = vsel %vm304, %v105, 0
  %v522 = vsel %vm304, %v106, 0
  %v525 = vsel %vm304, %v107, 0
  %v528 = vsel %vm304, %v108, 0
  %v531 = vsel %vm304, %v109, 0
  %v534 = vsel %vm304, %v110, 0
  %v537 = vsel %vm304, %v111, 0
  %v540 = vsel %vm304, %v112, 0
  %v543 = vsel %vm304, %v113, 0
  %v546 = vsel %vm304, %v114, 0
  %v549 = vsel %vm304, %v115, 0
  %v552 = vsel %vm304, %v116, 0
  %v555 = vsel %vm304, %v117, 0
  %v558 = vsel %vm304, %v118, 0
  %v561 = vsel %vm304, %v119, 0
  %v564 = vsel %vm304, %v120, 0
  %v567 = vsel %vm304, %v121, 0
  %v570 = vsel %vm304, %v122, 0
  %v573 = vsel %vm304, %v123, 0
  %v576 = vsel %vm304, %v124, 0
  %v579 = vsel %vm304, %v125, 0
  %v582 = vsel %vm304, %v126, 0
  %v585 = vsel %vm304, %v127, 0
  %v588 = vsel %vm304, %v128, 0
  %v591 = vsel %vm304, %v129, 0
  %v594 = vsel %vm304, %v130, 0
  %v597 = vsel %vm304, %v131, 0
  %v600 = vsel %vm304, %v132, 0
  %v603 = vsel %vm304, %v133, 0
  %v606 = vsel %vm304, %v134, 0
  %v609 = vsel %vm304, %v135, 0
  %v612 = vsel %vm304, %v136, 0
  %v615 = vsel %vm304, %v137, 0
  %v618 = vsel %vm304, %v138, 0
  %v621 = vsel %vm304, %v139, 0
  %v624 = vsel %vm304, %v140, 0
  %v627 = vsel %vm304, %v141, 0
  %v630 = vsel %vm304, %v142, 0
  %v633 = vsel %vm304, %v143, 0
  %v636 = vsel %vm304, %v144, 0
  %v639 = vsel %vm304, %v145, 0
  %v642 = vsel %vm304, %v146, 0
  %v645 = vsel %vm304, %v147, 0
  %v648 = vsel %vm304, %v148, 0
  %v651 = vsel %vm304, %v149, 0
  %v654 = vsel %vm304, %v150, 0
  %v657 = vsel %vm304, %v151, 0
  %v660 = vsel %vm304, %v152, 0
  %v663 = vsel %vm304, %v153, 0
  %v666 = vsel %vm304, %v154, 0
  %v669 = vsel %vm304, %v155, 0
  %v672 = vsel %vm304, %v156, 0
  %v675 = vsel %vm304, %v157, 0
  %v678 = vsel %vm304, %v158, 0
  %v681 = vsel %vm304, %v159, 0
  %v684 = vsel %vm304, %v160, 0
  %v687 = vsel %vm304, %v161, 0
  %v690 = vsel %vm304, %v162, 0
  %v693 = vsel %vm304, %v163, 0
  %v696 = vsel %vm304, %v164, 0
  %v699 = vsel %vm304, %v165, 0
  %v702 = vsel %vm304, %v166, 0
  %v705 = vsel %vm304, %v167, 0
  %v708 = vsel %vm304, %v168, 0
  %v711 = vsel %vm304, %v169, 0
  %v714 = vsel %vm304, %v170, 0
  %v717 = vsel %vm304, %v171, 0
  %v720 = vsel %vm304, %v172, 0
  %v723 = vsel %vm304, %v173, 0
  %v726 = vsel %vm304, %v174, 0
  %v729 = vsel %vm304, %v175, 0
  %v732 = vsel %vm304, %v176, 0
  %v735 = vsel %vm304, %v177, 0
  %v738 = vsel %vm304, %v178, 0
  %v741 = vsel %vm304, %v179, 0
  %v744 = vsel %vm304, %v180, 0
  %v747 = vsel %vm304, %v181, 0
  %v750 = vsel %vm304, %v182, 0
  %v753 = vsel %vm304, %v183, 0
  %v756 = vsel %vm304, %v184, 0
  %v759 = vsel %vm304, %v185, 0
  %v762 = vsel %vm304, %v186, 0
  %v765 = vsel %vm304, %v187, 0
  %v768 = vsel %vm304, %v188, 0
  %v771 = vsel %vm304, %v189, 0
  %v774 = vsel %vm304, %v190, 0
  %v777 = vsel %vm304, %v191, 0
  %v780 = vsel %vm304, %v192, 0
  %v783 = vsel %vm304, %v193, 0
  %v786 = vsel %vm304, %v194, 0
  %v789 = vsel %vm304, %v195, 0
  %v792 = vsel %vm304, %v196, 0
  %v795 = vsel %vm304, %v197, 0
  %v798 = vsel %vm304, %v198, 0
  %v801 = vsel %vm304, %v199, 0
  %v804 = vsel %vm304, %v200, 0
  %v807 = vsel %vm304, %v201, 0
  %v810 = vsel %vm304, %v202, 0
  %v813 = vsel %vm304, %v203, 0
  %v816 = vsel %vm304, %v204, 0
  %v819 = vsel %vm304, %v205, 0
  %v822 = vsel %vm304, %v206, 0
  %v825 = vsel %vm304, %v207, 0
  %v828 = vsel %vm304, %v208, 0
  %v831 = vsel %vm304, %v209, 0
  %v834 = vsel %vm304, %v210, 0
  %v837 = vsel %vm304, %v211, 0
  %v840 = vsel %vm304, %v212, 0
  %v843 = vsel %vm304, %v213, 0
  %v846 = vsel %vm304, %v214, 0
  %v849 = vsel %vm304, %v215, 0
  %v852 = vsel %vm304, %v216, 0
  %v855 = vsel %vm304, %v217, 0
  %v858 = vsel %vm304, %v218, 0
  %v861 = vsel %vm304, %v219, 0
  %v864 = vsel %vm304, %v220, 0
  %v867 = vsel %vm304, %v221, 0
  %v870 = vsel %vm304, %v222, 0
  %v873 = vsel %vm304, %v223, 0
  %v876 = vsel %vm304, %v224, 0
  %v879 = vsel %vm304, %v225, 0
  %v882 = vsel %vm304, %v226, 0
  %v885 = vsel %vm304, %v227, 0
  %v888 = vsel %vm304, %v228, 0
  %v891 = vsel %vm304, %v229, 0
  %v894 = vsel %vm304, %v230, 0
  %v897 = vsel %vm304, %v231, 0
  %v900 = vsel %vm304, %v232, 0
  %v903 = vsel %vm304, %v233, 0
  %v906 = vsel %vm304, %v234, 0
  %v909 = vsel %vm304, %v235, 0
  %v912 = vsel %vm304, %v236, 0
  %v915 = vsel %vm304, %v237, 0
  %v918 = vsel %vm304, %v238, 0
  %v921 = vsel %vm304, %v239, 0
  %v924 = vsel %vm304, %v240, 0
  %v927 = vsel %vm304, %v241, 0
  %v930 = vsel %vm304, %v242, 0
  %v933 = vsel %vm304, %v243, 0
  %v936 = vsel %vm304, %v244, 0
  %v939 = vsel %vm304, %v245, 0
  %v942 = vsel %vm304, %v246, 0
  %v945 = vsel %vm304, %v247, 0
  %v948 = vsel %vm304, %v248, 0
  %v951 = vsel %vm304, %v249, 0
  %v954 = vsel %vm304, %v250, 0
  %v957 = vsel %vm304, %v251, 0
  %v960 = vsel %vm304, %v252, 0
  %v963 = vsel %vm304, %v253, 0
  %v966 = vsel %vm304, %v254, 0
  %v969 = vsel %vm304, %v255, 0
  %v972 = vsel %vm304, %v256, 0
  %v975 = vsel %vm304, %v257, 0
  %v978 = vsel %vm304, %v258, 0
  %v981 = vsel %vm304, %v259, 0
  %v984 = vsel %vm304, %v260, 0
  %v987 = vsel %vm304, %v261, 0
  %v990 = vsel %vm304, %v262, 0
  %v993 = vsel %vm304, %v263, 0
  %v996 = vsel %vm304, %v264, 0
  %v999 = vsel %vm304, %v265, 0
  %v1002 = vsel %vm304, %v266, 0
  %v1005 = vsel %vm304, %v267, 0
  %v1008 = vsel %vm304, %v268, 0
  %v1011 = vsel %vm304, %v269, 0
  %v1014 = vsel %vm304, %v270, 0
  %v1017 = vsel %vm304, %v271, 0
  %v1020 = vsel %vm304, %v272, 0
  %v1023 = vsel %vm304, %v273, 0
  %v1026 = vsel %vm304, %v274, 0
  %v1029 = vsel %vm304, %v275, 0
  %v1032 = vsel %vm304, %v276, 0
  %v1035 = vsel %vm304, %v277, 0
  %v1038 = vsel %vm304, %v278, 0
  %v1041 = vsel %vm304, %v279, 0
  %v1044 = vsel %vm304, %v280, 0
  %v1047 = vsel %vm304, %v281, 0
  %v1050 = vsel %vm304, %v282, 0
  %v1053 = vsel %vm304, %v283, 0
  %v1056 = vsel %vm304, %v284, 0
  %v1059 = vsel %vm304, %v285, 0
  %v1062 = vsel %vm304, %v286, 0
  %v1065 = vsel %vm304, %v287, 0
  %v1068 = vsel %vm304, %v288, 0
  %v1071 = vsel %vm304, %v289, 0
  %1073 = vmatprep.subr.mxu0 %v291
  %1074 = vmatpush1.msra.mxu0 %v290
  %1075 = vmatprep.subr.mxu0 0.0
  %1076 = vmatpush1.msra.mxu0 0.0
  %1077 = vmatprep.subr.mxu0 0.0
  %1078 = vmatpush1.msra.mxu0 0.0
  %1079 = vmatprep.subr.mxu0 0.0
  %1080 = vmatpush1.msra.mxu0 0.0
  %1081 = vmatprep.subr.mxu0 0.0
  %1082 = vmatpush1.msra.mxu0 0.0
  %1083 = vmatprep.subr.mxu0 0.0
  %1084 = vmatpush1.msra.mxu0 0.0
  %1085 = vmatprep.subr.mxu0 0.0
  %1086 = vmatpush1.msra.mxu0 0.0
  %1087 = vmatprep.subr.mxu0 0.0
  %1088 = vmatpush1.msra.mxu0 0.0
  %1089 = vmatprep.subr.mxu0 0.0
  %1090 = vmatpush1.msra.mxu0 0.0
  %1091 = vmatprep.subr.mxu0 0.0
  %1092 = vmatpush1.msra.mxu0 0.0
  %1093 = vmatprep.subr.mxu0 0.0
  %1094 = vmatpush1.msra.mxu0 0.0
  %1095 = vmatprep.subr.mxu0 0.0
  %1096 = vmatpush1.msra.mxu0 0.0
  %1097 = vmatprep.subr.mxu0 0.0
  %1098 = vmatpush1.msra.mxu0 0.0
  %1099 = vmatprep.subr.mxu0 0.0
  %1100 = vmatpush1.msra.mxu0 0.0
  %1101 = vmatprep.subr.mxu0 0.0
  %1102 = vmatpush1.msra.mxu0 0.0
  %1103 = vmatprep.subr.mxu0 0.0
  %1104 = vmatpush1.msra.mxu0 0.0
  %1105 = vmatprep.subr.mxu0 0.0
  %1106 = vmatpush1.msra.mxu0 0.0
  %1107 = vmatprep.subr.mxu0 0.0
  %1108 = vmatpush1.msra.mxu0 0.0
  %1109 = vmatprep.subr.mxu0 0.0
  %1110 = vmatpush1.msra.mxu0 0.0
  %1111 = vmatprep.subr.mxu0 0.0
  %1112 = vmatpush1.msra.mxu0 0.0
  %1113 = vmatprep.subr.mxu0 0.0
  %1114 = vmatpush1.msra.mxu0 0.0
  %1115 = vmatprep.subr.mxu0 0.0
  %1116 = vmatpush1.msra.mxu0 0.0
  %1117 = vmatprep.subr.mxu0 0.0
  %1118 = vmatpush1.msra.mxu0 0.0
  %1119 = vmatprep.subr.mxu0 0.0
  %1120 = vmatpush1.msra.mxu0 0.0
  %1121 = vmatprep.subr.mxu0 0.0
  %1122 = vmatpush1.msra.mxu0 0.0
  %1123 = vmatprep.subr.mxu0 0.0
  %1124 = vmatpush1.msra.mxu0 0.0
  %1125 = vmatprep.subr.mxu0 0.0
  %1126 = vmatpush1.msra.mxu0 0.0
  %1127 = vmatprep.subr.mxu0 0.0
  %1128 = vmatpush1.msra.mxu0 0.0
  %1129 = vmatprep.subr.mxu0 0.0
  %1130 = vmatpush1.msra.mxu0 0.0
  %1131 = vmatprep.subr.mxu0 0.0
  %1132 = vmatpush1.msra.mxu0 0.0
  %1133 = vmatprep.subr.mxu0 0.0
  %1134 = vmatpush1.msra.mxu0 0.0
  %1135 = vmatprep.subr.mxu0 0.0
  %1136 = vmatpush1.msra.mxu0 0.0
  %1137 = vmatprep.mubr.f32.mxu0 0.0
  %1138 = vmatmul.mubr.f32.gmra.mrb[0].mxu0 %v306
  %v1139 = vpop.f32.mrb[0].mxu0
  %v1140 = vadd.f32 %v297, %v1139
  %v1141 = vpop.f32.mrb[0].mxu0
  %v1142 = vadd.f32 %v301, %v1141
  %1143 = vmatprep.mubr.f32.mxu0 0.0
  %1144 = vmatmul.mubr.f32.gmra.mrb[0].mxu0 %v309
  %v1145 = vpop.f32.mrb[0].mxu0
  %v1146 = vadd.f32 %v297, %v1145
  %v1147 = vpop.f32.mrb[0].mxu0
  %v1148 = vadd.f32 %v301, %v1147
  %1149 = vmatprep.mubr.f32.mxu0 0.0
  %1150 = vmatmul.mubr.f32.gmra.mrb[0].mxu0 %v312
  %v1151 = vpop.f32.mrb[0].mxu0
  %v1152 = vadd.f32 %v297, %v1151
  %v1153 = vpop.f32.mrb[0].mxu0
  %v1154 = vadd.f32 %v301, %v1153
  %1155 = vmatprep.mubr.f32.mxu0 0.0
  %1156 = vmatmul.mubr.f32.gmra.mrb[0].mxu0 %v315
  %v1157 = vpop.f32.mrb[0].mxu0
  %v1158 = vadd.f32 %v297, %v1157
  %v1159 = vpop.f32.mrb[0].mxu0
  %v1160 = vadd.f32 %v301, %v1159
  %1161 = vmatprep.mubr.f32.mxu0 0.0
  %1162 = vmatmul.mubr.f32.gmra.mrb[0].mxu0 %v318
  %v1163 = vpop.f32.mrb[0].mxu0
  %v1164 = vadd.f32 %v297, %v1163
  %v1165 = vpop.f32.mrb[0].mxu0
  %v1166 = vadd.f32 %v301, %v1165
  %1167 = vmatprep.mubr.f32.mxu0 0.0
  %1168 = vmatmul.mubr.f32.gmra.mrb[0].mxu0 %v321
  %v1169 = vpop.f32.mrb[0].mxu0
  %v1170 = vadd.f32 %v297, %v1169
  %v1171 = vpop.f32.mrb[0].mxu0
  %v1172 = vadd.f32 %v301, %v1171
  %1173 = vmatprep.mubr.f32.mxu0 0.0
  %1174 = vmatmul.mubr.f32.gmra.mrb[0].mxu0 %v324
  %v1175 = vpop.f32.mrb[0].mxu0
  %v1176 = vadd.f32 %v297, %v1175
  %v1177 = vpop.f32.mrb[0].mxu0
  %v1178 = vadd.f32 %v301, %v1177
  %1179 = vmatprep.mubr.f32.mxu0 0.0
  %1180 = vmatmul.mubr.f32.gmra.mrb[0].mxu0 %v327
  %v1181 = vpop.f32.mrb[0].mxu0
  %v1182 = vadd.f32 %v297, %v1181
  %v1183 = vpop.f32.mrb[0].mxu0
  %v1184 = vadd.f32 %v301, %v1183
  %1185 = vmatprep.mubr.f32.mxu0 0.0
  %1186 = vmatmul.mubr.f32.gmra.mrb[0].mxu0 %v330
  %v1187 = vpop.f32.mrb[0].mxu0
  %v1188 = vadd.f32 %v297, %v1187
  %v1189 = vpop.f32.mrb[0].mxu0
  %v1190 = vadd.f32 %v301, %v1189
  %1191 = vmatprep.mubr.f32.mxu0 0.0
  %1192 = vmatmul.mubr.f32.gmra.mrb[0].mxu0 %v333
  %v1193 = vpop.f32.mrb[0].mxu0
  %v1194 = vadd.f32 %v297, %v1193
  %v1195 = vpop.f32.mrb[0].mxu0
  %v1196 = vadd.f32 %v301, %v1195
  %1197 = vmatprep.mubr.f32.mxu0 0.0
  %1198 = vmatmul.mubr.f32.gmra.mrb[0].mxu0 %v336
  %v1199 = vpop.f32.mrb[0].mxu0
  %v1200 = vadd.f32 %v297, %v1199
  %v1201 = vpop.f32.mrb[0].mxu0
  %v1202 = vadd.f32 %v301, %v1201
  %1203 = vmatprep.mubr.f32.mxu0 0.0
  %1204 = vmatmul.mubr.f32.gmra.mrb[0].mxu0 %v339
  %v1205 = vpop.f32.mrb[0].mxu0
  %v1206 = vadd.f32 %v297, %v1205
  %v1207 = vpop.f32.mrb[0].mxu0
  %v1208 = vadd.f32 %v301, %v1207
  %1209 = vmatprep.mubr.f32.mxu0 0.0
  %1210 = vmatmul.mubr.f32.gmra.mrb[0].mxu0 %v342
  %v1211 = vpop.f32.mrb[0].mxu0
  %v1212 = vadd.f32 %v297, %v1211
  %v1213 = vpop.f32.mrb[0].mxu0
  %v1214 = vadd.f32 %v301, %v1213
  %1215 = vmatprep.mubr.f32.mxu0 0.0
  %1216 = vmatmul.mubr.f32.gmra.mrb[0].mxu0 %v345
  %v1217 = vpop.f32.mrb[0].mxu0
  %v1218 = vadd.f32 %v297, %v1217
  %v1219 = vpop.f32.mrb[0].mxu0
  %v1220 = vadd.f32 %v301, %v1219
  %1221 = vmatprep.mubr.f32.mxu0 0.0
  %1222 = vmatmul.mubr.f32.gmra.mrb[0].mxu0 %v348
  %v1223 = vpop.f32.mrb[0].mxu0
  %v1224 = vadd.f32 %v297, %v1223
  %v1225 = vpop.f32.mrb[0].mxu0
  %v1226 = vadd.f32 %v301, %v1225
  %1227 = vmatprep.mubr.f32.mxu0 0.0
  %1228 = vmatmul.mubr.f32.gmra.mrb[0].mxu0 %v351
  %v1229 = vpop.f32.mrb[0].mxu0
  %v1230 = vadd.f32 %v297, %v1229
  %v1231 = vpop.f32.mrb[0].mxu0
  %v1232 = vadd.f32 %v301, %v1231
  %1233 = vmatprep.mubr.f32.mxu0 0.0
  %1234 = vmatmul.mubr.f32.gmra.mrb[0].mxu0 %v354
  %v1235 = vpop.f32.mrb[0].mxu0
  %v1236 = vadd.f32 %v297, %v1235
  %v1237 = vpop.f32.mrb[0].mxu0
  %v1238 = vadd.f32 %v301, %v1237
  %1239 = vmatprep.mubr.f32.mxu0 0.0
  %1240 = vmatmul.mubr.f32.gmra.mrb[0].mxu0 %v357
  %v1241 = vpop.f32.mrb[0].mxu0
  %v1242 = vadd.f32 %v297, %v1241
  %v1243 = vpop.f32.mrb[0].mxu0
  %v1244 = vadd.f32 %v301, %v1243
  %1245 = vmatprep.mubr.f32.mxu0 0.0
  %1246 = vmatmul.mubr.f32.gmra.mrb[0].mxu0 %v360
  %v1247 = vpop.f32.mrb[0].mxu0
  %v1248 = vadd.f32 %v297, %v1247
  %v1249 = vpop.f32.mrb[0].mxu0
  %v1250 = vadd.f32 %v301, %v1249
  %1251 = vmatprep.mubr.f32.mxu0 0.0
  %1252 = vmatmul.mubr.f32.gmra.mrb[0].mxu0 %v363
  %v1253 = vpop.f32.mrb[0].mxu0
  %v1254 = vadd.f32 %v297, %v1253
  %v1255 = vpop.f32.mrb[0].mxu0
  %v1256 = vadd.f32 %v301, %v1255
  %1257 = vmatprep.mubr.f32.mxu0 0.0
  %1258 = vmatmul.mubr.f32.gmra.mrb[0].mxu0 %v366
  %v1259 = vpop.f32.mrb[0].mxu0
  %v1260 = vadd.f32 %v297, %v1259
  %v1261 = vpop.f32.mrb[0].mxu0
  %v1262 = vadd.f32 %v301, %v1261
  %1263 = vmatprep.mubr.f32.mxu0 0.0
  %1264 = vmatmul.mubr.f32.gmra.mrb[0].mxu0 %v369
  %v1265 = vpop.f32.mrb[0].mxu0
  %v1266 = vadd.f32 %v297, %v1265
  %v1267 = vpop.f32.mrb[0].mxu0
  %v1268 = vadd.f32 %v301, %v1267
  %1269 = vmatprep.mubr.f32.mxu0 0.0
  %1270 = vmatmul.mubr.f32.gmra.mrb[0].mxu0 %v372
  %v1271 = vpop.f32.mrb[0].mxu0
  %v1272 = vadd.f32 %v297, %v1271
  %v1273 = vpop.f32.mrb[0].mxu0
  %v1274 = vadd.f32 %v301, %v1273
  %1275 = vmatprep.mubr.f32.mxu0 0.0
  %1276 = vmatmul.mubr.f32.gmra.mrb[0].mxu0 %v375
  %v1277 = vpop.f32.mrb[0].mxu0
  %v1278 = vadd.f32 %v297, %v1277
  %v1279 = vpop.f32.mrb[0].mxu0
  %v1280 = vadd.f32 %v301, %v1279
  %1281 = vmatprep.mubr.f32.mxu0 0.0
  %1282 = vmatmul.mubr.f32.gmra.mrb[0].mxu0 %v378
  %v1283 = vpop.f32.mrb[0].mxu0
  %v1284 = vadd.f32 %v297, %v1283
  %v1285 = vpop.f32.mrb[0].mxu0
  %v1286 = vadd.f32 %v301, %v1285
  %1287 = vmatprep.mubr.f32.mxu0 0.0
  %1288 = vmatmul.mubr.f32.gmra.mrb[0].mxu0 %v381
  %v1289 = vpop.f32.mrb[0].mxu0
  %v1290 = vadd.f32 %v297, %v1289
  %v1291 = vpop.f32.mrb[0].mxu0
  %v1292 = vadd.f32 %v301, %v1291
  %1293 = vmatprep.mubr.f32.mxu0 0.0
  %1294 = vmatmul.mubr.f32.gmra.mrb[0].mxu0 %v384
  %v1295 = vpop.f32.mrb[0].mxu0
  %v1296 = vadd.f32 %v297, %v1295
  %v1297 = vpop.f32.mrb[0].mxu0
  %v1298 = vadd.f32 %v301, %v1297
  %1299 = vmatprep.mubr.f32.mxu0 0.0
  %1300 = vmatmul.mubr.f32.gmra.mrb[0].mxu0 %v387
  %v1301 = vpop.f32.mrb[0].mxu0
  %v1302 = vadd.f32 %v297, %v1301
  %v1303 = vpop.f32.mrb[0].mxu0
  %v1304 = vadd.f32 %v301, %v1303
  %1305 = vmatprep.mubr.f32.mxu0 0.0
  %1306 = vmatmul.mubr.f32.gmra.mrb[0].mxu0 %v390
  %v1307 = vpop.f32.mrb[0].mxu0
  %v1308 = vadd.f32 %v297, %v1307
  %v1309 = vpop.f32.mrb[0].mxu0
  %v1310 = vadd.f32 %v301, %v1309
  %1311 = vmatprep.mubr.f32.mxu0 0.0
  %1312 = vmatmul.mubr.f32.gmra.mrb[0].mxu0 %v393
  %v1313 = vpop.f32.mrb[0].mxu0
  %v1314 = vadd.f32 %v297, %v1313
  %v1315 = vpop.f32.mrb[0].mxu0
  %v1316 = vadd.f32 %v301, %v1315
  %1317 = vmatprep.mubr.f32.mxu0 0.0
  %1318 = vmatmul.mubr.f32.gmra.mrb[0].mxu0 %v396
  %v1319 = vpop.f32.mrb[0].mxu0
  %v1320 = vadd.f32 %v297, %v1319
  %v1321 = vpop.f32.mrb[0].mxu0
  %v1322 = vadd.f32 %v301, %v1321
  %1323 = vmatprep.mubr.f32.mxu0 0.0
  %1324 = vmatmul.mubr.f32.gmra.mrb[0].mxu0 %v399
  %v1325 = vpop.f32.mrb[0].mxu0
  %v1326 = vadd.f32 %v297, %v1325
  %v1327 = vpop.f32.mrb[0].mxu0
  %v1328 = vadd.f32 %v301, %v1327
  %1329 = vmatprep.mubr.f32.mxu0 0.0
  %1330 = vmatmul.mubr.f32.gmra.mrb[0].mxu0 %v402
  %v1331 = vpop.f32.mrb[0].mxu0
  %v1332 = vadd.f32 %v297, %v1331
  %v1333 = vpop.f32.mrb[0].mxu0
  %v1334 = vadd.f32 %v301, %v1333
  %1335 = vmatprep.mubr.f32.mxu0 0.0
  %1336 = vmatmul.mubr.f32.gmra.mrb[0].mxu0 %v405
  %v1337 = vpop.f32.mrb[0].mxu0
  %v1338 = vadd.f32 %v297, %v1337
  %v1339 = vpop.f32.mrb[0].mxu0
  %v1340 = vadd.f32 %v301, %v1339
  %1341 = vmatprep.mubr.f32.mxu0 0.0
  %1342 = vmatmul.mubr.f32.gmra.mrb[0].mxu0 %v408
  %v1343 = vpop.f32.mrb[0].mxu0
  %v1344 = vadd.f32 %v297, %v1343
  %v1345 = vpop.f32.mrb[0].mxu0
  %v1346 = vadd.f32 %v301, %v1345
  %1347 = vmatprep.mubr.f32.mxu0 0.0
  %1348 = vmatmul.mubr.f32.gmra.mrb[0].mxu0 %v411
  %v1349 = vpop.f32.mrb[0].mxu0
  %v1350 = vadd.f32 %v297, %v1349
  %v1351 = vpop.f32.mrb[0].mxu0
  %v1352 = vadd.f32 %v301, %v1351
  %1353 = vmatprep.mubr.f32.mxu0 0.0
  %1354 = vmatmul.mubr.f32.gmra.mrb[0].mxu0 %v414
  %v1355 = vpop.f32.mrb[0].mxu0
  %v1356 = vadd.f32 %v297, %v1355
  %v1357 = vpop.f32.mrb[0].mxu0
  %v1358 = vadd.f32 %v301, %v1357
  %1359 = vmatprep.mubr.f32.mxu0 0.0
  %1360 = vmatmul.mubr.f32.gmra.mrb[0].mxu0 %v417
  %v1361 = vpop.f32.mrb[0].mxu0
  %v1362 = vadd.f32 %v297, %v1361
  %v1363 = vpop.f32.mrb[0].mxu0
  %v1364 = vadd.f32 %v301, %v1363
  %1365 = vmatprep.mubr.f32.mxu0 0.0
  %1366 = vmatmul.mubr.f32.gmra.mrb[0].mxu0 %v420
  %v1367 = vpop.f32.mrb[0].mxu0
  %v1368 = vadd.f32 %v297, %v1367
  %v1369 = vpop.f32.mrb[0].mxu0
  %v1370 = vadd.f32 %v301, %v1369
  %1371 = vmatprep.mubr.f32.mxu0 0.0
  %1372 = vmatmul.mubr.f32.gmra.mrb[0].mxu0 %v423
  %v1373 = vpop.f32.mrb[0].mxu0
  %v1374 = vadd.f32 %v297, %v1373
  %v1375 = vpop.f32.mrb[0].mxu0
  %v1376 = vadd.f32 %v301, %v1375
  %1377 = vmatprep.mubr.f32.mxu0 0.0
  %1378 = vmatmul.mubr.f32.gmra.mrb[0].mxu0 %v426
  %v1379 = vpop.f32.mrb[0].mxu0
  %v1380 = vadd.f32 %v297, %v1379
  %v1381 = vpop.f32.mrb[0].mxu0
  %v1382 = vadd.f32 %v301, %v1381
  %1383 = vmatprep.mubr.f32.mxu0 0.0
  %1384 = vmatmul.mubr.f32.gmra.mrb[0].mxu0 %v429
  %v1385 = vpop.f32.mrb[0].mxu0
  %v1386 = vadd.f32 %v297, %v1385
  %v1387 = vpop.f32.mrb[0].mxu0
  %v1388 = vadd.f32 %v301, %v1387
  %1389 = vmatprep.mubr.f32.mxu0 0.0
  %1390 = vmatmul.mubr.f32.gmra.mrb[0].mxu0 %v432
  %v1391 = vpop.f32.mrb[0].mxu0
  %v1392 = vadd.f32 %v297, %v1391
  %v1393 = vpop.f32.mrb[0].mxu0
  %v1394 = vadd.f32 %v301, %v1393
  %1395 = vmatprep.mubr.f32.mxu0 0.0
  %1396 = vmatmul.mubr.f32.gmra.mrb[0].mxu0 %v435
  %v1397 = vpop.f32.mrb[0].mxu0
  %v1398 = vadd.f32 %v297, %v1397
  %v1399 = vpop.f32.mrb[0].mxu0
  %v1400 = vadd.f32 %v301, %v1399
  %1401 = vmatprep.mubr.f32.mxu0 0.0
  %1402 = vmatmul.mubr.f32.gmra.mrb[0].mxu0 %v438
  %v1403 = vpop.f32.mrb[0].mxu0
  %v1404 = vadd.f32 %v297, %v1403
  %v1405 = vpop.f32.mrb[0].mxu0
  %v1406 = vadd.f32 %v301, %v1405
  %1407 = vmatprep.mubr.f32.mxu0 0.0
  %1408 = vmatmul.mubr.f32.gmra.mrb[0].mxu0 %v441
  %v1409 = vpop.f32.mrb[0].mxu0
  %v1410 = vadd.f32 %v297, %v1409
  %v1411 = vpop.f32.mrb[0].mxu0
  %v1412 = vadd.f32 %v301, %v1411
  %1413 = vmatprep.mubr.f32.mxu0 0.0
  %1414 = vmatmul.mubr.f32.gmra.mrb[0].mxu0 %v444
  %v1415 = vpop.f32.mrb[0].mxu0
  %v1416 = vadd.f32 %v297, %v1415
  %v1417 = vpop.f32.mrb[0].mxu0
  %v1418 = vadd.f32 %v301, %v1417
  %1419 = vmatprep.mubr.f32.mxu0 0.0
  %1420 = vmatmul.mubr.f32.gmra.mrb[0].mxu0 %v447
  %v1421 = vpop.f32.mrb[0].mxu0
  %v1422 = vadd.f32 %v297, %v1421
  %v1423 = vpop.f32.mrb[0].mxu0
  %v1424 = vadd.f32 %v301, %v1423
  %1425 = vmatprep.mubr.f32.mxu0 0.0
  %1426 = vmatmul.mubr.f32.gmra.mrb[0].mxu0 %v450
  %v1427 = vpop.f32.mrb[0].mxu0
  %v1428 = vadd.f32 %v297, %v1427
  %v1429 = vpop.f32.mrb[0].mxu0
  %v1430 = vadd.f32 %v301, %v1429
  %1431 = vmatprep.mubr.f32.mxu0 0.0
  %1432 = vmatmul.mubr.f32.gmra.mrb[0].mxu0 %v453
  %v1433 = vpop.f32.mrb[0].mxu0
  %v1434 = vadd.f32 %v297, %v1433
  %v1435 = vpop.f32.mrb[0].mxu0
  %v1436 = vadd.f32 %v301, %v1435
  %1437 = vmatprep.mubr.f32.mxu0 0.0
  %1438 = vmatmul.mubr.f32.gmra.mrb[0].mxu0 %v456
  %v1439 = vpop.f32.mrb[0].mxu0
  %v1440 = vadd.f32 %v297, %v1439
  %v1441 = vpop.f32.mrb[0].mxu0
  %v1442 = vadd.f32 %v301, %v1441
  %1443 = vmatprep.mubr.f32.mxu0 0.0
  %1444 = vmatmul.mubr.f32.gmra.mrb[0].mxu0 %v459
  %v1445 = vpop.f32.mrb[0].mxu0
  %v1446 = vadd.f32 %v297, %v1445
  %v1447 = vpop.f32.mrb[0].mxu0
  %v1448 = vadd.f32 %v301, %v1447
  %1449 = vmatprep.mubr.f32.mxu0 0.0
  %1450 = vmatmul.mubr.f32.gmra.mrb[0].mxu0 %v462
  %v1451 = vpop.f32.mrb[0].mxu0
  %v1452 = vadd.f32 %v297, %v1451
  %v1453 = vpop.f32.mrb[0].mxu0
  %v1454 = vadd.f32 %v301, %v1453
  %1455 = vmatprep.mubr.f32.mxu0 0.0
  %1456 = vmatmul.mubr.f32.gmra.mrb[0].mxu0 %v465
  %v1457 = vpop.f32.mrb[0].mxu0
  %v1458 = vadd.f32 %v297, %v1457
  %v1459 = vpop.f32.mrb[0].mxu0
  %v1460 = vadd.f32 %v301, %v1459
  %1461 = vmatprep.mubr.f32.mxu0 0.0
  %1462 = vmatmul.mubr.f32.gmra.mrb[0].mxu0 %v468
  %v1463 = vpop.f32.mrb[0].mxu0
  %v1464 = vadd.f32 %v297, %v1463
  %v1465 = vpop.f32.mrb[0].mxu0
  %v1466 = vadd.f32 %v301, %v1465
  %1467 = vmatprep.mubr.f32.mxu0 0.0
  %1468 = vmatmul.mubr.f32.gmra.mrb[0].mxu0 %v471
  %v1469 = vpop.f32.mrb[0].mxu0
  %v1470 = vadd.f32 %v297, %v1469
  %v1471 = vpop.f32.mrb[0].mxu0
  %v1472 = vadd.f32 %v301, %v1471
  %1473 = vmatprep.mubr.f32.mxu0 0.0
  %1474 = vmatmul.mubr.f32.gmra.mrb[0].mxu0 %v474
  %v1475 = vpop.f32.mrb[0].mxu0
  %v1476 = vadd.f32 %v297, %v1475
  %v1477 = vpop.f32.mrb[0].mxu0
  %v1478 = vadd.f32 %v301, %v1477
  %1479 = vmatprep.mubr.f32.mxu0 0.0
  %1480 = vmatmul.mubr.f32.gmra.mrb[0].mxu0 %v477
  %v1481 = vpop.f32.mrb[0].mxu0
  %v1482 = vadd.f32 %v297, %v1481
  %v1483 = vpop.f32.mrb[0].mxu0
  %v1484 = vadd.f32 %v301, %v1483
  %1485 = vmatprep.mubr.f32.mxu0 0.0
  %1486 = vmatmul.mubr.f32.gmra.mrb[0].mxu0 %v480
  %v1487 = vpop.f32.mrb[0].mxu0
  %v1488 = vadd.f32 %v297, %v1487
  %v1489 = vpop.f32.mrb[0].mxu0
  %v1490 = vadd.f32 %v301, %v1489
  %1491 = vmatprep.mubr.f32.mxu0 0.0
  %1492 = vmatmul.mubr.f32.gmra.mrb[0].mxu0 %v483
  %v1493 = vpop.f32.mrb[0].mxu0
  %v1494 = vadd.f32 %v297, %v1493
  %v1495 = vpop.f32.mrb[0].mxu0
  %v1496 = vadd.f32 %v301, %v1495
  %1497 = vmatprep.mubr.f32.mxu0 0.0
  %1498 = vmatmul.mubr.f32.gmra.mrb[0].mxu0 %v486
  %v1499 = vpop.f32.mrb[0].mxu0
  %v1500 = vadd.f32 %v297, %v1499
  %v1501 = vpop.f32.mrb[0].mxu0
  %v1502 = vadd.f32 %v301, %v1501
  %1503 = vmatprep.mubr.f32.mxu0 0.0
  %1504 = vmatmul.mubr.f32.gmra.mrb[0].mxu0 %v489
  %v1505 = vpop.f32.mrb[0].mxu0
  %v1506 = vadd.f32 %v297, %v1505
  %v1507 = vpop.f32.mrb[0].mxu0
  %v1508 = vadd.f32 %v301, %v1507
  %1509 = vmatprep.mubr.f32.mxu0 0.0
  %1510 = vmatmul.mubr.f32.gmra.mrb[0].mxu0 %v492
  %v1511 = vpop.f32.mrb[0].mxu0
  %v1512 = vadd.f32 %v297, %v1511
  %v1513 = vpop.f32.mrb[0].mxu0
  %v1514 = vadd.f32 %v301, %v1513
  %1515 = vmatprep.mubr.f32.mxu0 0.0
  %1516 = vmatmul.mubr.f32.gmra.mrb[0].mxu0 %v495
  %v1517 = vpop.f32.mrb[0].mxu0
  %v1518 = vadd.f32 %v297, %v1517
  %v1519 = vpop.f32.mrb[0].mxu0
  %v1520 = vadd.f32 %v301, %v1519
  %1521 = vmatprep.mubr.f32.mxu0 0.0
  %1522 = vmatmul.mubr.f32.gmra.mrb[0].mxu0 %v498
  %v1523 = vpop.f32.mrb[0].mxu0
  %v1524 = vadd.f32 %v297, %v1523
  %v1525 = vpop.f32.mrb[0].mxu0
  %v1526 = vadd.f32 %v301, %v1525
  %1527 = vmatprep.mubr.f32.mxu0 0.0
  %1528 = vmatmul.mubr.f32.gmra.mrb[0].mxu0 %v501
  %v1529 = vpop.f32.mrb[0].mxu0
  %v1530 = vadd.f32 %v297, %v1529
  %v1531 = vpop.f32.mrb[0].mxu0
  %v1532 = vadd.f32 %v301, %v1531
  %1533 = vmatprep.mubr.f32.mxu0 0.0
  %1534 = vmatmul.mubr.f32.gmra.mrb[0].mxu0 %v504
  %v1535 = vpop.f32.mrb[0].mxu0
  %v1536 = vadd.f32 %v297, %v1535
  %v1537 = vpop.f32.mrb[0].mxu0
  %v1538 = vadd.f32 %v301, %v1537
  %1539 = vmatprep.mubr.f32.mxu0 0.0
  %1540 = vmatmul.mubr.f32.gmra.mrb[0].mxu0 %v507
  %v1541 = vpop.f32.mrb[0].mxu0
  %v1542 = vadd.f32 %v297, %v1541
  %v1543 = vpop.f32.mrb[0].mxu0
  %v1544 = vadd.f32 %v301, %v1543
  %1545 = vmatprep.mubr.f32.mxu0 0.0
  %1546 = vmatmul.mubr.f32.gmra.mrb[0].mxu0 %v510
  %v1547 = vpop.f32.mrb[0].mxu0
  %v1548 = vadd.f32 %v297, %v1547
  %v1549 = vpop.f32.mrb[0].mxu0
  %v1550 = vadd.f32 %v301, %v1549
  %1551 = vmatprep.mubr.f32.mxu0 0.0
  %1552 = vmatmul.mubr.f32.gmra.mrb[0].mxu0 %v513
  %v1553 = vpop.f32.mrb[0].mxu0
  %v1554 = vadd.f32 %v297, %v1553
  %v1555 = vpop.f32.mrb[0].mxu0
  %v1556 = vadd.f32 %v301, %v1555
  %1557 = vmatprep.mubr.f32.mxu0 0.0
  %1558 = vmatmul.mubr.f32.gmra.mrb[0].mxu0 %v516
  %v1559 = vpop.f32.mrb[0].mxu0
  %v1560 = vadd.f32 %v297, %v1559
  %v1561 = vpop.f32.mrb[0].mxu0
  %v1562 = vadd.f32 %v301, %v1561
  %1563 = vmatprep.mubr.f32.mxu0 0.0
  %1564 = vmatmul.mubr.f32.gmra.mrb[0].mxu0 %v519
  %v1565 = vpop.f32.mrb[0].mxu0
  %v1566 = vadd.f32 %v297, %v1565
  %v1567 = vpop.f32.mrb[0].mxu0
  %v1568 = vadd.f32 %v301, %v1567
  %1569 = vmatprep.mubr.f32.mxu0 0.0
  %1570 = vmatmul.mubr.f32.gmra.mrb[0].mxu0 %v522
  %v1571 = vpop.f32.mrb[0].mxu0
  %v1572 = vadd.f32 %v297, %v1571
  %v1573 = vpop.f32.mrb[0].mxu0
  %v1574 = vadd.f32 %v301, %v1573
  %1575 = vmatprep.mubr.f32.mxu0 0.0
  %1576 = vmatmul.mubr.f32.gmra.mrb[0].mxu0 %v525
  %v1577 = vpop.f32.mrb[0].mxu0
  %v1578 = vadd.f32 %v297, %v1577
  %v1579 = vpop.f32.mrb[0].mxu0
  %v1580 = vadd.f32 %v301, %v1579
  %1581 = vmatprep.mubr.f32.mxu0 0.0
  %1582 = vmatmul.mubr.f32.gmra.mrb[0].mxu0 %v528
  %v1583 = vpop.f32.mrb[0].mxu0
  %v1584 = vadd.f32 %v297, %v1583
  %v1585 = vpop.f32.mrb[0].mxu0
  %v1586 = vadd.f32 %v301, %v1585
  %1587 = vmatprep.mubr.f32.mxu0 0.0
  %1588 = vmatmul.mubr.f32.gmra.mrb[0].mxu0 %v531
  %v1589 = vpop.f32.mrb[0].mxu0
  %v1590 = vadd.f32 %v297, %v1589
  %v1591 = vpop.f32.mrb[0].mxu0
  %v1592 = vadd.f32 %v301, %v1591
  %1593 = vmatprep.mubr.f32.mxu0 0.0
  %1594 = vmatmul.mubr.f32.gmra.mrb[0].mxu0 %v534
  %v1595 = vpop.f32.mrb[0].mxu0
  %v1596 = vadd.f32 %v297, %v1595
  %v1597 = vpop.f32.mrb[0].mxu0
  %v1598 = vadd.f32 %v301, %v1597
  %1599 = vmatprep.mubr.f32.mxu0 0.0
  %1600 = vmatmul.mubr.f32.gmra.mrb[0].mxu0 %v537
  %v1601 = vpop.f32.mrb[0].mxu0
  %v1602 = vadd.f32 %v297, %v1601
  %v1603 = vpop.f32.mrb[0].mxu0
  %v1604 = vadd.f32 %v301, %v1603
  %1605 = vmatprep.mubr.f32.mxu0 0.0
  %1606 = vmatmul.mubr.f32.gmra.mrb[0].mxu0 %v540
  %v1607 = vpop.f32.mrb[0].mxu0
  %v1608 = vadd.f32 %v297, %v1607
  %v1609 = vpop.f32.mrb[0].mxu0
  %v1610 = vadd.f32 %v301, %v1609
  %1611 = vmatprep.mubr.f32.mxu0 0.0
  %1612 = vmatmul.mubr.f32.gmra.mrb[0].mxu0 %v543
  %v1613 = vpop.f32.mrb[0].mxu0
  %v1614 = vadd.f32 %v297, %v1613
  %v1615 = vpop.f32.mrb[0].mxu0
  %v1616 = vadd.f32 %v301, %v1615
  %1617 = vmatprep.mubr.f32.mxu0 0.0
  %1618 = vmatmul.mubr.f32.gmra.mrb[0].mxu0 %v546
  %v1619 = vpop.f32.mrb[0].mxu0
  %v1620 = vadd.f32 %v297, %v1619
  %v1621 = vpop.f32.mrb[0].mxu0
  %v1622 = vadd.f32 %v301, %v1621
  %1623 = vmatprep.mubr.f32.mxu0 0.0
  %1624 = vmatmul.mubr.f32.gmra.mrb[0].mxu0 %v549
  %v1625 = vpop.f32.mrb[0].mxu0
  %v1626 = vadd.f32 %v297, %v1625
  %v1627 = vpop.f32.mrb[0].mxu0
  %v1628 = vadd.f32 %v301, %v1627
  %1629 = vmatprep.mubr.f32.mxu0 0.0
  %1630 = vmatmul.mubr.f32.gmra.mrb[0].mxu0 %v552
  %v1631 = vpop.f32.mrb[0].mxu0
  %v1632 = vadd.f32 %v297, %v1631
  %v1633 = vpop.f32.mrb[0].mxu0
  %v1634 = vadd.f32 %v301, %v1633
  %1635 = vmatprep.mubr.f32.mxu0 0.0
  %1636 = vmatmul.mubr.f32.gmra.mrb[0].mxu0 %v555
  %v1637 = vpop.f32.mrb[0].mxu0
  %v1638 = vadd.f32 %v297, %v1637
  %v1639 = vpop.f32.mrb[0].mxu0
  %v1640 = vadd.f32 %v301, %v1639
  %1641 = vmatprep.mubr.f32.mxu0 0.0
  %1642 = vmatmul.mubr.f32.gmra.mrb[0].mxu0 %v558
  %v1643 = vpop.f32.mrb[0].mxu0
  %v1644 = vadd.f32 %v297, %v1643
  %v1645 = vpop.f32.mrb[0].mxu0
  %v1646 = vadd.f32 %v301, %v1645
  %1647 = vmatprep.mubr.f32.mxu0 0.0
  %1648 = vmatmul.mubr.f32.gmra.mrb[0].mxu0 %v561
  %v1649 = vpop.f32.mrb[0].mxu0
  %v1650 = vadd.f32 %v297, %v1649
  %v1651 = vpop.f32.mrb[0].mxu0
  %v1652 = vadd.f32 %v301, %v1651
  %1653 = vmatprep.mubr.f32.mxu0 0.0
  %1654 = vmatmul.mubr.f32.gmra.mrb[0].mxu0 %v564
  %v1655 = vpop.f32.mrb[0].mxu0
  %v1656 = vadd.f32 %v297, %v1655
  %v1657 = vpop.f32.mrb[0].mxu0
  %v1658 = vadd.f32 %v301, %v1657
  %1659 = vmatprep.mubr.f32.mxu0 0.0
  %1660 = vmatmul.mubr.f32.gmra.mrb[0].mxu0 %v567
  %v1661 = vpop.f32.mrb[0].mxu0
  %v1662 = vadd.f32 %v297, %v1661
  %v1663 = vpop.f32.mrb[0].mxu0
  %v1664 = vadd.f32 %v301, %v1663
  %1665 = vmatprep.mubr.f32.mxu0 0.0
  %1666 = vmatmul.mubr.f32.gmra.mrb[0].mxu0 %v570
  %v1667 = vpop.f32.mrb[0].mxu0
  %v1668 = vadd.f32 %v297, %v1667
  %v1669 = vpop.f32.mrb[0].mxu0
  %v1670 = vadd.f32 %v301, %v1669
  %1671 = vmatprep.mubr.f32.mxu0 0.0
  %1672 = vmatmul.mubr.f32.gmra.mrb[0].mxu0 %v573
  %v1673 = vpop.f32.mrb[0].mxu0
  %v1674 = vadd.f32 %v297, %v1673
  %v1675 = vpop.f32.mrb[0].mxu0
  %v1676 = vadd.f32 %v301, %v1675
  %1677 = vmatprep.mubr.f32.mxu0 0.0
  %1678 = vmatmul.mubr.f32.gmra.mrb[0].mxu0 %v576
  %v1679 = vpop.f32.mrb[0].mxu0
  %v1680 = vadd.f32 %v297, %v1679
  %v1681 = vpop.f32.mrb[0].mxu0
  %v1682 = vadd.f32 %v301, %v1681
  %1683 = vmatprep.mubr.f32.mxu0 0.0
  %1684 = vmatmul.mubr.f32.gmra.mrb[0].mxu0 %v579
  %v1685 = vpop.f32.mrb[0].mxu0
  %v1686 = vadd.f32 %v297, %v1685
  %v1687 = vpop.f32.mrb[0].mxu0
  %v1688 = vadd.f32 %v301, %v1687
  %1689 = vmatprep.mubr.f32.mxu0 0.0
  %1690 = vmatmul.mubr.f32.gmra.mrb[0].mxu0 %v582
  %v1691 = vpop.f32.mrb[0].mxu0
  %v1692 = vadd.f32 %v297, %v1691
  %v1693 = vpop.f32.mrb[0].mxu0
  %v1694 = vadd.f32 %v301, %v1693
  %1695 = vmatprep.mubr.f32.mxu0 0.0
  %1696 = vmatmul.mubr.f32.gmra.mrb[0].mxu0 %v585
  %v1697 = vpop.f32.mrb[0].mxu0
  %v1698 = vadd.f32 %v297, %v1697
  %v1699 = vpop.f32.mrb[0].mxu0
  %v1700 = vadd.f32 %v301, %v1699
  %1701 = vmatprep.mubr.f32.mxu0 0.0
  %1702 = vmatmul.mubr.f32.gmra.mrb[0].mxu0 %v588
  %v1703 = vpop.f32.mrb[0].mxu0
  %v1704 = vadd.f32 %v297, %v1703
  %v1705 = vpop.f32.mrb[0].mxu0
  %v1706 = vadd.f32 %v301, %v1705
  %1707 = vmatprep.mubr.f32.mxu0 0.0
  %1708 = vmatmul.mubr.f32.gmra.mrb[0].mxu0 %v591
  %v1709 = vpop.f32.mrb[0].mxu0
  %v1710 = vadd.f32 %v297, %v1709
  %v1711 = vpop.f32.mrb[0].mxu0
  %v1712 = vadd.f32 %v301, %v1711
  %1713 = vmatprep.mubr.f32.mxu0 0.0
  %1714 = vmatmul.mubr.f32.gmra.mrb[0].mxu0 %v594
  %v1715 = vpop.f32.mrb[0].mxu0
  %v1716 = vadd.f32 %v297, %v1715
  %v1717 = vpop.f32.mrb[0].mxu0
  %v1718 = vadd.f32 %v301, %v1717
  %1719 = vmatprep.mubr.f32.mxu0 0.0
  %1720 = vmatmul.mubr.f32.gmra.mrb[0].mxu0 %v597
  %v1721 = vpop.f32.mrb[0].mxu0
  %v1722 = vadd.f32 %v297, %v1721
  %v1723 = vpop.f32.mrb[0].mxu0
  %v1724 = vadd.f32 %v301, %v1723
  %1725 = vmatprep.mubr.f32.mxu0 0.0
  %1726 = vmatmul.mubr.f32.gmra.mrb[0].mxu0 %v600
  %v1727 = vpop.f32.mrb[0].mxu0
  %v1728 = vadd.f32 %v297, %v1727
  %v1729 = vpop.f32.mrb[0].mxu0
  %v1730 = vadd.f32 %v301, %v1729
  %1731 = vmatprep.mubr.f32.mxu0 0.0
  %1732 = vmatmul.mubr.f32.gmra.mrb[0].mxu0 %v603
  %v1733 = vpop.f32.mrb[0].mxu0
  %v1734 = vadd.f32 %v297, %v1733
  %v1735 = vpop.f32.mrb[0].mxu0
  %v1736 = vadd.f32 %v301, %v1735
  %1737 = vmatprep.mubr.f32.mxu0 0.0
  %1738 = vmatmul.mubr.f32.gmra.mrb[0].mxu0 %v606
  %v1739 = vpop.f32.mrb[0].mxu0
  %v1740 = vadd.f32 %v297, %v1739
  %v1741 = vpop.f32.mrb[0].mxu0
  %v1742 = vadd.f32 %v301, %v1741
  %1743 = vmatprep.mubr.f32.mxu0 0.0
  %1744 = vmatmul.mubr.f32.gmra.mrb[0].mxu0 %v609
  %v1745 = vpop.f32.mrb[0].mxu0
  %v1746 = vadd.f32 %v297, %v1745
  %v1747 = vpop.f32.mrb[0].mxu0
  %v1748 = vadd.f32 %v301, %v1747
  %1749 = vmatprep.mubr.f32.mxu0 0.0
  %1750 = vmatmul.mubr.f32.gmra.mrb[0].mxu0 %v612
  %v1751 = vpop.f32.mrb[0].mxu0
  %v1752 = vadd.f32 %v297, %v1751
  %v1753 = vpop.f32.mrb[0].mxu0
  %v1754 = vadd.f32 %v301, %v1753
  %1755 = vmatprep.mubr.f32.mxu0 0.0
  %1756 = vmatmul.mubr.f32.gmra.mrb[0].mxu0 %v615
  %v1757 = vpop.f32.mrb[0].mxu0
  %v1758 = vadd.f32 %v297, %v1757
  %v1759 = vpop.f32.mrb[0].mxu0
  %v1760 = vadd.f32 %v301, %v1759
  %1761 = vmatprep.mubr.f32.mxu0 0.0
  %1762 = vmatmul.mubr.f32.gmra.mrb[0].mxu0 %v618
  %v1763 = vpop.f32.mrb[0].mxu0
  %v1764 = vadd.f32 %v297, %v1763
  %v1765 = vpop.f32.mrb[0].mxu0
  %v1766 = vadd.f32 %v301, %v1765
  %1767 = vmatprep.mubr.f32.mxu0 0.0
  %1768 = vmatmul.mubr.f32.gmra.mrb[0].mxu0 %v621
  %v1769 = vpop.f32.mrb[0].mxu0
  %v1770 = vadd.f32 %v297, %v1769
  %v1771 = vpop.f32.mrb[0].mxu0
  %v1772 = vadd.f32 %v301, %v1771
  %1773 = vmatprep.mubr.f32.mxu0 0.0
  %1774 = vmatmul.mubr.f32.gmra.mrb[0].mxu0 %v624
  %v1775 = vpop.f32.mrb[0].mxu0
  %v1776 = vadd.f32 %v297, %v1775
  %v1777 = vpop.f32.mrb[0].mxu0
  %v1778 = vadd.f32 %v301, %v1777
  %1779 = vmatprep.mubr.f32.mxu0 0.0
  %1780 = vmatmul.mubr.f32.gmra.mrb[0].mxu0 %v627
  %v1781 = vpop.f32.mrb[0].mxu0
  %v1782 = vadd.f32 %v297, %v1781
  %v1783 = vpop.f32.mrb[0].mxu0
  %v1784 = vadd.f32 %v301, %v1783
  %1785 = vmatprep.mubr.f32.mxu0 0.0
  %1786 = vmatmul.mubr.f32.gmra.mrb[0].mxu0 %v630
  %v1787 = vpop.f32.mrb[0].mxu0
  %v1788 = vadd.f32 %v297, %v1787
  %v1789 = vpop.f32.mrb[0].mxu0
  %v1790 = vadd.f32 %v301, %v1789
  %1791 = vmatprep.mubr.f32.mxu0 0.0
  %1792 = vmatmul.mubr.f32.gmra.mrb[0].mxu0 %v633
  %v1793 = vpop.f32.mrb[0].mxu0
  %v1794 = vadd.f32 %v297, %v1793
  %v1795 = vpop.f32.mrb[0].mxu0
  %v1796 = vadd.f32 %v301, %v1795
  %1797 = vmatprep.mubr.f32.mxu0 0.0
  %1798 = vmatmul.mubr.f32.gmra.mrb[0].mxu0 %v636
  %v1799 = vpop.f32.mrb[0].mxu0
  %v1800 = vadd.f32 %v297, %v1799
  %v1801 = vpop.f32.mrb[0].mxu0
  %v1802 = vadd.f32 %v301, %v1801
  %1803 = vmatprep.mubr.f32.mxu0 0.0
  %1804 = vmatmul.mubr.f32.gmra.mrb[0].mxu0 %v639
  %v1805 = vpop.f32.mrb[0].mxu0
  %v1806 = vadd.f32 %v297, %v1805
  %v1807 = vpop.f32.mrb[0].mxu0
  %v1808 = vadd.f32 %v301, %v1807
  %1809 = vmatprep.mubr.f32.mxu0 0.0
  %1810 = vmatmul.mubr.f32.gmra.mrb[0].mxu0 %v642
  %v1811 = vpop.f32.mrb[0].mxu0
  %v1812 = vadd.f32 %v297, %v1811
  %v1813 = vpop.f32.mrb[0].mxu0
  %v1814 = vadd.f32 %v301, %v1813
  %1815 = vmatprep.mubr.f32.mxu0 0.0
  %1816 = vmatmul.mubr.f32.gmra.mrb[0].mxu0 %v645
  %v1817 = vpop.f32.mrb[0].mxu0
  %v1818 = vadd.f32 %v297, %v1817
  %v1819 = vpop.f32.mrb[0].mxu0
  %v1820 = vadd.f32 %v301, %v1819
  %1821 = vmatprep.mubr.f32.mxu0 0.0
  %1822 = vmatmul.mubr.f32.gmra.mrb[0].mxu0 %v648
  %v1823 = vpop.f32.mrb[0].mxu0
  %v1824 = vadd.f32 %v297, %v1823
  %v1825 = vpop.f32.mrb[0].mxu0
  %v1826 = vadd.f32 %v301, %v1825
  %1827 = vmatprep.mubr.f32.mxu0 0.0
  %1828 = vmatmul.mubr.f32.gmra.mrb[0].mxu0 %v651
  %v1829 = vpop.f32.mrb[0].mxu0
  %v1830 = vadd.f32 %v297, %v1829
  %v1831 = vpop.f32.mrb[0].mxu0
  %v1832 = vadd.f32 %v301, %v1831
  %1833 = vmatprep.mubr.f32.mxu0 0.0
  %1834 = vmatmul.mubr.f32.gmra.mrb[0].mxu0 %v654
  %v1835 = vpop.f32.mrb[0].mxu0
  %v1836 = vadd.f32 %v297, %v1835
  %v1837 = vpop.f32.mrb[0].mxu0
  %v1838 = vadd.f32 %v301, %v1837
  %1839 = vmatprep.mubr.f32.mxu0 0.0
  %1840 = vmatmul.mubr.f32.gmra.mrb[0].mxu0 %v657
  %v1841 = vpop.f32.mrb[0].mxu0
  %v1842 = vadd.f32 %v297, %v1841
  %v1843 = vpop.f32.mrb[0].mxu0
  %v1844 = vadd.f32 %v301, %v1843
  %1845 = vmatprep.mubr.f32.mxu0 0.0
  %1846 = vmatmul.mubr.f32.gmra.mrb[0].mxu0 %v660
  %v1847 = vpop.f32.mrb[0].mxu0
  %v1848 = vadd.f32 %v297, %v1847
  %v1849 = vpop.f32.mrb[0].mxu0
  %v1850 = vadd.f32 %v301, %v1849
  %1851 = vmatprep.mubr.f32.mxu0 0.0
  %1852 = vmatmul.mubr.f32.gmra.mrb[0].mxu0 %v663
  %v1853 = vpop.f32.mrb[0].mxu0
  %v1854 = vadd.f32 %v297, %v1853
  %v1855 = vpop.f32.mrb[0].mxu0
  %v1856 = vadd.f32 %v301, %v1855
  %1857 = vmatprep.mubr.f32.mxu0 0.0
  %1858 = vmatmul.mubr.f32.gmra.mrb[0].mxu0 %v666
  %v1859 = vpop.f32.mrb[0].mxu0
  %v1860 = vadd.f32 %v297, %v1859
  %v1861 = vpop.f32.mrb[0].mxu0
  %v1862 = vadd.f32 %v301, %v1861
  %1863 = vmatprep.mubr.f32.mxu0 0.0
  %1864 = vmatmul.mubr.f32.gmra.mrb[0].mxu0 %v669
  %v1865 = vpop.f32.mrb[0].mxu0
  %v1866 = vadd.f32 %v297, %v1865
  %v1867 = vpop.f32.mrb[0].mxu0
  %v1868 = vadd.f32 %v301, %v1867
  %1869 = vmatprep.mubr.f32.mxu0 0.0
  %1870 = vmatmul.mubr.f32.gmra.mrb[0].mxu0 %v672
  %v1871 = vpop.f32.mrb[0].mxu0
  %v1872 = vadd.f32 %v297, %v1871
  %v1873 = vpop.f32.mrb[0].mxu0
  %v1874 = vadd.f32 %v301, %v1873
  %1875 = vmatprep.mubr.f32.mxu0 0.0
  %1876 = vmatmul.mubr.f32.gmra.mrb[0].mxu0 %v675
  %v1877 = vpop.f32.mrb[0].mxu0
  %v1878 = vadd.f32 %v297, %v1877
  %v1879 = vpop.f32.mrb[0].mxu0
  %v1880 = vadd.f32 %v301, %v1879
  %1881 = vmatprep.mubr.f32.mxu0 0.0
  %1882 = vmatmul.mubr.f32.gmra.mrb[0].mxu0 %v678
  %v1883 = vpop.f32.mrb[0].mxu0
  %v1884 = vadd.f32 %v297, %v1883
  %v1885 = vpop.f32.mrb[0].mxu0
  %v1886 = vadd.f32 %v301, %v1885
  %1887 = vmatprep.mubr.f32.mxu0 0.0
  %1888 = vmatmul.mubr.f32.gmra.mrb[0].mxu0 %v681
  %v1889 = vpop.f32.mrb[0].mxu0
  %v1890 = vadd.f32 %v297, %v1889
  %v1891 = vpop.f32.mrb[0].mxu0
  %v1892 = vadd.f32 %v301, %v1891
  %1893 = vmatprep.mubr.f32.mxu0 0.0
  %1894 = vmatmul.mubr.f32.gmra.mrb[0].mxu0 %v684
  %v1895 = vpop.f32.mrb[0].mxu0
  %v1896 = vadd.f32 %v297, %v1895
  %v1897 = vpop.f32.mrb[0].mxu0
  %v1898 = vadd.f32 %v301, %v1897
  %1899 = vmatprep.mubr.f32.mxu0 0.0
  %1900 = vmatmul.mubr.f32.gmra.mrb[0].mxu0 %v687
  %v1901 = vpop.f32.mrb[0].mxu0
  %v1902 = vadd.f32 %v297, %v1901
  %v1903 = vpop.f32.mrb[0].mxu0
  %v1904 = vadd.f32 %v301, %v1903
  %1905 = vmatprep.mubr.f32.mxu0 0.0
  %1906 = vmatmul.mubr.f32.gmra.mrb[0].mxu0 %v690
  %v1907 = vpop.f32.mrb[0].mxu0
  %v1908 = vadd.f32 %v297, %v1907
  %v1909 = vpop.f32.mrb[0].mxu0
  %v1910 = vadd.f32 %v301, %v1909
  %1911 = vmatprep.mubr.f32.mxu0 0.0
  %1912 = vmatmul.mubr.f32.gmra.mrb[0].mxu0 %v693
  %v1913 = vpop.f32.mrb[0].mxu0
  %v1914 = vadd.f32 %v297, %v1913
  %v1915 = vpop.f32.mrb[0].mxu0
  %v1916 = vadd.f32 %v301, %v1915
  %1917 = vmatprep.mubr.f32.mxu0 0.0
  %1918 = vmatmul.mubr.f32.gmra.mrb[0].mxu0 %v696
  %v1919 = vpop.f32.mrb[0].mxu0
  %v1920 = vadd.f32 %v297, %v1919
  %v1921 = vpop.f32.mrb[0].mxu0
  %v1922 = vadd.f32 %v301, %v1921
  %1923 = vmatprep.mubr.f32.mxu0 0.0
  %1924 = vmatmul.mubr.f32.gmra.mrb[0].mxu0 %v699
  %v1925 = vpop.f32.mrb[0].mxu0
  %v1926 = vadd.f32 %v297, %v1925
  %v1927 = vpop.f32.mrb[0].mxu0
  %v1928 = vadd.f32 %v301, %v1927
  %1929 = vmatprep.mubr.f32.mxu0 0.0
  %1930 = vmatmul.mubr.f32.gmra.mrb[0].mxu0 %v702
  %v1931 = vpop.f32.mrb[0].mxu0
  %v1932 = vadd.f32 %v297, %v1931
  %v1933 = vpop.f32.mrb[0].mxu0
  %v1934 = vadd.f32 %v301, %v1933
  %1935 = vmatprep.mubr.f32.mxu0 0.0
  %1936 = vmatmul.mubr.f32.gmra.mrb[0].mxu0 %v705
  %v1937 = vpop.f32.mrb[0].mxu0
  %v1938 = vadd.f32 %v297, %v1937
  %v1939 = vpop.f32.mrb[0].mxu0
  %v1940 = vadd.f32 %v301, %v1939
  %1941 = vmatprep.mubr.f32.mxu0 0.0
  %1942 = vmatmul.mubr.f32.gmra.mrb[0].mxu0 %v708
  %v1943 = vpop.f32.mrb[0].mxu0
  %v1944 = vadd.f32 %v297, %v1943
  %v1945 = vpop.f32.mrb[0].mxu0
  %v1946 = vadd.f32 %v301, %v1945
  %1947 = vmatprep.mubr.f32.mxu0 0.0
  %1948 = vmatmul.mubr.f32.gmra.mrb[0].mxu0 %v711
  %v1949 = vpop.f32.mrb[0].mxu0
  %v1950 = vadd.f32 %v297, %v1949
  %v1951 = vpop.f32.mrb[0].mxu0
  %v1952 = vadd.f32 %v301, %v1951
  %1953 = vmatprep.mubr.f32.mxu0 0.0
  %1954 = vmatmul.mubr.f32.gmra.mrb[0].mxu0 %v714
  %v1955 = vpop.f32.mrb[0].mxu0
  %v1956 = vadd.f32 %v297, %v1955
  %v1957 = vpop.f32.mrb[0].mxu0
  %v1958 = vadd.f32 %v301, %v1957
  %1959 = vmatprep.mubr.f32.mxu0 0.0
  %1960 = vmatmul.mubr.f32.gmra.mrb[0].mxu0 %v717
  %v1961 = vpop.f32.mrb[0].mxu0
  %v1962 = vadd.f32 %v297, %v1961
  %v1963 = vpop.f32.mrb[0].mxu0
  %v1964 = vadd.f32 %v301, %v1963
  %1965 = vmatprep.mubr.f32.mxu0 0.0
  %1966 = vmatmul.mubr.f32.gmra.mrb[0].mxu0 %v720
  %v1967 = vpop.f32.mrb[0].mxu0
  %v1968 = vadd.f32 %v297, %v1967
  %v1969 = vpop.f32.mrb[0].mxu0
  %v1970 = vadd.f32 %v301, %v1969
  %1971 = vmatprep.mubr.f32.mxu0 0.0
  %1972 = vmatmul.mubr.f32.gmra.mrb[0].mxu0 %v723
  %v1973 = vpop.f32.mrb[0].mxu0
  %v1974 = vadd.f32 %v297, %v1973
  %v1975 = vpop.f32.mrb[0].mxu0
  %v1976 = vadd.f32 %v301, %v1975
  %1977 = vmatprep.mubr.f32.mxu0 0.0
  %1978 = vmatmul.mubr.f32.gmra.mrb[0].mxu0 %v726
  %v1979 = vpop.f32.mrb[0].mxu0
  %v1980 = vadd.f32 %v297, %v1979
  %v1981 = vpop.f32.mrb[0].mxu0
  %v1982 = vadd.f32 %v301, %v1981
  %1983 = vmatprep.mubr.f32.mxu0 0.0
  %1984 = vmatmul.mubr.f32.gmra.mrb[0].mxu0 %v729
  %v1985 = vpop.f32.mrb[0].mxu0
  %v1986 = vadd.f32 %v297, %v1985
  %v1987 = vpop.f32.mrb[0].mxu0
  %v1988 = vadd.f32 %v301, %v1987
  %1989 = vmatprep.mubr.f32.mxu0 0.0
  %1990 = vmatmul.mubr.f32.gmra.mrb[0].mxu0 %v732
  %v1991 = vpop.f32.mrb[0].mxu0
  %v1992 = vadd.f32 %v297, %v1991
  %v1993 = vpop.f32.mrb[0].mxu0
  %v1994 = vadd.f32 %v301, %v1993
  %1995 = vmatprep.mubr.f32.mxu0 0.0
  %1996 = vmatmul.mubr.f32.gmra.mrb[0].mxu0 %v735
  %v1997 = vpop.f32.mrb[0].mxu0
  %v1998 = vadd.f32 %v297, %v1997
  %v1999 = vpop.f32.mrb[0].mxu0
  %v2000 = vadd.f32 %v301, %v1999
  %2001 = vmatprep.mubr.f32.mxu0 0.0
  %2002 = vmatmul.mubr.f32.gmra.mrb[0].mxu0 %v738
  %v2003 = vpop.f32.mrb[0].mxu0
  %v2004 = vadd.f32 %v297, %v2003
  %v2005 = vpop.f32.mrb[0].mxu0
  %v2006 = vadd.f32 %v301, %v2005
  %2007 = vmatprep.mubr.f32.mxu0 0.0
  %2008 = vmatmul.mubr.f32.gmra.mrb[0].mxu0 %v741
  %v2009 = vpop.f32.mrb[0].mxu0
  %v2010 = vadd.f32 %v297, %v2009
  %v2011 = vpop.f32.mrb[0].mxu0
  %v2012 = vadd.f32 %v301, %v2011
  %2013 = vmatprep.mubr.f32.mxu0 0.0
  %2014 = vmatmul.mubr.f32.gmra.mrb[0].mxu0 %v744
  %v2015 = vpop.f32.mrb[0].mxu0
  %v2016 = vadd.f32 %v297, %v2015
  %v2017 = vpop.f32.mrb[0].mxu0
  %v2018 = vadd.f32 %v301, %v2017
  %2019 = vmatprep.mubr.f32.mxu0 0.0
  %2020 = vmatmul.mubr.f32.gmra.mrb[0].mxu0 %v747
  %v2021 = vpop.f32.mrb[0].mxu0
  %v2022 = vadd.f32 %v297, %v2021
  %v2023 = vpop.f32.mrb[0].mxu0
  %v2024 = vadd.f32 %v301, %v2023
  %2025 = vmatprep.mubr.f32.mxu0 0.0
  %2026 = vmatmul.mubr.f32.gmra.mrb[0].mxu0 %v750
  %v2027 = vpop.f32.mrb[0].mxu0
  %v2028 = vadd.f32 %v297, %v2027
  %v2029 = vpop.f32.mrb[0].mxu0
  %v2030 = vadd.f32 %v301, %v2029
  %2031 = vmatprep.mubr.f32.mxu0 0.0
  %2032 = vmatmul.mubr.f32.gmra.mrb[0].mxu0 %v753
  %v2033 = vpop.f32.mrb[0].mxu0
  %v2034 = vadd.f32 %v297, %v2033
  %v2035 = vpop.f32.mrb[0].mxu0
  %v2036 = vadd.f32 %v301, %v2035
  %2037 = vmatprep.mubr.f32.mxu0 0.0
  %2038 = vmatmul.mubr.f32.gmra.mrb[0].mxu0 %v756
  %v2039 = vpop.f32.mrb[0].mxu0
  %v2040 = vadd.f32 %v297, %v2039
  %v2041 = vpop.f32.mrb[0].mxu0
  %v2042 = vadd.f32 %v301, %v2041
  %2043 = vmatprep.mubr.f32.mxu0 0.0
  %2044 = vmatmul.mubr.f32.gmra.mrb[0].mxu0 %v759
  %v2045 = vpop.f32.mrb[0].mxu0
  %v2046 = vadd.f32 %v297, %v2045
  %v2047 = vpop.f32.mrb[0].mxu0
  %v2048 = vadd.f32 %v301, %v2047
  %2049 = vmatprep.mubr.f32.mxu0 0.0
  %2050 = vmatmul.mubr.f32.gmra.mrb[0].mxu0 %v762
  %v2051 = vpop.f32.mrb[0].mxu0
  %v2052 = vadd.f32 %v297, %v2051
  %v2053 = vpop.f32.mrb[0].mxu0
  %v2054 = vadd.f32 %v301, %v2053
  %2055 = vmatprep.mubr.f32.mxu0 0.0
  %2056 = vmatmul.mubr.f32.gmra.mrb[0].mxu0 %v765
  %v2057 = vpop.f32.mrb[0].mxu0
  %v2058 = vadd.f32 %v297, %v2057
  %v2059 = vpop.f32.mrb[0].mxu0
  %v2060 = vadd.f32 %v301, %v2059
  %2061 = vmatprep.mubr.f32.mxu0 0.0
  %2062 = vmatmul.mubr.f32.gmra.mrb[0].mxu0 %v768
  %v2063 = vpop.f32.mrb[0].mxu0
  %v2064 = vadd.f32 %v297, %v2063
  %v2065 = vpop.f32.mrb[0].mxu0
  %v2066 = vadd.f32 %v301, %v2065
  %2067 = vmatprep.mubr.f32.mxu0 0.0
  %2068 = vmatmul.mubr.f32.gmra.mrb[0].mxu0 %v771
  %v2069 = vpop.f32.mrb[0].mxu0
  %v2070 = vadd.f32 %v297, %v2069
  %v2071 = vpop.f32.mrb[0].mxu0
  %v2072 = vadd.f32 %v301, %v2071
  %2073 = vmatprep.mubr.f32.mxu0 0.0
  %2074 = vmatmul.mubr.f32.gmra.mrb[0].mxu0 %v774
  %v2075 = vpop.f32.mrb[0].mxu0
  %v2076 = vadd.f32 %v297, %v2075
  %v2077 = vpop.f32.mrb[0].mxu0
  %v2078 = vadd.f32 %v301, %v2077
  %2079 = vmatprep.mubr.f32.mxu0 0.0
  %2080 = vmatmul.mubr.f32.gmra.mrb[0].mxu0 %v777
  %v2081 = vpop.f32.mrb[0].mxu0
  %v2082 = vadd.f32 %v297, %v2081
  %v2083 = vpop.f32.mrb[0].mxu0
  %v2084 = vadd.f32 %v301, %v2083
  %2085 = vmatprep.mubr.f32.mxu0 0.0
  %2086 = vmatmul.mubr.f32.gmra.mrb[0].mxu0 %v780
  %v2087 = vpop.f32.mrb[0].mxu0
  %v2088 = vadd.f32 %v297, %v2087
  %v2089 = vpop.f32.mrb[0].mxu0
  %v2090 = vadd.f32 %v301, %v2089
  %2091 = vmatprep.mubr.f32.mxu0 0.0
  %2092 = vmatmul.mubr.f32.gmra.mrb[0].mxu0 %v783
  %v2093 = vpop.f32.mrb[0].mxu0
  %v2094 = vadd.f32 %v297, %v2093
  %v2095 = vpop.f32.mrb[0].mxu0
  %v2096 = vadd.f32 %v301, %v2095
  %2097 = vmatprep.mubr.f32.mxu0 0.0
  %2098 = vmatmul.mubr.f32.gmra.mrb[0].mxu0 %v786
  %v2099 = vpop.f32.mrb[0].mxu0
  %v2100 = vadd.f32 %v297, %v2099
  %v2101 = vpop.f32.mrb[0].mxu0
  %v2102 = vadd.f32 %v301, %v2101
  %2103 = vmatprep.mubr.f32.mxu0 0.0
  %2104 = vmatmul.mubr.f32.gmra.mrb[0].mxu0 %v789
  %v2105 = vpop.f32.mrb[0].mxu0
  %v2106 = vadd.f32 %v297, %v2105
  %v2107 = vpop.f32.mrb[0].mxu0
  %v2108 = vadd.f32 %v301, %v2107
  %2109 = vmatprep.mubr.f32.mxu0 0.0
  %2110 = vmatmul.mubr.f32.gmra.mrb[0].mxu0 %v792
  %v2111 = vpop.f32.mrb[0].mxu0
  %v2112 = vadd.f32 %v297, %v2111
  %v2113 = vpop.f32.mrb[0].mxu0
  %v2114 = vadd.f32 %v301, %v2113
  %2115 = vmatprep.mubr.f32.mxu0 0.0
  %2116 = vmatmul.mubr.f32.gmra.mrb[0].mxu0 %v795
  %v2117 = vpop.f32.mrb[0].mxu0
  %v2118 = vadd.f32 %v297, %v2117
  %v2119 = vpop.f32.mrb[0].mxu0
  %v2120 = vadd.f32 %v301, %v2119
  %2121 = vmatprep.mubr.f32.mxu0 0.0
  %2122 = vmatmul.mubr.f32.gmra.mrb[0].mxu0 %v798
  %v2123 = vpop.f32.mrb[0].mxu0
  %v2124 = vadd.f32 %v297, %v2123
  %v2125 = vpop.f32.mrb[0].mxu0
  %v2126 = vadd.f32 %v301, %v2125
  %2127 = vmatprep.mubr.f32.mxu0 0.0
  %2128 = vmatmul.mubr.f32.gmra.mrb[0].mxu0 %v801
  %v2129 = vpop.f32.mrb[0].mxu0
  %v2130 = vadd.f32 %v297, %v2129
  %v2131 = vpop.f32.mrb[0].mxu0
  %v2132 = vadd.f32 %v301, %v2131
  %2133 = vmatprep.mubr.f32.mxu0 0.0
  %2134 = vmatmul.mubr.f32.gmra.mrb[0].mxu0 %v804
  %v2135 = vpop.f32.mrb[0].mxu0
  %v2136 = vadd.f32 %v297, %v2135
  %v2137 = vpop.f32.mrb[0].mxu0
  %v2138 = vadd.f32 %v301, %v2137
  %2139 = vmatprep.mubr.f32.mxu0 0.0
  %2140 = vmatmul.mubr.f32.gmra.mrb[0].mxu0 %v807
  %v2141 = vpop.f32.mrb[0].mxu0
  %v2142 = vadd.f32 %v297, %v2141
  %v2143 = vpop.f32.mrb[0].mxu0
  %v2144 = vadd.f32 %v301, %v2143
  %2145 = vmatprep.mubr.f32.mxu0 0.0
  %2146 = vmatmul.mubr.f32.gmra.mrb[0].mxu0 %v810
  %v2147 = vpop.f32.mrb[0].mxu0
  %v2148 = vadd.f32 %v297, %v2147
  %v2149 = vpop.f32.mrb[0].mxu0
  %v2150 = vadd.f32 %v301, %v2149
  %2151 = vmatprep.mubr.f32.mxu0 0.0
  %2152 = vmatmul.mubr.f32.gmra.mrb[0].mxu0 %v813
  %v2153 = vpop.f32.mrb[0].mxu0
  %v2154 = vadd.f32 %v297, %v2153
  %v2155 = vpop.f32.mrb[0].mxu0
  %v2156 = vadd.f32 %v301, %v2155
  %2157 = vmatprep.mubr.f32.mxu0 0.0
  %2158 = vmatmul.mubr.f32.gmra.mrb[0].mxu0 %v816
  %v2159 = vpop.f32.mrb[0].mxu0
  %v2160 = vadd.f32 %v297, %v2159
  %v2161 = vpop.f32.mrb[0].mxu0
  %v2162 = vadd.f32 %v301, %v2161
  %2163 = vmatprep.mubr.f32.mxu0 0.0
  %2164 = vmatmul.mubr.f32.gmra.mrb[0].mxu0 %v819
  %v2165 = vpop.f32.mrb[0].mxu0
  %v2166 = vadd.f32 %v297, %v2165
  %v2167 = vpop.f32.mrb[0].mxu0
  %v2168 = vadd.f32 %v301, %v2167
  %2169 = vmatprep.mubr.f32.mxu0 0.0
  %2170 = vmatmul.mubr.f32.gmra.mrb[0].mxu0 %v822
  %v2171 = vpop.f32.mrb[0].mxu0
  %v2172 = vadd.f32 %v297, %v2171
  %v2173 = vpop.f32.mrb[0].mxu0
  %v2174 = vadd.f32 %v301, %v2173
  %2175 = vmatprep.mubr.f32.mxu0 0.0
  %2176 = vmatmul.mubr.f32.gmra.mrb[0].mxu0 %v825
  %v2177 = vpop.f32.mrb[0].mxu0
  %v2178 = vadd.f32 %v297, %v2177
  %v2179 = vpop.f32.mrb[0].mxu0
  %v2180 = vadd.f32 %v301, %v2179
  %2181 = vmatprep.mubr.f32.mxu0 0.0
  %2182 = vmatmul.mubr.f32.gmra.mrb[0].mxu0 %v828
  %v2183 = vpop.f32.mrb[0].mxu0
  %v2184 = vadd.f32 %v297, %v2183
  %v2185 = vpop.f32.mrb[0].mxu0
  %v2186 = vadd.f32 %v301, %v2185
  %2187 = vmatprep.mubr.f32.mxu0 0.0
  %2188 = vmatmul.mubr.f32.gmra.mrb[0].mxu0 %v831
  %v2189 = vpop.f32.mrb[0].mxu0
  %v2190 = vadd.f32 %v297, %v2189
  %v2191 = vpop.f32.mrb[0].mxu0
  %v2192 = vadd.f32 %v301, %v2191
  %2193 = vmatprep.mubr.f32.mxu0 0.0
  %2194 = vmatmul.mubr.f32.gmra.mrb[0].mxu0 %v834
  %v2195 = vpop.f32.mrb[0].mxu0
  %v2196 = vadd.f32 %v297, %v2195
  %v2197 = vpop.f32.mrb[0].mxu0
  %v2198 = vadd.f32 %v301, %v2197
  %2199 = vmatprep.mubr.f32.mxu0 0.0
  %2200 = vmatmul.mubr.f32.gmra.mrb[0].mxu0 %v837
  %v2201 = vpop.f32.mrb[0].mxu0
  %v2202 = vadd.f32 %v297, %v2201
  %v2203 = vpop.f32.mrb[0].mxu0
  %v2204 = vadd.f32 %v301, %v2203
  %2205 = vmatprep.mubr.f32.mxu0 0.0
  %2206 = vmatmul.mubr.f32.gmra.mrb[0].mxu0 %v840
  %v2207 = vpop.f32.mrb[0].mxu0
  %v2208 = vadd.f32 %v297, %v2207
  %v2209 = vpop.f32.mrb[0].mxu0
  %v2210 = vadd.f32 %v301, %v2209
  %2211 = vmatprep.mubr.f32.mxu0 0.0
  %2212 = vmatmul.mubr.f32.gmra.mrb[0].mxu0 %v843
  %v2213 = vpop.f32.mrb[0].mxu0
  %v2214 = vadd.f32 %v297, %v2213
  %v2215 = vpop.f32.mrb[0].mxu0
  %v2216 = vadd.f32 %v301, %v2215
  %2217 = vmatprep.mubr.f32.mxu0 0.0
  %2218 = vmatmul.mubr.f32.gmra.mrb[0].mxu0 %v846
  %v2219 = vpop.f32.mrb[0].mxu0
  %v2220 = vadd.f32 %v297, %v2219
  %v2221 = vpop.f32.mrb[0].mxu0
  %v2222 = vadd.f32 %v301, %v2221
  %2223 = vmatprep.mubr.f32.mxu0 0.0
  %2224 = vmatmul.mubr.f32.gmra.mrb[0].mxu0 %v849
  %v2225 = vpop.f32.mrb[0].mxu0
  %v2226 = vadd.f32 %v297, %v2225
  %v2227 = vpop.f32.mrb[0].mxu0
  %v2228 = vadd.f32 %v301, %v2227
  %2229 = vmatprep.mubr.f32.mxu0 0.0
  %2230 = vmatmul.mubr.f32.gmra.mrb[0].mxu0 %v852
  %v2231 = vpop.f32.mrb[0].mxu0
  %v2232 = vadd.f32 %v297, %v2231
  %v2233 = vpop.f32.mrb[0].mxu0
  %v2234 = vadd.f32 %v301, %v2233
  %2235 = vmatprep.mubr.f32.mxu0 0.0
  %2236 = vmatmul.mubr.f32.gmra.mrb[0].mxu0 %v855
  %v2237 = vpop.f32.mrb[0].mxu0
  %v2238 = vadd.f32 %v297, %v2237
  %v2239 = vpop.f32.mrb[0].mxu0
  %v2240 = vadd.f32 %v301, %v2239
  %2241 = vmatprep.mubr.f32.mxu0 0.0
  %2242 = vmatmul.mubr.f32.gmra.mrb[0].mxu0 %v858
  %v2243 = vpop.f32.mrb[0].mxu0
  %v2244 = vadd.f32 %v297, %v2243
  %v2245 = vpop.f32.mrb[0].mxu0
  %v2246 = vadd.f32 %v301, %v2245
  %2247 = vmatprep.mubr.f32.mxu0 0.0
  %2248 = vmatmul.mubr.f32.gmra.mrb[0].mxu0 %v861
  %v2249 = vpop.f32.mrb[0].mxu0
  %v2250 = vadd.f32 %v297, %v2249
  %v2251 = vpop.f32.mrb[0].mxu0
  %v2252 = vadd.f32 %v301, %v2251
  %2253 = vmatprep.mubr.f32.mxu0 0.0
  %2254 = vmatmul.mubr.f32.gmra.mrb[0].mxu0 %v864
  %v2255 = vpop.f32.mrb[0].mxu0
  %v2256 = vadd.f32 %v297, %v2255
  %v2257 = vpop.f32.mrb[0].mxu0
  %v2258 = vadd.f32 %v301, %v2257
  %2259 = vmatprep.mubr.f32.mxu0 0.0
  %2260 = vmatmul.mubr.f32.gmra.mrb[0].mxu0 %v867
  %v2261 = vpop.f32.mrb[0].mxu0
  %v2262 = vadd.f32 %v297, %v2261
  %v2263 = vpop.f32.mrb[0].mxu0
  %v2264 = vadd.f32 %v301, %v2263
  %2265 = vmatprep.mubr.f32.mxu0 0.0
  %2266 = vmatmul.mubr.f32.gmra.mrb[0].mxu0 %v870
  %v2267 = vpop.f32.mrb[0].mxu0
  %v2268 = vadd.f32 %v297, %v2267
  %v2269 = vpop.f32.mrb[0].mxu0
  %v2270 = vadd.f32 %v301, %v2269
  %2271 = vmatprep.mubr.f32.mxu0 0.0
  %2272 = vmatmul.mubr.f32.gmra.mrb[0].mxu0 %v873
  %v2273 = vpop.f32.mrb[0].mxu0
  %v2274 = vadd.f32 %v297, %v2273
  %v2275 = vpop.f32.mrb[0].mxu0
  %v2276 = vadd.f32 %v301, %v2275
  %2277 = vmatprep.mubr.f32.mxu0 0.0
  %2278 = vmatmul.mubr.f32.gmra.mrb[0].mxu0 %v876
  %v2279 = vpop.f32.mrb[0].mxu0
  %v2280 = vadd.f32 %v297, %v2279
  %v2281 = vpop.f32.mrb[0].mxu0
  %v2282 = vadd.f32 %v301, %v2281
  %2283 = vmatprep.mubr.f32.mxu0 0.0
  %2284 = vmatmul.mubr.f32.gmra.mrb[0].mxu0 %v879
  %v2285 = vpop.f32.mrb[0].mxu0
  %v2286 = vadd.f32 %v297, %v2285
  %v2287 = vpop.f32.mrb[0].mxu0
  %v2288 = vadd.f32 %v301, %v2287
  %2289 = vmatprep.mubr.f32.mxu0 0.0
  %2290 = vmatmul.mubr.f32.gmra.mrb[0].mxu0 %v882
  %v2291 = vpop.f32.mrb[0].mxu0
  %v2292 = vadd.f32 %v297, %v2291
  %v2293 = vpop.f32.mrb[0].mxu0
  %v2294 = vadd.f32 %v301, %v2293
  %2295 = vmatprep.mubr.f32.mxu0 0.0
  %2296 = vmatmul.mubr.f32.gmra.mrb[0].mxu0 %v885
  %v2297 = vpop.f32.mrb[0].mxu0
  %v2298 = vadd.f32 %v297, %v2297
  %v2299 = vpop.f32.mrb[0].mxu0
  %v2300 = vadd.f32 %v301, %v2299
  %2301 = vmatprep.mubr.f32.mxu0 0.0
  %2302 = vmatmul.mubr.f32.gmra.mrb[0].mxu0 %v888
  %v2303 = vpop.f32.mrb[0].mxu0
  %v2304 = vadd.f32 %v297, %v2303
  %v2305 = vpop.f32.mrb[0].mxu0
  %v2306 = vadd.f32 %v301, %v2305
  %2307 = vmatprep.mubr.f32.mxu0 0.0
  %2308 = vmatmul.mubr.f32.gmra.mrb[0].mxu0 %v891
  %v2309 = vpop.f32.mrb[0].mxu0
  %v2310 = vadd.f32 %v297, %v2309
  %v2311 = vpop.f32.mrb[0].mxu0
  %v2312 = vadd.f32 %v301, %v2311
  %2313 = vmatprep.mubr.f32.mxu0 0.0
  %2314 = vmatmul.mubr.f32.gmra.mrb[0].mxu0 %v894
  %v2315 = vpop.f32.mrb[0].mxu0
  %v2316 = vadd.f32 %v297, %v2315
  %v2317 = vpop.f32.mrb[0].mxu0
  %v2318 = vadd.f32 %v301, %v2317
  %2319 = vmatprep.mubr.f32.mxu0 0.0
  %2320 = vmatmul.mubr.f32.gmra.mrb[0].mxu0 %v897
  %v2321 = vpop.f32.mrb[0].mxu0
  %v2322 = vadd.f32 %v297, %v2321
  %v2323 = vpop.f32.mrb[0].mxu0
  %v2324 = vadd.f32 %v301, %v2323
  %2325 = vmatprep.mubr.f32.mxu0 0.0
  %2326 = vmatmul.mubr.f32.gmra.mrb[0].mxu0 %v900
  %v2327 = vpop.f32.mrb[0].mxu0
  %v2328 = vadd.f32 %v297, %v2327
  %v2329 = vpop.f32.mrb[0].mxu0
  %v2330 = vadd.f32 %v301, %v2329
  %2331 = vmatprep.mubr.f32.mxu0 0.0
  %2332 = vmatmul.mubr.f32.gmra.mrb[0].mxu0 %v903
  %v2333 = vpop.f32.mrb[0].mxu0
  %v2334 = vadd.f32 %v297, %v2333
  %v2335 = vpop.f32.mrb[0].mxu0
  %v2336 = vadd.f32 %v301, %v2335
  %2337 = vmatprep.mubr.f32.mxu0 0.0
  %2338 = vmatmul.mubr.f32.gmra.mrb[0].mxu0 %v906
  %v2339 = vpop.f32.mrb[0].mxu0
  %v2340 = vadd.f32 %v297, %v2339
  %v2341 = vpop.f32.mrb[0].mxu0
  %v2342 = vadd.f32 %v301, %v2341
  %2343 = vmatprep.mubr.f32.mxu0 0.0
  %2344 = vmatmul.mubr.f32.gmra.mrb[0].mxu0 %v909
  %v2345 = vpop.f32.mrb[0].mxu0
  %v2346 = vadd.f32 %v297, %v2345
  %v2347 = vpop.f32.mrb[0].mxu0
  %v2348 = vadd.f32 %v301, %v2347
  %2349 = vmatprep.mubr.f32.mxu0 0.0
  %2350 = vmatmul.mubr.f32.gmra.mrb[0].mxu0 %v912
  %v2351 = vpop.f32.mrb[0].mxu0
  %v2352 = vadd.f32 %v297, %v2351
  %v2353 = vpop.f32.mrb[0].mxu0
  %v2354 = vadd.f32 %v301, %v2353
  %2355 = vmatprep.mubr.f32.mxu0 0.0
  %2356 = vmatmul.mubr.f32.gmra.mrb[0].mxu0 %v915
  %v2357 = vpop.f32.mrb[0].mxu0
  %v2358 = vadd.f32 %v297, %v2357
  %v2359 = vpop.f32.mrb[0].mxu0
  %v2360 = vadd.f32 %v301, %v2359
  %2361 = vmatprep.mubr.f32.mxu0 0.0
  %2362 = vmatmul.mubr.f32.gmra.mrb[0].mxu0 %v918
  %v2363 = vpop.f32.mrb[0].mxu0
  %v2364 = vadd.f32 %v297, %v2363
  %v2365 = vpop.f32.mrb[0].mxu0
  %v2366 = vadd.f32 %v301, %v2365
  %2367 = vmatprep.mubr.f32.mxu0 0.0
  %2368 = vmatmul.mubr.f32.gmra.mrb[0].mxu0 %v921
  %v2369 = vpop.f32.mrb[0].mxu0
  %v2370 = vadd.f32 %v297, %v2369
  %v2371 = vpop.f32.mrb[0].mxu0
  %v2372 = vadd.f32 %v301, %v2371
  %2373 = vmatprep.mubr.f32.mxu0 0.0
  %2374 = vmatmul.mubr.f32.gmra.mrb[0].mxu0 %v924
  %v2375 = vpop.f32.mrb[0].mxu0
  %v2376 = vadd.f32 %v297, %v2375
  %v2377 = vpop.f32.mrb[0].mxu0
  %v2378 = vadd.f32 %v301, %v2377
  %2379 = vmatprep.mubr.f32.mxu0 0.0
  %2380 = vmatmul.mubr.f32.gmra.mrb[0].mxu0 %v927
  %v2381 = vpop.f32.mrb[0].mxu0
  %v2382 = vadd.f32 %v297, %v2381
  %v2383 = vpop.f32.mrb[0].mxu0
  %v2384 = vadd.f32 %v301, %v2383
  %2385 = vmatprep.mubr.f32.mxu0 0.0
  %2386 = vmatmul.mubr.f32.gmra.mrb[0].mxu0 %v930
  %v2387 = vpop.f32.mrb[0].mxu0
  %v2388 = vadd.f32 %v297, %v2387
  %v2389 = vpop.f32.mrb[0].mxu0
  %v2390 = vadd.f32 %v301, %v2389
  %2391 = vmatprep.mubr.f32.mxu0 0.0
  %2392 = vmatmul.mubr.f32.gmra.mrb[0].mxu0 %v933
  %v2393 = vpop.f32.mrb[0].mxu0
  %v2394 = vadd.f32 %v297, %v2393
  %v2395 = vpop.f32.mrb[0].mxu0
  %v2396 = vadd.f32 %v301, %v2395
  %2397 = vmatprep.mubr.f32.mxu0 0.0
  %2398 = vmatmul.mubr.f32.gmra.mrb[0].mxu0 %v936
  %v2399 = vpop.f32.mrb[0].mxu0
  %v2400 = vadd.f32 %v297, %v2399
  %v2401 = vpop.f32.mrb[0].mxu0
  %v2402 = vadd.f32 %v301, %v2401
  %2403 = vmatprep.mubr.f32.mxu0 0.0
  %2404 = vmatmul.mubr.f32.gmra.mrb[0].mxu0 %v939
  %v2405 = vpop.f32.mrb[0].mxu0
  %v2406 = vadd.f32 %v297, %v2405
  %v2407 = vpop.f32.mrb[0].mxu0
  %v2408 = vadd.f32 %v301, %v2407
  %2409 = vmatprep.mubr.f32.mxu0 0.0
  %2410 = vmatmul.mubr.f32.gmra.mrb[0].mxu0 %v942
  %v2411 = vpop.f32.mrb[0].mxu0
  %v2412 = vadd.f32 %v297, %v2411
  %v2413 = vpop.f32.mrb[0].mxu0
  %v2414 = vadd.f32 %v301, %v2413
  %2415 = vmatprep.mubr.f32.mxu0 0.0
  %2416 = vmatmul.mubr.f32.gmra.mrb[0].mxu0 %v945
  %v2417 = vpop.f32.mrb[0].mxu0
  %v2418 = vadd.f32 %v297, %v2417
  %v2419 = vpop.f32.mrb[0].mxu0
  %v2420 = vadd.f32 %v301, %v2419
  %2421 = vmatprep.mubr.f32.mxu0 0.0
  %2422 = vmatmul.mubr.f32.gmra.mrb[0].mxu0 %v948
  %v2423 = vpop.f32.mrb[0].mxu0
  %v2424 = vadd.f32 %v297, %v2423
  %v2425 = vpop.f32.mrb[0].mxu0
  %v2426 = vadd.f32 %v301, %v2425
  %2427 = vmatprep.mubr.f32.mxu0 0.0
  %2428 = vmatmul.mubr.f32.gmra.mrb[0].mxu0 %v951
  %v2429 = vpop.f32.mrb[0].mxu0
  %v2430 = vadd.f32 %v297, %v2429
  %v2431 = vpop.f32.mrb[0].mxu0
  %v2432 = vadd.f32 %v301, %v2431
  %2433 = vmatprep.mubr.f32.mxu0 0.0
  %2434 = vmatmul.mubr.f32.gmra.mrb[0].mxu0 %v954
  %v2435 = vpop.f32.mrb[0].mxu0
  %v2436 = vadd.f32 %v297, %v2435
  %v2437 = vpop.f32.mrb[0].mxu0
  %v2438 = vadd.f32 %v301, %v2437
  %2439 = vmatprep.mubr.f32.mxu0 0.0
  %2440 = vmatmul.mubr.f32.gmra.mrb[0].mxu0 %v957
  %v2441 = vpop.f32.mrb[0].mxu0
  %v2442 = vadd.f32 %v297, %v2441
  %v2443 = vpop.f32.mrb[0].mxu0
  %v2444 = vadd.f32 %v301, %v2443
  %2445 = vmatprep.mubr.f32.mxu0 0.0
  %2446 = vmatmul.mubr.f32.gmra.mrb[0].mxu0 %v960
  %v2447 = vpop.f32.mrb[0].mxu0
  %v2448 = vadd.f32 %v297, %v2447
  %v2449 = vpop.f32.mrb[0].mxu0
  %v2450 = vadd.f32 %v301, %v2449
  %2451 = vmatprep.mubr.f32.mxu0 0.0
  %2452 = vmatmul.mubr.f32.gmra.mrb[0].mxu0 %v963
  %v2453 = vpop.f32.mrb[0].mxu0
  %v2454 = vadd.f32 %v297, %v2453
  %v2455 = vpop.f32.mrb[0].mxu0
  %v2456 = vadd.f32 %v301, %v2455
  %2457 = vmatprep.mubr.f32.mxu0 0.0
  %2458 = vmatmul.mubr.f32.gmra.mrb[0].mxu0 %v966
  %v2459 = vpop.f32.mrb[0].mxu0
  %v2460 = vadd.f32 %v297, %v2459
  %v2461 = vpop.f32.mrb[0].mxu0
  %v2462 = vadd.f32 %v301, %v2461
  %2463 = vmatprep.mubr.f32.mxu0 0.0
  %2464 = vmatmul.mubr.f32.gmra.mrb[0].mxu0 %v969
  %v2465 = vpop.f32.mrb[0].mxu0
  %v2466 = vadd.f32 %v297, %v2465
  %v2467 = vpop.f32.mrb[0].mxu0
  %v2468 = vadd.f32 %v301, %v2467
  %2469 = vmatprep.mubr.f32.mxu0 0.0
  %2470 = vmatmul.mubr.f32.gmra.mrb[0].mxu0 %v972
  %v2471 = vpop.f32.mrb[0].mxu0
  %v2472 = vadd.f32 %v297, %v2471
  %v2473 = vpop.f32.mrb[0].mxu0
  %v2474 = vadd.f32 %v301, %v2473
  %2475 = vmatprep.mubr.f32.mxu0 0.0
  %2476 = vmatmul.mubr.f32.gmra.mrb[0].mxu0 %v975
  %v2477 = vpop.f32.mrb[0].mxu0
  %v2478 = vadd.f32 %v297, %v2477
  %v2479 = vpop.f32.mrb[0].mxu0
  %v2480 = vadd.f32 %v301, %v2479
  %2481 = vmatprep.mubr.f32.mxu0 0.0
  %2482 = vmatmul.mubr.f32.gmra.mrb[0].mxu0 %v978
  %v2483 = vpop.f32.mrb[0].mxu0
  %v2484 = vadd.f32 %v297, %v2483
  %v2485 = vpop.f32.mrb[0].mxu0
  %v2486 = vadd.f32 %v301, %v2485
  %2487 = vmatprep.mubr.f32.mxu0 0.0
  %2488 = vmatmul.mubr.f32.gmra.mrb[0].mxu0 %v981
  %v2489 = vpop.f32.mrb[0].mxu0
  %v2490 = vadd.f32 %v297, %v2489
  %v2491 = vpop.f32.mrb[0].mxu0
  %v2492 = vadd.f32 %v301, %v2491
  %2493 = vmatprep.mubr.f32.mxu0 0.0
  %2494 = vmatmul.mubr.f32.gmra.mrb[0].mxu0 %v984
  %v2495 = vpop.f32.mrb[0].mxu0
  %v2496 = vadd.f32 %v297, %v2495
  %v2497 = vpop.f32.mrb[0].mxu0
  %v2498 = vadd.f32 %v301, %v2497
  %2499 = vmatprep.mubr.f32.mxu0 0.0
  %2500 = vmatmul.mubr.f32.gmra.mrb[0].mxu0 %v987
  %v2501 = vpop.f32.mrb[0].mxu0
  %v2502 = vadd.f32 %v297, %v2501
  %v2503 = vpop.f32.mrb[0].mxu0
  %v2504 = vadd.f32 %v301, %v2503
  %2505 = vmatprep.mubr.f32.mxu0 0.0
  %2506 = vmatmul.mubr.f32.gmra.mrb[0].mxu0 %v990
  %v2507 = vpop.f32.mrb[0].mxu0
  %v2508 = vadd.f32 %v297, %v2507
  %v2509 = vpop.f32.mrb[0].mxu0
  %v2510 = vadd.f32 %v301, %v2509
  %2511 = vmatprep.mubr.f32.mxu0 0.0
  %2512 = vmatmul.mubr.f32.gmra.mrb[0].mxu0 %v993
  %v2513 = vpop.f32.mrb[0].mxu0
  %v2514 = vadd.f32 %v297, %v2513
  %v2515 = vpop.f32.mrb[0].mxu0
  %v2516 = vadd.f32 %v301, %v2515
  %2517 = vmatprep.mubr.f32.mxu0 0.0
  %2518 = vmatmul.mubr.f32.gmra.mrb[0].mxu0 %v996
  %v2519 = vpop.f32.mrb[0].mxu0
  %v2520 = vadd.f32 %v297, %v2519
  %v2521 = vpop.f32.mrb[0].mxu0
  %v2522 = vadd.f32 %v301, %v2521
  %2523 = vmatprep.mubr.f32.mxu0 0.0
  %2524 = vmatmul.mubr.f32.gmra.mrb[0].mxu0 %v999
  %v2525 = vpop.f32.mrb[0].mxu0
  %v2526 = vadd.f32 %v297, %v2525
  %v2527 = vpop.f32.mrb[0].mxu0
  %v2528 = vadd.f32 %v301, %v2527
  %2529 = vmatprep.mubr.f32.mxu0 0.0
  %2530 = vmatmul.mubr.f32.gmra.mrb[0].mxu0 %v1002
  %v2531 = vpop.f32.mrb[0].mxu0
  %v2532 = vadd.f32 %v297, %v2531
  %v2533 = vpop.f32.mrb[0].mxu0
  %v2534 = vadd.f32 %v301, %v2533
  %2535 = vmatprep.mubr.f32.mxu0 0.0
  %2536 = vmatmul.mubr.f32.gmra.mrb[0].mxu0 %v1005
  %v2537 = vpop.f32.mrb[0].mxu0
  %v2538 = vadd.f32 %v297, %v2537
  %v2539 = vpop.f32.mrb[0].mxu0
  %v2540 = vadd.f32 %v301, %v2539
  %2541 = vmatprep.mubr.f32.mxu0 0.0
  %2542 = vmatmul.mubr.f32.gmra.mrb[0].mxu0 %v1008
  %v2543 = vpop.f32.mrb[0].mxu0
  %v2544 = vadd.f32 %v297, %v2543
  %v2545 = vpop.f32.mrb[0].mxu0
  %v2546 = vadd.f32 %v301, %v2545
  %2547 = vmatprep.mubr.f32.mxu0 0.0
  %2548 = vmatmul.mubr.f32.gmra.mrb[0].mxu0 %v1011
  %v2549 = vpop.f32.mrb[0].mxu0
  %v2550 = vadd.f32 %v297, %v2549
  %v2551 = vpop.f32.mrb[0].mxu0
  %v2552 = vadd.f32 %v301, %v2551
  %2553 = vmatprep.mubr.f32.mxu0 0.0
  %2554 = vmatmul.mubr.f32.gmra.mrb[0].mxu0 %v1014
  %v2555 = vpop.f32.mrb[0].mxu0
  %v2556 = vadd.f32 %v297, %v2555
  %v2557 = vpop.f32.mrb[0].mxu0
  %v2558 = vadd.f32 %v301, %v2557
  %2559 = vmatprep.mubr.f32.mxu0 0.0
  %2560 = vmatmul.mubr.f32.gmra.mrb[0].mxu0 %v1017
  %v2561 = vpop.f32.mrb[0].mxu0
  %v2562 = vadd.f32 %v297, %v2561
  %v2563 = vpop.f32.mrb[0].mxu0
  %v2564 = vadd.f32 %v301, %v2563
  %2565 = vmatprep.mubr.f32.mxu0 0.0
  %2566 = vmatmul.mubr.f32.gmra.mrb[0].mxu0 %v1020
  %v2567 = vpop.f32.mrb[0].mxu0
  %v2568 = vadd.f32 %v297, %v2567
  %v2569 = vpop.f32.mrb[0].mxu0
  %v2570 = vadd.f32 %v301, %v2569
  %2571 = vmatprep.mubr.f32.mxu0 0.0
  %2572 = vmatmul.mubr.f32.gmra.mrb[0].mxu0 %v1023
  %v2573 = vpop.f32.mrb[0].mxu0
  %v2574 = vadd.f32 %v297, %v2573
  %v2575 = vpop.f32.mrb[0].mxu0
  %v2576 = vadd.f32 %v301, %v2575
  %2577 = vmatprep.mubr.f32.mxu0 0.0
  %2578 = vmatmul.mubr.f32.gmra.mrb[0].mxu0 %v1026
  %v2579 = vpop.f32.mrb[0].mxu0
  %v2580 = vadd.f32 %v297, %v2579
  %v2581 = vpop.f32.mrb[0].mxu0
  %v2582 = vadd.f32 %v301, %v2581
  %2583 = vmatprep.mubr.f32.mxu0 0.0
  %2584 = vmatmul.mubr.f32.gmra.mrb[0].mxu0 %v1029
  %v2585 = vpop.f32.mrb[0].mxu0
  %v2586 = vadd.f32 %v297, %v2585
  %v2587 = vpop.f32.mrb[0].mxu0
  %v2588 = vadd.f32 %v301, %v2587
  %2589 = vmatprep.mubr.f32.mxu0 0.0
  %2590 = vmatmul.mubr.f32.gmra.mrb[0].mxu0 %v1032
  %v2591 = vpop.f32.mrb[0].mxu0
  %v2592 = vadd.f32 %v297, %v2591
  %v2593 = vpop.f32.mrb[0].mxu0
  %v2594 = vadd.f32 %v301, %v2593
  %2595 = vmatprep.mubr.f32.mxu0 0.0
  %2596 = vmatmul.mubr.f32.gmra.mrb[0].mxu0 %v1035
  %v2597 = vpop.f32.mrb[0].mxu0
  %v2598 = vadd.f32 %v297, %v2597
  %v2599 = vpop.f32.mrb[0].mxu0
  %v2600 = vadd.f32 %v301, %v2599
  %2601 = vmatprep.mubr.f32.mxu0 0.0
  %2602 = vmatmul.mubr.f32.gmra.mrb[0].mxu0 %v1038
  %v2603 = vpop.f32.mrb[0].mxu0
  %v2604 = vadd.f32 %v297, %v2603
  %v2605 = vpop.f32.mrb[0].mxu0
  %v2606 = vadd.f32 %v301, %v2605
  %2607 = vmatprep.mubr.f32.mxu0 0.0
  %2608 = vmatmul.mubr.f32.gmra.mrb[0].mxu0 %v1041
  %v2609 = vpop.f32.mrb[0].mxu0
  %v2610 = vadd.f32 %v297, %v2609
  %v2611 = vpop.f32.mrb[0].mxu0
  %v2612 = vadd.f32 %v301, %v2611
  %2613 = vmatprep.mubr.f32.mxu0 0.0
  %2614 = vmatmul.mubr.f32.gmra.mrb[0].mxu0 %v1044
  %v2615 = vpop.f32.mrb[0].mxu0
  %v2616 = vadd.f32 %v297, %v2615
  %v2617 = vpop.f32.mrb[0].mxu0
  %v2618 = vadd.f32 %v301, %v2617
  %2619 = vmatprep.mubr.f32.mxu0 0.0
  %2620 = vmatmul.mubr.f32.gmra.mrb[0].mxu0 %v1047
  %v2621 = vpop.f32.mrb[0].mxu0
  %v2622 = vadd.f32 %v297, %v2621
  %v2623 = vpop.f32.mrb[0].mxu0
  %v2624 = vadd.f32 %v301, %v2623
  %2625 = vmatprep.mubr.f32.mxu0 0.0
  %2626 = vmatmul.mubr.f32.gmra.mrb[0].mxu0 %v1050
  %v2627 = vpop.f32.mrb[0].mxu0
  %v2628 = vadd.f32 %v297, %v2627
  %v2629 = vpop.f32.mrb[0].mxu0
  %v2630 = vadd.f32 %v301, %v2629
  %2631 = vmatprep.mubr.f32.mxu0 0.0
  %2632 = vmatmul.mubr.f32.gmra.mrb[0].mxu0 %v1053
  %v2633 = vpop.f32.mrb[0].mxu0
  %v2634 = vadd.f32 %v297, %v2633
  %v2635 = vpop.f32.mrb[0].mxu0
  %v2636 = vadd.f32 %v301, %v2635
  %2637 = vmatprep.mubr.f32.mxu0 0.0
  %2638 = vmatmul.mubr.f32.gmra.mrb[0].mxu0 %v1056
  %v2639 = vpop.f32.mrb[0].mxu0
  %v2640 = vadd.f32 %v297, %v2639
  %v2641 = vpop.f32.mrb[0].mxu0
  %v2642 = vadd.f32 %v301, %v2641
  %2643 = vmatprep.mubr.f32.mxu0 0.0
  %2644 = vmatmul.mubr.f32.gmra.mrb[0].mxu0 %v1059
  %v2645 = vpop.f32.mrb[0].mxu0
  %v2646 = vadd.f32 %v297, %v2645
  %v2647 = vpop.f32.mrb[0].mxu0
  %v2648 = vadd.f32 %v301, %v2647
  %2649 = vmatprep.mubr.f32.mxu0 0.0
  %2650 = vmatmul.mubr.f32.gmra.mrb[0].mxu0 %v1062
  %v2651 = vpop.f32.mrb[0].mxu0
  %v2652 = vadd.f32 %v297, %v2651
  %v2653 = vpop.f32.mrb[0].mxu0
  %v2654 = vadd.f32 %v301, %v2653
  %2655 = vmatprep.mubr.f32.mxu0 0.0
  %2656 = vmatmul.mubr.f32.gmra.mrb[0].mxu0 %v1065
  %v2657 = vpop.f32.mrb[0].mxu0
  %v2658 = vadd.f32 %v297, %v2657
  %v2659 = vpop.f32.mrb[0].mxu0
  %v2660 = vadd.f32 %v301, %v2659
  %2661 = vmatprep.mubr.f32.mxu0 0.0
  %2662 = vmatmul.mubr.f32.gmra.mrb[0].mxu0 %v1068
  %v2663 = vpop.f32.mrb[0].mxu0
  %v2664 = vadd.f32 %v297, %v2663
  %v2665 = vpop.f32.mrb[0].mxu0
  %v2666 = vadd.f32 %v301, %v2665
  %2667 = vmatprep.mubr.f32.mxu0 0.0
  %2668 = vmatmul.mubr.f32.gmra.mrb[0].mxu0 %v1071
  %v2669 = vpop.f32.mrb[0].mxu0
  %v2670 = vadd.f32 %v297, %v2669
  %v2671 = vpop.f32.mrb[0].mxu0
  %v2672 = vadd.f32 %v301, %v2671
  %2673 = vdwg.mxu0
  %v2674 = vtanh.pop %v1140
  %v2675 = vtanh.pop %v1142
  %v2676 = vtanh.pop %v1146
  %v2677 = vtanh.pop %v1148
  %v2678 = vtanh.pop %v1152
  %v2679 = vtanh.pop %v1154
  %v2680 = vtanh.pop %v1158
  %v2681 = vtanh.pop %v1160
  %v2682 = vtanh.pop %v1164
  %v2683 = vtanh.pop %v1166
  %v2684 = vtanh.pop %v1170
  %v2685 = vtanh.pop %v1172
  %v2686 = vtanh.pop %v1176
  %v2687 = vtanh.pop %v1178
  %v2688 = vtanh.pop %v1182
  %v2689 = vtanh.pop %v1184
  %v2690 = vtanh.pop %v1188
  %v2691 = vtanh.pop %v1190
  %v2692 = vtanh.pop %v1194
  %v2693 = vtanh.pop %v1196
  %v2694 = vtanh.pop %v1200
  %v2695 = vtanh.pop %v1202
  %v2696 = vtanh.pop %v1206
  %v2697 = vtanh.pop %v1208
  %v2698 = vtanh.pop %v1212
  %v2699 = vtanh.pop %v1214
  %v2700 = vtanh.pop %v1218
  %v2701 = vtanh.pop %v1220
  %v2702 = vtanh.pop %v1224
  %v2703 = vtanh.pop %v1226
  %v2704 = vtanh.pop %v1230
  %v2705 = vtanh.pop %v1232
  %v2706 = vtanh.pop %v1236
  %v2707 = vtanh.pop %v1238
  %v2708 = vtanh.pop %v1242
  %v2709 = vtanh.pop %v1244
  %v2710 = vtanh.pop %v1248
  %v2711 = vtanh.pop %v1250
  %v2712 = vtanh.pop %v1254
  %v2713 = vtanh.pop %v1256
  %v2714 = vtanh.pop %v1260
  %v2715 = vtanh.pop %v1262
  %v2716 = vtanh.pop %v1266
  %v2717 = vtanh.pop %v1268
  %v2718 = vtanh.pop %v1272
  %v2719 = vtanh.pop %v1274
  %v2720 = vtanh.pop %v1278
  %v2721 = vtanh.pop %v1280
  %v2722 = vtanh.pop %v1284
  %v2723 = vtanh.pop %v1286
  %v2724 = vtanh.pop %v1290
  %v2725 = vtanh.pop %v1292
  %v2726 = vtanh.pop %v1296
  %v2727 = vtanh.pop %v1298
  %v2728 = vtanh.pop %v1302
  %v2729 = vtanh.pop %v1304
  %v2730 = vtanh.pop %v1308
  %v2731 = vtanh.pop %v1310
  %v2732 = vtanh.pop %v1314
  %v2733 = vtanh.pop %v1316
  %v2734 = vtanh.pop %v1320
  %v2735 = vtanh.pop %v1322
  %v2736 = vtanh.pop %v1326
  %v2737 = vtanh.pop %v1328
  %v2738 = vtanh.pop %v1332
  %v2739 = vtanh.pop %v1334
  %v2740 = vtanh.pop %v1338
  %v2741 = vtanh.pop %v1340
  %v2742 = vtanh.pop %v1344
  %v2743 = vtanh.pop %v1346
  %v2744 = vtanh.pop %v1350
  %v2745 = vtanh.pop %v1352
  %v2746 = vtanh.pop %v1356
  %v2747 = vtanh.pop %v1358
  %v2748 = vtanh.pop %v1362
  %v2749 = vtanh.pop %v1364
  %v2750 = vtanh.pop %v1368
  %v2751 = vtanh.pop %v1370
  %v2752 = vtanh.pop %v1374
  %v2753 = vtanh.pop %v1376
  %v2754 = vtanh.pop %v1380
  %v2755 = vtanh.pop %v1382
  %v2756 = vtanh.pop %v1386
  %v2757 = vtanh.pop %v1388
  %v2758 = vtanh.pop %v1392
  %v2759 = vtanh.pop %v1394
  %v2760 = vtanh.pop %v1398
  %v2761 = vtanh.pop %v1400
  %v2762 = vtanh.pop %v1404
  %v2763 = vtanh.pop %v1406
  %v2764 = vtanh.pop %v1410
  %v2765 = vtanh.pop %v1412
  %v2766 = vtanh.pop %v1416
  %v2767 = vtanh.pop %v1418
  %v2768 = vtanh.pop %v1422
  %v2769 = vtanh.pop %v1424
  %v2770 = vtanh.pop %v1428
  %v2771 = vtanh.pop %v1430
  %v2772 = vtanh.pop %v1434
  %v2773 = vtanh.pop %v1436
  %v2774 = vtanh.pop %v1440
  %v2775 = vtanh.pop %v1442
  %v2776 = vtanh.pop %v1446
  %v2777 = vtanh.pop %v1448
  %v2778 = vtanh.pop %v1452
  %v2779 = vtanh.pop %v1454
  %v2780 = vtanh.pop %v1458
  %v2781 = vtanh.pop %v1460
  %v2782 = vtanh.pop %v1464
  %v2783 = vtanh.pop %v1466
  %v2784 = vtanh.pop %v1470
  %v2785 = vtanh.pop %v1472
  %v2786 = vtanh.pop %v1476
  %v2787 = vtanh.pop %v1478
  %v2788 = vtanh.pop %v1482
  %v2789 = vtanh.pop %v1484
  %v2790 = vtanh.pop %v1488
  %v2791 = vtanh.pop %v1490
  %v2792 = vtanh.pop %v1494
  %v2793 = vtanh.pop %v1496
  %v2794 = vtanh.pop %v1500
  %v2795 = vtanh.pop %v1502
  %v2796 = vtanh.pop %v1506
  %v2797 = vtanh.pop %v1508
  %v2798 = vtanh.pop %v1512
  %v2799 = vtanh.pop %v1514
  %v2800 = vtanh.pop %v1518
  %v2801 = vtanh.pop %v1520
  %v2802 = vtanh.pop %v1524
  %v2803 = vtanh.pop %v1526
  %v2804 = vtanh.pop %v1530
  %v2805 = vtanh.pop %v1532
  %v2806 = vtanh.pop %v1536
  %v2807 = vtanh.pop %v1538
  %v2808 = vtanh.pop %v1542
  %v2809 = vtanh.pop %v1544
  %v2810 = vtanh.pop %v1548
  %v2811 = vtanh.pop %v1550
  %v2812 = vtanh.pop %v1554
  %v2813 = vtanh.pop %v1556
  %v2814 = vtanh.pop %v1560
  %v2815 = vtanh.pop %v1562
  %v2816 = vtanh.pop %v1566
  %v2817 = vtanh.pop %v1568
  %v2818 = vtanh.pop %v1572
  %v2819 = vtanh.pop %v1574
  %v2820 = vtanh.pop %v1578
  %v2821 = vtanh.pop %v1580
  %v2822 = vtanh.pop %v1584
  %v2823 = vtanh.pop %v1586
  %v2824 = vtanh.pop %v1590
  %v2825 = vtanh.pop %v1592
  %v2826 = vtanh.pop %v1596
  %v2827 = vtanh.pop %v1598
  %v2828 = vtanh.pop %v1602
  %v2829 = vtanh.pop %v1604
  %v2830 = vtanh.pop %v1608
  %v2831 = vtanh.pop %v1610
  %v2832 = vtanh.pop %v1614
  %v2833 = vtanh.pop %v1616
  %v2834 = vtanh.pop %v1620
  %v2835 = vtanh.pop %v1622
  %v2836 = vtanh.pop %v1626
  %v2837 = vtanh.pop %v1628
  %v2838 = vtanh.pop %v1632
  %v2839 = vtanh.pop %v1634
  %v2840 = vtanh.pop %v1638
  %v2841 = vtanh.pop %v1640
  %v2842 = vtanh.pop %v1644
  %v2843 = vtanh.pop %v1646
  %v2844 = vtanh.pop %v1650
  %v2845 = vtanh.pop %v1652
  %v2846 = vtanh.pop %v1656
  %v2847 = vtanh.pop %v1658
  %v2848 = vtanh.pop %v1662
  %v2849 = vtanh.pop %v1664
  %v2850 = vtanh.pop %v1668
  %v2851 = vtanh.pop %v1670
  %v2852 = vtanh.pop %v1674
  %v2853 = vtanh.pop %v1676
  %v2854 = vtanh.pop %v1680
  %v2855 = vtanh.pop %v1682
  %v2856 = vtanh.pop %v1686
  %v2857 = vtanh.pop %v1688
  %v2858 = vtanh.pop %v1692
  %v2859 = vtanh.pop %v1694
  %v2860 = vtanh.pop %v1698
  %v2861 = vtanh.pop %v1700
  %v2862 = vtanh.pop %v1704
  %v2863 = vtanh.pop %v1706
  %v2864 = vtanh.pop %v1710
  %v2865 = vtanh.pop %v1712
  %v2866 = vtanh.pop %v1716
  %v2867 = vtanh.pop %v1718
  %v2868 = vtanh.pop %v1722
  %v2869 = vtanh.pop %v1724
  %v2870 = vtanh.pop %v1728
  %v2871 = vtanh.pop %v1730
  %v2872 = vtanh.pop %v1734
  %v2873 = vtanh.pop %v1736
  %v2874 = vtanh.pop %v1740
  %v2875 = vtanh.pop %v1742
  %v2876 = vtanh.pop %v1746
  %v2877 = vtanh.pop %v1748
  %v2878 = vtanh.pop %v1752
  %v2879 = vtanh.pop %v1754
  %v2880 = vtanh.pop %v1758
  %v2881 = vtanh.pop %v1760
  %v2882 = vtanh.pop %v1764
  %v2883 = vtanh.pop %v1766
  %v2884 = vtanh.pop %v1770
  %v2885 = vtanh.pop %v1772
  %v2886 = vtanh.pop %v1776
  %v2887 = vtanh.pop %v1778
  %v2888 = vtanh.pop %v1782
  %v2889 = vtanh.pop %v1784
  %v2890 = vtanh.pop %v1788
  %v2891 = vtanh.pop %v1790
  %v2892 = vtanh.pop %v1794
  %v2893 = vtanh.pop %v1796
  %v2894 = vtanh.pop %v1800
  %v2895 = vtanh.pop %v1802
  %v2896 = vtanh.pop %v1806
  %v2897 = vtanh.pop %v1808
  %v2898 = vtanh.pop %v1812
  %v2899 = vtanh.pop %v1814
  %v2900 = vtanh.pop %v1818
  %v2901 = vtanh.pop %v1820
  %v2902 = vtanh.pop %v1824
  %v2903 = vtanh.pop %v1826
  %v2904 = vtanh.pop %v1830
  %v2905 = vtanh.pop %v1832
  %v2906 = vtanh.pop %v1836
  %v2907 = vtanh.pop %v1838
  %v2908 = vtanh.pop %v1842
  %v2909 = vtanh.pop %v1844
  %v2910 = vtanh.pop %v1848
  %v2911 = vtanh.pop %v1850
  %v2912 = vtanh.pop %v1854
  %v2913 = vtanh.pop %v1856
  %v2914 = vtanh.pop %v1860
  %v2915 = vtanh.pop %v1862
  %v2916 = vtanh.pop %v1866
  %v2917 = vtanh.pop %v1868
  %v2918 = vtanh.pop %v1872
  %v2919 = vtanh.pop %v1874
  %v2920 = vtanh.pop %v1878
  %v2921 = vtanh.pop %v1880
  %v2922 = vtanh.pop %v1884
  %v2923 = vtanh.pop %v1886
  %v2924 = vtanh.pop %v1890
  %v2925 = vtanh.pop %v1892
  %v2926 = vtanh.pop %v1896
  %v2927 = vtanh.pop %v1898
  %v2928 = vtanh.pop %v1902
  %v2929 = vtanh.pop %v1904
  %v2930 = vtanh.pop %v1908
  %v2931 = vtanh.pop %v1910
  %v2932 = vtanh.pop %v1914
  %v2933 = vtanh.pop %v1916
  %v2934 = vtanh.pop %v1920
  %v2935 = vtanh.pop %v1922
  %v2936 = vtanh.pop %v1926
  %v2937 = vtanh.pop %v1928
  %v2938 = vtanh.pop %v1932
  %v2939 = vtanh.pop %v1934
  %v2940 = vtanh.pop %v1938
  %v2941 = vtanh.pop %v1940
  %v2942 = vtanh.pop %v1944
  %v2943 = vtanh.pop %v1946
  %v2944 = vtanh.pop %v1950
  %v2945 = vtanh.pop %v1952
  %v2946 = vtanh.pop %v1956
  %v2947 = vtanh.pop %v1958
  %v2948 = vtanh.pop %v1962
  %v2949 = vtanh.pop %v1964
  %v2950 = vtanh.pop %v1968
  %v2951 = vtanh.pop %v1970
  %v2952 = vtanh.pop %v1974
  %v2953 = vtanh.pop %v1976
  %v2954 = vtanh.pop %v1980
  %v2955 = vtanh.pop %v1982
  %v2956 = vtanh.pop %v1986
  %v2957 = vtanh.pop %v1988
  %v2958 = vtanh.pop %v1992
  %v2959 = vtanh.pop %v1994
  %v2960 = vtanh.pop %v1998
  %v2961 = vtanh.pop %v2000
  %v2962 = vtanh.pop %v2004
  %v2963 = vtanh.pop %v2006
  %v2964 = vtanh.pop %v2010
  %v2965 = vtanh.pop %v2012
  %v2966 = vtanh.pop %v2016
  %v2967 = vtanh.pop %v2018
  %v2968 = vtanh.pop %v2022
  %v2969 = vtanh.pop %v2024
  %v2970 = vtanh.pop %v2028
  %v2971 = vtanh.pop %v2030
  %v2972 = vtanh.pop %v2034
  %v2973 = vtanh.pop %v2036
  %v2974 = vtanh.pop %v2040
  %v2975 = vtanh.pop %v2042
  %v2976 = vtanh.pop %v2046
  %v2977 = vtanh.pop %v2048
  %v2978 = vtanh.pop %v2052
  %v2979 = vtanh.pop %v2054
  %v2980 = vtanh.pop %v2058
  %v2981 = vtanh.pop %v2060
  %v2982 = vtanh.pop %v2064
  %v2983 = vtanh.pop %v2066
  %v2984 = vtanh.pop %v2070
  %v2985 = vtanh.pop %v2072
  %v2986 = vtanh.pop %v2076
  %v2987 = vtanh.pop %v2078
  %v2988 = vtanh.pop %v2082
  %v2989 = vtanh.pop %v2084
  %v2990 = vtanh.pop %v2088
  %v2991 = vtanh.pop %v2090
  %v2992 = vtanh.pop %v2094
  %v2993 = vtanh.pop %v2096
  %v2994 = vtanh.pop %v2100
  %v2995 = vtanh.pop %v2102
  %v2996 = vtanh.pop %v2106
  %v2997 = vtanh.pop %v2108
  %v2998 = vtanh.pop %v2112
  %v2999 = vtanh.pop %v2114
  %v3000 = vtanh.pop %v2118
  %v3001 = vtanh.pop %v2120
  %v3002 = vtanh.pop %v2124
  %v3003 = vtanh.pop %v2126
  %v3004 = vtanh.pop %v2130
  %v3005 = vtanh.pop %v2132
  %v3006 = vtanh.pop %v2136
  %v3007 = vtanh.pop %v2138
  %v3008 = vtanh.pop %v2142
  %v3009 = vtanh.pop %v2144
  %v3010 = vtanh.pop %v2148
  %v3011 = vtanh.pop %v2150
  %v3012 = vtanh.pop %v2154
  %v3013 = vtanh.pop %v2156
  %v3014 = vtanh.pop %v2160
  %v3015 = vtanh.pop %v2162
  %v3016 = vtanh.pop %v2166
  %v3017 = vtanh.pop %v2168
  %v3018 = vtanh.pop %v2172
  %v3019 = vtanh.pop %v2174
  %v3020 = vtanh.pop %v2178
  %v3021 = vtanh.pop %v2180
  %v3022 = vtanh.pop %v2184
  %v3023 = vtanh.pop %v2186
  %v3024 = vtanh.pop %v2190
  %v3025 = vtanh.pop %v2192
  %v3026 = vtanh.pop %v2196
  %v3027 = vtanh.pop %v2198
  %v3028 = vtanh.pop %v2202
  %v3029 = vtanh.pop %v2204
  %v3030 = vtanh.pop %v2208
  %v3031 = vtanh.pop %v2210
  %v3032 = vtanh.pop %v2214
  %v3033 = vtanh.pop %v2216
  %v3034 = vtanh.pop %v2220
  %v3035 = vtanh.pop %v2222
  %v3036 = vtanh.pop %v2226
  %v3037 = vtanh.pop %v2228
  %v3038 = vtanh.pop %v2232
  %v3039 = vtanh.pop %v2234
  %v3040 = vtanh.pop %v2238
  %v3041 = vtanh.pop %v2240
  %v3042 = vtanh.pop %v2244
  %v3043 = vtanh.pop %v2246
  %v3044 = vtanh.pop %v2250
  %v3045 = vtanh.pop %v2252
  %v3046 = vtanh.pop %v2256
  %v3047 = vtanh.pop %v2258
  %v3048 = vtanh.pop %v2262
  %v3049 = vtanh.pop %v2264
  %v3050 = vtanh.pop %v2268
  %v3051 = vtanh.pop %v2270
  %v3052 = vtanh.pop %v2274
  %v3053 = vtanh.pop %v2276
  %v3054 = vtanh.pop %v2280
  %v3055 = vtanh.pop %v2282
  %v3056 = vtanh.pop %v2286
  %v3057 = vtanh.pop %v2288
  %v3058 = vtanh.pop %v2292
  %v3059 = vtanh.pop %v2294
  %v3060 = vtanh.pop %v2298
  %v3061 = vtanh.pop %v2300
  %v3062 = vtanh.pop %v2304
  %v3063 = vtanh.pop %v2306
  %v3064 = vtanh.pop %v2310
  %v3065 = vtanh.pop %v2312
  %v3066 = vtanh.pop %v2316
  %v3067 = vtanh.pop %v2318
  %v3068 = vtanh.pop %v2322
  %v3069 = vtanh.pop %v2324
  %v3070 = vtanh.pop %v2328
  %v3071 = vtanh.pop %v2330
  %v3072 = vtanh.pop %v2334
  %v3073 = vtanh.pop %v2336
  %v3074 = vtanh.pop %v2340
  %v3075 = vtanh.pop %v2342
  %v3076 = vtanh.pop %v2346
  %v3077 = vtanh.pop %v2348
  %v3078 = vtanh.pop %v2352
  %v3079 = vtanh.pop %v2354
  %v3080 = vtanh.pop %v2358
  %v3081 = vtanh.pop %v2360
  %v3082 = vtanh.pop %v2364
  %v3083 = vtanh.pop %v2366
  %v3084 = vtanh.pop %v2370
  %v3085 = vtanh.pop %v2372
  %v3086 = vtanh.pop %v2376
  %v3087 = vtanh.pop %v2378
  %v3088 = vtanh.pop %v2382
  %v3089 = vtanh.pop %v2384
  %v3090 = vtanh.pop %v2388
  %v3091 = vtanh.pop %v2390
  %v3092 = vtanh.pop %v2394
  %v3093 = vtanh.pop %v2396
  %v3094 = vtanh.pop %v2400
  %v3095 = vtanh.pop %v2402
  %v3096 = vtanh.pop %v2406
  %v3097 = vtanh.pop %v2408
  %v3098 = vtanh.pop %v2412
  %v3099 = vtanh.pop %v2414
  %v3100 = vtanh.pop %v2418
  %v3101 = vtanh.pop %v2420
  %v3102 = vtanh.pop %v2424
  %v3103 = vtanh.pop %v2426
  %v3104 = vtanh.pop %v2430
  %v3105 = vtanh.pop %v2432
  %v3106 = vtanh.pop %v2436
  %v3107 = vtanh.pop %v2438
  %v3108 = vtanh.pop %v2442
  %v3109 = vtanh.pop %v2444
  %v3110 = vtanh.pop %v2448
  %v3111 = vtanh.pop %v2450
  %v3112 = vtanh.pop %v2454
  %v3113 = vtanh.pop %v2456
  %v3114 = vtanh.pop %v2460
  %v3115 = vtanh.pop %v2462
  %v3116 = vtanh.pop %v2466
  %v3117 = vtanh.pop %v2468
  %v3118 = vtanh.pop %v2472
  %v3119 = vtanh.pop %v2474
  %v3120 = vtanh.pop %v2478
  %v3121 = vtanh.pop %v2480
  %v3122 = vtanh.pop %v2484
  %v3123 = vtanh.pop %v2486
  %v3124 = vtanh.pop %v2490
  %v3125 = vtanh.pop %v2492
  %v3126 = vtanh.pop %v2496
  %v3127 = vtanh.pop %v2498
  %v3128 = vtanh.pop %v2502
  %v3129 = vtanh.pop %v2504
  %v3130 = vtanh.pop %v2508
  %v3131 = vtanh.pop %v2510
  %v3132 = vtanh.pop %v2514
  %v3133 = vtanh.pop %v2516
  %v3134 = vtanh.pop %v2520
  %v3135 = vtanh.pop %v2522
  %v3136 = vtanh.pop %v2526
  %v3137 = vtanh.pop %v2528
  %v3138 = vtanh.pop %v2532
  %v3139 = vtanh.pop %v2534
  %v3140 = vtanh.pop %v2538
  %v3141 = vtanh.pop %v2540
  %v3142 = vtanh.pop %v2544
  %v3143 = vtanh.pop %v2546
  %v3144 = vtanh.pop %v2550
  %v3145 = vtanh.pop %v2552
  %v3146 = vtanh.pop %v2556
  %v3147 = vtanh.pop %v2558
  %v3148 = vtanh.pop %v2562
  %v3149 = vtanh.pop %v2564
  %v3150 = vtanh.pop %v2568
  %v3151 = vtanh.pop %v2570
  %v3152 = vtanh.pop %v2574
  %v3153 = vtanh.pop %v2576
  %v3154 = vtanh.pop %v2580
  %v3155 = vtanh.pop %v2582
  %v3156 = vtanh.pop %v2586
  %v3157 = vtanh.pop %v2588
  %v3158 = vtanh.pop %v2592
  %v3159 = vtanh.pop %v2594
  %v3160 = vtanh.pop %v2598
  %v3161 = vtanh.pop %v2600
  %v3162 = vtanh.pop %v2604
  %v3163 = vtanh.pop %v2606
  %v3164 = vtanh.pop %v2610
  %v3165 = vtanh.pop %v2612
  %v3166 = vtanh.pop %v2616
  %v3167 = vtanh.pop %v2618
  %v3168 = vtanh.pop %v2622
  %v3169 = vtanh.pop %v2624
  %v3170 = vtanh.pop %v2628
  %v3171 = vtanh.pop %v2630
  %v3172 = vtanh.pop %v2634
  %v3173 = vtanh.pop %v2636
  %v3174 = vtanh.pop %v2640
  %v3175 = vtanh.pop %v2642
  %v3176 = vtanh.pop %v2646
  %v3177 = vtanh.pop %v2648
  %v3178 = vtanh.pop %v2652
  %v3179 = vtanh.pop %v2654
  %v3180 = vtanh.pop %v2658
  %v3181 = vtanh.pop %v2660
  %v3182 = vtanh.pop %v2664
  %v3183 = vtanh.pop %v2666
  %v3184 = vtanh.pop %v2670
  %v3185 = vtanh.pop %v2672
  %v3186 = vpack.c.bf16 %v2676, %v2674
  %v3187 = vpack.c.bf16 %v2677, %v2675
  %v3188 = vpack.c.bf16 %v2680, %v2678
  %v3189 = vpack.c.bf16 %v2681, %v2679
  %v3190 = vpack.c.bf16 %v2684, %v2682
  %v3191 = vpack.c.bf16 %v2685, %v2683
  %v3192 = vpack.c.bf16 %v2688, %v2686
  %v3193 = vpack.c.bf16 %v2689, %v2687
  %v3194 = vpack.c.bf16 %v2692, %v2690
  %v3195 = vpack.c.bf16 %v2693, %v2691
  %v3196 = vpack.c.bf16 %v2696, %v2694
  %v3197 = vpack.c.bf16 %v2697, %v2695
  %v3198 = vpack.c.bf16 %v2700, %v2698
  %v3199 = vpack.c.bf16 %v2701, %v2699
  %v3200 = vpack.c.bf16 %v2704, %v2702
  %v3201 = vpack.c.bf16 %v2705, %v2703
  %v3202 = vpack.c.bf16 %v2708, %v2706
  %v3203 = vpack.c.bf16 %v2709, %v2707
  %v3204 = vpack.c.bf16 %v2712, %v2710
  %v3205 = vpack.c.bf16 %v2713, %v2711
  %v3206 = vpack.c.bf16 %v2716, %v2714
  %v3207 = vpack.c.bf16 %v2717, %v2715
  %v3208 = vpack.c.bf16 %v2720, %v2718
  %v3209 = vpack.c.bf16 %v2721, %v2719
  %v3210 = vpack.c.bf16 %v2724, %v2722
  %v3211 = vpack.c.bf16 %v2725, %v2723
  %v3212 = vpack.c.bf16 %v2728, %v2726
  %v3213 = vpack.c.bf16 %v2729, %v2727
  %v3214 = vpack.c.bf16 %v2732, %v2730
  %v3215 = vpack.c.bf16 %v2733, %v2731
  %v3216 = vpack.c.bf16 %v2736, %v2734
  %v3217 = vpack.c.bf16 %v2737, %v2735
  %v3218 = vpack.c.bf16 %v2740, %v2738
  %v3219 = vpack.c.bf16 %v2741, %v2739
  %v3220 = vpack.c.bf16 %v2744, %v2742
  %v3221 = vpack.c.bf16 %v2745, %v2743
  %v3222 = vpack.c.bf16 %v2748, %v2746
  %v3223 = vpack.c.bf16 %v2749, %v2747
  %v3224 = vpack.c.bf16 %v2752, %v2750
  %v3225 = vpack.c.bf16 %v2753, %v2751
  %v3226 = vpack.c.bf16 %v2756, %v2754
  %v3227 = vpack.c.bf16 %v2757, %v2755
  %v3228 = vpack.c.bf16 %v2760, %v2758
  %v3229 = vpack.c.bf16 %v2761, %v2759
  %v3230 = vpack.c.bf16 %v2764, %v2762
  %v3231 = vpack.c.bf16 %v2765, %v2763
  %v3232 = vpack.c.bf16 %v2768, %v2766
  %v3233 = vpack.c.bf16 %v2769, %v2767
  %v3234 = vpack.c.bf16 %v2772, %v2770
  %v3235 = vpack.c.bf16 %v2773, %v2771
  %v3236 = vpack.c.bf16 %v2776, %v2774
  %v3237 = vpack.c.bf16 %v2777, %v2775
  %v3238 = vpack.c.bf16 %v2780, %v2778
  %v3239 = vpack.c.bf16 %v2781, %v2779
  %v3240 = vpack.c.bf16 %v2784, %v2782
  %v3241 = vpack.c.bf16 %v2785, %v2783
  %v3242 = vpack.c.bf16 %v2788, %v2786
  %v3243 = vpack.c.bf16 %v2789, %v2787
  %v3244 = vpack.c.bf16 %v2792, %v2790
  %v3245 = vpack.c.bf16 %v2793, %v2791
  %v3246 = vpack.c.bf16 %v2796, %v2794
  %v3247 = vpack.c.bf16 %v2797, %v2795
  %v3248 = vpack.c.bf16 %v2800, %v2798
  %v3249 = vpack.c.bf16 %v2801, %v2799
  %v3250 = vpack.c.bf16 %v2804, %v2802
  %v3251 = vpack.c.bf16 %v2805, %v2803
  %v3252 = vpack.c.bf16 %v2808, %v2806
  %v3253 = vpack.c.bf16 %v2809, %v2807
  %v3254 = vpack.c.bf16 %v2812, %v2810
  %v3255 = vpack.c.bf16 %v2813, %v2811
  %v3256 = vpack.c.bf16 %v2816, %v2814
  %v3257 = vpack.c.bf16 %v2817, %v2815
  %v3258 = vpack.c.bf16 %v2820, %v2818
  %v3259 = vpack.c.bf16 %v2821, %v2819
  %v3260 = vpack.c.bf16 %v2824, %v2822
  %v3261 = vpack.c.bf16 %v2825, %v2823
  %v3262 = vpack.c.bf16 %v2828, %v2826
  %v3263 = vpack.c.bf16 %v2829, %v2827
  %v3264 = vpack.c.bf16 %v2832, %v2830
  %v3265 = vpack.c.bf16 %v2833, %v2831
  %v3266 = vpack.c.bf16 %v2836, %v2834
  %v3267 = vpack.c.bf16 %v2837, %v2835
  %v3268 = vpack.c.bf16 %v2840, %v2838
  %v3269 = vpack.c.bf16 %v2841, %v2839
  %v3270 = vpack.c.bf16 %v2844, %v2842
  %v3271 = vpack.c.bf16 %v2845, %v2843
  %v3272 = vpack.c.bf16 %v2848, %v2846
  %v3273 = vpack.c.bf16 %v2849, %v2847
  %v3274 = vpack.c.bf16 %v2852, %v2850
  %v3275 = vpack.c.bf16 %v2853, %v2851
  %v3276 = vpack.c.bf16 %v2856, %v2854
  %v3277 = vpack.c.bf16 %v2857, %v2855
  %v3278 = vpack.c.bf16 %v2860, %v2858
  %v3279 = vpack.c.bf16 %v2861, %v2859
  %v3280 = vpack.c.bf16 %v2864, %v2862
  %v3281 = vpack.c.bf16 %v2865, %v2863
  %v3282 = vpack.c.bf16 %v2868, %v2866
  %v3283 = vpack.c.bf16 %v2869, %v2867
  %v3284 = vpack.c.bf16 %v2872, %v2870
  %v3285 = vpack.c.bf16 %v2873, %v2871
  %v3286 = vpack.c.bf16 %v2876, %v2874
  %v3287 = vpack.c.bf16 %v2877, %v2875
  %v3288 = vpack.c.bf16 %v2880, %v2878
  %v3289 = vpack.c.bf16 %v2881, %v2879
  %v3290 = vpack.c.bf16 %v2884, %v2882
  %v3291 = vpack.c.bf16 %v2885, %v2883
  %v3292 = vpack.c.bf16 %v2888, %v2886
  %v3293 = vpack.c.bf16 %v2889, %v2887
  %v3294 = vpack.c.bf16 %v2892, %v2890
  %v3295 = vpack.c.bf16 %v2893, %v2891
  %v3296 = vpack.c.bf16 %v2896, %v2894
  %v3297 = vpack.c.bf16 %v2897, %v2895
  %v3298 = vpack.c.bf16 %v2900, %v2898
  %v3299 = vpack.c.bf16 %v2901, %v2899
  %v3300 = vpack.c.bf16 %v2904, %v2902
  %v3301 = vpack.c.bf16 %v2905, %v2903
  %v3302 = vpack.c.bf16 %v2908, %v2906
  %v3303 = vpack.c.bf16 %v2909, %v2907
  %v3304 = vpack.c.bf16 %v2912, %v2910
  %v3305 = vpack.c.bf16 %v2913, %v2911
  %v3306 = vpack.c.bf16 %v2916, %v2914
  %v3307 = vpack.c.bf16 %v2917, %v2915
  %v3308 = vpack.c.bf16 %v2920, %v2918
  %v3309 = vpack.c.bf16 %v2921, %v2919
  %v3310 = vpack.c.bf16 %v2924, %v2922
  %v3311 = vpack.c.bf16 %v2925, %v2923
  %v3312 = vpack.c.bf16 %v2928, %v2926
  %v3313 = vpack.c.bf16 %v2929, %v2927
  %v3314 = vpack.c.bf16 %v2932, %v2930
  %v3315 = vpack.c.bf16 %v2933, %v2931
  %v3316 = vpack.c.bf16 %v2936, %v2934
  %v3317 = vpack.c.bf16 %v2937, %v2935
  %v3318 = vpack.c.bf16 %v2940, %v2938
  %v3319 = vpack.c.bf16 %v2941, %v2939
  %v3320 = vpack.c.bf16 %v2944, %v2942
  %v3321 = vpack.c.bf16 %v2945, %v2943
  %v3322 = vpack.c.bf16 %v2948, %v2946
  %v3323 = vpack.c.bf16 %v2949, %v2947
  %v3324 = vpack.c.bf16 %v2952, %v2950
  %v3325 = vpack.c.bf16 %v2953, %v2951
  %v3326 = vpack.c.bf16 %v2956, %v2954
  %v3327 = vpack.c.bf16 %v2957, %v2955
  %v3328 = vpack.c.bf16 %v2960, %v2958
  %v3329 = vpack.c.bf16 %v2961, %v2959
  %v3330 = vpack.c.bf16 %v2964, %v2962
  %v3331 = vpack.c.bf16 %v2965, %v2963
  %v3332 = vpack.c.bf16 %v2968, %v2966
  %v3333 = vpack.c.bf16 %v2969, %v2967
  %v3334 = vpack.c.bf16 %v2972, %v2970
  %v3335 = vpack.c.bf16 %v2973, %v2971
  %v3336 = vpack.c.bf16 %v2976, %v2974
  %v3337 = vpack.c.bf16 %v2977, %v2975
  %v3338 = vpack.c.bf16 %v2980, %v2978
  %v3339 = vpack.c.bf16 %v2981, %v2979
  %v3340 = vpack.c.bf16 %v2984, %v2982
  %v3341 = vpack.c.bf16 %v2985, %v2983
  %v3342 = vpack.c.bf16 %v2988, %v2986
  %v3343 = vpack.c.bf16 %v2989, %v2987
  %v3344 = vpack.c.bf16 %v2992, %v2990
  %v3345 = vpack.c.bf16 %v2993, %v2991
  %v3346 = vpack.c.bf16 %v2996, %v2994
  %v3347 = vpack.c.bf16 %v2997, %v2995
  %v3348 = vpack.c.bf16 %v3000, %v2998
  %v3349 = vpack.c.bf16 %v3001, %v2999
  %v3350 = vpack.c.bf16 %v3004, %v3002
  %v3351 = vpack.c.bf16 %v3005, %v3003
  %v3352 = vpack.c.bf16 %v3008, %v3006
  %v3353 = vpack.c.bf16 %v3009, %v3007
  %v3354 = vpack.c.bf16 %v3012, %v3010
  %v3355 = vpack.c.bf16 %v3013, %v3011
  %v3356 = vpack.c.bf16 %v3016, %v3014
  %v3357 = vpack.c.bf16 %v3017, %v3015
  %v3358 = vpack.c.bf16 %v3020, %v3018
  %v3359 = vpack.c.bf16 %v3021, %v3019
  %v3360 = vpack.c.bf16 %v3024, %v3022
  %v3361 = vpack.c.bf16 %v3025, %v3023
  %v3362 = vpack.c.bf16 %v3028, %v3026
  %v3363 = vpack.c.bf16 %v3029, %v3027
  %v3364 = vpack.c.bf16 %v3032, %v3030
  %v3365 = vpack.c.bf16 %v3033, %v3031
  %v3366 = vpack.c.bf16 %v3036, %v3034
  %v3367 = vpack.c.bf16 %v3037, %v3035
  %v3368 = vpack.c.bf16 %v3040, %v3038
  %v3369 = vpack.c.bf16 %v3041, %v3039
  %v3370 = vpack.c.bf16 %v3044, %v3042
  %v3371 = vpack.c.bf16 %v3045, %v3043
  %v3372 = vpack.c.bf16 %v3048, %v3046
  %v3373 = vpack.c.bf16 %v3049, %v3047
  %v3374 = vpack.c.bf16 %v3052, %v3050
  %v3375 = vpack.c.bf16 %v3053, %v3051
  %v3376 = vpack.c.bf16 %v3056, %v3054
  %v3377 = vpack.c.bf16 %v3057, %v3055
  %v3378 = vpack.c.bf16 %v3060, %v3058
  %v3379 = vpack.c.bf16 %v3061, %v3059
  %v3380 = vpack.c.bf16 %v3064, %v3062
  %v3381 = vpack.c.bf16 %v3065, %v3063
  %v3382 = vpack.c.bf16 %v3068, %v3066
  %v3383 = vpack.c.bf16 %v3069, %v3067
  %v3384 = vpack.c.bf16 %v3072, %v3070
  %v3385 = vpack.c.bf16 %v3073, %v3071
  %v3386 = vpack.c.bf16 %v3076, %v3074
  %v3387 = vpack.c.bf16 %v3077, %v3075
  %v3388 = vpack.c.bf16 %v3080, %v3078
  %v3389 = vpack.c.bf16 %v3081, %v3079
  %v3390 = vpack.c.bf16 %v3084, %v3082
  %v3391 = vpack.c.bf16 %v3085, %v3083
  %v3392 = vpack.c.bf16 %v3088, %v3086
  %v3393 = vpack.c.bf16 %v3089, %v3087
  %v3394 = vpack.c.bf16 %v3092, %v3090
  %v3395 = vpack.c.bf16 %v3093, %v3091
  %v3396 = vpack.c.bf16 %v3096, %v3094
  %v3397 = vpack.c.bf16 %v3097, %v3095
  %v3398 = vpack.c.bf16 %v3100, %v3098
  %v3399 = vpack.c.bf16 %v3101, %v3099
  %v3400 = vpack.c.bf16 %v3104, %v3102
  %v3401 = vpack.c.bf16 %v3105, %v3103
  %v3402 = vpack.c.bf16 %v3108, %v3106
  %v3403 = vpack.c.bf16 %v3109, %v3107
  %v3404 = vpack.c.bf16 %v3112, %v3110
  %v3405 = vpack.c.bf16 %v3113, %v3111
  %v3406 = vpack.c.bf16 %v3116, %v3114
  %v3407 = vpack.c.bf16 %v3117, %v3115
  %v3408 = vpack.c.bf16 %v3120, %v3118
  %v3409 = vpack.c.bf16 %v3121, %v3119
  %v3410 = vpack.c.bf16 %v3124, %v3122
  %v3411 = vpack.c.bf16 %v3125, %v3123
  %v3412 = vpack.c.bf16 %v3128, %v3126
  %v3413 = vpack.c.bf16 %v3129, %v3127
  %v3414 = vpack.c.bf16 %v3132, %v3130
  %v3415 = vpack.c.bf16 %v3133, %v3131
  %v3416 = vpack.c.bf16 %v3136, %v3134
  %v3417 = vpack.c.bf16 %v3137, %v3135
  %v3418 = vpack.c.bf16 %v3140, %v3138
  %v3419 = vpack.c.bf16 %v3141, %v3139
  %v3420 = vpack.c.bf16 %v3144, %v3142
  %v3421 = vpack.c.bf16 %v3145, %v3143
  %v3422 = vpack.c.bf16 %v3148, %v3146
  %v3423 = vpack.c.bf16 %v3149, %v3147
  %v3424 = vpack.c.bf16 %v3152, %v3150
  %v3425 = vpack.c.bf16 %v3153, %v3151
  %v3426 = vpack.c.bf16 %v3156, %v3154
  %v3427 = vpack.c.bf16 %v3157, %v3155
  %v3428 = vpack.c.bf16 %v3160, %v3158
  %v3429 = vpack.c.bf16 %v3161, %v3159
  %v3430 = vpack.c.bf16 %v3164, %v3162
  %v3431 = vpack.c.bf16 %v3165, %v3163
  %v3432 = vpack.c.bf16 %v3168, %v3166
  %v3433 = vpack.c.bf16 %v3169, %v3167
  %v3434 = vpack.c.bf16 %v3172, %v3170
  %v3435 = vpack.c.bf16 %v3173, %v3171
  %v3436 = vpack.c.bf16 %v3176, %v3174
  %v3437 = vpack.c.bf16 %v3177, %v3175
  %v3438 = vpack.c.bf16 %v3180, %v3178
  %v3439 = vpack.c.bf16 %v3181, %v3179
  %v3440 = vpack.c.bf16 %v3184, %v3182
  %v3441 = vpack.c.bf16 %v3185, %v3183
  %v3442 = vld [vmem:[%s3] sm:$0xff]
  %v3443 = vld [vmem:[%s3 + $0x8] sm:$0xff]
  %v3444 = vld [vmem:[%s3 + $0x10] sm:$0xff]
  %v3445 = vld [vmem:[%s3 + $0x18] sm:$0xff]
  %v3446 = vld [vmem:[%s3 + $0x20] sm:$0xff]
  %v3447 = vld [vmem:[%s3 + $0x28] sm:$0xff]
  %v3448 = vld [vmem:[%s3 + $0x30] sm:$0xff]
  %v3449 = vld [vmem:[%s3 + $0x38] sm:$0xff]
  %v3450 = vld [vmem:[%s3 + $0x40] sm:$0xff]
  %v3451 = vld [vmem:[%s3 + $0x48] sm:$0xff]
  %v3452 = vld [vmem:[%s3 + $0x50] sm:$0xff]
  %v3453 = vld [vmem:[%s3 + $0x58] sm:$0xff]
  %v3454 = vld [vmem:[%s3 + $0x60] sm:$0xff]
  %v3455 = vld [vmem:[%s3 + $0x68] sm:$0xff]
  %v3456 = vld [vmem:[%s3 + $0x70] sm:$0xff]
  %v3457 = vld [vmem:[%s3 + $0x78] sm:$0xff]
  %v3458 = vld [vmem:[%s3 + $0x80] sm:$0xff]
  %v3459 = vld [vmem:[%s3 + $0x88] sm:$0xff]
  %v3460 = vld [vmem:[%s3 + $0x90] sm:$0xff]
  %v3461 = vld [vmem:[%s3 + $0x98] sm:$0xff]
  %v3462 = vld [vmem:[%s3 + $0xa0] sm:$0xff]
  %v3463 = vld [vmem:[%s3 + $0xa8] sm:$0xff]
  %v3464 = vld [vmem:[%s3 + $0xb0] sm:$0xff]
  %v3465 = vld [vmem:[%s3 + $0xb8] sm:$0xff]
  %v3466 = vld [vmem:[%s3 + $0xc0] sm:$0xff]
  %v3467 = vld [vmem:[%s3 + $0xc8] sm:$0xff]
  %v3468 = vld [vmem:[%s3 + $0xd0] sm:$0xff]
  %v3469 = vld [vmem:[%s3 + $0xd8] sm:$0xff]
  %v3470 = vld [vmem:[%s3 + $0xe0] sm:$0xff]
  %v3471 = vld [vmem:[%s3 + $0xe8] sm:$0xff]
  %v3472 = vld [vmem:[%s3 + $0xf0] sm:$0xff]
  %v3473 = vld [vmem:[%s3 + $0xf8] sm:$0xff]
  %v3474 = vld [vmem:[%s4] sm:$0x3]
  %v3476 = vlaneseq
  %v3477 = vshrl.u32 %v3476, 7
  %v3478 = vsub.s32 0, %v3477
  %v3479 = vrot.slane %v3474, %v3478
  %v3480 = vlaneseq
  %v3481 = vshrl.u32 %v3480, 7
  %v3482 = vsub.s32 1, %v3481
  %v3483 = vrot.slane %v3474, %v3482
  %v3518 = vunpack.c.l.b16 %v3442
  %v3519 = vunpack.c.h.b16 %v3442
  %v3520 = vunpack.c.l.b16 %v3443
  %v3521 = vunpack.c.h.b16 %v3443
  %v3522 = vunpack.c.l.b16 %v3444
  %v3523 = vunpack.c.h.b16 %v3444
  %v3524 = vunpack.c.l.b16 %v3445
  %v3525 = vunpack.c.h.b16 %v3445
  %v3526 = vunpack.c.l.b16 %v3446
  %v3527 = vunpack.c.h.b16 %v3446
  %v3528 = vunpack.c.l.b16 %v3447
  %v3529 = vunpack.c.h.b16 %v3447
  %v3530 = vunpack.c.l.b16 %v3448
  %v3531 = vunpack.c.h.b16 %v3448
  %v3532 = vunpack.c.l.b16 %v3449
  %v3533 = vunpack.c.h.b16 %v3449
  %v3534 = vunpack.c.l.b16 %v3450
  %v3535 = vunpack.c.h.b16 %v3450
  %v3536 = vunpack.c.l.b16 %v3451
  %v3537 = vunpack.c.h.b16 %v3451
  %v3538 = vunpack.c.l.b16 %v3452
  %v3539 = vunpack.c.h.b16 %v3452
  %v3540 = vunpack.c.l.b16 %v3453
  %v3541 = vunpack.c.h.b16 %v3453
  %v3542 = vunpack.c.l.b16 %v3454
  %v3543 = vunpack.c.h.b16 %v3454
  %v3544 = vunpack.c.l.b16 %v3455
  %v3545 = vunpack.c.h.b16 %v3455
  %v3546 = vunpack.c.l.b16 %v3456
  %v3547 = vunpack.c.h.b16 %v3456
  %v3548 = vunpack.c.l.b16 %v3457
  %v3549 = vunpack.c.h.b16 %v3457
  %v3550 = vunpack.c.l.b16 %v3458
  %v3551 = vunpack.c.h.b16 %v3458
  %v3552 = vunpack.c.l.b16 %v3459
  %v3553 = vunpack.c.h.b16 %v3459
  %v3554 = vunpack.c.l.b16 %v3460
  %v3555 = vunpack.c.h.b16 %v3460
  %v3556 = vunpack.c.l.b16 %v3461
  %v3557 = vunpack.c.h.b16 %v3461
  %v3558 = vunpack.c.l.b16 %v3462
  %v3559 = vunpack.c.h.b16 %v3462
  %v3560 = vunpack.c.l.b16 %v3463
  %v3561 = vunpack.c.h.b16 %v3463
  %v3562 = vunpack.c.l.b16 %v3464
  %v3563 = vunpack.c.h.b16 %v3464
  %v3564 = vunpack.c.l.b16 %v3465
  %v3565 = vunpack.c.h.b16 %v3465
  %v3566 = vunpack.c.l.b16 %v3466
  %v3567 = vunpack.c.h.b16 %v3466
  %v3568 = vunpack.c.l.b16 %v3467
  %v3569 = vunpack.c.h.b16 %v3467
  %v3570 = vunpack.c.l.b16 %v3468
  %v3571 = vunpack.c.h.b16 %v3468
  %v3572 = vunpack.c.l.b16 %v3469
  %v3573 = vunpack.c.h.b16 %v3469
  %v3574 = vunpack.c.l.b16 %v3470
  %v3575 = vunpack.c.h.b16 %v3470
  %v3576 = vunpack.c.l.b16 %v3471
  %v3577 = vunpack.c.h.b16 %v3471
  %v3578 = vunpack.c.l.b16 %v3472
  %v3579 = vunpack.c.h.b16 %v3472
  %v3580 = vunpack.c.l.b16 %v3473
  %v3581 = vunpack.c.h.b16 %v3473
  %v3582 = vpack.c.b16 %v3520, %v3518
  %v3583 = vpack.c.b16 %v3521, %v3519
  %v3584 = vpack.c.b16 %v3524, %v3522
  %v3585 = vpack.c.b16 %v3525, %v3523
  %v3586 = vpack.c.b16 %v3528, %v3526
  %v3587 = vpack.c.b16 %v3529, %v3527
  %v3588 = vpack.c.b16 %v3532, %v3530
  %v3589 = vpack.c.b16 %v3533, %v3531
  %v3590 = vpack.c.b16 %v3536, %v3534
  %v3591 = vpack.c.b16 %v3537, %v3535
  %v3592 = vpack.c.b16 %v3540, %v3538
  %v3593 = vpack.c.b16 %v3541, %v3539
  %v3594 = vpack.c.b16 %v3544, %v3542
  %v3595 = vpack.c.b16 %v3545, %v3543
  %v3596 = vpack.c.b16 %v3548, %v3546
  %v3597 = vpack.c.b16 %v3549, %v3547
  %v3598 = vpack.c.b16 %v3552, %v3550
  %v3599 = vpack.c.b16 %v3553, %v3551
  %v3600 = vpack.c.b16 %v3556, %v3554
  %v3601 = vpack.c.b16 %v3557, %v3555
  %v3602 = vpack.c.b16 %v3560, %v3558
  %v3603 = vpack.c.b16 %v3561, %v3559
  %v3604 = vpack.c.b16 %v3564, %v3562
  %v3605 = vpack.c.b16 %v3565, %v3563
  %v3606 = vpack.c.b16 %v3568, %v3566
  %v3607 = vpack.c.b16 %v3569, %v3567
  %v3608 = vpack.c.b16 %v3572, %v3570
  %v3609 = vpack.c.b16 %v3573, %v3571
  %v3610 = vpack.c.b16 %v3576, %v3574
  %v3611 = vpack.c.b16 %v3577, %v3575
  %v3612 = vpack.c.b16 %v3580, %v3578
  %v3613 = vpack.c.b16 %v3581, %v3579
  %3646 = vmatprep.subr.bf16.mxu0 %v3583
  %3647 = vmatpush1.bf16.msra.mxu0 %v3582
  %3648 = vmatprep.subr.bf16.mxu0 %v3585
  %3649 = vmatpush1.bf16.msra.mxu0 %v3584
  %3650 = vmatprep.subr.bf16.mxu0 %v3587
  %3651 = vmatpush1.bf16.msra.mxu0 %v3586
  %3652 = vmatprep.subr.bf16.mxu0 %v3589
  %3653 = vmatpush1.bf16.msra.mxu0 %v3588
  %3654 = vmatprep.subr.bf16.mxu0 %v3591
  %3655 = vmatpush1.bf16.msra.mxu0 %v3590
  %3656 = vmatprep.subr.bf16.mxu0 %v3593
  %3657 = vmatpush1.bf16.msra.mxu0 %v3592
  %3658 = vmatprep.subr.bf16.mxu0 %v3595
  %3659 = vmatpush1.bf16.msra.mxu0 %v3594
  %3660 = vmatprep.subr.bf16.mxu0 %v3597
  %3661 = vmatpush1.bf16.msra.mxu0 %v3596
  %3662 = vmatprep.subr.bf16.mxu0 %v3599
  %3663 = vmatpush1.bf16.msra.mxu0 %v3598
  %3664 = vmatprep.subr.bf16.mxu0 %v3601
  %3665 = vmatpush1.bf16.msra.mxu0 %v3600
  %3666 = vmatprep.subr.bf16.mxu0 %v3603
  %3667 = vmatpush1.bf16.msra.mxu0 %v3602
  %3668 = vmatprep.subr.bf16.mxu0 %v3605
  %3669 = vmatpush1.bf16.msra.mxu0 %v3604
  %3670 = vmatprep.subr.bf16.mxu0 %v3607
  %3671 = vmatpush1.bf16.msra.mxu0 %v3606
  %3672 = vmatprep.subr.bf16.mxu0 %v3609
  %3673 = vmatpush1.bf16.msra.mxu0 %v3608
  %3674 = vmatprep.subr.bf16.mxu0 %v3611
  %3675 = vmatpush1.bf16.msra.mxu0 %v3610
  %3676 = vmatprep.subr.bf16.mxu0 %v3613
  %3677 = vmatpush1.bf16.msra.mxu0 %v3612
  %3678 = vmatprep.mubr.bf16.mxu0 %v3187
  %3679 = vmatmul.mubr.bf16.gmra.mrb[0].mxu0 %v3186
  %v3680 = vpop.f32.mrb[0].mxu0
  %v3681 = vadd.f32 %v3479, %v3680
  %v3682 = vpop.f32.mrb[0].mxu0
  %v3683 = vadd.f32 %v3483, %v3682
  %v3684 = vpop.f32.mrb[0].mxu0
  %v3685 = vadd.f32 %v3479, %v3684
  %v3686 = vpop.f32.mrb[0].mxu0
  %v3687 = vadd.f32 %v3483, %v3686
  %3688 = vmatprep.mubr.bf16.mxu0 %v3189
  %3689 = vmatmul.mubr.bf16.gmra.mrb[0].mxu0 %v3188
  %v3690 = vpop.f32.mrb[0].mxu0
  %v3691 = vadd.f32 %v3479, %v3690
  %v3692 = vpop.f32.mrb[0].mxu0
  %v3693 = vadd.f32 %v3483, %v3692
  %v3694 = vpop.f32.mrb[0].mxu0
  %v3695 = vadd.f32 %v3479, %v3694
  %v3696 = vpop.f32.mrb[0].mxu0
  %v3697 = vadd.f32 %v3483, %v3696
  %3698 = vmatprep.mubr.bf16.mxu0 %v3191
  %3699 = vmatmul.mubr.bf16.gmra.mrb[0].mxu0 %v3190
  %v3700 = vpop.f32.mrb[0].mxu0
  %v3701 = vadd.f32 %v3479, %v3700
  %v3702 = vpop.f32.mrb[0].mxu0
  %v3703 = vadd.f32 %v3483, %v3702
  %v3704 = vpop.f32.mrb[0].mxu0
  %v3705 = vadd.f32 %v3479, %v3704
  %v3706 = vpop.f32.mrb[0].mxu0
  %v3707 = vadd.f32 %v3483, %v3706
  %3708 = vmatprep.mubr.bf16.mxu0 %v3193
  %3709 = vmatmul.mubr.bf16.gmra.mrb[0].mxu0 %v3192
  %v3710 = vpop.f32.mrb[0].mxu0
  %v3711 = vadd.f32 %v3479, %v3710
  %v3712 = vpop.f32.mrb[0].mxu0
  %v3713 = vadd.f32 %v3483, %v3712
  %v3714 = vpop.f32.mrb[0].mxu0
  %v3715 = vadd.f32 %v3479, %v3714
  %v3716 = vpop.f32.mrb[0].mxu0
  %v3717 = vadd.f32 %v3483, %v3716
  %3718 = vmatprep.mubr.bf16.mxu0 %v3195
  %3719 = vmatmul.mubr.bf16.gmra.mrb[0].mxu0 %v3194
  %v3720 = vpop.f32.mrb[0].mxu0
  %v3721 = vadd.f32 %v3479, %v3720
  %v3722 = vpop.f32.mrb[0].mxu0
  %v3723 = vadd.f32 %v3483, %v3722
  %v3724 = vpop.f32.mrb[0].mxu0
  %v3725 = vadd.f32 %v3479, %v3724
  %v3726 = vpop.f32.mrb[0].mxu0
  %v3727 = vadd.f32 %v3483, %v3726
  %3728 = vmatprep.mubr.bf16.mxu0 %v3197
  %3729 = vmatmul.mubr.bf16.gmra.mrb[0].mxu0 %v3196
  %v3730 = vpop.f32.mrb[0].mxu0
  %v3731 = vadd.f32 %v3479, %v3730
  %v3732 = vpop.f32.mrb[0].mxu0
  %v3733 = vadd.f32 %v3483, %v3732
  %v3734 = vpop.f32.mrb[0].mxu0
  %v3735 = vadd.f32 %v3479, %v3734
  %v3736 = vpop.f32.mrb[0].mxu0
  %v3737 = vadd.f32 %v3483, %v3736
  %3738 = vmatprep.mubr.bf16.mxu0 %v3199
  %3739 = vmatmul.mubr.bf16.gmra.mrb[0].mxu0 %v3198
  %v3740 = vpop.f32.mrb[0].mxu0
  %v3741 = vadd.f32 %v3479, %v3740
  %v3742 = vpop.f32.mrb[0].mxu0
  %v3743 = vadd.f32 %v3483, %v3742
  %v3744 = vpop.f32.mrb[0].mxu0
  %v3745 = vadd.f32 %v3479, %v3744
  %v3746 = vpop.f32.mrb[0].mxu0
  %v3747 = vadd.f32 %v3483, %v3746
  %3748 = vmatprep.mubr.bf16.mxu0 %v3201
  %3749 = vmatmul.mubr.bf16.gmra.mrb[0].mxu0 %v3200
  %v3750 = vpop.f32.mrb[0].mxu0
  %v3751 = vadd.f32 %v3479, %v3750
  %v3752 = vpop.f32.mrb[0].mxu0
  %v3753 = vadd.f32 %v3483, %v3752
  %v3754 = vpop.f32.mrb[0].mxu0
  %v3755 = vadd.f32 %v3479, %v3754
  %v3756 = vpop.f32.mrb[0].mxu0
  %v3757 = vadd.f32 %v3483, %v3756
  %3758 = vmatprep.mubr.bf16.mxu0 %v3203
  %3759 = vmatmul.mubr.bf16.gmra.mrb[0].mxu0 %v3202
  %v3760 = vpop.f32.mrb[0].mxu0
  %v3761 = vadd.f32 %v3479, %v3760
  %v3762 = vpop.f32.mrb[0].mxu0
  %v3763 = vadd.f32 %v3483, %v3762
  %v3764 = vpop.f32.mrb[0].mxu0
  %v3765 = vadd.f32 %v3479, %v3764
  %v3766 = vpop.f32.mrb[0].mxu0
  %v3767 = vadd.f32 %v3483, %v3766
  %3768 = vmatprep.mubr.bf16.mxu0 %v3205
  %3769 = vmatmul.mubr.bf16.gmra.mrb[0].mxu0 %v3204
  %v3770 = vpop.f32.mrb[0].mxu0
  %v3771 = vadd.f32 %v3479, %v3770
  %v3772 = vpop.f32.mrb[0].mxu0
  %v3773 = vadd.f32 %v3483, %v3772
  %v3774 = vpop.f32.mrb[0].mxu0
  %v3775 = vadd.f32 %v3479, %v3774
  %v3776 = vpop.f32.mrb[0].mxu0
  %v3777 = vadd.f32 %v3483, %v3776
  %3778 = vmatprep.mubr.bf16.mxu0 %v3207
  %3779 = vmatmul.mubr.bf16.gmra.mrb[0].mxu0 %v3206
  %v3780 = vpop.f32.mrb[0].mxu0
  %v3781 = vadd.f32 %v3479, %v3780
  %v3782 = vpop.f32.mrb[0].mxu0
  %v3783 = vadd.f32 %v3483, %v3782
  %v3784 = vpop.f32.mrb[0].mxu0
  %v3785 = vadd.f32 %v3479, %v3784
  %v3786 = vpop.f32.mrb[0].mxu0
  %v3787 = vadd.f32 %v3483, %v3786
  %3788 = vmatprep.mubr.bf16.mxu0 %v3209
  %3789 = vmatmul.mubr.bf16.gmra.mrb[0].mxu0 %v3208
  %v3790 = vpop.f32.mrb[0].mxu0
  %v3791 = vadd.f32 %v3479, %v3790
  %v3792 = vpop.f32.mrb[0].mxu0
  %v3793 = vadd.f32 %v3483, %v3792
  %v3794 = vpop.f32.mrb[0].mxu0
  %v3795 = vadd.f32 %v3479, %v3794
  %v3796 = vpop.f32.mrb[0].mxu0
  %v3797 = vadd.f32 %v3483, %v3796
  %3798 = vmatprep.mubr.bf16.mxu0 %v3211
  %3799 = vmatmul.mubr.bf16.gmra.mrb[0].mxu0 %v3210
  %v3800 = vpop.f32.mrb[0].mxu0
  %v3801 = vadd.f32 %v3479, %v3800
  %v3802 = vpop.f32.mrb[0].mxu0
  %v3803 = vadd.f32 %v3483, %v3802
  %v3804 = vpop.f32.mrb[0].mxu0
  %v3805 = vadd.f32 %v3479, %v3804
  %v3806 = vpop.f32.mrb[0].mxu0
  %v3807 = vadd.f32 %v3483, %v3806
  %3808 = vmatprep.mubr.bf16.mxu0 %v3213
  %3809 = vmatmul.mubr.bf16.gmra.mrb[0].mxu0 %v3212
  %v3810 = vpop.f32.mrb[0].mxu0
  %v3811 = vadd.f32 %v3479, %v3810
  %v3812 = vpop.f32.mrb[0].mxu0
  %v3813 = vadd.f32 %v3483, %v3812
  %v3814 = vpop.f32.mrb[0].mxu0
  %v3815 = vadd.f32 %v3479, %v3814
  %v3816 = vpop.f32.mrb[0].mxu0
  %v3817 = vadd.f32 %v3483, %v3816
  %3818 = vmatprep.mubr.bf16.mxu0 %v3215
  %3819 = vmatmul.mubr.bf16.gmra.mrb[0].mxu0 %v3214
  %v3820 = vpop.f32.mrb[0].mxu0
  %v3821 = vadd.f32 %v3479, %v3820
  %v3822 = vpop.f32.mrb[0].mxu0
  %v3823 = vadd.f32 %v3483, %v3822
  %v3824 = vpop.f32.mrb[0].mxu0
  %v3825 = vadd.f32 %v3479, %v3824
  %v3826 = vpop.f32.mrb[0].mxu0
  %v3827 = vadd.f32 %v3483, %v3826
  %3828 = vmatprep.mubr.bf16.mxu0 %v3217
  %3829 = vmatmul.mubr.bf16.gmra.mrb[0].mxu0 %v3216
  %v3830 = vpop.f32.mrb[0].mxu0
  %v3831 = vadd.f32 %v3479, %v3830
  %v3832 = vpop.f32.mrb[0].mxu0
  %v3833 = vadd.f32 %v3483, %v3832
  %v3834 = vpop.f32.mrb[0].mxu0
  %v3835 = vadd.f32 %v3479, %v3834
  %v3836 = vpop.f32.mrb[0].mxu0
  %v3837 = vadd.f32 %v3483, %v3836
  %3838 = vmatprep.mubr.bf16.mxu0 %v3219
  %3839 = vmatmul.mubr.bf16.gmra.mrb[0].mxu0 %v3218
  %v3840 = vpop.f32.mrb[0].mxu0
  %v3841 = vadd.f32 %v3479, %v3840
  %v3842 = vpop.f32.mrb[0].mxu0
  %v3843 = vadd.f32 %v3483, %v3842
  %v3844 = vpop.f32.mrb[0].mxu0
  %v3845 = vadd.f32 %v3479, %v3844
  %v3846 = vpop.f32.mrb[0].mxu0
  %v3847 = vadd.f32 %v3483, %v3846
  %3848 = vmatprep.mubr.bf16.mxu0 %v3221
  %3849 = vmatmul.mubr.bf16.gmra.mrb[0].mxu0 %v3220
  %v3850 = vpop.f32.mrb[0].mxu0
  %v3851 = vadd.f32 %v3479, %v3850
  %v3852 = vpop.f32.mrb[0].mxu0
  %v3853 = vadd.f32 %v3483, %v3852
  %v3854 = vpop.f32.mrb[0].mxu0
  %v3855 = vadd.f32 %v3479, %v3854
  %v3856 = vpop.f32.mrb[0].mxu0
  %v3857 = vadd.f32 %v3483, %v3856
  %3858 = vmatprep.mubr.bf16.mxu0 %v3223
  %3859 = vmatmul.mubr.bf16.gmra.mrb[0].mxu0 %v3222
  %v3860 = vpop.f32.mrb[0].mxu0
  %v3861 = vadd.f32 %v3479, %v3860
  %v3862 = vpop.f32.mrb[0].mxu0
  %v3863 = vadd.f32 %v3483, %v3862
  %v3864 = vpop.f32.mrb[0].mxu0
  %v3865 = vadd.f32 %v3479, %v3864
  %v3866 = vpop.f32.mrb[0].mxu0
  %v3867 = vadd.f32 %v3483, %v3866
  %3868 = vmatprep.mubr.bf16.mxu0 %v3225
  %3869 = vmatmul.mubr.bf16.gmra.mrb[0].mxu0 %v3224
  %v3870 = vpop.f32.mrb[0].mxu0
  %v3871 = vadd.f32 %v3479, %v3870
  %v3872 = vpop.f32.mrb[0].mxu0
  %v3873 = vadd.f32 %v3483, %v3872
  %v3874 = vpop.f32.mrb[0].mxu0
  %v3875 = vadd.f32 %v3479, %v3874
  %v3876 = vpop.f32.mrb[0].mxu0
  %v3877 = vadd.f32 %v3483, %v3876
  %3878 = vmatprep.mubr.bf16.mxu0 %v3227
  %3879 = vmatmul.mubr.bf16.gmra.mrb[0].mxu0 %v3226
  %v3880 = vpop.f32.mrb[0].mxu0
  %v3881 = vadd.f32 %v3479, %v3880
  %v3882 = vpop.f32.mrb[0].mxu0
  %v3883 = vadd.f32 %v3483, %v3882
  %v3884 = vpop.f32.mrb[0].mxu0
  %v3885 = vadd.f32 %v3479, %v3884
  %v3886 = vpop.f32.mrb[0].mxu0
  %v3887 = vadd.f32 %v3483, %v3886
  %3888 = vmatprep.mubr.bf16.mxu0 %v3229
  %3889 = vmatmul.mubr.bf16.gmra.mrb[0].mxu0 %v3228
  %v3890 = vpop.f32.mrb[0].mxu0
  %v3891 = vadd.f32 %v3479, %v3890
  %v3892 = vpop.f32.mrb[0].mxu0
  %v3893 = vadd.f32 %v3483, %v3892
  %v3894 = vpop.f32.mrb[0].mxu0
  %v3895 = vadd.f32 %v3479, %v3894
  %v3896 = vpop.f32.mrb[0].mxu0
  %v3897 = vadd.f32 %v3483, %v3896
  %3898 = vmatprep.mubr.bf16.mxu0 %v3231
  %3899 = vmatmul.mubr.bf16.gmra.mrb[0].mxu0 %v3230
  %v3900 = vpop.f32.mrb[0].mxu0
  %v3901 = vadd.f32 %v3479, %v3900
  %v3902 = vpop.f32.mrb[0].mxu0
  %v3903 = vadd.f32 %v3483, %v3902
  %v3904 = vpop.f32.mrb[0].mxu0
  %v3905 = vadd.f32 %v3479, %v3904
  %v3906 = vpop.f32.mrb[0].mxu0
  %v3907 = vadd.f32 %v3483, %v3906
  %3908 = vmatprep.mubr.bf16.mxu0 %v3233
  %3909 = vmatmul.mubr.bf16.gmra.mrb[0].mxu0 %v3232
  %v3910 = vpop.f32.mrb[0].mxu0
  %v3911 = vadd.f32 %v3479, %v3910
  %v3912 = vpop.f32.mrb[0].mxu0
  %v3913 = vadd.f32 %v3483, %v3912
  %v3914 = vpop.f32.mrb[0].mxu0
  %v3915 = vadd.f32 %v3479, %v3914
  %v3916 = vpop.f32.mrb[0].mxu0
  %v3917 = vadd.f32 %v3483, %v3916
  %3918 = vmatprep.mubr.bf16.mxu0 %v3235
  %3919 = vmatmul.mubr.bf16.gmra.mrb[0].mxu0 %v3234
  %v3920 = vpop.f32.mrb[0].mxu0
  %v3921 = vadd.f32 %v3479, %v3920
  %v3922 = vpop.f32.mrb[0].mxu0
  %v3923 = vadd.f32 %v3483, %v3922
  %v3924 = vpop.f32.mrb[0].mxu0
  %v3925 = vadd.f32 %v3479, %v3924
  %v3926 = vpop.f32.mrb[0].mxu0
  %v3927 = vadd.f32 %v3483, %v3926
  %3928 = vmatprep.mubr.bf16.mxu0 %v3237
  %3929 = vmatmul.mubr.bf16.gmra.mrb[0].mxu0 %v3236
  %v3930 = vpop.f32.mrb[0].mxu0
  %v3931 = vadd.f32 %v3479, %v3930
  %v3932 = vpop.f32.mrb[0].mxu0
  %v3933 = vadd.f32 %v3483, %v3932
  %v3934 = vpop.f32.mrb[0].mxu0
  %v3935 = vadd.f32 %v3479, %v3934
  %v3936 = vpop.f32.mrb[0].mxu0
  %v3937 = vadd.f32 %v3483, %v3936
  %3938 = vmatprep.mubr.bf16.mxu0 %v3239
  %3939 = vmatmul.mubr.bf16.gmra.mrb[0].mxu0 %v3238
  %v3940 = vpop.f32.mrb[0].mxu0
  %v3941 = vadd.f32 %v3479, %v3940
  %v3942 = vpop.f32.mrb[0].mxu0
  %v3943 = vadd.f32 %v3483, %v3942
  %v3944 = vpop.f32.mrb[0].mxu0
  %v3945 = vadd.f32 %v3479, %v3944
  %v3946 = vpop.f32.mrb[0].mxu0
  %v3947 = vadd.f32 %v3483, %v3946
  %3948 = vmatprep.mubr.bf16.mxu0 %v3241
  %3949 = vmatmul.mubr.bf16.gmra.mrb[0].mxu0 %v3240
  %v3950 = vpop.f32.mrb[0].mxu0
  %v3951 = vadd.f32 %v3479, %v3950
  %v3952 = vpop.f32.mrb[0].mxu0
  %v3953 = vadd.f32 %v3483, %v3952
  %v3954 = vpop.f32.mrb[0].mxu0
  %v3955 = vadd.f32 %v3479, %v3954
  %v3956 = vpop.f32.mrb[0].mxu0
  %v3957 = vadd.f32 %v3483, %v3956
  %3958 = vmatprep.mubr.bf16.mxu0 %v3243
  %3959 = vmatmul.mubr.bf16.gmra.mrb[0].mxu0 %v3242
  %v3960 = vpop.f32.mrb[0].mxu0
  %v3961 = vadd.f32 %v3479, %v3960
  %v3962 = vpop.f32.mrb[0].mxu0
  %v3963 = vadd.f32 %v3483, %v3962
  %v3964 = vpop.f32.mrb[0].mxu0
  %v3965 = vadd.f32 %v3479, %v3964
  %v3966 = vpop.f32.mrb[0].mxu0
  %v3967 = vadd.f32 %v3483, %v3966
  %3968 = vmatprep.mubr.bf16.mxu0 %v3245
  %3969 = vmatmul.mubr.bf16.gmra.mrb[0].mxu0 %v3244
  %v3970 = vpop.f32.mrb[0].mxu0
  %v3971 = vadd.f32 %v3479, %v3970
  %v3972 = vpop.f32.mrb[0].mxu0
  %v3973 = vadd.f32 %v3483, %v3972
  %v3974 = vpop.f32.mrb[0].mxu0
  %v3975 = vadd.f32 %v3479, %v3974
  %v3976 = vpop.f32.mrb[0].mxu0
  %v3977 = vadd.f32 %v3483, %v3976
  %3978 = vmatprep.mubr.bf16.mxu0 %v3247
  %3979 = vmatmul.mubr.bf16.gmra.mrb[0].mxu0 %v3246
  %v3980 = vpop.f32.mrb[0].mxu0
  %v3981 = vadd.f32 %v3479, %v3980
  %v3982 = vpop.f32.mrb[0].mxu0
  %v3983 = vadd.f32 %v3483, %v3982
  %v3984 = vpop.f32.mrb[0].mxu0
  %v3985 = vadd.f32 %v3479, %v3984
  %v3986 = vpop.f32.mrb[0].mxu0
  %v3987 = vadd.f32 %v3483, %v3986
  %3988 = vmatprep.mubr.bf16.mxu0 %v3249
  %3989 = vmatmul.mubr.bf16.gmra.mrb[0].mxu0 %v3248
  %v3990 = vpop.f32.mrb[0].mxu0
  %v3991 = vadd.f32 %v3479, %v3990
  %v3992 = vpop.f32.mrb[0].mxu0
  %v3993 = vadd.f32 %v3483, %v3992
  %v3994 = vpop.f32.mrb[0].mxu0
  %v3995 = vadd.f32 %v3479, %v3994
  %v3996 = vpop.f32.mrb[0].mxu0
  %v3997 = vadd.f32 %v3483, %v3996
  %3998 = vmatprep.mubr.bf16.mxu0 %v3251
  %3999 = vmatmul.mubr.bf16.gmra.mrb[0].mxu0 %v3250
  %v4000 = vpop.f32.mrb[0].mxu0
  %v4001 = vadd.f32 %v3479, %v4000
  %v4002 = vpop.f32.mrb[0].mxu0
  %v4003 = vadd.f32 %v3483, %v4002
  %v4004 = vpop.f32.mrb[0].mxu0
  %v4005 = vadd.f32 %v3479, %v4004
  %v4006 = vpop.f32.mrb[0].mxu0
  %v4007 = vadd.f32 %v3483, %v4006
  %4008 = vmatprep.mubr.bf16.mxu0 %v3253
  %4009 = vmatmul.mubr.bf16.gmra.mrb[0].mxu0 %v3252
  %v4010 = vpop.f32.mrb[0].mxu0
  %v4011 = vadd.f32 %v3479, %v4010
  %v4012 = vpop.f32.mrb[0].mxu0
  %v4013 = vadd.f32 %v3483, %v4012
  %v4014 = vpop.f32.mrb[0].mxu0
  %v4015 = vadd.f32 %v3479, %v4014
  %v4016 = vpop.f32.mrb[0].mxu0
  %v4017 = vadd.f32 %v3483, %v4016
  %4018 = vmatprep.mubr.bf16.mxu0 %v3255
  %4019 = vmatmul.mubr.bf16.gmra.mrb[0].mxu0 %v3254
  %v4020 = vpop.f32.mrb[0].mxu0
  %v4021 = vadd.f32 %v3479, %v4020
  %v4022 = vpop.f32.mrb[0].mxu0
  %v4023 = vadd.f32 %v3483, %v4022
  %v4024 = vpop.f32.mrb[0].mxu0
  %v4025 = vadd.f32 %v3479, %v4024
  %v4026 = vpop.f32.mrb[0].mxu0
  %v4027 = vadd.f32 %v3483, %v4026
  %4028 = vmatprep.mubr.bf16.mxu0 %v3257
  %4029 = vmatmul.mubr.bf16.gmra.mrb[0].mxu0 %v3256
  %v4030 = vpop.f32.mrb[0].mxu0
  %v4031 = vadd.f32 %v3479, %v4030
  %v4032 = vpop.f32.mrb[0].mxu0
  %v4033 = vadd.f32 %v3483, %v4032
  %v4034 = vpop.f32.mrb[0].mxu0
  %v4035 = vadd.f32 %v3479, %v4034
  %v4036 = vpop.f32.mrb[0].mxu0
  %v4037 = vadd.f32 %v3483, %v4036
  %4038 = vmatprep.mubr.bf16.mxu0 %v3259
  %4039 = vmatmul.mubr.bf16.gmra.mrb[0].mxu0 %v3258
  %v4040 = vpop.f32.mrb[0].mxu0
  %v4041 = vadd.f32 %v3479, %v4040
  %v4042 = vpop.f32.mrb[0].mxu0
  %v4043 = vadd.f32 %v3483, %v4042
  %v4044 = vpop.f32.mrb[0].mxu0
  %v4045 = vadd.f32 %v3479, %v4044
  %v4046 = vpop.f32.mrb[0].mxu0
  %v4047 = vadd.f32 %v3483, %v4046
  %4048 = vmatprep.mubr.bf16.mxu0 %v3261
  %4049 = vmatmul.mubr.bf16.gmra.mrb[0].mxu0 %v3260
  %v4050 = vpop.f32.mrb[0].mxu0
  %v4051 = vadd.f32 %v3479, %v4050
  %v4052 = vpop.f32.mrb[0].mxu0
  %v4053 = vadd.f32 %v3483, %v4052
  %v4054 = vpop.f32.mrb[0].mxu0
  %v4055 = vadd.f32 %v3479, %v4054
  %v4056 = vpop.f32.mrb[0].mxu0
  %v4057 = vadd.f32 %v3483, %v4056
  %4058 = vmatprep.mubr.bf16.mxu0 %v3263
  %4059 = vmatmul.mubr.bf16.gmra.mrb[0].mxu0 %v3262
  %v4060 = vpop.f32.mrb[0].mxu0
  %v4061 = vadd.f32 %v3479, %v4060
  %v4062 = vpop.f32.mrb[0].mxu0
  %v4063 = vadd.f32 %v3483, %v4062
  %v4064 = vpop.f32.mrb[0].mxu0
  %v4065 = vadd.f32 %v3479, %v4064
  %v4066 = vpop.f32.mrb[0].mxu0
  %v4067 = vadd.f32 %v3483, %v4066
  %4068 = vmatprep.mubr.bf16.mxu0 %v3265
  %4069 = vmatmul.mubr.bf16.gmra.mrb[0].mxu0 %v3264
  %v4070 = vpop.f32.mrb[0].mxu0
  %v4071 = vadd.f32 %v3479, %v4070
  %v4072 = vpop.f32.mrb[0].mxu0
  %v4073 = vadd.f32 %v3483, %v4072
  %v4074 = vpop.f32.mrb[0].mxu0
  %v4075 = vadd.f32 %v3479, %v4074
  %v4076 = vpop.f32.mrb[0].mxu0
  %v4077 = vadd.f32 %v3483, %v4076
  %4078 = vmatprep.mubr.bf16.mxu0 %v3267
  %4079 = vmatmul.mubr.bf16.gmra.mrb[0].mxu0 %v3266
  %v4080 = vpop.f32.mrb[0].mxu0
  %v4081 = vadd.f32 %v3479, %v4080
  %v4082 = vpop.f32.mrb[0].mxu0
  %v4083 = vadd.f32 %v3483, %v4082
  %v4084 = vpop.f32.mrb[0].mxu0
  %v4085 = vadd.f32 %v3479, %v4084
  %v4086 = vpop.f32.mrb[0].mxu0
  %v4087 = vadd.f32 %v3483, %v4086
  %4088 = vmatprep.mubr.bf16.mxu0 %v3269
  %4089 = vmatmul.mubr.bf16.gmra.mrb[0].mxu0 %v3268
  %v4090 = vpop.f32.mrb[0].mxu0
  %v4091 = vadd.f32 %v3479, %v4090
  %v4092 = vpop.f32.mrb[0].mxu0
  %v4093 = vadd.f32 %v3483, %v4092
  %v4094 = vpop.f32.mrb[0].mxu0
  %v4095 = vadd.f32 %v3479, %v4094
  %v4096 = vpop.f32.mrb[0].mxu0
  %v4097 = vadd.f32 %v3483, %v4096
  %4098 = vmatprep.mubr.bf16.mxu0 %v3271
  %4099 = vmatmul.mubr.bf16.gmra.mrb[0].mxu0 %v3270
  %v4100 = vpop.f32.mrb[0].mxu0
  %v4101 = vadd.f32 %v3479, %v4100
  %v4102 = vpop.f32.mrb[0].mxu0
  %v4103 = vadd.f32 %v3483, %v4102
  %v4104 = vpop.f32.mrb[0].mxu0
  %v4105 = vadd.f32 %v3479, %v4104
  %v4106 = vpop.f32.mrb[0].mxu0
  %v4107 = vadd.f32 %v3483, %v4106
  %4108 = vmatprep.mubr.bf16.mxu0 %v3273
  %4109 = vmatmul.mubr.bf16.gmra.mrb[0].mxu0 %v3272
  %v4110 = vpop.f32.mrb[0].mxu0
  %v4111 = vadd.f32 %v3479, %v4110
  %v4112 = vpop.f32.mrb[0].mxu0
  %v4113 = vadd.f32 %v3483, %v4112
  %v4114 = vpop.f32.mrb[0].mxu0
  %v4115 = vadd.f32 %v3479, %v4114
  %v4116 = vpop.f32.mrb[0].mxu0
  %v4117 = vadd.f32 %v3483, %v4116
  %4118 = vmatprep.mubr.bf16.mxu0 %v3275
  %4119 = vmatmul.mubr.bf16.gmra.mrb[0].mxu0 %v3274
  %v4120 = vpop.f32.mrb[0].mxu0
  %v4121 = vadd.f32 %v3479, %v4120
  %v4122 = vpop.f32.mrb[0].mxu0
  %v4123 = vadd.f32 %v3483, %v4122
  %v4124 = vpop.f32.mrb[0].mxu0
  %v4125 = vadd.f32 %v3479, %v4124
  %v4126 = vpop.f32.mrb[0].mxu0
  %v4127 = vadd.f32 %v3483, %v4126
  %4128 = vmatprep.mubr.bf16.mxu0 %v3277
  %4129 = vmatmul.mubr.bf16.gmra.mrb[0].mxu0 %v3276
  %v4130 = vpop.f32.mrb[0].mxu0
  %v4131 = vadd.f32 %v3479, %v4130
  %v4132 = vpop.f32.mrb[0].mxu0
  %v4133 = vadd.f32 %v3483, %v4132
  %v4134 = vpop.f32.mrb[0].mxu0
  %v4135 = vadd.f32 %v3479, %v4134
  %v4136 = vpop.f32.mrb[0].mxu0
  %v4137 = vadd.f32 %v3483, %v4136
  %4138 = vmatprep.mubr.bf16.mxu0 %v3279
  %4139 = vmatmul.mubr.bf16.gmra.mrb[0].mxu0 %v3278
  %v4140 = vpop.f32.mrb[0].mxu0
  %v4141 = vadd.f32 %v3479, %v4140
  %v4142 = vpop.f32.mrb[0].mxu0
  %v4143 = vadd.f32 %v3483, %v4142
  %v4144 = vpop.f32.mrb[0].mxu0
  %v4145 = vadd.f32 %v3479, %v4144
  %v4146 = vpop.f32.mrb[0].mxu0
  %v4147 = vadd.f32 %v3483, %v4146
  %4148 = vmatprep.mubr.bf16.mxu0 %v3281
  %4149 = vmatmul.mubr.bf16.gmra.mrb[0].mxu0 %v3280
  %v4150 = vpop.f32.mrb[0].mxu0
  %v4151 = vadd.f32 %v3479, %v4150
  %v4152 = vpop.f32.mrb[0].mxu0
  %v4153 = vadd.f32 %v3483, %v4152
  %v4154 = vpop.f32.mrb[0].mxu0
  %v4155 = vadd.f32 %v3479, %v4154
  %v4156 = vpop.f32.mrb[0].mxu0
  %v4157 = vadd.f32 %v3483, %v4156
  %4158 = vmatprep.mubr.bf16.mxu0 %v3283
  %4159 = vmatmul.mubr.bf16.gmra.mrb[0].mxu0 %v3282
  %v4160 = vpop.f32.mrb[0].mxu0
  %v4161 = vadd.f32 %v3479, %v4160
  %v4162 = vpop.f32.mrb[0].mxu0
  %v4163 = vadd.f32 %v3483, %v4162
  %v4164 = vpop.f32.mrb[0].mxu0
  %v4165 = vadd.f32 %v3479, %v4164
  %v4166 = vpop.f32.mrb[0].mxu0
  %v4167 = vadd.f32 %v3483, %v4166
  %4168 = vmatprep.mubr.bf16.mxu0 %v3285
  %4169 = vmatmul.mubr.bf16.gmra.mrb[0].mxu0 %v3284
  %v4170 = vpop.f32.mrb[0].mxu0
  %v4171 = vadd.f32 %v3479, %v4170
  %v4172 = vpop.f32.mrb[0].mxu0
  %v4173 = vadd.f32 %v3483, %v4172
  %v4174 = vpop.f32.mrb[0].mxu0
  %v4175 = vadd.f32 %v3479, %v4174
  %v4176 = vpop.f32.mrb[0].mxu0
  %v4177 = vadd.f32 %v3483, %v4176
  %4178 = vmatprep.mubr.bf16.mxu0 %v3287
  %4179 = vmatmul.mubr.bf16.gmra.mrb[0].mxu0 %v3286
  %v4180 = vpop.f32.mrb[0].mxu0
  %v4181 = vadd.f32 %v3479, %v4180
  %v4182 = vpop.f32.mrb[0].mxu0
  %v4183 = vadd.f32 %v3483, %v4182
  %v4184 = vpop.f32.mrb[0].mxu0
  %v4185 = vadd.f32 %v3479, %v4184
  %v4186 = vpop.f32.mrb[0].mxu0
  %v4187 = vadd.f32 %v3483, %v4186
  %4188 = vmatprep.mubr.bf16.mxu0 %v3289
  %4189 = vmatmul.mubr.bf16.gmra.mrb[0].mxu0 %v3288
  %v4190 = vpop.f32.mrb[0].mxu0
  %v4191 = vadd.f32 %v3479, %v4190
  %v4192 = vpop.f32.mrb[0].mxu0
  %v4193 = vadd.f32 %v3483, %v4192
  %v4194 = vpop.f32.mrb[0].mxu0
  %v4195 = vadd.f32 %v3479, %v4194
  %v4196 = vpop.f32.mrb[0].mxu0
  %v4197 = vadd.f32 %v3483, %v4196
  %4198 = vmatprep.mubr.bf16.mxu0 %v3291
  %4199 = vmatmul.mubr.bf16.gmra.mrb[0].mxu0 %v3290
  %v4200 = vpop.f32.mrb[0].mxu0
  %v4201 = vadd.f32 %v3479, %v4200
  %v4202 = vpop.f32.mrb[0].mxu0
  %v4203 = vadd.f32 %v3483, %v4202
  %v4204 = vpop.f32.mrb[0].mxu0
  %v4205 = vadd.f32 %v3479, %v4204
  %v4206 = vpop.f32.mrb[0].mxu0
  %v4207 = vadd.f32 %v3483, %v4206
  %4208 = vmatprep.mubr.bf16.mxu0 %v3293
  %4209 = vmatmul.mubr.bf16.gmra.mrb[0].mxu0 %v3292
  %v4210 = vpop.f32.mrb[0].mxu0
  %v4211 = vadd.f32 %v3479, %v4210
  %v4212 = vpop.f32.mrb[0].mxu0
  %v4213 = vadd.f32 %v3483, %v4212
  %v4214 = vpop.f32.mrb[0].mxu0
  %v4215 = vadd.f32 %v3479, %v4214
  %v4216 = vpop.f32.mrb[0].mxu0
  %v4217 = vadd.f32 %v3483, %v4216
  %4218 = vmatprep.mubr.bf16.mxu0 %v3295
  %4219 = vmatmul.mubr.bf16.gmra.mrb[0].mxu0 %v3294
  %v4220 = vpop.f32.mrb[0].mxu0
  %v4221 = vadd.f32 %v3479, %v4220
  %v4222 = vpop.f32.mrb[0].mxu0
  %v4223 = vadd.f32 %v3483, %v4222
  %v4224 = vpop.f32.mrb[0].mxu0
  %v4225 = vadd.f32 %v3479, %v4224
  %v4226 = vpop.f32.mrb[0].mxu0
  %v4227 = vadd.f32 %v3483, %v4226
  %4228 = vmatprep.mubr.bf16.mxu0 %v3297
  %4229 = vmatmul.mubr.bf16.gmra.mrb[0].mxu0 %v3296
  %v4230 = vpop.f32.mrb[0].mxu0
  %v4231 = vadd.f32 %v3479, %v4230
  %v4232 = vpop.f32.mrb[0].mxu0
  %v4233 = vadd.f32 %v3483, %v4232
  %v4234 = vpop.f32.mrb[0].mxu0
  %v4235 = vadd.f32 %v3479, %v4234
  %v4236 = vpop.f32.mrb[0].mxu0
  %v4237 = vadd.f32 %v3483, %v4236
  %4238 = vmatprep.mubr.bf16.mxu0 %v3299
  %4239 = vmatmul.mubr.bf16.gmra.mrb[0].mxu0 %v3298
  %v4240 = vpop.f32.mrb[0].mxu0
  %v4241 = vadd.f32 %v3479, %v4240
  %v4242 = vpop.f32.mrb[0].mxu0
  %v4243 = vadd.f32 %v3483, %v4242
  %v4244 = vpop.f32.mrb[0].mxu0
  %v4245 = vadd.f32 %v3479, %v4244
  %v4246 = vpop.f32.mrb[0].mxu0
  %v4247 = vadd.f32 %v3483, %v4246
  %4248 = vmatprep.mubr.bf16.mxu0 %v3301
  %4249 = vmatmul.mubr.bf16.gmra.mrb[0].mxu0 %v3300
  %v4250 = vpop.f32.mrb[0].mxu0
  %v4251 = vadd.f32 %v3479, %v4250
  %v4252 = vpop.f32.mrb[0].mxu0
  %v4253 = vadd.f32 %v3483, %v4252
  %v4254 = vpop.f32.mrb[0].mxu0
  %v4255 = vadd.f32 %v3479, %v4254
  %v4256 = vpop.f32.mrb[0].mxu0
  %v4257 = vadd.f32 %v3483, %v4256
  %4258 = vmatprep.mubr.bf16.mxu0 %v3303
  %4259 = vmatmul.mubr.bf16.gmra.mrb[0].mxu0 %v3302
  %v4260 = vpop.f32.mrb[0].mxu0
  %v4261 = vadd.f32 %v3479, %v4260
  %v4262 = vpop.f32.mrb[0].mxu0
  %v4263 = vadd.f32 %v3483, %v4262
  %v4264 = vpop.f32.mrb[0].mxu0
  %v4265 = vadd.f32 %v3479, %v4264
  %v4266 = vpop.f32.mrb[0].mxu0
  %v4267 = vadd.f32 %v3483, %v4266
  %4268 = vmatprep.mubr.bf16.mxu0 %v3305
  %4269 = vmatmul.mubr.bf16.gmra.mrb[0].mxu0 %v3304
  %v4270 = vpop.f32.mrb[0].mxu0
  %v4271 = vadd.f32 %v3479, %v4270
  %v4272 = vpop.f32.mrb[0].mxu0
  %v4273 = vadd.f32 %v3483, %v4272
  %v4274 = vpop.f32.mrb[0].mxu0
  %v4275 = vadd.f32 %v3479, %v4274
  %v4276 = vpop.f32.mrb[0].mxu0
  %v4277 = vadd.f32 %v3483, %v4276
  %4278 = vmatprep.mubr.bf16.mxu0 %v3307
  %4279 = vmatmul.mubr.bf16.gmra.mrb[0].mxu0 %v3306
  %v4280 = vpop.f32.mrb[0].mxu0
  %v4281 = vadd.f32 %v3479, %v4280
  %v4282 = vpop.f32.mrb[0].mxu0
  %v4283 = vadd.f32 %v3483, %v4282
  %v4284 = vpop.f32.mrb[0].mxu0
  %v4285 = vadd.f32 %v3479, %v4284
  %v4286 = vpop.f32.mrb[0].mxu0
  %v4287 = vadd.f32 %v3483, %v4286
  %4288 = vmatprep.mubr.bf16.mxu0 %v3309
  %4289 = vmatmul.mubr.bf16.gmra.mrb[0].mxu0 %v3308
  %v4290 = vpop.f32.mrb[0].mxu0
  %v4291 = vadd.f32 %v3479, %v4290
  %v4292 = vpop.f32.mrb[0].mxu0
  %v4293 = vadd.f32 %v3483, %v4292
  %v4294 = vpop.f32.mrb[0].mxu0
  %v4295 = vadd.f32 %v3479, %v4294
  %v4296 = vpop.f32.mrb[0].mxu0
  %v4297 = vadd.f32 %v3483, %v4296
  %4298 = vmatprep.mubr.bf16.mxu0 %v3311
  %4299 = vmatmul.mubr.bf16.gmra.mrb[0].mxu0 %v3310
  %v4300 = vpop.f32.mrb[0].mxu0
  %v4301 = vadd.f32 %v3479, %v4300
  %v4302 = vpop.f32.mrb[0].mxu0
  %v4303 = vadd.f32 %v3483, %v4302
  %v4304 = vpop.f32.mrb[0].mxu0
  %v4305 = vadd.f32 %v3479, %v4304
  %v4306 = vpop.f32.mrb[0].mxu0
  %v4307 = vadd.f32 %v3483, %v4306
  %4308 = vmatprep.mubr.bf16.mxu0 %v3313
  %4309 = vmatmul.mubr.bf16.gmra.mrb[0].mxu0 %v3312
  %v4310 = vpop.f32.mrb[0].mxu0
  %v4311 = vadd.f32 %v3479, %v4310
  %v4312 = vpop.f32.mrb[0].mxu0
  %v4313 = vadd.f32 %v3483, %v4312
  %v4314 = vpop.f32.mrb[0].mxu0
  %v4315 = vadd.f32 %v3479, %v4314
  %v4316 = vpop.f32.mrb[0].mxu0
  %v4317 = vadd.f32 %v3483, %v4316
  %4318 = vmatprep.mubr.bf16.mxu0 %v3315
  %4319 = vmatmul.mubr.bf16.gmra.mrb[0].mxu0 %v3314
  %v4320 = vpop.f32.mrb[0].mxu0
  %v4321 = vadd.f32 %v3479, %v4320
  %v4322 = vpop.f32.mrb[0].mxu0
  %v4323 = vadd.f32 %v3483, %v4322
  %v4324 = vpop.f32.mrb[0].mxu0
  %v4325 = vadd.f32 %v3479, %v4324
  %v4326 = vpop.f32.mrb[0].mxu0
  %v4327 = vadd.f32 %v3483, %v4326
  %4328 = vmatprep.mubr.bf16.mxu0 %v3317
  %4329 = vmatmul.mubr.bf16.gmra.mrb[0].mxu0 %v3316
  %v4330 = vpop.f32.mrb[0].mxu0
  %v4331 = vadd.f32 %v3479, %v4330
  %v4332 = vpop.f32.mrb[0].mxu0
  %v4333 = vadd.f32 %v3483, %v4332
  %v4334 = vpop.f32.mrb[0].mxu0
  %v4335 = vadd.f32 %v3479, %v4334
  %v4336 = vpop.f32.mrb[0].mxu0
  %v4337 = vadd.f32 %v3483, %v4336
  %4338 = vmatprep.mubr.bf16.mxu0 %v3319
  %4339 = vmatmul.mubr.bf16.gmra.mrb[0].mxu0 %v3318
  %v4340 = vpop.f32.mrb[0].mxu0
  %v4341 = vadd.f32 %v3479, %v4340
  %v4342 = vpop.f32.mrb[0].mxu0
  %v4343 = vadd.f32 %v3483, %v4342
  %v4344 = vpop.f32.mrb[0].mxu0
  %v4345 = vadd.f32 %v3479, %v4344
  %v4346 = vpop.f32.mrb[0].mxu0
  %v4347 = vadd.f32 %v3483, %v4346
  %4348 = vmatprep.mubr.bf16.mxu0 %v3321
  %4349 = vmatmul.mubr.bf16.gmra.mrb[0].mxu0 %v3320
  %v4350 = vpop.f32.mrb[0].mxu0
  %v4351 = vadd.f32 %v3479, %v4350
  %v4352 = vpop.f32.mrb[0].mxu0
  %v4353 = vadd.f32 %v3483, %v4352
  %v4354 = vpop.f32.mrb[0].mxu0
  %v4355 = vadd.f32 %v3479, %v4354
  %v4356 = vpop.f32.mrb[0].mxu0
  %v4357 = vadd.f32 %v3483, %v4356
  %4358 = vmatprep.mubr.bf16.mxu0 %v3323
  %4359 = vmatmul.mubr.bf16.gmra.mrb[0].mxu0 %v3322
  %v4360 = vpop.f32.mrb[0].mxu0
  %v4361 = vadd.f32 %v3479, %v4360
  %v4362 = vpop.f32.mrb[0].mxu0
  %v4363 = vadd.f32 %v3483, %v4362
  %v4364 = vpop.f32.mrb[0].mxu0
  %v4365 = vadd.f32 %v3479, %v4364
  %v4366 = vpop.f32.mrb[0].mxu0
  %v4367 = vadd.f32 %v3483, %v4366
  %4368 = vmatprep.mubr.bf16.mxu0 %v3325
  %4369 = vmatmul.mubr.bf16.gmra.mrb[0].mxu0 %v3324
  %v4370 = vpop.f32.mrb[0].mxu0
  %v4371 = vadd.f32 %v3479, %v4370
  %v4372 = vpop.f32.mrb[0].mxu0
  %v4373 = vadd.f32 %v3483, %v4372
  %v4374 = vpop.f32.mrb[0].mxu0
  %v4375 = vadd.f32 %v3479, %v4374
  %v4376 = vpop.f32.mrb[0].mxu0
  %v4377 = vadd.f32 %v3483, %v4376
  %4378 = vmatprep.mubr.bf16.mxu0 %v3327
  %4379 = vmatmul.mubr.bf16.gmra.mrb[0].mxu0 %v3326
  %v4380 = vpop.f32.mrb[0].mxu0
  %v4381 = vadd.f32 %v3479, %v4380
  %v4382 = vpop.f32.mrb[0].mxu0
  %v4383 = vadd.f32 %v3483, %v4382
  %v4384 = vpop.f32.mrb[0].mxu0
  %v4385 = vadd.f32 %v3479, %v4384
  %v4386 = vpop.f32.mrb[0].mxu0
  %v4387 = vadd.f32 %v3483, %v4386
  %4388 = vmatprep.mubr.bf16.mxu0 %v3329
  %4389 = vmatmul.mubr.bf16.gmra.mrb[0].mxu0 %v3328
  %v4390 = vpop.f32.mrb[0].mxu0
  %v4391 = vadd.f32 %v3479, %v4390
  %v4392 = vpop.f32.mrb[0].mxu0
  %v4393 = vadd.f32 %v3483, %v4392
  %v4394 = vpop.f32.mrb[0].mxu0
  %v4395 = vadd.f32 %v3479, %v4394
  %v4396 = vpop.f32.mrb[0].mxu0
  %v4397 = vadd.f32 %v3483, %v4396
  %4398 = vmatprep.mubr.bf16.mxu0 %v3331
  %4399 = vmatmul.mubr.bf16.gmra.mrb[0].mxu0 %v3330
  %v4400 = vpop.f32.mrb[0].mxu0
  %v4401 = vadd.f32 %v3479, %v4400
  %v4402 = vpop.f32.mrb[0].mxu0
  %v4403 = vadd.f32 %v3483, %v4402
  %v4404 = vpop.f32.mrb[0].mxu0
  %v4405 = vadd.f32 %v3479, %v4404
  %v4406 = vpop.f32.mrb[0].mxu0
  %v4407 = vadd.f32 %v3483, %v4406
  %4408 = vmatprep.mubr.bf16.mxu0 %v3333
  %4409 = vmatmul.mubr.bf16.gmra.mrb[0].mxu0 %v3332
  %v4410 = vpop.f32.mrb[0].mxu0
  %v4411 = vadd.f32 %v3479, %v4410
  %v4412 = vpop.f32.mrb[0].mxu0
  %v4413 = vadd.f32 %v3483, %v4412
  %v4414 = vpop.f32.mrb[0].mxu0
  %v4415 = vadd.f32 %v3479, %v4414
  %v4416 = vpop.f32.mrb[0].mxu0
  %v4417 = vadd.f32 %v3483, %v4416
  %4418 = vmatprep.mubr.bf16.mxu0 %v3335
  %4419 = vmatmul.mubr.bf16.gmra.mrb[0].mxu0 %v3334
  %v4420 = vpop.f32.mrb[0].mxu0
  %v4421 = vadd.f32 %v3479, %v4420
  %v4422 = vpop.f32.mrb[0].mxu0
  %v4423 = vadd.f32 %v3483, %v4422
  %v4424 = vpop.f32.mrb[0].mxu0
  %v4425 = vadd.f32 %v3479, %v4424
  %v4426 = vpop.f32.mrb[0].mxu0
  %v4427 = vadd.f32 %v3483, %v4426
  %4428 = vmatprep.mubr.bf16.mxu0 %v3337
  %4429 = vmatmul.mubr.bf16.gmra.mrb[0].mxu0 %v3336
  %v4430 = vpop.f32.mrb[0].mxu0
  %v4431 = vadd.f32 %v3479, %v4430
  %v4432 = vpop.f32.mrb[0].mxu0
  %v4433 = vadd.f32 %v3483, %v4432
  %v4434 = vpop.f32.mrb[0].mxu0
  %v4435 = vadd.f32 %v3479, %v4434
  %v4436 = vpop.f32.mrb[0].mxu0
  %v4437 = vadd.f32 %v3483, %v4436
  %4438 = vmatprep.mubr.bf16.mxu0 %v3339
  %4439 = vmatmul.mubr.bf16.gmra.mrb[0].mxu0 %v3338
  %v4440 = vpop.f32.mrb[0].mxu0
  %v4441 = vadd.f32 %v3479, %v4440
  %v4442 = vpop.f32.mrb[0].mxu0
  %v4443 = vadd.f32 %v3483, %v4442
  %v4444 = vpop.f32.mrb[0].mxu0
  %v4445 = vadd.f32 %v3479, %v4444
  %v4446 = vpop.f32.mrb[0].mxu0
  %v4447 = vadd.f32 %v3483, %v4446
  %4448 = vmatprep.mubr.bf16.mxu0 %v3341
  %4449 = vmatmul.mubr.bf16.gmra.mrb[0].mxu0 %v3340
  %v4450 = vpop.f32.mrb[0].mxu0
  %v4451 = vadd.f32 %v3479, %v4450
  %v4452 = vpop.f32.mrb[0].mxu0
  %v4453 = vadd.f32 %v3483, %v4452
  %v4454 = vpop.f32.mrb[0].mxu0
  %v4455 = vadd.f32 %v3479, %v4454
  %v4456 = vpop.f32.mrb[0].mxu0
  %v4457 = vadd.f32 %v3483, %v4456
  %4458 = vmatprep.mubr.bf16.mxu0 %v3343
  %4459 = vmatmul.mubr.bf16.gmra.mrb[0].mxu0 %v3342
  %v4460 = vpop.f32.mrb[0].mxu0
  %v4461 = vadd.f32 %v3479, %v4460
  %v4462 = vpop.f32.mrb[0].mxu0
  %v4463 = vadd.f32 %v3483, %v4462
  %v4464 = vpop.f32.mrb[0].mxu0
  %v4465 = vadd.f32 %v3479, %v4464
  %v4466 = vpop.f32.mrb[0].mxu0
  %v4467 = vadd.f32 %v3483, %v4466
  %4468 = vmatprep.mubr.bf16.mxu0 %v3345
  %4469 = vmatmul.mubr.bf16.gmra.mrb[0].mxu0 %v3344
  %v4470 = vpop.f32.mrb[0].mxu0
  %v4471 = vadd.f32 %v3479, %v4470
  %v4472 = vpop.f32.mrb[0].mxu0
  %v4473 = vadd.f32 %v3483, %v4472
  %v4474 = vpop.f32.mrb[0].mxu0
  %v4475 = vadd.f32 %v3479, %v4474
  %v4476 = vpop.f32.mrb[0].mxu0
  %v4477 = vadd.f32 %v3483, %v4476
  %4478 = vmatprep.mubr.bf16.mxu0 %v3347
  %4479 = vmatmul.mubr.bf16.gmra.mrb[0].mxu0 %v3346
  %v4480 = vpop.f32.mrb[0].mxu0
  %v4481 = vadd.f32 %v3479, %v4480
  %v4482 = vpop.f32.mrb[0].mxu0
  %v4483 = vadd.f32 %v3483, %v4482
  %v4484 = vpop.f32.mrb[0].mxu0
  %v4485 = vadd.f32 %v3479, %v4484
  %v4486 = vpop.f32.mrb[0].mxu0
  %v4487 = vadd.f32 %v3483, %v4486
  %4488 = vmatprep.mubr.bf16.mxu0 %v3349
  %4489 = vmatmul.mubr.bf16.gmra.mrb[0].mxu0 %v3348
  %v4490 = vpop.f32.mrb[0].mxu0
  %v4491 = vadd.f32 %v3479, %v4490
  %v4492 = vpop.f32.mrb[0].mxu0
  %v4493 = vadd.f32 %v3483, %v4492
  %v4494 = vpop.f32.mrb[0].mxu0
  %v4495 = vadd.f32 %v3479, %v4494
  %v4496 = vpop.f32.mrb[0].mxu0
  %v4497 = vadd.f32 %v3483, %v4496
  %4498 = vmatprep.mubr.bf16.mxu0 %v3351
  %4499 = vmatmul.mubr.bf16.gmra.mrb[0].mxu0 %v3350
  %v4500 = vpop.f32.mrb[0].mxu0
  %v4501 = vadd.f32 %v3479, %v4500
  %v4502 = vpop.f32.mrb[0].mxu0
  %v4503 = vadd.f32 %v3483, %v4502
  %v4504 = vpop.f32.mrb[0].mxu0
  %v4505 = vadd.f32 %v3479, %v4504
  %v4506 = vpop.f32.mrb[0].mxu0
  %v4507 = vadd.f32 %v3483, %v4506
  %4508 = vmatprep.mubr.bf16.mxu0 %v3353
  %4509 = vmatmul.mubr.bf16.gmra.mrb[0].mxu0 %v3352
  %v4510 = vpop.f32.mrb[0].mxu0
  %v4511 = vadd.f32 %v3479, %v4510
  %v4512 = vpop.f32.mrb[0].mxu0
  %v4513 = vadd.f32 %v3483, %v4512
  %v4514 = vpop.f32.mrb[0].mxu0
  %v4515 = vadd.f32 %v3479, %v4514
  %v4516 = vpop.f32.mrb[0].mxu0
  %v4517 = vadd.f32 %v3483, %v4516
  %4518 = vmatprep.mubr.bf16.mxu0 %v3355
  %4519 = vmatmul.mubr.bf16.gmra.mrb[0].mxu0 %v3354
  %v4520 = vpop.f32.mrb[0].mxu0
  %v4521 = vadd.f32 %v3479, %v4520
  %v4522 = vpop.f32.mrb[0].mxu0
  %v4523 = vadd.f32 %v3483, %v4522
  %v4524 = vpop.f32.mrb[0].mxu0
  %v4525 = vadd.f32 %v3479, %v4524
  %v4526 = vpop.f32.mrb[0].mxu0
  %v4527 = vadd.f32 %v3483, %v4526
  %4528 = vmatprep.mubr.bf16.mxu0 %v3357
  %4529 = vmatmul.mubr.bf16.gmra.mrb[0].mxu0 %v3356
  %v4530 = vpop.f32.mrb[0].mxu0
  %v4531 = vadd.f32 %v3479, %v4530
  %v4532 = vpop.f32.mrb[0].mxu0
  %v4533 = vadd.f32 %v3483, %v4532
  %v4534 = vpop.f32.mrb[0].mxu0
  %v4535 = vadd.f32 %v3479, %v4534
  %v4536 = vpop.f32.mrb[0].mxu0
  %v4537 = vadd.f32 %v3483, %v4536
  %4538 = vmatprep.mubr.bf16.mxu0 %v3359
  %4539 = vmatmul.mubr.bf16.gmra.mrb[0].mxu0 %v3358
  %v4540 = vpop.f32.mrb[0].mxu0
  %v4541 = vadd.f32 %v3479, %v4540
  %v4542 = vpop.f32.mrb[0].mxu0
  %v4543 = vadd.f32 %v3483, %v4542
  %v4544 = vpop.f32.mrb[0].mxu0
  %v4545 = vadd.f32 %v3479, %v4544
  %v4546 = vpop.f32.mrb[0].mxu0
  %v4547 = vadd.f32 %v3483, %v4546
  %4548 = vmatprep.mubr.bf16.mxu0 %v3361
  %4549 = vmatmul.mubr.bf16.gmra.mrb[0].mxu0 %v3360
  %v4550 = vpop.f32.mrb[0].mxu0
  %v4551 = vadd.f32 %v3479, %v4550
  %v4552 = vpop.f32.mrb[0].mxu0
  %v4553 = vadd.f32 %v3483, %v4552
  %v4554 = vpop.f32.mrb[0].mxu0
  %v4555 = vadd.f32 %v3479, %v4554
  %v4556 = vpop.f32.mrb[0].mxu0
  %v4557 = vadd.f32 %v3483, %v4556
  %4558 = vmatprep.mubr.bf16.mxu0 %v3363
  %4559 = vmatmul.mubr.bf16.gmra.mrb[0].mxu0 %v3362
  %v4560 = vpop.f32.mrb[0].mxu0
  %v4561 = vadd.f32 %v3479, %v4560
  %v4562 = vpop.f32.mrb[0].mxu0
  %v4563 = vadd.f32 %v3483, %v4562
  %v4564 = vpop.f32.mrb[0].mxu0
  %v4565 = vadd.f32 %v3479, %v4564
  %v4566 = vpop.f32.mrb[0].mxu0
  %v4567 = vadd.f32 %v3483, %v4566
  %4568 = vmatprep.mubr.bf16.mxu0 %v3365
  %4569 = vmatmul.mubr.bf16.gmra.mrb[0].mxu0 %v3364
  %v4570 = vpop.f32.mrb[0].mxu0
  %v4571 = vadd.f32 %v3479, %v4570
  %v4572 = vpop.f32.mrb[0].mxu0
  %v4573 = vadd.f32 %v3483, %v4572
  %v4574 = vpop.f32.mrb[0].mxu0
  %v4575 = vadd.f32 %v3479, %v4574
  %v4576 = vpop.f32.mrb[0].mxu0
  %v4577 = vadd.f32 %v3483, %v4576
  %4578 = vmatprep.mubr.bf16.mxu0 %v3367
  %4579 = vmatmul.mubr.bf16.gmra.mrb[0].mxu0 %v3366
  %v4580 = vpop.f32.mrb[0].mxu0
  %v4581 = vadd.f32 %v3479, %v4580
  %v4582 = vpop.f32.mrb[0].mxu0
  %v4583 = vadd.f32 %v3483, %v4582
  %v4584 = vpop.f32.mrb[0].mxu0
  %v4585 = vadd.f32 %v3479, %v4584
  %v4586 = vpop.f32.mrb[0].mxu0
  %v4587 = vadd.f32 %v3483, %v4586
  %4588 = vmatprep.mubr.bf16.mxu0 %v3369
  %4589 = vmatmul.mubr.bf16.gmra.mrb[0].mxu0 %v3368
  %v4590 = vpop.f32.mrb[0].mxu0
  %v4591 = vadd.f32 %v3479, %v4590
  %v4592 = vpop.f32.mrb[0].mxu0
  %v4593 = vadd.f32 %v3483, %v4592
  %v4594 = vpop.f32.mrb[0].mxu0
  %v4595 = vadd.f32 %v3479, %v4594
  %v4596 = vpop.f32.mrb[0].mxu0
  %v4597 = vadd.f32 %v3483, %v4596
  %4598 = vmatprep.mubr.bf16.mxu0 %v3371
  %4599 = vmatmul.mubr.bf16.gmra.mrb[0].mxu0 %v3370
  %v4600 = vpop.f32.mrb[0].mxu0
  %v4601 = vadd.f32 %v3479, %v4600
  %v4602 = vpop.f32.mrb[0].mxu0
  %v4603 = vadd.f32 %v3483, %v4602
  %v4604 = vpop.f32.mrb[0].mxu0
  %v4605 = vadd.f32 %v3479, %v4604
  %v4606 = vpop.f32.mrb[0].mxu0
  %v4607 = vadd.f32 %v3483, %v4606
  %4608 = vmatprep.mubr.bf16.mxu0 %v3373
  %4609 = vmatmul.mubr.bf16.gmra.mrb[0].mxu0 %v3372
  %v4610 = vpop.f32.mrb[0].mxu0
  %v4611 = vadd.f32 %v3479, %v4610
  %v4612 = vpop.f32.mrb[0].mxu0
  %v4613 = vadd.f32 %v3483, %v4612
  %v4614 = vpop.f32.mrb[0].mxu0
  %v4615 = vadd.f32 %v3479, %v4614
  %v4616 = vpop.f32.mrb[0].mxu0
  %v4617 = vadd.f32 %v3483, %v4616
  %4618 = vmatprep.mubr.bf16.mxu0 %v3375
  %4619 = vmatmul.mubr.bf16.gmra.mrb[0].mxu0 %v3374
  %v4620 = vpop.f32.mrb[0].mxu0
  %v4621 = vadd.f32 %v3479, %v4620
  %v4622 = vpop.f32.mrb[0].mxu0
  %v4623 = vadd.f32 %v3483, %v4622
  %v4624 = vpop.f32.mrb[0].mxu0
  %v4625 = vadd.f32 %v3479, %v4624
  %v4626 = vpop.f32.mrb[0].mxu0
  %v4627 = vadd.f32 %v3483, %v4626
  %4628 = vmatprep.mubr.bf16.mxu0 %v3377
  %4629 = vmatmul.mubr.bf16.gmra.mrb[0].mxu0 %v3376
  %v4630 = vpop.f32.mrb[0].mxu0
  %v4631 = vadd.f32 %v3479, %v4630
  %v4632 = vpop.f32.mrb[0].mxu0
  %v4633 = vadd.f32 %v3483, %v4632
  %v4634 = vpop.f32.mrb[0].mxu0
  %v4635 = vadd.f32 %v3479, %v4634
  %v4636 = vpop.f32.mrb[0].mxu0
  %v4637 = vadd.f32 %v3483, %v4636
  %4638 = vmatprep.mubr.bf16.mxu0 %v3379
  %4639 = vmatmul.mubr.bf16.gmra.mrb[0].mxu0 %v3378
  %v4640 = vpop.f32.mrb[0].mxu0
  %v4641 = vadd.f32 %v3479, %v4640
  %v4642 = vpop.f32.mrb[0].mxu0
  %v4643 = vadd.f32 %v3483, %v4642
  %v4644 = vpop.f32.mrb[0].mxu0
  %v4645 = vadd.f32 %v3479, %v4644
  %v4646 = vpop.f32.mrb[0].mxu0
  %v4647 = vadd.f32 %v3483, %v4646
  %4648 = vmatprep.mubr.bf16.mxu0 %v3381
  %4649 = vmatmul.mubr.bf16.gmra.mrb[0].mxu0 %v3380
  %v4650 = vpop.f32.mrb[0].mxu0
  %v4651 = vadd.f32 %v3479, %v4650
  %v4652 = vpop.f32.mrb[0].mxu0
  %v4653 = vadd.f32 %v3483, %v4652
  %v4654 = vpop.f32.mrb[0].mxu0
  %v4655 = vadd.f32 %v3479, %v4654
  %v4656 = vpop.f32.mrb[0].mxu0
  %v4657 = vadd.f32 %v3483, %v4656
  %4658 = vmatprep.mubr.bf16.mxu0 %v3383
  %4659 = vmatmul.mubr.bf16.gmra.mrb[0].mxu0 %v3382
  %v4660 = vpop.f32.mrb[0].mxu0
  %v4661 = vadd.f32 %v3479, %v4660
  %v4662 = vpop.f32.mrb[0].mxu0
  %v4663 = vadd.f32 %v3483, %v4662
  %v4664 = vpop.f32.mrb[0].mxu0
  %v4665 = vadd.f32 %v3479, %v4664
  %v4666 = vpop.f32.mrb[0].mxu0
  %v4667 = vadd.f32 %v3483, %v4666
  %4668 = vmatprep.mubr.bf16.mxu0 %v3385
  %4669 = vmatmul.mubr.bf16.gmra.mrb[0].mxu0 %v3384
  %v4670 = vpop.f32.mrb[0].mxu0
  %v4671 = vadd.f32 %v3479, %v4670
  %v4672 = vpop.f32.mrb[0].mxu0
  %v4673 = vadd.f32 %v3483, %v4672
  %v4674 = vpop.f32.mrb[0].mxu0
  %v4675 = vadd.f32 %v3479, %v4674
  %v4676 = vpop.f32.mrb[0].mxu0
  %v4677 = vadd.f32 %v3483, %v4676
  %4678 = vmatprep.mubr.bf16.mxu0 %v3387
  %4679 = vmatmul.mubr.bf16.gmra.mrb[0].mxu0 %v3386
  %v4680 = vpop.f32.mrb[0].mxu0
  %v4681 = vadd.f32 %v3479, %v4680
  %v4682 = vpop.f32.mrb[0].mxu0
  %v4683 = vadd.f32 %v3483, %v4682
  %v4684 = vpop.f32.mrb[0].mxu0
  %v4685 = vadd.f32 %v3479, %v4684
  %v4686 = vpop.f32.mrb[0].mxu0
  %v4687 = vadd.f32 %v3483, %v4686
  %4688 = vmatprep.mubr.bf16.mxu0 %v3389
  %4689 = vmatmul.mubr.bf16.gmra.mrb[0].mxu0 %v3388
  %v4690 = vpop.f32.mrb[0].mxu0
  %v4691 = vadd.f32 %v3479, %v4690
  %v4692 = vpop.f32.mrb[0].mxu0
  %v4693 = vadd.f32 %v3483, %v4692
  %v4694 = vpop.f32.mrb[0].mxu0
  %v4695 = vadd.f32 %v3479, %v4694
  %v4696 = vpop.f32.mrb[0].mxu0
  %v4697 = vadd.f32 %v3483, %v4696
  %4698 = vmatprep.mubr.bf16.mxu0 %v3391
  %4699 = vmatmul.mubr.bf16.gmra.mrb[0].mxu0 %v3390
  %v4700 = vpop.f32.mrb[0].mxu0
  %v4701 = vadd.f32 %v3479, %v4700
  %v4702 = vpop.f32.mrb[0].mxu0
  %v4703 = vadd.f32 %v3483, %v4702
  %v4704 = vpop.f32.mrb[0].mxu0
  %v4705 = vadd.f32 %v3479, %v4704
  %v4706 = vpop.f32.mrb[0].mxu0
  %v4707 = vadd.f32 %v3483, %v4706
  %4708 = vmatprep.mubr.bf16.mxu0 %v3393
  %4709 = vmatmul.mubr.bf16.gmra.mrb[0].mxu0 %v3392
  %v4710 = vpop.f32.mrb[0].mxu0
  %v4711 = vadd.f32 %v3479, %v4710
  %v4712 = vpop.f32.mrb[0].mxu0
  %v4713 = vadd.f32 %v3483, %v4712
  %v4714 = vpop.f32.mrb[0].mxu0
  %v4715 = vadd.f32 %v3479, %v4714
  %v4716 = vpop.f32.mrb[0].mxu0
  %v4717 = vadd.f32 %v3483, %v4716
  %4718 = vmatprep.mubr.bf16.mxu0 %v3395
  %4719 = vmatmul.mubr.bf16.gmra.mrb[0].mxu0 %v3394
  %v4720 = vpop.f32.mrb[0].mxu0
  %v4721 = vadd.f32 %v3479, %v4720
  %v4722 = vpop.f32.mrb[0].mxu0
  %v4723 = vadd.f32 %v3483, %v4722
  %v4724 = vpop.f32.mrb[0].mxu0
  %v4725 = vadd.f32 %v3479, %v4724
  %v4726 = vpop.f32.mrb[0].mxu0
  %v4727 = vadd.f32 %v3483, %v4726
  %4728 = vmatprep.mubr.bf16.mxu0 %v3397
  %4729 = vmatmul.mubr.bf16.gmra.mrb[0].mxu0 %v3396
  %v4730 = vpop.f32.mrb[0].mxu0
  %v4731 = vadd.f32 %v3479, %v4730
  %v4732 = vpop.f32.mrb[0].mxu0
  %v4733 = vadd.f32 %v3483, %v4732
  %v4734 = vpop.f32.mrb[0].mxu0
  %v4735 = vadd.f32 %v3479, %v4734
  %v4736 = vpop.f32.mrb[0].mxu0
  %v4737 = vadd.f32 %v3483, %v4736
  %4738 = vmatprep.mubr.bf16.mxu0 %v3399
  %4739 = vmatmul.mubr.bf16.gmra.mrb[0].mxu0 %v3398
  %v4740 = vpop.f32.mrb[0].mxu0
  %v4741 = vadd.f32 %v3479, %v4740
  %v4742 = vpop.f32.mrb[0].mxu0
  %v4743 = vadd.f32 %v3483, %v4742
  %v4744 = vpop.f32.mrb[0].mxu0
  %v4745 = vadd.f32 %v3479, %v4744
  %v4746 = vpop.f32.mrb[0].mxu0
  %v4747 = vadd.f32 %v3483, %v4746
  %4748 = vmatprep.mubr.bf16.mxu0 %v3401
  %4749 = vmatmul.mubr.bf16.gmra.mrb[0].mxu0 %v3400
  %v4750 = vpop.f32.mrb[0].mxu0
  %v4751 = vadd.f32 %v3479, %v4750
  %v4752 = vpop.f32.mrb[0].mxu0
  %v4753 = vadd.f32 %v3483, %v4752
  %v4754 = vpop.f32.mrb[0].mxu0
  %v4755 = vadd.f32 %v3479, %v4754
  %v4756 = vpop.f32.mrb[0].mxu0
  %v4757 = vadd.f32 %v3483, %v4756
  %4758 = vmatprep.mubr.bf16.mxu0 %v3403
  %4759 = vmatmul.mubr.bf16.gmra.mrb[0].mxu0 %v3402
  %v4760 = vpop.f32.mrb[0].mxu0
  %v4761 = vadd.f32 %v3479, %v4760
  %v4762 = vpop.f32.mrb[0].mxu0
  %v4763 = vadd.f32 %v3483, %v4762
  %v4764 = vpop.f32.mrb[0].mxu0
  %v4765 = vadd.f32 %v3479, %v4764
  %v4766 = vpop.f32.mrb[0].mxu0
  %v4767 = vadd.f32 %v3483, %v4766
  %4768 = vmatprep.mubr.bf16.mxu0 %v3405
  %4769 = vmatmul.mubr.bf16.gmra.mrb[0].mxu0 %v3404
  %v4770 = vpop.f32.mrb[0].mxu0
  %v4771 = vadd.f32 %v3479, %v4770
  %v4772 = vpop.f32.mrb[0].mxu0
  %v4773 = vadd.f32 %v3483, %v4772
  %v4774 = vpop.f32.mrb[0].mxu0
  %v4775 = vadd.f32 %v3479, %v4774
  %v4776 = vpop.f32.mrb[0].mxu0
  %v4777 = vadd.f32 %v3483, %v4776
  %4778 = vmatprep.mubr.bf16.mxu0 %v3407
  %4779 = vmatmul.mubr.bf16.gmra.mrb[0].mxu0 %v3406
  %v4780 = vpop.f32.mrb[0].mxu0
  %v4781 = vadd.f32 %v3479, %v4780
  %v4782 = vpop.f32.mrb[0].mxu0
  %v4783 = vadd.f32 %v3483, %v4782
  %v4784 = vpop.f32.mrb[0].mxu0
  %v4785 = vadd.f32 %v3479, %v4784
  %v4786 = vpop.f32.mrb[0].mxu0
  %v4787 = vadd.f32 %v3483, %v4786
  %4788 = vmatprep.mubr.bf16.mxu0 %v3409
  %4789 = vmatmul.mubr.bf16.gmra.mrb[0].mxu0 %v3408
  %v4790 = vpop.f32.mrb[0].mxu0
  %v4791 = vadd.f32 %v3479, %v4790
  %v4792 = vpop.f32.mrb[0].mxu0
  %v4793 = vadd.f32 %v3483, %v4792
  %v4794 = vpop.f32.mrb[0].mxu0
  %v4795 = vadd.f32 %v3479, %v4794
  %v4796 = vpop.f32.mrb[0].mxu0
  %v4797 = vadd.f32 %v3483, %v4796
  %4798 = vmatprep.mubr.bf16.mxu0 %v3411
  %4799 = vmatmul.mubr.bf16.gmra.mrb[0].mxu0 %v3410
  %v4800 = vpop.f32.mrb[0].mxu0
  %v4801 = vadd.f32 %v3479, %v4800
  %v4802 = vpop.f32.mrb[0].mxu0
  %v4803 = vadd.f32 %v3483, %v4802
  %v4804 = vpop.f32.mrb[0].mxu0
  %v4805 = vadd.f32 %v3479, %v4804
  %v4806 = vpop.f32.mrb[0].mxu0
  %v4807 = vadd.f32 %v3483, %v4806
  %4808 = vmatprep.mubr.bf16.mxu0 %v3413
  %4809 = vmatmul.mubr.bf16.gmra.mrb[0].mxu0 %v3412
  %v4810 = vpop.f32.mrb[0].mxu0
  %v4811 = vadd.f32 %v3479, %v4810
  %v4812 = vpop.f32.mrb[0].mxu0
  %v4813 = vadd.f32 %v3483, %v4812
  %v4814 = vpop.f32.mrb[0].mxu0
  %v4815 = vadd.f32 %v3479, %v4814
  %v4816 = vpop.f32.mrb[0].mxu0
  %v4817 = vadd.f32 %v3483, %v4816
  %4818 = vmatprep.mubr.bf16.mxu0 %v3415
  %4819 = vmatmul.mubr.bf16.gmra.mrb[0].mxu0 %v3414
  %v4820 = vpop.f32.mrb[0].mxu0
  %v4821 = vadd.f32 %v3479, %v4820
  %v4822 = vpop.f32.mrb[0].mxu0
  %v4823 = vadd.f32 %v3483, %v4822
  %v4824 = vpop.f32.mrb[0].mxu0
  %v4825 = vadd.f32 %v3479, %v4824
  %v4826 = vpop.f32.mrb[0].mxu0
  %v4827 = vadd.f32 %v3483, %v4826
  %4828 = vmatprep.mubr.bf16.mxu0 %v3417
  %4829 = vmatmul.mubr.bf16.gmra.mrb[0].mxu0 %v3416
  %v4830 = vpop.f32.mrb[0].mxu0
  %v4831 = vadd.f32 %v3479, %v4830
  %v4832 = vpop.f32.mrb[0].mxu0
  %v4833 = vadd.f32 %v3483, %v4832
  %v4834 = vpop.f32.mrb[0].mxu0
  %v4835 = vadd.f32 %v3479, %v4834
  %v4836 = vpop.f32.mrb[0].mxu0
  %v4837 = vadd.f32 %v3483, %v4836
  %4838 = vmatprep.mubr.bf16.mxu0 %v3419
  %4839 = vmatmul.mubr.bf16.gmra.mrb[0].mxu0 %v3418
  %v4840 = vpop.f32.mrb[0].mxu0
  %v4841 = vadd.f32 %v3479, %v4840
  %v4842 = vpop.f32.mrb[0].mxu0
  %v4843 = vadd.f32 %v3483, %v4842
  %v4844 = vpop.f32.mrb[0].mxu0
  %v4845 = vadd.f32 %v3479, %v4844
  %v4846 = vpop.f32.mrb[0].mxu0
  %v4847 = vadd.f32 %v3483, %v4846
  %4848 = vmatprep.mubr.bf16.mxu0 %v3421
  %4849 = vmatmul.mubr.bf16.gmra.mrb[0].mxu0 %v3420
  %v4850 = vpop.f32.mrb[0].mxu0
  %v4851 = vadd.f32 %v3479, %v4850
  %v4852 = vpop.f32.mrb[0].mxu0
  %v4853 = vadd.f32 %v3483, %v4852
  %v4854 = vpop.f32.mrb[0].mxu0
  %v4855 = vadd.f32 %v3479, %v4854
  %v4856 = vpop.f32.mrb[0].mxu0
  %v4857 = vadd.f32 %v3483, %v4856
  %4858 = vmatprep.mubr.bf16.mxu0 %v3423
  %4859 = vmatmul.mubr.bf16.gmra.mrb[0].mxu0 %v3422
  %v4860 = vpop.f32.mrb[0].mxu0
  %v4861 = vadd.f32 %v3479, %v4860
  %v4862 = vpop.f32.mrb[0].mxu0
  %v4863 = vadd.f32 %v3483, %v4862
  %v4864 = vpop.f32.mrb[0].mxu0
  %v4865 = vadd.f32 %v3479, %v4864
  %v4866 = vpop.f32.mrb[0].mxu0
  %v4867 = vadd.f32 %v3483, %v4866
  %4868 = vmatprep.mubr.bf16.mxu0 %v3425
  %4869 = vmatmul.mubr.bf16.gmra.mrb[0].mxu0 %v3424
  %v4870 = vpop.f32.mrb[0].mxu0
  %v4871 = vadd.f32 %v3479, %v4870
  %v4872 = vpop.f32.mrb[0].mxu0
  %v4873 = vadd.f32 %v3483, %v4872
  %v4874 = vpop.f32.mrb[0].mxu0
  %v4875 = vadd.f32 %v3479, %v4874
  %v4876 = vpop.f32.mrb[0].mxu0
  %v4877 = vadd.f32 %v3483, %v4876
  %4878 = vmatprep.mubr.bf16.mxu0 %v3427
  %4879 = vmatmul.mubr.bf16.gmra.mrb[0].mxu0 %v3426
  %v4880 = vpop.f32.mrb[0].mxu0
  %v4881 = vadd.f32 %v3479, %v4880
  %v4882 = vpop.f32.mrb[0].mxu0
  %v4883 = vadd.f32 %v3483, %v4882
  %v4884 = vpop.f32.mrb[0].mxu0
  %v4885 = vadd.f32 %v3479, %v4884
  %v4886 = vpop.f32.mrb[0].mxu0
  %v4887 = vadd.f32 %v3483, %v4886
  %4888 = vmatprep.mubr.bf16.mxu0 %v3429
  %4889 = vmatmul.mubr.bf16.gmra.mrb[0].mxu0 %v3428
  %v4890 = vpop.f32.mrb[0].mxu0
  %v4891 = vadd.f32 %v3479, %v4890
  %v4892 = vpop.f32.mrb[0].mxu0
  %v4893 = vadd.f32 %v3483, %v4892
  %v4894 = vpop.f32.mrb[0].mxu0
  %v4895 = vadd.f32 %v3479, %v4894
  %v4896 = vpop.f32.mrb[0].mxu0
  %v4897 = vadd.f32 %v3483, %v4896
  %4898 = vmatprep.mubr.bf16.mxu0 %v3431
  %4899 = vmatmul.mubr.bf16.gmra.mrb[0].mxu0 %v3430
  %v4900 = vpop.f32.mrb[0].mxu0
  %v4901 = vadd.f32 %v3479, %v4900
  %v4902 = vpop.f32.mrb[0].mxu0
  %v4903 = vadd.f32 %v3483, %v4902
  %v4904 = vpop.f32.mrb[0].mxu0
  %v4905 = vadd.f32 %v3479, %v4904
  %v4906 = vpop.f32.mrb[0].mxu0
  %v4907 = vadd.f32 %v3483, %v4906
  %4908 = vmatprep.mubr.bf16.mxu0 %v3433
  %4909 = vmatmul.mubr.bf16.gmra.mrb[0].mxu0 %v3432
  %v4910 = vpop.f32.mrb[0].mxu0
  %v4911 = vadd.f32 %v3479, %v4910
  %v4912 = vpop.f32.mrb[0].mxu0
  %v4913 = vadd.f32 %v3483, %v4912
  %v4914 = vpop.f32.mrb[0].mxu0
  %v4915 = vadd.f32 %v3479, %v4914
  %v4916 = vpop.f32.mrb[0].mxu0
  %v4917 = vadd.f32 %v3483, %v4916
  %4918 = vmatprep.mubr.bf16.mxu0 %v3435
  %4919 = vmatmul.mubr.bf16.gmra.mrb[0].mxu0 %v3434
  %v4920 = vpop.f32.mrb[0].mxu0
  %v4921 = vadd.f32 %v3479, %v4920
  %v4922 = vpop.f32.mrb[0].mxu0
  %v4923 = vadd.f32 %v3483, %v4922
  %v4924 = vpop.f32.mrb[0].mxu0
  %v4925 = vadd.f32 %v3479, %v4924
  %v4926 = vpop.f32.mrb[0].mxu0
  %v4927 = vadd.f32 %v3483, %v4926
  %4928 = vmatprep.mubr.bf16.mxu0 %v3437
  %4929 = vmatmul.mubr.bf16.gmra.mrb[0].mxu0 %v3436
  %v4930 = vpop.f32.mrb[0].mxu0
  %v4931 = vadd.f32 %v3479, %v4930
  %v4932 = vpop.f32.mrb[0].mxu0
  %v4933 = vadd.f32 %v3483, %v4932
  %v4934 = vpop.f32.mrb[0].mxu0
  %v4935 = vadd.f32 %v3479, %v4934
  %v4936 = vpop.f32.mrb[0].mxu0
  %v4937 = vadd.f32 %v3483, %v4936
  %4938 = vmatprep.mubr.bf16.mxu0 %v3439
  %4939 = vmatmul.mubr.bf16.gmra.mrb[0].mxu0 %v3438
  %v4940 = vpop.f32.mrb[0].mxu0
  %v4941 = vadd.f32 %v3479, %v4940
  %v4942 = vpop.f32.mrb[0].mxu0
  %v4943 = vadd.f32 %v3483, %v4942
  %v4944 = vpop.f32.mrb[0].mxu0
  %v4945 = vadd.f32 %v3479, %v4944
  %v4946 = vpop.f32.mrb[0].mxu0
  %v4947 = vadd.f32 %v3483, %v4946
  %4948 = vmatprep.mubr.bf16.mxu0 %v3441
  %4949 = vmatmul.mubr.bf16.gmra.mrb[0].mxu0 %v3440
  %v4950 = vpop.f32.mrb[0].mxu0
  %v4951 = vadd.f32 %v3479, %v4950
  %v4952 = vpop.f32.mrb[0].mxu0
  %v4953 = vadd.f32 %v3483, %v4952
  %v4954 = vpop.f32.mrb[0].mxu0
  %v4955 = vadd.f32 %v3479, %v4954
  %v4956 = vpop.f32.mrb[0].mxu0
  %v4957 = vadd.f32 %v3483, %v4956
  %4958 = vdwg.mxu0
  %v4959 = vtanh.pop %v3681
  %v4960 = vtanh.pop %v3683
  %v4961 = vtanh.pop %v3685
  %v4962 = vtanh.pop %v3687
  %v4963 = vtanh.pop %v3691
  %v4964 = vtanh.pop %v3693
  %v4965 = vtanh.pop %v3695
  %v4966 = vtanh.pop %v3697
  %v4967 = vtanh.pop %v3701
  %v4968 = vtanh.pop %v3703
  %v4969 = vtanh.pop %v3705
  %v4970 = vtanh.pop %v3707
  %v4971 = vtanh.pop %v3711
  %v4972 = vtanh.pop %v3713
  %v4973 = vtanh.pop %v3715
  %v4974 = vtanh.pop %v3717
  %v4975 = vtanh.pop %v3721
  %v4976 = vtanh.pop %v3723
  %v4977 = vtanh.pop %v3725
  %v4978 = vtanh.pop %v3727
  %v4979 = vtanh.pop %v3731
  %v4980 = vtanh.pop %v3733
  %v4981 = vtanh.pop %v3735
  %v4982 = vtanh.pop %v3737
  %v4983 = vtanh.pop %v3741
  %v4984 = vtanh.pop %v3743
  %v4985 = vtanh.pop %v3745
  %v4986 = vtanh.pop %v3747
  %v4987 = vtanh.pop %v3751
  %v4988 = vtanh.pop %v3753
  %v4989 = vtanh.pop %v3755
  %v4990 = vtanh.pop %v3757
  %v4991 = vtanh.pop %v3761
  %v4992 = vtanh.pop %v3763
  %v4993 = vtanh.pop %v3765
  %v4994 = vtanh.pop %v3767
  %v4995 = vtanh.pop %v3771
  %v4996 = vtanh.pop %v3773
  %v4997 = vtanh.pop %v3775
  %v4998 = vtanh.pop %v3777
  %v4999 = vtanh.pop %v3781
  %v5000 = vtanh.pop %v3783
  %v5001 = vtanh.pop %v3785
  %v5002 = vtanh.pop %v3787
  %v5003 = vtanh.pop %v3791
  %v5004 = vtanh.pop %v3793
  %v5005 = vtanh.pop %v3795
  %v5006 = vtanh.pop %v3797
  %v5007 = vtanh.pop %v3801
  %v5008 = vtanh.pop %v3803
  %v5009 = vtanh.pop %v3805
  %v5010 = vtanh.pop %v3807
  %v5011 = vtanh.pop %v3811
  %v5012 = vtanh.pop %v3813
  %v5013 = vtanh.pop %v3815
  %v5014 = vtanh.pop %v3817
  %v5015 = vtanh.pop %v3821
  %v5016 = vtanh.pop %v3823
  %v5017 = vtanh.pop %v3825
  %v5018 = vtanh.pop %v3827
  %v5019 = vtanh.pop %v3831
  %v5020 = vtanh.pop %v3833
  %v5021 = vtanh.pop %v3835
  %v5022 = vtanh.pop %v3837
  %v5023 = vtanh.pop %v3841
  %v5024 = vtanh.pop %v3843
  %v5025 = vtanh.pop %v3845
  %v5026 = vtanh.pop %v3847
  %v5027 = vtanh.pop %v3851
  %v5028 = vtanh.pop %v3853
  %v5029 = vtanh.pop %v3855
  %v5030 = vtanh.pop %v3857
  %v5031 = vtanh.pop %v3861
  %v5032 = vtanh.pop %v3863
  %v5033 = vtanh.pop %v3865
  %v5034 = vtanh.pop %v3867
  %v5035 = vtanh.pop %v3871
  %v5036 = vtanh.pop %v3873
  %v5037 = vtanh.pop %v3875
  %v5038 = vtanh.pop %v3877
  %v5039 = vtanh.pop %v3881
  %v5040 = vtanh.pop %v3883
  %v5041 = vtanh.pop %v3885
  %v5042 = vtanh.pop %v3887
  %v5043 = vtanh.pop %v3891
  %v5044 = vtanh.pop %v3893
  %v5045 = vtanh.pop %v3895
  %v5046 = vtanh.pop %v3897
  %v5047 = vtanh.pop %v3901
  %v5048 = vtanh.pop %v3903
  %v5049 = vtanh.pop %v3905
  %v5050 = vtanh.pop %v3907
  %v5051 = vtanh.pop %v3911
  %v5052 = vtanh.pop %v3913
  %v5053 = vtanh.pop %v3915
  %v5054 = vtanh.pop %v3917
  %v5055 = vtanh.pop %v3921
  %v5056 = vtanh.pop %v3923
  %v5057 = vtanh.pop %v3925
  %v5058 = vtanh.pop %v3927
  %v5059 = vtanh.pop %v3931
  %v5060 = vtanh.pop %v3933
  %v5061 = vtanh.pop %v3935
  %v5062 = vtanh.pop %v3937
  %v5063 = vtanh.pop %v3941
  %v5064 = vtanh.pop %v3943
  %v5065 = vtanh.pop %v3945
  %v5066 = vtanh.pop %v3947
  %v5067 = vtanh.pop %v3951
  %v5068 = vtanh.pop %v3953
  %v5069 = vtanh.pop %v3955
  %v5070 = vtanh.pop %v3957
  %v5071 = vtanh.pop %v3961
  %v5072 = vtanh.pop %v3963
  %v5073 = vtanh.pop %v3965
  %v5074 = vtanh.pop %v3967
  %v5075 = vtanh.pop %v3971
  %v5076 = vtanh.pop %v3973
  %v5077 = vtanh.pop %v3975
  %v5078 = vtanh.pop %v3977
  %v5079 = vtanh.pop %v3981
  %v5080 = vtanh.pop %v3983
  %v5081 = vtanh.pop %v3985
  %v5082 = vtanh.pop %v3987
  %v5083 = vtanh.pop %v3991
  %v5084 = vtanh.pop %v3993
  %v5085 = vtanh.pop %v3995
  %v5086 = vtanh.pop %v3997
  %v5087 = vtanh.pop %v4001
  %v5088 = vtanh.pop %v4003
  %v5089 = vtanh.pop %v4005
  %v5090 = vtanh.pop %v4007
  %v5091 = vtanh.pop %v4011
  %v5092 = vtanh.pop %v4013
  %v5093 = vtanh.pop %v4015
  %v5094 = vtanh.pop %v4017
  %v5095 = vtanh.pop %v4021
  %v5096 = vtanh.pop %v4023
  %v5097 = vtanh.pop %v4025
  %v5098 = vtanh.pop %v4027
  %v5099 = vtanh.pop %v4031
  %v5100 = vtanh.pop %v4033
  %v5101 = vtanh.pop %v4035
  %v5102 = vtanh.pop %v4037
  %v5103 = vtanh.pop %v4041
  %v5104 = vtanh.pop %v4043
  %v5105 = vtanh.pop %v4045
  %v5106 = vtanh.pop %v4047
  %v5107 = vtanh.pop %v4051
  %v5108 = vtanh.pop %v4053
  %v5109 = vtanh.pop %v4055
  %v5110 = vtanh.pop %v4057
  %v5111 = vtanh.pop %v4061
  %v5112 = vtanh.pop %v4063
  %v5113 = vtanh.pop %v4065
  %v5114 = vtanh.pop %v4067
  %v5115 = vtanh.pop %v4071
  %v5116 = vtanh.pop %v4073
  %v5117 = vtanh.pop %v4075
  %v5118 = vtanh.pop %v4077
  %v5119 = vtanh.pop %v4081
  %v5120 = vtanh.pop %v4083
  %v5121 = vtanh.pop %v4085
  %v5122 = vtanh.pop %v4087
  %v5123 = vtanh.pop %v4091
  %v5124 = vtanh.pop %v4093
  %v5125 = vtanh.pop %v4095
  %v5126 = vtanh.pop %v4097
  %v5127 = vtanh.pop %v4101
  %v5128 = vtanh.pop %v4103
  %v5129 = vtanh.pop %v4105
  %v5130 = vtanh.pop %v4107
  %v5131 = vtanh.pop %v4111
  %v5132 = vtanh.pop %v4113
  %v5133 = vtanh.pop %v4115
  %v5134 = vtanh.pop %v4117
  %v5135 = vtanh.pop %v4121
  %v5136 = vtanh.pop %v4123
  %v5137 = vtanh.pop %v4125
  %v5138 = vtanh.pop %v4127
  %v5139 = vtanh.pop %v4131
  %v5140 = vtanh.pop %v4133
  %v5141 = vtanh.pop %v4135
  %v5142 = vtanh.pop %v4137
  %v5143 = vtanh.pop %v4141
  %v5144 = vtanh.pop %v4143
  %v5145 = vtanh.pop %v4145
  %v5146 = vtanh.pop %v4147
  %v5147 = vtanh.pop %v4151
  %v5148 = vtanh.pop %v4153
  %v5149 = vtanh.pop %v4155
  %v5150 = vtanh.pop %v4157
  %v5151 = vtanh.pop %v4161
  %v5152 = vtanh.pop %v4163
  %v5153 = vtanh.pop %v4165
  %v5154 = vtanh.pop %v4167
  %v5155 = vtanh.pop %v4171
  %v5156 = vtanh.pop %v4173
  %v5157 = vtanh.pop %v4175
  %v5158 = vtanh.pop %v4177
  %v5159 = vtanh.pop %v4181
  %v5160 = vtanh.pop %v4183
  %v5161 = vtanh.pop %v4185
  %v5162 = vtanh.pop %v4187
  %v5163 = vtanh.pop %v4191
  %v5164 = vtanh.pop %v4193
  %v5165 = vtanh.pop %v4195
  %v5166 = vtanh.pop %v4197
  %v5167 = vtanh.pop %v4201
  %v5168 = vtanh.pop %v4203
  %v5169 = vtanh.pop %v4205
  %v5170 = vtanh.pop %v4207
  %v5171 = vtanh.pop %v4211
  %v5172 = vtanh.pop %v4213
  %v5173 = vtanh.pop %v4215
  %v5174 = vtanh.pop %v4217
  %v5175 = vtanh.pop %v4221
  %v5176 = vtanh.pop %v4223
  %v5177 = vtanh.pop %v4225
  %v5178 = vtanh.pop %v4227
  %v5179 = vtanh.pop %v4231
  %v5180 = vtanh.pop %v4233
  %v5181 = vtanh.pop %v4235
  %v5182 = vtanh.pop %v4237
  %v5183 = vtanh.pop %v4241
  %v5184 = vtanh.pop %v4243
  %v5185 = vtanh.pop %v4245
  %v5186 = vtanh.pop %v4247
  %v5187 = vtanh.pop %v4251
  %v5188 = vtanh.pop %v4253
  %v5189 = vtanh.pop %v4255
  %v5190 = vtanh.pop %v4257
  %v5191 = vtanh.pop %v4261
  %v5192 = vtanh.pop %v4263
  %v5193 = vtanh.pop %v4265
  %v5194 = vtanh.pop %v4267
  %v5195 = vtanh.pop %v4271
  %v5196 = vtanh.pop %v4273
  %v5197 = vtanh.pop %v4275
  %v5198 = vtanh.pop %v4277
  %v5199 = vtanh.pop %v4281
  %v5200 = vtanh.pop %v4283
  %v5201 = vtanh.pop %v4285
  %v5202 = vtanh.pop %v4287
  %v5203 = vtanh.pop %v4291
  %v5204 = vtanh.pop %v4293
  %v5205 = vtanh.pop %v4295
  %v5206 = vtanh.pop %v4297
  %v5207 = vtanh.pop %v4301
  %v5208 = vtanh.pop %v4303
  %v5209 = vtanh.pop %v4305
  %v5210 = vtanh.pop %v4307
  %v5211 = vtanh.pop %v4311
  %v5212 = vtanh.pop %v4313
  %v5213 = vtanh.pop %v4315
  %v5214 = vtanh.pop %v4317
  %v5215 = vtanh.pop %v4321
  %v5216 = vtanh.pop %v4323
  %v5217 = vtanh.pop %v4325
  %v5218 = vtanh.pop %v4327
  %v5219 = vtanh.pop %v4331
  %v5220 = vtanh.pop %v4333
  %v5221 = vtanh.pop %v4335
  %v5222 = vtanh.pop %v4337
  %v5223 = vtanh.pop %v4341
  %v5224 = vtanh.pop %v4343
  %v5225 = vtanh.pop %v4345
  %v5226 = vtanh.pop %v4347
  %v5227 = vtanh.pop %v4351
  %v5228 = vtanh.pop %v4353
  %v5229 = vtanh.pop %v4355
  %v5230 = vtanh.pop %v4357
  %v5231 = vtanh.pop %v4361
  %v5232 = vtanh.pop %v4363
  %v5233 = vtanh.pop %v4365
  %v5234 = vtanh.pop %v4367
  %v5235 = vtanh.pop %v4371
  %v5236 = vtanh.pop %v4373
  %v5237 = vtanh.pop %v4375
  %v5238 = vtanh.pop %v4377
  %v5239 = vtanh.pop %v4381
  %v5240 = vtanh.pop %v4383
  %v5241 = vtanh.pop %v4385
  %v5242 = vtanh.pop %v4387
  %v5243 = vtanh.pop %v4391
  %v5244 = vtanh.pop %v4393
  %v5245 = vtanh.pop %v4395
  %v5246 = vtanh.pop %v4397
  %v5247 = vtanh.pop %v4401
  %v5248 = vtanh.pop %v4403
  %v5249 = vtanh.pop %v4405
  %v5250 = vtanh.pop %v4407
  %v5251 = vtanh.pop %v4411
  %v5252 = vtanh.pop %v4413
  %v5253 = vtanh.pop %v4415
  %v5254 = vtanh.pop %v4417
  %v5255 = vtanh.pop %v4421
  %v5256 = vtanh.pop %v4423
  %v5257 = vtanh.pop %v4425
  %v5258 = vtanh.pop %v4427
  %v5259 = vtanh.pop %v4431
  %v5260 = vtanh.pop %v4433
  %v5261 = vtanh.pop %v4435
  %v5262 = vtanh.pop %v4437
  %v5263 = vtanh.pop %v4441
  %v5264 = vtanh.pop %v4443
  %v5265 = vtanh.pop %v4445
  %v5266 = vtanh.pop %v4447
  %v5267 = vtanh.pop %v4451
  %v5268 = vtanh.pop %v4453
  %v5269 = vtanh.pop %v4455
  %v5270 = vtanh.pop %v4457
  %v5271 = vtanh.pop %v4461
  %v5272 = vtanh.pop %v4463
  %v5273 = vtanh.pop %v4465
  %v5274 = vtanh.pop %v4467
  %v5275 = vtanh.pop %v4471
  %v5276 = vtanh.pop %v4473
  %v5277 = vtanh.pop %v4475
  %v5278 = vtanh.pop %v4477
  %v5279 = vtanh.pop %v4481
  %v5280 = vtanh.pop %v4483
  %v5281 = vtanh.pop %v4485
  %v5282 = vtanh.pop %v4487
  %v5283 = vtanh.pop %v4491
  %v5284 = vtanh.pop %v4493
  %v5285 = vtanh.pop %v4495
  %v5286 = vtanh.pop %v4497
  %v5287 = vtanh.pop %v4501
  %v5288 = vtanh.pop %v4503
  %v5289 = vtanh.pop %v4505
  %v5290 = vtanh.pop %v4507
  %v5291 = vtanh.pop %v4511
  %v5292 = vtanh.pop %v4513
  %v5293 = vtanh.pop %v4515
  %v5294 = vtanh.pop %v4517
  %v5295 = vtanh.pop %v4521
  %v5296 = vtanh.pop %v4523
  %v5297 = vtanh.pop %v4525
  %v5298 = vtanh.pop %v4527
  %v5299 = vtanh.pop %v4531
  %v5300 = vtanh.pop %v4533
  %v5301 = vtanh.pop %v4535
  %v5302 = vtanh.pop %v4537
  %v5303 = vtanh.pop %v4541
  %v5304 = vtanh.pop %v4543
  %v5305 = vtanh.pop %v4545
  %v5306 = vtanh.pop %v4547
  %v5307 = vtanh.pop %v4551
  %v5308 = vtanh.pop %v4553
  %v5309 = vtanh.pop %v4555
  %v5310 = vtanh.pop %v4557
  %v5311 = vtanh.pop %v4561
  %v5312 = vtanh.pop %v4563
  %v5313 = vtanh.pop %v4565
  %v5314 = vtanh.pop %v4567
  %v5315 = vtanh.pop %v4571
  %v5316 = vtanh.pop %v4573
  %v5317 = vtanh.pop %v4575
  %v5318 = vtanh.pop %v4577
  %v5319 = vtanh.pop %v4581
  %v5320 = vtanh.pop %v4583
  %v5321 = vtanh.pop %v4585
  %v5322 = vtanh.pop %v4587
  %v5323 = vtanh.pop %v4591
  %v5324 = vtanh.pop %v4593
  %v5325 = vtanh.pop %v4595
  %v5326 = vtanh.pop %v4597
  %v5327 = vtanh.pop %v4601
  %v5328 = vtanh.pop %v4603
  %v5329 = vtanh.pop %v4605
  %v5330 = vtanh.pop %v4607
  %v5331 = vtanh.pop %v4611
  %v5332 = vtanh.pop %v4613
  %v5333 = vtanh.pop %v4615
  %v5334 = vtanh.pop %v4617
  %v5335 = vtanh.pop %v4621
  %v5336 = vtanh.pop %v4623
  %v5337 = vtanh.pop %v4625
  %v5338 = vtanh.pop %v4627
  %v5339 = vtanh.pop %v4631
  %v5340 = vtanh.pop %v4633
  %v5341 = vtanh.pop %v4635
  %v5342 = vtanh.pop %v4637
  %v5343 = vtanh.pop %v4641
  %v5344 = vtanh.pop %v4643
  %v5345 = vtanh.pop %v4645
  %v5346 = vtanh.pop %v4647
  %v5347 = vtanh.pop %v4651
  %v5348 = vtanh.pop %v4653
  %v5349 = vtanh.pop %v4655
  %v5350 = vtanh.pop %v4657
  %v5351 = vtanh.pop %v4661
  %v5352 = vtanh.pop %v4663
  %v5353 = vtanh.pop %v4665
  %v5354 = vtanh.pop %v4667
  %v5355 = vtanh.pop %v4671
  %v5356 = vtanh.pop %v4673
  %v5357 = vtanh.pop %v4675
  %v5358 = vtanh.pop %v4677
  %v5359 = vtanh.pop %v4681
  %v5360 = vtanh.pop %v4683
  %v5361 = vtanh.pop %v4685
  %v5362 = vtanh.pop %v4687
  %v5363 = vtanh.pop %v4691
  %v5364 = vtanh.pop %v4693
  %v5365 = vtanh.pop %v4695
  %v5366 = vtanh.pop %v4697
  %v5367 = vtanh.pop %v4701
  %v5368 = vtanh.pop %v4703
  %v5369 = vtanh.pop %v4705
  %v5370 = vtanh.pop %v4707
  %v5371 = vtanh.pop %v4711
  %v5372 = vtanh.pop %v4713
  %v5373 = vtanh.pop %v4715
  %v5374 = vtanh.pop %v4717
  %v5375 = vtanh.pop %v4721
  %v5376 = vtanh.pop %v4723
  %v5377 = vtanh.pop %v4725
  %v5378 = vtanh.pop %v4727
  %v5379 = vtanh.pop %v4731
  %v5380 = vtanh.pop %v4733
  %v5381 = vtanh.pop %v4735
  %v5382 = vtanh.pop %v4737
  %v5383 = vtanh.pop %v4741
  %v5384 = vtanh.pop %v4743
  %v5385 = vtanh.pop %v4745
  %v5386 = vtanh.pop %v4747
  %v5387 = vtanh.pop %v4751
  %v5388 = vtanh.pop %v4753
  %v5389 = vtanh.pop %v4755
  %v5390 = vtanh.pop %v4757
  %v5391 = vtanh.pop %v4761
  %v5392 = vtanh.pop %v4763
  %v5393 = vtanh.pop %v4765
  %v5394 = vtanh.pop %v4767
  %v5395 = vtanh.pop %v4771
  %v5396 = vtanh.pop %v4773
  %v5397 = vtanh.pop %v4775
  %v5398 = vtanh.pop %v4777
  %v5399 = vtanh.pop %v4781
  %v5400 = vtanh.pop %v4783
  %v5401 = vtanh.pop %v4785
  %v5402 = vtanh.pop %v4787
  %v5403 = vtanh.pop %v4791
  %v5404 = vtanh.pop %v4793
  %v5405 = vtanh.pop %v4795
  %v5406 = vtanh.pop %v4797
  %v5407 = vtanh.pop %v4801
  %v5408 = vtanh.pop %v4803
  %v5409 = vtanh.pop %v4805
  %v5410 = vtanh.pop %v4807
  %v5411 = vtanh.pop %v4811
  %v5412 = vtanh.pop %v4813
  %v5413 = vtanh.pop %v4815
  %v5414 = vtanh.pop %v4817
  %v5415 = vtanh.pop %v4821
  %v5416 = vtanh.pop %v4823
  %v5417 = vtanh.pop %v4825
  %v5418 = vtanh.pop %v4827
  %v5419 = vtanh.pop %v4831
  %v5420 = vtanh.pop %v4833
  %v5421 = vtanh.pop %v4835
  %v5422 = vtanh.pop %v4837
  %v5423 = vtanh.pop %v4841
  %v5424 = vtanh.pop %v4843
  %v5425 = vtanh.pop %v4845
  %v5426 = vtanh.pop %v4847
  %v5427 = vtanh.pop %v4851
  %v5428 = vtanh.pop %v4853
  %v5429 = vtanh.pop %v4855
  %v5430 = vtanh.pop %v4857
  %v5431 = vtanh.pop %v4861
  %v5432 = vtanh.pop %v4863
  %v5433 = vtanh.pop %v4865
  %v5434 = vtanh.pop %v4867
  %v5435 = vtanh.pop %v4871
  %v5436 = vtanh.pop %v4873
  %v5437 = vtanh.pop %v4875
  %v5438 = vtanh.pop %v4877
  %v5439 = vtanh.pop %v4881
  %v5440 = vtanh.pop %v4883
  %v5441 = vtanh.pop %v4885
  %v5442 = vtanh.pop %v4887
  %v5443 = vtanh.pop %v4891
  %v5444 = vtanh.pop %v4893
  %v5445 = vtanh.pop %v4895
  %v5446 = vtanh.pop %v4897
  %v5447 = vtanh.pop %v4901
  %v5448 = vtanh.pop %v4903
  %v5449 = vtanh.pop %v4905
  %v5450 = vtanh.pop %v4907
  %v5451 = vtanh.pop %v4911
  %v5452 = vtanh.pop %v4913
  %v5453 = vtanh.pop %v4915
  %v5454 = vtanh.pop %v4917
  %v5455 = vtanh.pop %v4921
  %v5456 = vtanh.pop %v4923
  %v5457 = vtanh.pop %v4925
  %v5458 = vtanh.pop %v4927
  %v5459 = vtanh.pop %v4931
  %v5460 = vtanh.pop %v4933
  %v5461 = vtanh.pop %v4935
  %v5462 = vtanh.pop %v4937
  %v5463 = vtanh.pop %v4941
  %v5464 = vtanh.pop %v4943
  %v5465 = vtanh.pop %v4945
  %v5466 = vtanh.pop %v4947
  %v5467 = vtanh.pop %v4951
  %v5468 = vtanh.pop %v4953
  %v5469 = vtanh.pop %v4955
  %v5470 = vtanh.pop %v4957
  %v5471 = vpack.c.bf16 %v4961, %v4959
  %v5472 = vpack.c.bf16 %v4962, %v4960
  %v5473 = vpack.c.bf16 %v4965, %v4963
  %v5474 = vpack.c.bf16 %v4966, %v4964
  %v5475 = vpack.c.bf16 %v4969, %v4967
  %v5476 = vpack.c.bf16 %v4970, %v4968
  %v5477 = vpack.c.bf16 %v4973, %v4971
  %v5478 = vpack.c.bf16 %v4974, %v4972
  %v5479 = vpack.c.bf16 %v4977, %v4975
  %v5480 = vpack.c.bf16 %v4978, %v4976
  %v5481 = vpack.c.bf16 %v4981, %v4979
  %v5482 = vpack.c.bf16 %v4982, %v4980
  %v5483 = vpack.c.bf16 %v4985, %v4983
  %v5484 = vpack.c.bf16 %v4986, %v4984
  %v5485 = vpack.c.bf16 %v4989, %v4987
  %v5486 = vpack.c.bf16 %v4990, %v4988
  %v5487 = vpack.c.bf16 %v4993, %v4991
  %v5488 = vpack.c.bf16 %v4994, %v4992
  %v5489 = vpack.c.bf16 %v4997, %v4995
  %v5490 = vpack.c.bf16 %v4998, %v4996
  %v5491 = vpack.c.bf16 %v5001, %v4999
  %v5492 = vpack.c.bf16 %v5002, %v5000
  %v5493 = vpack.c.bf16 %v5005, %v5003
  %v5494 = vpack.c.bf16 %v5006, %v5004
  %v5495 = vpack.c.bf16 %v5009, %v5007
  %v5496 = vpack.c.bf16 %v5010, %v5008
  %v5497 = vpack.c.bf16 %v5013, %v5011
  %v5498 = vpack.c.bf16 %v5014, %v5012
  %v5499 = vpack.c.bf16 %v5017, %v5015
  %v5500 = vpack.c.bf16 %v5018, %v5016
  %v5501 = vpack.c.bf16 %v5021, %v5019
  %v5502 = vpack.c.bf16 %v5022, %v5020
  %v5503 = vpack.c.bf16 %v5025, %v5023
  %v5504 = vpack.c.bf16 %v5026, %v5024
  %v5505 = vpack.c.bf16 %v5029, %v5027
  %v5506 = vpack.c.bf16 %v5030, %v5028
  %v5507 = vpack.c.bf16 %v5033, %v5031
  %v5508 = vpack.c.bf16 %v5034, %v5032
  %v5509 = vpack.c.bf16 %v5037, %v5035
  %v5510 = vpack.c.bf16 %v5038, %v5036
  %v5511 = vpack.c.bf16 %v5041, %v5039
  %v5512 = vpack.c.bf16 %v5042, %v5040
  %v5513 = vpack.c.bf16 %v5045, %v5043
  %v5514 = vpack.c.bf16 %v5046, %v5044
  %v5515 = vpack.c.bf16 %v5049, %v5047
  %v5516 = vpack.c.bf16 %v5050, %v5048
  %v5517 = vpack.c.bf16 %v5053, %v5051
  %v5518 = vpack.c.bf16 %v5054, %v5052
  %v5519 = vpack.c.bf16 %v5057, %v5055
  %v5520 = vpack.c.bf16 %v5058, %v5056
  %v5521 = vpack.c.bf16 %v5061, %v5059
  %v5522 = vpack.c.bf16 %v5062, %v5060
  %v5523 = vpack.c.bf16 %v5065, %v5063
  %v5524 = vpack.c.bf16 %v5066, %v5064
  %v5525 = vpack.c.bf16 %v5069, %v5067
  %v5526 = vpack.c.bf16 %v5070, %v5068
  %v5527 = vpack.c.bf16 %v5073, %v5071
  %v5528 = vpack.c.bf16 %v5074, %v5072
  %v5529 = vpack.c.bf16 %v5077, %v5075
  %v5530 = vpack.c.bf16 %v5078, %v5076
  %v5531 = vpack.c.bf16 %v5081, %v5079
  %v5532 = vpack.c.bf16 %v5082, %v5080
  %v5533 = vpack.c.bf16 %v5085, %v5083
  %v5534 = vpack.c.bf16 %v5086, %v5084
  %v5535 = vpack.c.bf16 %v5089, %v5087
  %v5536 = vpack.c.bf16 %v5090, %v5088
  %v5537 = vpack.c.bf16 %v5093, %v5091
  %v5538 = vpack.c.bf16 %v5094, %v5092
  %v5539 = vpack.c.bf16 %v5097, %v5095
  %v5540 = vpack.c.bf16 %v5098, %v5096
  %v5541 = vpack.c.bf16 %v5101, %v5099
  %v5542 = vpack.c.bf16 %v5102, %v5100
  %v5543 = vpack.c.bf16 %v5105, %v5103
  %v5544 = vpack.c.bf16 %v5106, %v5104
  %v5545 = vpack.c.bf16 %v5109, %v5107
  %v5546 = vpack.c.bf16 %v5110, %v5108
  %v5547 = vpack.c.bf16 %v5113, %v5111
  %v5548 = vpack.c.bf16 %v5114, %v5112
  %v5549 = vpack.c.bf16 %v5117, %v5115
  %v5550 = vpack.c.bf16 %v5118, %v5116
  %v5551 = vpack.c.bf16 %v5121, %v5119
  %v5552 = vpack.c.bf16 %v5122, %v5120
  %v5553 = vpack.c.bf16 %v5125, %v5123
  %v5554 = vpack.c.bf16 %v5126, %v5124
  %v5555 = vpack.c.bf16 %v5129, %v5127
  %v5556 = vpack.c.bf16 %v5130, %v5128
  %v5557 = vpack.c.bf16 %v5133, %v5131
  %v5558 = vpack.c.bf16 %v5134, %v5132
  %v5559 = vpack.c.bf16 %v5137, %v5135
  %v5560 = vpack.c.bf16 %v5138, %v5136
  %v5561 = vpack.c.bf16 %v5141, %v5139
  %v5562 = vpack.c.bf16 %v5142, %v5140
  %v5563 = vpack.c.bf16 %v5145, %v5143
  %v5564 = vpack.c.bf16 %v5146, %v5144
  %v5565 = vpack.c.bf16 %v5149, %v5147
  %v5566 = vpack.c.bf16 %v5150, %v5148
  %v5567 = vpack.c.bf16 %v5153, %v5151
  %v5568 = vpack.c.bf16 %v5154, %v5152
  %v5569 = vpack.c.bf16 %v5157, %v5155
  %v5570 = vpack.c.bf16 %v5158, %v5156
  %v5571 = vpack.c.bf16 %v5161, %v5159
  %v5572 = vpack.c.bf16 %v5162, %v5160
  %v5573 = vpack.c.bf16 %v5165, %v5163
  %v5574 = vpack.c.bf16 %v5166, %v5164
  %v5575 = vpack.c.bf16 %v5169, %v5167
  %v5576 = vpack.c.bf16 %v5170, %v5168
  %v5577 = vpack.c.bf16 %v5173, %v5171
  %v5578 = vpack.c.bf16 %v5174, %v5172
  %v5579 = vpack.c.bf16 %v5177, %v5175
  %v5580 = vpack.c.bf16 %v5178, %v5176
  %v5581 = vpack.c.bf16 %v5181, %v5179
  %v5582 = vpack.c.bf16 %v5182, %v5180
  %v5583 = vpack.c.bf16 %v5185, %v5183
  %v5584 = vpack.c.bf16 %v5186, %v5184
  %v5585 = vpack.c.bf16 %v5189, %v5187
  %v5586 = vpack.c.bf16 %v5190, %v5188
  %v5587 = vpack.c.bf16 %v5193, %v5191
  %v5588 = vpack.c.bf16 %v5194, %v5192
  %v5589 = vpack.c.bf16 %v5197, %v5195
  %v5590 = vpack.c.bf16 %v5198, %v5196
  %v5591 = vpack.c.bf16 %v5201, %v5199
  %v5592 = vpack.c.bf16 %v5202, %v5200
  %v5593 = vpack.c.bf16 %v5205, %v5203
  %v5594 = vpack.c.bf16 %v5206, %v5204
  %v5595 = vpack.c.bf16 %v5209, %v5207
  %v5596 = vpack.c.bf16 %v5210, %v5208
  %v5597 = vpack.c.bf16 %v5213, %v5211
  %v5598 = vpack.c.bf16 %v5214, %v5212
  %v5599 = vpack.c.bf16 %v5217, %v5215
  %v5600 = vpack.c.bf16 %v5218, %v5216
  %v5601 = vpack.c.bf16 %v5221, %v5219
  %v5602 = vpack.c.bf16 %v5222, %v5220
  %v5603 = vpack.c.bf16 %v5225, %v5223
  %v5604 = vpack.c.bf16 %v5226, %v5224
  %v5605 = vpack.c.bf16 %v5229, %v5227
  %v5606 = vpack.c.bf16 %v5230, %v5228
  %v5607 = vpack.c.bf16 %v5233, %v5231
  %v5608 = vpack.c.bf16 %v5234, %v5232
  %v5609 = vpack.c.bf16 %v5237, %v5235
  %v5610 = vpack.c.bf16 %v5238, %v5236
  %v5611 = vpack.c.bf16 %v5241, %v5239
  %v5612 = vpack.c.bf16 %v5242, %v5240
  %v5613 = vpack.c.bf16 %v5245, %v5243
  %v5614 = vpack.c.bf16 %v5246, %v5244
  %v5615 = vpack.c.bf16 %v5249, %v5247
  %v5616 = vpack.c.bf16 %v5250, %v5248
  %v5617 = vpack.c.bf16 %v5253, %v5251
  %v5618 = vpack.c.bf16 %v5254, %v5252
  %v5619 = vpack.c.bf16 %v5257, %v5255
  %v5620 = vpack.c.bf16 %v5258, %v5256
  %v5621 = vpack.c.bf16 %v5261, %v5259
  %v5622 = vpack.c.bf16 %v5262, %v5260
  %v5623 = vpack.c.bf16 %v5265, %v5263
  %v5624 = vpack.c.bf16 %v5266, %v5264
  %v5625 = vpack.c.bf16 %v5269, %v5267
  %v5626 = vpack.c.bf16 %v5270, %v5268
  %v5627 = vpack.c.bf16 %v5273, %v5271
  %v5628 = vpack.c.bf16 %v5274, %v5272
  %v5629 = vpack.c.bf16 %v5277, %v5275
  %v5630 = vpack.c.bf16 %v5278, %v5276
  %v5631 = vpack.c.bf16 %v5281, %v5279
  %v5632 = vpack.c.bf16 %v5282, %v5280
  %v5633 = vpack.c.bf16 %v5285, %v5283
  %v5634 = vpack.c.bf16 %v5286, %v5284
  %v5635 = vpack.c.bf16 %v5289, %v5287
  %v5636 = vpack.c.bf16 %v5290, %v5288
  %v5637 = vpack.c.bf16 %v5293, %v5291
  %v5638 = vpack.c.bf16 %v5294, %v5292
  %v5639 = vpack.c.bf16 %v5297, %v5295
  %v5640 = vpack.c.bf16 %v5298, %v5296
  %v5641 = vpack.c.bf16 %v5301, %v5299
  %v5642 = vpack.c.bf16 %v5302, %v5300
  %v5643 = vpack.c.bf16 %v5305, %v5303
  %v5644 = vpack.c.bf16 %v5306, %v5304
  %v5645 = vpack.c.bf16 %v5309, %v5307
  %v5646 = vpack.c.bf16 %v5310, %v5308
  %v5647 = vpack.c.bf16 %v5313, %v5311
  %v5648 = vpack.c.bf16 %v5314, %v5312
  %v5649 = vpack.c.bf16 %v5317, %v5315
  %v5650 = vpack.c.bf16 %v5318, %v5316
  %v5651 = vpack.c.bf16 %v5321, %v5319
  %v5652 = vpack.c.bf16 %v5322, %v5320
  %v5653 = vpack.c.bf16 %v5325, %v5323
  %v5654 = vpack.c.bf16 %v5326, %v5324
  %v5655 = vpack.c.bf16 %v5329, %v5327
  %v5656 = vpack.c.bf16 %v5330, %v5328
  %v5657 = vpack.c.bf16 %v5333, %v5331
  %v5658 = vpack.c.bf16 %v5334, %v5332
  %v5659 = vpack.c.bf16 %v5337, %v5335
  %v5660 = vpack.c.bf16 %v5338, %v5336
  %v5661 = vpack.c.bf16 %v5341, %v5339
  %v5662 = vpack.c.bf16 %v5342, %v5340
  %v5663 = vpack.c.bf16 %v5345, %v5343
  %v5664 = vpack.c.bf16 %v5346, %v5344
  %v5665 = vpack.c.bf16 %v5349, %v5347
  %v5666 = vpack.c.bf16 %v5350, %v5348
  %v5667 = vpack.c.bf16 %v5353, %v5351
  %v5668 = vpack.c.bf16 %v5354, %v5352
  %v5669 = vpack.c.bf16 %v5357, %v5355
  %v5670 = vpack.c.bf16 %v5358, %v5356
  %v5671 = vpack.c.bf16 %v5361, %v5359
  %v5672 = vpack.c.bf16 %v5362, %v5360
  %v5673 = vpack.c.bf16 %v5365, %v5363
  %v5674 = vpack.c.bf16 %v5366, %v5364
  %v5675 = vpack.c.bf16 %v5369, %v5367
  %v5676 = vpack.c.bf16 %v5370, %v5368
  %v5677 = vpack.c.bf16 %v5373, %v5371
  %v5678 = vpack.c.bf16 %v5374, %v5372
  %v5679 = vpack.c.bf16 %v5377, %v5375
  %v5680 = vpack.c.bf16 %v5378, %v5376
  %v5681 = vpack.c.bf16 %v5381, %v5379
  %v5682 = vpack.c.bf16 %v5382, %v5380
  %v5683 = vpack.c.bf16 %v5385, %v5383
  %v5684 = vpack.c.bf16 %v5386, %v5384
  %v5685 = vpack.c.bf16 %v5389, %v5387
  %v5686 = vpack.c.bf16 %v5390, %v5388
  %v5687 = vpack.c.bf16 %v5393, %v5391
  %v5688 = vpack.c.bf16 %v5394, %v5392
  %v5689 = vpack.c.bf16 %v5397, %v5395
  %v5690 = vpack.c.bf16 %v5398, %v5396
  %v5691 = vpack.c.bf16 %v5401, %v5399
  %v5692 = vpack.c.bf16 %v5402, %v5400
  %v5693 = vpack.c.bf16 %v5405, %v5403
  %v5694 = vpack.c.bf16 %v5406, %v5404
  %v5695 = vpack.c.bf16 %v5409, %v5407
  %v5696 = vpack.c.bf16 %v5410, %v5408
  %v5697 = vpack.c.bf16 %v5413, %v5411
  %v5698 = vpack.c.bf16 %v5414, %v5412
  %v5699 = vpack.c.bf16 %v5417, %v5415
  %v5700 = vpack.c.bf16 %v5418, %v5416
  %v5701 = vpack.c.bf16 %v5421, %v5419
  %v5702 = vpack.c.bf16 %v5422, %v5420
  %v5703 = vpack.c.bf16 %v5425, %v5423
  %v5704 = vpack.c.bf16 %v5426, %v5424
  %v5705 = vpack.c.bf16 %v5429, %v5427
  %v5706 = vpack.c.bf16 %v5430, %v5428
  %v5707 = vpack.c.bf16 %v5433, %v5431
  %v5708 = vpack.c.bf16 %v5434, %v5432
  %v5709 = vpack.c.bf16 %v5437, %v5435
  %v5710 = vpack.c.bf16 %v5438, %v5436
  %v5711 = vpack.c.bf16 %v5441, %v5439
  %v5712 = vpack.c.bf16 %v5442, %v5440
  %v5713 = vpack.c.bf16 %v5445, %v5443
  %v5714 = vpack.c.bf16 %v5446, %v5444
  %v5715 = vpack.c.bf16 %v5449, %v5447
  %v5716 = vpack.c.bf16 %v5450, %v5448
  %v5717 = vpack.c.bf16 %v5453, %v5451
  %v5718 = vpack.c.bf16 %v5454, %v5452
  %v5719 = vpack.c.bf16 %v5457, %v5455
  %v5720 = vpack.c.bf16 %v5458, %v5456
  %v5721 = vpack.c.bf16 %v5461, %v5459
  %v5722 = vpack.c.bf16 %v5462, %v5460
  %v5723 = vpack.c.bf16 %v5465, %v5463
  %v5724 = vpack.c.bf16 %v5466, %v5464
  %v5725 = vpack.c.bf16 %v5469, %v5467
  %v5726 = vpack.c.bf16 %v5470, %v5468
  %v5727 = vld [vmem:[%s5] sm:$0xff]
  %v5728 = vld [vmem:[%s5 + $0x8] sm:$0xff]
  %v5729 = vld [vmem:[%s5 + $0x10] sm:$0xff]
  %v5730 = vld [vmem:[%s5 + $0x18] sm:$0xff]
  %v5731 = vld [vmem:[%s5 + $0x20] sm:$0xff]
  %v5732 = vld [vmem:[%s5 + $0x28] sm:$0xff]
  %v5733 = vld [vmem:[%s5 + $0x30] sm:$0xff]
  %v5734 = vld [vmem:[%s5 + $0x38] sm:$0xff]
  %v5735 = vld [vmem:[%s5 + $0x40] sm:$0xff]
  %v5736 = vld [vmem:[%s5 + $0x48] sm:$0xff]
  %v5737 = vld [vmem:[%s5 + $0x50] sm:$0xff]
  %v5738 = vld [vmem:[%s5 + $0x58] sm:$0xff]
  %v5739 = vld [vmem:[%s5 + $0x60] sm:$0xff]
  %v5740 = vld [vmem:[%s5 + $0x68] sm:$0xff]
  %v5741 = vld [vmem:[%s5 + $0x70] sm:$0xff]
  %v5742 = vld [vmem:[%s5 + $0x78] sm:$0xff]
  %v5743 = vld [vmem:[%s5 + $0x80] sm:$0xff]
  %v5744 = vld [vmem:[%s5 + $0x88] sm:$0xff]
  %v5745 = vld [vmem:[%s5 + $0x90] sm:$0xff]
  %v5746 = vld [vmem:[%s5 + $0x98] sm:$0xff]
  %v5747 = vld [vmem:[%s5 + $0xa0] sm:$0xff]
  %v5748 = vld [vmem:[%s5 + $0xa8] sm:$0xff]
  %v5749 = vld [vmem:[%s5 + $0xb0] sm:$0xff]
  %v5750 = vld [vmem:[%s5 + $0xb8] sm:$0xff]
  %v5751 = vld [vmem:[%s5 + $0xc0] sm:$0xff]
  %v5752 = vld [vmem:[%s5 + $0xc8] sm:$0xff]
  %v5753 = vld [vmem:[%s5 + $0xd0] sm:$0xff]
  %v5754 = vld [vmem:[%s5 + $0xd8] sm:$0xff]
  %v5755 = vld [vmem:[%s5 + $0xe0] sm:$0xff]
  %v5756 = vld [vmem:[%s5 + $0xe8] sm:$0xff]
  %v5757 = vld [vmem:[%s5 + $0xf0] sm:$0xff]
  %v5758 = vld [vmem:[%s5 + $0xf8] sm:$0xff]
  %v5759 = vld [vmem:[%s6] sm:$0x3]
  %v5761 = vlaneseq
  %v5762 = vshrl.u32 %v5761, 7
  %v5763 = vsub.s32 0, %v5762
  %v5764 = vrot.slane %v5759, %v5763
  %v5765 = vlaneseq
  %v5766 = vshrl.u32 %v5765, 7
  %v5767 = vsub.s32 1, %v5766
  %v5768 = vrot.slane %v5759, %v5767
  %v5803 = vunpack.c.l.b16 %v5727
  %v5804 = vunpack.c.h.b16 %v5727
  %v5805 = vunpack.c.l.b16 %v5728
  %v5806 = vunpack.c.h.b16 %v5728
  %v5807 = vunpack.c.l.b16 %v5729
  %v5808 = vunpack.c.h.b16 %v5729
  %v5809 = vunpack.c.l.b16 %v5730
  %v5810 = vunpack.c.h.b16 %v5730
  %v5811 = vunpack.c.l.b16 %v5731
  %v5812 = vunpack.c.h.b16 %v5731
  %v5813 = vunpack.c.l.b16 %v5732
  %v5814 = vunpack.c.h.b16 %v5732
  %v5815 = vunpack.c.l.b16 %v5733
  %v5816 = vunpack.c.h.b16 %v5733
  %v5817 = vunpack.c.l.b16 %v5734
  %v5818 = vunpack.c.h.b16 %v5734
  %v5819 = vunpack.c.l.b16 %v5735
  %v5820 = vunpack.c.h.b16 %v5735
  %v5821 = vunpack.c.l.b16 %v5736
  %v5822 = vunpack.c.h.b16 %v5736
  %v5823 = vunpack.c.l.b16 %v5737
  %v5824 = vunpack.c.h.b16 %v5737
  %v5825 = vunpack.c.l.b16 %v5738
  %v5826 = vunpack.c.h.b16 %v5738
  %v5827 = vunpack.c.l.b16 %v5739
  %v5828 = vunpack.c.h.b16 %v5739
  %v5829 = vunpack.c.l.b16 %v5740
  %v5830 = vunpack.c.h.b16 %v5740
  %v5831 = vunpack.c.l.b16 %v5741
  %v5832 = vunpack.c.h.b16 %v5741
  %v5833 = vunpack.c.l.b16 %v5742
  %v5834 = vunpack.c.h.b16 %v5742
  %v5835 = vunpack.c.l.b16 %v5743
  %v5836 = vunpack.c.h.b16 %v5743
  %v5837 = vunpack.c.l.b16 %v5744
  %v5838 = vunpack.c.h.b16 %v5744
  %v5839 = vunpack.c.l.b16 %v5745
  %v5840 = vunpack.c.h.b16 %v5745
  %v5841 = vunpack.c.l.b16 %v5746
  %v5842 = vunpack.c.h.b16 %v5746
  %v5843 = vunpack.c.l.b16 %v5747
  %v5844 = vunpack.c.h.b16 %v5747
  %v5845 = vunpack.c.l.b16 %v5748
  %v5846 = vunpack.c.h.b16 %v5748
  %v5847 = vunpack.c.l.b16 %v5749
  %v5848 = vunpack.c.h.b16 %v5749
  %v5849 = vunpack.c.l.b16 %v5750
  %v5850 = vunpack.c.h.b16 %v5750
  %v5851 = vunpack.c.l.b16 %v5751
  %v5852 = vunpack.c.h.b16 %v5751
  %v5853 = vunpack.c.l.b16 %v5752
  %v5854 = vunpack.c.h.b16 %v5752
  %v5855 = vunpack.c.l.b16 %v5753
  %v5856 = vunpack.c.h.b16 %v5753
  %v5857 = vunpack.c.l.b16 %v5754
  %v5858 = vunpack.c.h.b16 %v5754
  %v5859 = vunpack.c.l.b16 %v5755
  %v5860 = vunpack.c.h.b16 %v5755
  %v5861 = vunpack.c.l.b16 %v5756
  %v5862 = vunpack.c.h.b16 %v5756
  %v5863 = vunpack.c.l.b16 %v5757
  %v5864 = vunpack.c.h.b16 %v5757
  %v5865 = vunpack.c.l.b16 %v5758
  %v5866 = vunpack.c.h.b16 %v5758
  %v5867 = vpack.c.b16 %v5805, %v5803
  %v5868 = vpack.c.b16 %v5806, %v5804
  %v5869 = vpack.c.b16 %v5809, %v5807
  %v5870 = vpack.c.b16 %v5810, %v5808
  %v5871 = vpack.c.b16 %v5813, %v5811
  %v5872 = vpack.c.b16 %v5814, %v5812
  %v5873 = vpack.c.b16 %v5817, %v5815
  %v5874 = vpack.c.b16 %v5818, %v5816
  %v5875 = vpack.c.b16 %v5821, %v5819
  %v5876 = vpack.c.b16 %v5822, %v5820
  %v5877 = vpack.c.b16 %v5825, %v5823
  %v5878 = vpack.c.b16 %v5826, %v5824
  %v5879 = vpack.c.b16 %v5829, %v5827
  %v5880 = vpack.c.b16 %v5830, %v5828
  %v5881 = vpack.c.b16 %v5833, %v5831
  %v5882 = vpack.c.b16 %v5834, %v5832
  %v5883 = vpack.c.b16 %v5837, %v5835
  %v5884 = vpack.c.b16 %v5838, %v5836
  %v5885 = vpack.c.b16 %v5841, %v5839
  %v5886 = vpack.c.b16 %v5842, %v5840
  %v5887 = vpack.c.b16 %v5845, %v5843
  %v5888 = vpack.c.b16 %v5846, %v5844
  %v5889 = vpack.c.b16 %v5849, %v5847
  %v5890 = vpack.c.b16 %v5850, %v5848
  %v5891 = vpack.c.b16 %v5853, %v5851
  %v5892 = vpack.c.b16 %v5854, %v5852
  %v5893 = vpack.c.b16 %v5857, %v5855
  %v5894 = vpack.c.b16 %v5858, %v5856
  %v5895 = vpack.c.b16 %v5861, %v5859
  %v5896 = vpack.c.b16 %v5862, %v5860
  %v5897 = vpack.c.b16 %v5865, %v5863
  %v5898 = vpack.c.b16 %v5866, %v5864
  %5931 = vmatprep.subr.bf16.mxu0 %v5868
  %5932 = vmatpush1.bf16.msra.mxu0 %v5867
  %5933 = vmatprep.subr.bf16.mxu0 %v5870
  %5934 = vmatpush1.bf16.msra.mxu0 %v5869
  %5935 = vmatprep.subr.bf16.mxu0 %v5872
  %5936 = vmatpush1.bf16.msra.mxu0 %v5871
  %5937 = vmatprep.subr.bf16.mxu0 %v5874
  %5938 = vmatpush1.bf16.msra.mxu0 %v5873
  %5939 = vmatprep.subr.bf16.mxu0 %v5876
  %5940 = vmatpush1.bf16.msra.mxu0 %v5875
  %5941 = vmatprep.subr.bf16.mxu0 %v5878
  %5942 = vmatpush1.bf16.msra.mxu0 %v5877
  %5943 = vmatprep.subr.bf16.mxu0 %v5880
  %5944 = vmatpush1.bf16.msra.mxu0 %v5879
  %5945 = vmatprep.subr.bf16.mxu0 %v5882
  %5946 = vmatpush1.bf16.msra.mxu0 %v5881
  %5947 = vmatprep.subr.bf16.mxu0 %v5884
  %5948 = vmatpush1.bf16.msra.mxu0 %v5883
  %5949 = vmatprep.subr.bf16.mxu0 %v5886
  %5950 = vmatpush1.bf16.msra.mxu0 %v5885
  %5951 = vmatprep.subr.bf16.mxu0 %v5888
  %5952 = vmatpush1.bf16.msra.mxu0 %v5887
  %5953 = vmatprep.subr.bf16.mxu0 %v5890
  %5954 = vmatpush1.bf16.msra.mxu0 %v5889
  %5955 = vmatprep.subr.bf16.mxu0 %v5892
  %5956 = vmatpush1.bf16.msra.mxu0 %v5891
  %5957 = vmatprep.subr.bf16.mxu0 %v5894
  %5958 = vmatpush1.bf16.msra.mxu0 %v5893
  %5959 = vmatprep.subr.bf16.mxu0 %v5896
  %5960 = vmatpush1.bf16.msra.mxu0 %v5895
  %5961 = vmatprep.subr.bf16.mxu0 %v5898
  %5962 = vmatpush1.bf16.msra.mxu0 %v5897
  %5963 = vmatprep.mubr.bf16.mxu0 %v5472
  %5964 = vmatmul.mubr.bf16.gmra.mrb[0].mxu0 %v5471
  %v5965 = vpop.f32.mrb[0].mxu0
  %v5966 = vadd.f32 %v5764, %v5965
  %v5967 = vpop.f32.mrb[0].mxu0
  %v5968 = vadd.f32 %v5768, %v5967
  %v5969 = vpop.f32.mrb[0].mxu0
  %v5970 = vadd.f32 %v5764, %v5969
  %v5971 = vpop.f32.mrb[0].mxu0
  %v5972 = vadd.f32 %v5768, %v5971
  %5973 = vmatprep.mubr.bf16.mxu0 %v5474
  %5974 = vmatmul.mubr.bf16.gmra.mrb[0].mxu0 %v5473
  %v5975 = vpop.f32.mrb[0].mxu0
  %v5976 = vadd.f32 %v5764, %v5975
  %v5977 = vpop.f32.mrb[0].mxu0
  %v5978 = vadd.f32 %v5768, %v5977
  %v5979 = vpop.f32.mrb[0].mxu0
  %v5980 = vadd.f32 %v5764, %v5979
  %v5981 = vpop.f32.mrb[0].mxu0
  %v5982 = vadd.f32 %v5768, %v5981
  %5983 = vmatprep.mubr.bf16.mxu0 %v5476
  %5984 = vmatmul.mubr.bf16.gmra.mrb[0].mxu0 %v5475
  %v5985 = vpop.f32.mrb[0].mxu0
  %v5986 = vadd.f32 %v5764, %v5985
  %v5987 = vpop.f32.mrb[0].mxu0
  %v5988 = vadd.f32 %v5768, %v5987
  %v5989 = vpop.f32.mrb[0].mxu0
  %v5990 = vadd.f32 %v5764, %v5989
  %v5991 = vpop.f32.mrb[0].mxu0
  %v5992 = vadd.f32 %v5768, %v5991
  %5993 = vmatprep.mubr.bf16.mxu0 %v5478
  %5994 = vmatmul.mubr.bf16.gmra.mrb[0].mxu0 %v5477
  %v5995 = vpop.f32.mrb[0].mxu0
  %v5996 = vadd.f32 %v5764, %v5995
  %v5997 = vpop.f32.mrb[0].mxu0
  %v5998 = vadd.f32 %v5768, %v5997
  %v5999 = vpop.f32.mrb[0].mxu0
  %v6000 = vadd.f32 %v5764, %v5999
  %v6001 = vpop.f32.mrb[0].mxu0
  %v6002 = vadd.f32 %v5768, %v6001
  %6003 = vmatprep.mubr.bf16.mxu0 %v5480
  %6004 = vmatmul.mubr.bf16.gmra.mrb[0].mxu0 %v5479
  %v6005 = vpop.f32.mrb[0].mxu0
  %v6006 = vadd.f32 %v5764, %v6005
  %v6007 = vpop.f32.mrb[0].mxu0
  %v6008 = vadd.f32 %v5768, %v6007
  %v6009 = vpop.f32.mrb[0].mxu0
  %v6010 = vadd.f32 %v5764, %v6009
  %v6011 = vpop.f32.mrb[0].mxu0
  %v6012 = vadd.f32 %v5768, %v6011
  %6013 = vmatprep.mubr.bf16.mxu0 %v5482
  %6014 = vmatmul.mubr.bf16.gmra.mrb[0].mxu0 %v5481
  %v6015 = vpop.f32.mrb[0].mxu0
  %v6016 = vadd.f32 %v5764, %v6015
  %v6017 = vpop.f32.mrb[0].mxu0
  %v6018 = vadd.f32 %v5768, %v6017
  %v6019 = vpop.f32.mrb[0].mxu0
  %v6020 = vadd.f32 %v5764, %v6019
  %v6021 = vpop.f32.mrb[0].mxu0
  %v6022 = vadd.f32 %v5768, %v6021
  %6023 = vmatprep.mubr.bf16.mxu0 %v5484
  %6024 = vmatmul.mubr.bf16.gmra.mrb[0].mxu0 %v5483
  %v6025 = vpop.f32.mrb[0].mxu0
  %v6026 = vadd.f32 %v5764, %v6025
  %v6027 = vpop.f32.mrb[0].mxu0
  %v6028 = vadd.f32 %v5768, %v6027
  %v6029 = vpop.f32.mrb[0].mxu0
  %v6030 = vadd.f32 %v5764, %v6029
  %v6031 = vpop.f32.mrb[0].mxu0
  %v6032 = vadd.f32 %v5768, %v6031
  %6033 = vmatprep.mubr.bf16.mxu0 %v5486
  %6034 = vmatmul.mubr.bf16.gmra.mrb[0].mxu0 %v5485
  %v6035 = vpop.f32.mrb[0].mxu0
  %v6036 = vadd.f32 %v5764, %v6035
  %v6037 = vpop.f32.mrb[0].mxu0
  %v6038 = vadd.f32 %v5768, %v6037
  %v6039 = vpop.f32.mrb[0].mxu0
  %v6040 = vadd.f32 %v5764, %v6039
  %v6041 = vpop.f32.mrb[0].mxu0
  %v6042 = vadd.f32 %v5768, %v6041
  %6043 = vmatprep.mubr.bf16.mxu0 %v5488
  %6044 = vmatmul.mubr.bf16.gmra.mrb[0].mxu0 %v5487
  %v6045 = vpop.f32.mrb[0].mxu0
  %v6046 = vadd.f32 %v5764, %v6045
  %v6047 = vpop.f32.mrb[0].mxu0
  %v6048 = vadd.f32 %v5768, %v6047
  %v6049 = vpop.f32.mrb[0].mxu0
  %v6050 = vadd.f32 %v5764, %v6049
  %v6051 = vpop.f32.mrb[0].mxu0
  %v6052 = vadd.f32 %v5768, %v6051
  %6053 = vmatprep.mubr.bf16.mxu0 %v5490
  %6054 = vmatmul.mubr.bf16.gmra.mrb[0].mxu0 %v5489
  %v6055 = vpop.f32.mrb[0].mxu0
  %v6056 = vadd.f32 %v5764, %v6055
  %v6057 = vpop.f32.mrb[0].mxu0
  %v6058 = vadd.f32 %v5768, %v6057
  %v6059 = vpop.f32.mrb[0].mxu0
  %v6060 = vadd.f32 %v5764, %v6059
  %v6061 = vpop.f32.mrb[0].mxu0
  %v6062 = vadd.f32 %v5768, %v6061
  %6063 = vmatprep.mubr.bf16.mxu0 %v5492
  %6064 = vmatmul.mubr.bf16.gmra.mrb[0].mxu0 %v5491
  %v6065 = vpop.f32.mrb[0].mxu0
  %v6066 = vadd.f32 %v5764, %v6065
  %v6067 = vpop.f32.mrb[0].mxu0
  %v6068 = vadd.f32 %v5768, %v6067
  %v6069 = vpop.f32.mrb[0].mxu0
  %v6070 = vadd.f32 %v5764, %v6069
  %v6071 = vpop.f32.mrb[0].mxu0
  %v6072 = vadd.f32 %v5768, %v6071
  %6073 = vmatprep.mubr.bf16.mxu0 %v5494
  %6074 = vmatmul.mubr.bf16.gmra.mrb[0].mxu0 %v5493
  %v6075 = vpop.f32.mrb[0].mxu0
  %v6076 = vadd.f32 %v5764, %v6075
  %v6077 = vpop.f32.mrb[0].mxu0
  %v6078 = vadd.f32 %v5768, %v6077
  %v6079 = vpop.f32.mrb[0].mxu0
  %v6080 = vadd.f32 %v5764, %v6079
  %v6081 = vpop.f32.mrb[0].mxu0
  %v6082 = vadd.f32 %v5768, %v6081
  %6083 = vmatprep.mubr.bf16.mxu0 %v5496
  %6084 = vmatmul.mubr.bf16.gmra.mrb[0].mxu0 %v5495
  %v6085 = vpop.f32.mrb[0].mxu0
  %v6086 = vadd.f32 %v5764, %v6085
  %v6087 = vpop.f32.mrb[0].mxu0
  %v6088 = vadd.f32 %v5768, %v6087
  %v6089 = vpop.f32.mrb[0].mxu0
  %v6090 = vadd.f32 %v5764, %v6089
  %v6091 = vpop.f32.mrb[0].mxu0
  %v6092 = vadd.f32 %v5768, %v6091
  %6093 = vmatprep.mubr.bf16.mxu0 %v5498
  %6094 = vmatmul.mubr.bf16.gmra.mrb[0].mxu0 %v5497
  %v6095 = vpop.f32.mrb[0].mxu0
  %v6096 = vadd.f32 %v5764, %v6095
  %v6097 = vpop.f32.mrb[0].mxu0
  %v6098 = vadd.f32 %v5768, %v6097
  %v6099 = vpop.f32.mrb[0].mxu0
  %v6100 = vadd.f32 %v5764, %v6099
  %v6101 = vpop.f32.mrb[0].mxu0
  %v6102 = vadd.f32 %v5768, %v6101
  %6103 = vmatprep.mubr.bf16.mxu0 %v5500
  %6104 = vmatmul.mubr.bf16.gmra.mrb[0].mxu0 %v5499
  %v6105 = vpop.f32.mrb[0].mxu0
  %v6106 = vadd.f32 %v5764, %v6105
  %v6107 = vpop.f32.mrb[0].mxu0
  %v6108 = vadd.f32 %v5768, %v6107
  %v6109 = vpop.f32.mrb[0].mxu0
  %v6110 = vadd.f32 %v5764, %v6109
  %v6111 = vpop.f32.mrb[0].mxu0
  %v6112 = vadd.f32 %v5768, %v6111
  %6113 = vmatprep.mubr.bf16.mxu0 %v5502
  %6114 = vmatmul.mubr.bf16.gmra.mrb[0].mxu0 %v5501
  %v6115 = vpop.f32.mrb[0].mxu0
  %v6116 = vadd.f32 %v5764, %v6115
  %v6117 = vpop.f32.mrb[0].mxu0
  %v6118 = vadd.f32 %v5768, %v6117
  %v6119 = vpop.f32.mrb[0].mxu0
  %v6120 = vadd.f32 %v5764, %v6119
  %v6121 = vpop.f32.mrb[0].mxu0
  %v6122 = vadd.f32 %v5768, %v6121
  %6123 = vmatprep.mubr.bf16.mxu0 %v5504
  %6124 = vmatmul.mubr.bf16.gmra.mrb[0].mxu0 %v5503
  %v6125 = vpop.f32.mrb[0].mxu0
  %v6126 = vadd.f32 %v5764, %v6125
  %v6127 = vpop.f32.mrb[0].mxu0
  %v6128 = vadd.f32 %v5768, %v6127
  %v6129 = vpop.f32.mrb[0].mxu0
  %v6130 = vadd.f32 %v5764, %v6129
  %v6131 = vpop.f32.mrb[0].mxu0
  %v6132 = vadd.f32 %v5768, %v6131
  %6133 = vmatprep.mubr.bf16.mxu0 %v5506
  %6134 = vmatmul.mubr.bf16.gmra.mrb[0].mxu0 %v5505
  %v6135 = vpop.f32.mrb[0].mxu0
  %v6136 = vadd.f32 %v5764, %v6135
  %v6137 = vpop.f32.mrb[0].mxu0
  %v6138 = vadd.f32 %v5768, %v6137
  %v6139 = vpop.f32.mrb[0].mxu0
  %v6140 = vadd.f32 %v5764, %v6139
  %v6141 = vpop.f32.mrb[0].mxu0
  %v6142 = vadd.f32 %v5768, %v6141
  %6143 = vmatprep.mubr.bf16.mxu0 %v5508
  %6144 = vmatmul.mubr.bf16.gmra.mrb[0].mxu0 %v5507
  %v6145 = vpop.f32.mrb[0].mxu0
  %v6146 = vadd.f32 %v5764, %v6145
  %v6147 = vpop.f32.mrb[0].mxu0
  %v6148 = vadd.f32 %v5768, %v6147
  %v6149 = vpop.f32.mrb[0].mxu0
  %v6150 = vadd.f32 %v5764, %v6149
  %v6151 = vpop.f32.mrb[0].mxu0
  %v6152 = vadd.f32 %v5768, %v6151
  %6153 = vmatprep.mubr.bf16.mxu0 %v5510
  %6154 = vmatmul.mubr.bf16.gmra.mrb[0].mxu0 %v5509
  %v6155 = vpop.f32.mrb[0].mxu0
  %v6156 = vadd.f32 %v5764, %v6155
  %v6157 = vpop.f32.mrb[0].mxu0
  %v6158 = vadd.f32 %v5768, %v6157
  %v6159 = vpop.f32.mrb[0].mxu0
  %v6160 = vadd.f32 %v5764, %v6159
  %v6161 = vpop.f32.mrb[0].mxu0
  %v6162 = vadd.f32 %v5768, %v6161
  %6163 = vmatprep.mubr.bf16.mxu0 %v5512
  %6164 = vmatmul.mubr.bf16.gmra.mrb[0].mxu0 %v5511
  %v6165 = vpop.f32.mrb[0].mxu0
  %v6166 = vadd.f32 %v5764, %v6165
  %v6167 = vpop.f32.mrb[0].mxu0
  %v6168 = vadd.f32 %v5768, %v6167
  %v6169 = vpop.f32.mrb[0].mxu0
  %v6170 = vadd.f32 %v5764, %v6169
  %v6171 = vpop.f32.mrb[0].mxu0
  %v6172 = vadd.f32 %v5768, %v6171
  %6173 = vmatprep.mubr.bf16.mxu0 %v5514
  %6174 = vmatmul.mubr.bf16.gmra.mrb[0].mxu0 %v5513
  %v6175 = vpop.f32.mrb[0].mxu0
  %v6176 = vadd.f32 %v5764, %v6175
  %v6177 = vpop.f32.mrb[0].mxu0
  %v6178 = vadd.f32 %v5768, %v6177
  %v6179 = vpop.f32.mrb[0].mxu0
  %v6180 = vadd.f32 %v5764, %v6179
  %v6181 = vpop.f32.mrb[0].mxu0
  %v6182 = vadd.f32 %v5768, %v6181
  %6183 = vmatprep.mubr.bf16.mxu0 %v5516
  %6184 = vmatmul.mubr.bf16.gmra.mrb[0].mxu0 %v5515
  %v6185 = vpop.f32.mrb[0].mxu0
  %v6186 = vadd.f32 %v5764, %v6185
  %v6187 = vpop.f32.mrb[0].mxu0
  %v6188 = vadd.f32 %v5768, %v6187
  %v6189 = vpop.f32.mrb[0].mxu0
  %v6190 = vadd.f32 %v5764, %v6189
  %v6191 = vpop.f32.mrb[0].mxu0
  %v6192 = vadd.f32 %v5768, %v6191
  %6193 = vmatprep.mubr.bf16.mxu0 %v5518
  %6194 = vmatmul.mubr.bf16.gmra.mrb[0].mxu0 %v5517
  %v6195 = vpop.f32.mrb[0].mxu0
  %v6196 = vadd.f32 %v5764, %v6195
  %v6197 = vpop.f32.mrb[0].mxu0
  %v6198 = vadd.f32 %v5768, %v6197
  %v6199 = vpop.f32.mrb[0].mxu0
  %v6200 = vadd.f32 %v5764, %v6199
  %v6201 = vpop.f32.mrb[0].mxu0
  %v6202 = vadd.f32 %v5768, %v6201
  %6203 = vmatprep.mubr.bf16.mxu0 %v5520
  %6204 = vmatmul.mubr.bf16.gmra.mrb[0].mxu0 %v5519
  %v6205 = vpop.f32.mrb[0].mxu0
  %v6206 = vadd.f32 %v5764, %v6205
  %v6207 = vpop.f32.mrb[0].mxu0
  %v6208 = vadd.f32 %v5768, %v6207
  %v6209 = vpop.f32.mrb[0].mxu0
  %v6210 = vadd.f32 %v5764, %v6209
  %v6211 = vpop.f32.mrb[0].mxu0
  %v6212 = vadd.f32 %v5768, %v6211
  %6213 = vmatprep.mubr.bf16.mxu0 %v5522
  %6214 = vmatmul.mubr.bf16.gmra.mrb[0].mxu0 %v5521
  %v6215 = vpop.f32.mrb[0].mxu0
  %v6216 = vadd.f32 %v5764, %v6215
  %v6217 = vpop.f32.mrb[0].mxu0
  %v6218 = vadd.f32 %v5768, %v6217
  %v6219 = vpop.f32.mrb[0].mxu0
  %v6220 = vadd.f32 %v5764, %v6219
  %v6221 = vpop.f32.mrb[0].mxu0
  %v6222 = vadd.f32 %v5768, %v6221
  %6223 = vmatprep.mubr.bf16.mxu0 %v5524
  %6224 = vmatmul.mubr.bf16.gmra.mrb[0].mxu0 %v5523
  %v6225 = vpop.f32.mrb[0].mxu0
  %v6226 = vadd.f32 %v5764, %v6225
  %v6227 = vpop.f32.mrb[0].mxu0
  %v6228 = vadd.f32 %v5768, %v6227
  %v6229 = vpop.f32.mrb[0].mxu0
  %v6230 = vadd.f32 %v5764, %v6229
  %v6231 = vpop.f32.mrb[0].mxu0
  %v6232 = vadd.f32 %v5768, %v6231
  %6233 = vmatprep.mubr.bf16.mxu0 %v5526
  %6234 = vmatmul.mubr.bf16.gmra.mrb[0].mxu0 %v5525
  %v6235 = vpop.f32.mrb[0].mxu0
  %v6236 = vadd.f32 %v5764, %v6235
  %v6237 = vpop.f32.mrb[0].mxu0
  %v6238 = vadd.f32 %v5768, %v6237
  %v6239 = vpop.f32.mrb[0].mxu0
  %v6240 = vadd.f32 %v5764, %v6239
  %v6241 = vpop.f32.mrb[0].mxu0
  %v6242 = vadd.f32 %v5768, %v6241
  %6243 = vmatprep.mubr.bf16.mxu0 %v5528
  %6244 = vmatmul.mubr.bf16.gmra.mrb[0].mxu0 %v5527
  %v6245 = vpop.f32.mrb[0].mxu0
  %v6246 = vadd.f32 %v5764, %v6245
  %v6247 = vpop.f32.mrb[0].mxu0
  %v6248 = vadd.f32 %v5768, %v6247
  %v6249 = vpop.f32.mrb[0].mxu0
  %v6250 = vadd.f32 %v5764, %v6249
  %v6251 = vpop.f32.mrb[0].mxu0
  %v6252 = vadd.f32 %v5768, %v6251
  %6253 = vmatprep.mubr.bf16.mxu0 %v5530
  %6254 = vmatmul.mubr.bf16.gmra.mrb[0].mxu0 %v5529
  %v6255 = vpop.f32.mrb[0].mxu0
  %v6256 = vadd.f32 %v5764, %v6255
  %v6257 = vpop.f32.mrb[0].mxu0
  %v6258 = vadd.f32 %v5768, %v6257
  %v6259 = vpop.f32.mrb[0].mxu0
  %v6260 = vadd.f32 %v5764, %v6259
  %v6261 = vpop.f32.mrb[0].mxu0
  %v6262 = vadd.f32 %v5768, %v6261
  %6263 = vmatprep.mubr.bf16.mxu0 %v5532
  %6264 = vmatmul.mubr.bf16.gmra.mrb[0].mxu0 %v5531
  %v6265 = vpop.f32.mrb[0].mxu0
  %v6266 = vadd.f32 %v5764, %v6265
  %v6267 = vpop.f32.mrb[0].mxu0
  %v6268 = vadd.f32 %v5768, %v6267
  %v6269 = vpop.f32.mrb[0].mxu0
  %v6270 = vadd.f32 %v5764, %v6269
  %v6271 = vpop.f32.mrb[0].mxu0
  %v6272 = vadd.f32 %v5768, %v6271
  %6273 = vmatprep.mubr.bf16.mxu0 %v5534
  %6274 = vmatmul.mubr.bf16.gmra.mrb[0].mxu0 %v5533
  %v6275 = vpop.f32.mrb[0].mxu0
  %v6276 = vadd.f32 %v5764, %v6275
  %v6277 = vpop.f32.mrb[0].mxu0
  %v6278 = vadd.f32 %v5768, %v6277
  %v6279 = vpop.f32.mrb[0].mxu0
  %v6280 = vadd.f32 %v5764, %v6279
  %v6281 = vpop.f32.mrb[0].mxu0
  %v6282 = vadd.f32 %v5768, %v6281
  %6283 = vmatprep.mubr.bf16.mxu0 %v5536
  %6284 = vmatmul.mubr.bf16.gmra.mrb[0].mxu0 %v5535
  %v6285 = vpop.f32.mrb[0].mxu0
  %v6286 = vadd.f32 %v5764, %v6285
  %v6287 = vpop.f32.mrb[0].mxu0
  %v6288 = vadd.f32 %v5768, %v6287
  %v6289 = vpop.f32.mrb[0].mxu0
  %v6290 = vadd.f32 %v5764, %v6289
  %v6291 = vpop.f32.mrb[0].mxu0
  %v6292 = vadd.f32 %v5768, %v6291
  %6293 = vmatprep.mubr.bf16.mxu0 %v5538
  %6294 = vmatmul.mubr.bf16.gmra.mrb[0].mxu0 %v5537
  %v6295 = vpop.f32.mrb[0].mxu0
  %v6296 = vadd.f32 %v5764, %v6295
  %v6297 = vpop.f32.mrb[0].mxu0
  %v6298 = vadd.f32 %v5768, %v6297
  %v6299 = vpop.f32.mrb[0].mxu0
  %v6300 = vadd.f32 %v5764, %v6299
  %v6301 = vpop.f32.mrb[0].mxu0
  %v6302 = vadd.f32 %v5768, %v6301
  %6303 = vmatprep.mubr.bf16.mxu0 %v5540
  %6304 = vmatmul.mubr.bf16.gmra.mrb[0].mxu0 %v5539
  %v6305 = vpop.f32.mrb[0].mxu0
  %v6306 = vadd.f32 %v5764, %v6305
  %v6307 = vpop.f32.mrb[0].mxu0
  %v6308 = vadd.f32 %v5768, %v6307
  %v6309 = vpop.f32.mrb[0].mxu0
  %v6310 = vadd.f32 %v5764, %v6309
  %v6311 = vpop.f32.mrb[0].mxu0
  %v6312 = vadd.f32 %v5768, %v6311
  %6313 = vmatprep.mubr.bf16.mxu0 %v5542
  %6314 = vmatmul.mubr.bf16.gmra.mrb[0].mxu0 %v5541
  %v6315 = vpop.f32.mrb[0].mxu0
  %v6316 = vadd.f32 %v5764, %v6315
  %v6317 = vpop.f32.mrb[0].mxu0
  %v6318 = vadd.f32 %v5768, %v6317
  %v6319 = vpop.f32.mrb[0].mxu0
  %v6320 = vadd.f32 %v5764, %v6319
  %v6321 = vpop.f32.mrb[0].mxu0
  %v6322 = vadd.f32 %v5768, %v6321
  %6323 = vmatprep.mubr.bf16.mxu0 %v5544
  %6324 = vmatmul.mubr.bf16.gmra.mrb[0].mxu0 %v5543
  %v6325 = vpop.f32.mrb[0].mxu0
  %v6326 = vadd.f32 %v5764, %v6325
  %v6327 = vpop.f32.mrb[0].mxu0
  %v6328 = vadd.f32 %v5768, %v6327
  %v6329 = vpop.f32.mrb[0].mxu0
  %v6330 = vadd.f32 %v5764, %v6329
  %v6331 = vpop.f32.mrb[0].mxu0
  %v6332 = vadd.f32 %v5768, %v6331
  %6333 = vmatprep.mubr.bf16.mxu0 %v5546
  %6334 = vmatmul.mubr.bf16.gmra.mrb[0].mxu0 %v5545
  %v6335 = vpop.f32.mrb[0].mxu0
  %v6336 = vadd.f32 %v5764, %v6335
  %v6337 = vpop.f32.mrb[0].mxu0
  %v6338 = vadd.f32 %v5768, %v6337
  %v6339 = vpop.f32.mrb[0].mxu0
  %v6340 = vadd.f32 %v5764, %v6339
  %v6341 = vpop.f32.mrb[0].mxu0
  %v6342 = vadd.f32 %v5768, %v6341
  %6343 = vmatprep.mubr.bf16.mxu0 %v5548
  %6344 = vmatmul.mubr.bf16.gmra.mrb[0].mxu0 %v5547
  %v6345 = vpop.f32.mrb[0].mxu0
  %v6346 = vadd.f32 %v5764, %v6345
  %v6347 = vpop.f32.mrb[0].mxu0
  %v6348 = vadd.f32 %v5768, %v6347
  %v6349 = vpop.f32.mrb[0].mxu0
  %v6350 = vadd.f32 %v5764, %v6349
  %v6351 = vpop.f32.mrb[0].mxu0
  %v6352 = vadd.f32 %v5768, %v6351
  %6353 = vmatprep.mubr.bf16.mxu0 %v5550
  %6354 = vmatmul.mubr.bf16.gmra.mrb[0].mxu0 %v5549
  %v6355 = vpop.f32.mrb[0].mxu0
  %v6356 = vadd.f32 %v5764, %v6355
  %v6357 = vpop.f32.mrb[0].mxu0
  %v6358 = vadd.f32 %v5768, %v6357
  %v6359 = vpop.f32.mrb[0].mxu0
  %v6360 = vadd.f32 %v5764, %v6359
  %v6361 = vpop.f32.mrb[0].mxu0
  %v6362 = vadd.f32 %v5768, %v6361
  %6363 = vmatprep.mubr.bf16.mxu0 %v5552
  %6364 = vmatmul.mubr.bf16.gmra.mrb[0].mxu0 %v5551
  %v6365 = vpop.f32.mrb[0].mxu0
  %v6366 = vadd.f32 %v5764, %v6365
  %v6367 = vpop.f32.mrb[0].mxu0
  %v6368 = vadd.f32 %v5768, %v6367
  %v6369 = vpop.f32.mrb[0].mxu0
  %v6370 = vadd.f32 %v5764, %v6369
  %v6371 = vpop.f32.mrb[0].mxu0
  %v6372 = vadd.f32 %v5768, %v6371
  %6373 = vmatprep.mubr.bf16.mxu0 %v5554
  %6374 = vmatmul.mubr.bf16.gmra.mrb[0].mxu0 %v5553
  %v6375 = vpop.f32.mrb[0].mxu0
  %v6376 = vadd.f32 %v5764, %v6375
  %v6377 = vpop.f32.mrb[0].mxu0
  %v6378 = vadd.f32 %v5768, %v6377
  %v6379 = vpop.f32.mrb[0].mxu0
  %v6380 = vadd.f32 %v5764, %v6379
  %v6381 = vpop.f32.mrb[0].mxu0
  %v6382 = vadd.f32 %v5768, %v6381
  %6383 = vmatprep.mubr.bf16.mxu0 %v5556
  %6384 = vmatmul.mubr.bf16.gmra.mrb[0].mxu0 %v5555
  %v6385 = vpop.f32.mrb[0].mxu0
  %v6386 = vadd.f32 %v5764, %v6385
  %v6387 = vpop.f32.mrb[0].mxu0
  %v6388 = vadd.f32 %v5768, %v6387
  %v6389 = vpop.f32.mrb[0].mxu0
  %v6390 = vadd.f32 %v5764, %v6389
  %v6391 = vpop.f32.mrb[0].mxu0
  %v6392 = vadd.f32 %v5768, %v6391
  %6393 = vmatprep.mubr.bf16.mxu0 %v5558
  %6394 = vmatmul.mubr.bf16.gmra.mrb[0].mxu0 %v5557
  %v6395 = vpop.f32.mrb[0].mxu0
  %v6396 = vadd.f32 %v5764, %v6395
  %v6397 = vpop.f32.mrb[0].mxu0
  %v6398 = vadd.f32 %v5768, %v6397
  %v6399 = vpop.f32.mrb[0].mxu0
  %v6400 = vadd.f32 %v5764, %v6399
  %v6401 = vpop.f32.mrb[0].mxu0
  %v6402 = vadd.f32 %v5768, %v6401
  %6403 = vmatprep.mubr.bf16.mxu0 %v5560
  %6404 = vmatmul.mubr.bf16.gmra.mrb[0].mxu0 %v5559
  %v6405 = vpop.f32.mrb[0].mxu0
  %v6406 = vadd.f32 %v5764, %v6405
  %v6407 = vpop.f32.mrb[0].mxu0
  %v6408 = vadd.f32 %v5768, %v6407
  %v6409 = vpop.f32.mrb[0].mxu0
  %v6410 = vadd.f32 %v5764, %v6409
  %v6411 = vpop.f32.mrb[0].mxu0
  %v6412 = vadd.f32 %v5768, %v6411
  %6413 = vmatprep.mubr.bf16.mxu0 %v5562
  %6414 = vmatmul.mubr.bf16.gmra.mrb[0].mxu0 %v5561
  %v6415 = vpop.f32.mrb[0].mxu0
  %v6416 = vadd.f32 %v5764, %v6415
  %v6417 = vpop.f32.mrb[0].mxu0
  %v6418 = vadd.f32 %v5768, %v6417
  %v6419 = vpop.f32.mrb[0].mxu0
  %v6420 = vadd.f32 %v5764, %v6419
  %v6421 = vpop.f32.mrb[0].mxu0
  %v6422 = vadd.f32 %v5768, %v6421
  %6423 = vmatprep.mubr.bf16.mxu0 %v5564
  %6424 = vmatmul.mubr.bf16.gmra.mrb[0].mxu0 %v5563
  %v6425 = vpop.f32.mrb[0].mxu0
  %v6426 = vadd.f32 %v5764, %v6425
  %v6427 = vpop.f32.mrb[0].mxu0
  %v6428 = vadd.f32 %v5768, %v6427
  %v6429 = vpop.f32.mrb[0].mxu0
  %v6430 = vadd.f32 %v5764, %v6429
  %v6431 = vpop.f32.mrb[0].mxu0
  %v6432 = vadd.f32 %v5768, %v6431
  %6433 = vmatprep.mubr.bf16.mxu0 %v5566
  %6434 = vmatmul.mubr.bf16.gmra.mrb[0].mxu0 %v5565
  %v6435 = vpop.f32.mrb[0].mxu0
  %v6436 = vadd.f32 %v5764, %v6435
  %v6437 = vpop.f32.mrb[0].mxu0
  %v6438 = vadd.f32 %v5768, %v6437
  %v6439 = vpop.f32.mrb[0].mxu0
  %v6440 = vadd.f32 %v5764, %v6439
  %v6441 = vpop.f32.mrb[0].mxu0
  %v6442 = vadd.f32 %v5768, %v6441
  %6443 = vmatprep.mubr.bf16.mxu0 %v5568
  %6444 = vmatmul.mubr.bf16.gmra.mrb[0].mxu0 %v5567
  %v6445 = vpop.f32.mrb[0].mxu0
  %v6446 = vadd.f32 %v5764, %v6445
  %v6447 = vpop.f32.mrb[0].mxu0
  %v6448 = vadd.f32 %v5768, %v6447
  %v6449 = vpop.f32.mrb[0].mxu0
  %v6450 = vadd.f32 %v5764, %v6449
  %v6451 = vpop.f32.mrb[0].mxu0
  %v6452 = vadd.f32 %v5768, %v6451
  %6453 = vmatprep.mubr.bf16.mxu0 %v5570
  %6454 = vmatmul.mubr.bf16.gmra.mrb[0].mxu0 %v5569
  %v6455 = vpop.f32.mrb[0].mxu0
  %v6456 = vadd.f32 %v5764, %v6455
  %v6457 = vpop.f32.mrb[0].mxu0
  %v6458 = vadd.f32 %v5768, %v6457
  %v6459 = vpop.f32.mrb[0].mxu0
  %v6460 = vadd.f32 %v5764, %v6459
  %v6461 = vpop.f32.mrb[0].mxu0
  %v6462 = vadd.f32 %v5768, %v6461
  %6463 = vmatprep.mubr.bf16.mxu0 %v5572
  %6464 = vmatmul.mubr.bf16.gmra.mrb[0].mxu0 %v5571
  %v6465 = vpop.f32.mrb[0].mxu0
  %v6466 = vadd.f32 %v5764, %v6465
  %v6467 = vpop.f32.mrb[0].mxu0
  %v6468 = vadd.f32 %v5768, %v6467
  %v6469 = vpop.f32.mrb[0].mxu0
  %v6470 = vadd.f32 %v5764, %v6469
  %v6471 = vpop.f32.mrb[0].mxu0
  %v6472 = vadd.f32 %v5768, %v6471
  %6473 = vmatprep.mubr.bf16.mxu0 %v5574
  %6474 = vmatmul.mubr.bf16.gmra.mrb[0].mxu0 %v5573
  %v6475 = vpop.f32.mrb[0].mxu0
  %v6476 = vadd.f32 %v5764, %v6475
  %v6477 = vpop.f32.mrb[0].mxu0
  %v6478 = vadd.f32 %v5768, %v6477
  %v6479 = vpop.f32.mrb[0].mxu0
  %v6480 = vadd.f32 %v5764, %v6479
  %v6481 = vpop.f32.mrb[0].mxu0
  %v6482 = vadd.f32 %v5768, %v6481
  %6483 = vmatprep.mubr.bf16.mxu0 %v5576
  %6484 = vmatmul.mubr.bf16.gmra.mrb[0].mxu0 %v5575
  %v6485 = vpop.f32.mrb[0].mxu0
  %v6486 = vadd.f32 %v5764, %v6485
  %v6487 = vpop.f32.mrb[0].mxu0
  %v6488 = vadd.f32 %v5768, %v6487
  %v6489 = vpop.f32.mrb[0].mxu0
  %v6490 = vadd.f32 %v5764, %v6489
  %v6491 = vpop.f32.mrb[0].mxu0
  %v6492 = vadd.f32 %v5768, %v6491
  %6493 = vmatprep.mubr.bf16.mxu0 %v5578
  %6494 = vmatmul.mubr.bf16.gmra.mrb[0].mxu0 %v5577
  %v6495 = vpop.f32.mrb[0].mxu0
  %v6496 = vadd.f32 %v5764, %v6495
  %v6497 = vpop.f32.mrb[0].mxu0
  %v6498 = vadd.f32 %v5768, %v6497
  %v6499 = vpop.f32.mrb[0].mxu0
  %v6500 = vadd.f32 %v5764, %v6499
  %v6501 = vpop.f32.mrb[0].mxu0
  %v6502 = vadd.f32 %v5768, %v6501
  %6503 = vmatprep.mubr.bf16.mxu0 %v5580
  %6504 = vmatmul.mubr.bf16.gmra.mrb[0].mxu0 %v5579
  %v6505 = vpop.f32.mrb[0].mxu0
  %v6506 = vadd.f32 %v5764, %v6505
  %v6507 = vpop.f32.mrb[0].mxu0
  %v6508 = vadd.f32 %v5768, %v6507
  %v6509 = vpop.f32.mrb[0].mxu0
  %v6510 = vadd.f32 %v5764, %v6509
  %v6511 = vpop.f32.mrb[0].mxu0
  %v6512 = vadd.f32 %v5768, %v6511
  %6513 = vmatprep.mubr.bf16.mxu0 %v5582
  %6514 = vmatmul.mubr.bf16.gmra.mrb[0].mxu0 %v5581
  %v6515 = vpop.f32.mrb[0].mxu0
  %v6516 = vadd.f32 %v5764, %v6515
  %v6517 = vpop.f32.mrb[0].mxu0
  %v6518 = vadd.f32 %v5768, %v6517
  %v6519 = vpop.f32.mrb[0].mxu0
  %v6520 = vadd.f32 %v5764, %v6519
  %v6521 = vpop.f32.mrb[0].mxu0
  %v6522 = vadd.f32 %v5768, %v6521
  %6523 = vmatprep.mubr.bf16.mxu0 %v5584
  %6524 = vmatmul.mubr.bf16.gmra.mrb[0].mxu0 %v5583
  %v6525 = vpop.f32.mrb[0].mxu0
  %v6526 = vadd.f32 %v5764, %v6525
  %v6527 = vpop.f32.mrb[0].mxu0
  %v6528 = vadd.f32 %v5768, %v6527
  %v6529 = vpop.f32.mrb[0].mxu0
  %v6530 = vadd.f32 %v5764, %v6529
  %v6531 = vpop.f32.mrb[0].mxu0
  %v6532 = vadd.f32 %v5768, %v6531
  %6533 = vmatprep.mubr.bf16.mxu0 %v5586
  %6534 = vmatmul.mubr.bf16.gmra.mrb[0].mxu0 %v5585
  %v6535 = vpop.f32.mrb[0].mxu0
  %v6536 = vadd.f32 %v5764, %v6535
  %v6537 = vpop.f32.mrb[0].mxu0
  %v6538 = vadd.f32 %v5768, %v6537
  %v6539 = vpop.f32.mrb[0].mxu0
  %v6540 = vadd.f32 %v5764, %v6539
  %v6541 = vpop.f32.mrb[0].mxu0
  %v6542 = vadd.f32 %v5768, %v6541
  %6543 = vmatprep.mubr.bf16.mxu0 %v5588
  %6544 = vmatmul.mubr.bf16.gmra.mrb[0].mxu0 %v5587
  %v6545 = vpop.f32.mrb[0].mxu0
  %v6546 = vadd.f32 %v5764, %v6545
  %v6547 = vpop.f32.mrb[0].mxu0
  %v6548 = vadd.f32 %v5768, %v6547
  %v6549 = vpop.f32.mrb[0].mxu0
  %v6550 = vadd.f32 %v5764, %v6549
  %v6551 = vpop.f32.mrb[0].mxu0
  %v6552 = vadd.f32 %v5768, %v6551
  %6553 = vmatprep.mubr.bf16.mxu0 %v5590
  %6554 = vmatmul.mubr.bf16.gmra.mrb[0].mxu0 %v5589
  %v6555 = vpop.f32.mrb[0].mxu0
  %v6556 = vadd.f32 %v5764, %v6555
  %v6557 = vpop.f32.mrb[0].mxu0
  %v6558 = vadd.f32 %v5768, %v6557
  %v6559 = vpop.f32.mrb[0].mxu0
  %v6560 = vadd.f32 %v5764, %v6559
  %v6561 = vpop.f32.mrb[0].mxu0
  %v6562 = vadd.f32 %v5768, %v6561
  %6563 = vmatprep.mubr.bf16.mxu0 %v5592
  %6564 = vmatmul.mubr.bf16.gmra.mrb[0].mxu0 %v5591
  %v6565 = vpop.f32.mrb[0].mxu0
  %v6566 = vadd.f32 %v5764, %v6565
  %v6567 = vpop.f32.mrb[0].mxu0
  %v6568 = vadd.f32 %v5768, %v6567
  %v6569 = vpop.f32.mrb[0].mxu0
  %v6570 = vadd.f32 %v5764, %v6569
  %v6571 = vpop.f32.mrb[0].mxu0
  %v6572 = vadd.f32 %v5768, %v6571
  %6573 = vmatprep.mubr.bf16.mxu0 %v5594
  %6574 = vmatmul.mubr.bf16.gmra.mrb[0].mxu0 %v5593
  %v6575 = vpop.f32.mrb[0].mxu0
  %v6576 = vadd.f32 %v5764, %v6575
  %v6577 = vpop.f32.mrb[0].mxu0
  %v6578 = vadd.f32 %v5768, %v6577
  %v6579 = vpop.f32.mrb[0].mxu0
  %v6580 = vadd.f32 %v5764, %v6579
  %v6581 = vpop.f32.mrb[0].mxu0
  %v6582 = vadd.f32 %v5768, %v6581
  %6583 = vmatprep.mubr.bf16.mxu0 %v5596
  %6584 = vmatmul.mubr.bf16.gmra.mrb[0].mxu0 %v5595
  %v6585 = vpop.f32.mrb[0].mxu0
  %v6586 = vadd.f32 %v5764, %v6585
  %v6587 = vpop.f32.mrb[0].mxu0
  %v6588 = vadd.f32 %v5768, %v6587
  %v6589 = vpop.f32.mrb[0].mxu0
  %v6590 = vadd.f32 %v5764, %v6589
  %v6591 = vpop.f32.mrb[0].mxu0
  %v6592 = vadd.f32 %v5768, %v6591
  %6593 = vmatprep.mubr.bf16.mxu0 %v5598
  %6594 = vmatmul.mubr.bf16.gmra.mrb[0].mxu0 %v5597
  %v6595 = vpop.f32.mrb[0].mxu0
  %v6596 = vadd.f32 %v5764, %v6595
  %v6597 = vpop.f32.mrb[0].mxu0
  %v6598 = vadd.f32 %v5768, %v6597
  %v6599 = vpop.f32.mrb[0].mxu0
  %v6600 = vadd.f32 %v5764, %v6599
  %v6601 = vpop.f32.mrb[0].mxu0
  %v6602 = vadd.f32 %v5768, %v6601
  %6603 = vmatprep.mubr.bf16.mxu0 %v5600
  %6604 = vmatmul.mubr.bf16.gmra.mrb[0].mxu0 %v5599
  %v6605 = vpop.f32.mrb[0].mxu0
  %v6606 = vadd.f32 %v5764, %v6605
  %v6607 = vpop.f32.mrb[0].mxu0
  %v6608 = vadd.f32 %v5768, %v6607
  %v6609 = vpop.f32.mrb[0].mxu0
  %v6610 = vadd.f32 %v5764, %v6609
  %v6611 = vpop.f32.mrb[0].mxu0
  %v6612 = vadd.f32 %v5768, %v6611
  %6613 = vmatprep.mubr.bf16.mxu0 %v5602
  %6614 = vmatmul.mubr.bf16.gmra.mrb[0].mxu0 %v5601
  %v6615 = vpop.f32.mrb[0].mxu0
  %v6616 = vadd.f32 %v5764, %v6615
  %v6617 = vpop.f32.mrb[0].mxu0
  %v6618 = vadd.f32 %v5768, %v6617
  %v6619 = vpop.f32.mrb[0].mxu0
  %v6620 = vadd.f32 %v5764, %v6619
  %v6621 = vpop.f32.mrb[0].mxu0
  %v6622 = vadd.f32 %v5768, %v6621
  %6623 = vmatprep.mubr.bf16.mxu0 %v5604
  %6624 = vmatmul.mubr.bf16.gmra.mrb[0].mxu0 %v5603
  %v6625 = vpop.f32.mrb[0].mxu0
  %v6626 = vadd.f32 %v5764, %v6625
  %v6627 = vpop.f32.mrb[0].mxu0
  %v6628 = vadd.f32 %v5768, %v6627
  %v6629 = vpop.f32.mrb[0].mxu0
  %v6630 = vadd.f32 %v5764, %v6629
  %v6631 = vpop.f32.mrb[0].mxu0
  %v6632 = vadd.f32 %v5768, %v6631
  %6633 = vmatprep.mubr.bf16.mxu0 %v5606
  %6634 = vmatmul.mubr.bf16.gmra.mrb[0].mxu0 %v5605
  %v6635 = vpop.f32.mrb[0].mxu0
  %v6636 = vadd.f32 %v5764, %v6635
  %v6637 = vpop.f32.mrb[0].mxu0
  %v6638 = vadd.f32 %v5768, %v6637
  %v6639 = vpop.f32.mrb[0].mxu0
  %v6640 = vadd.f32 %v5764, %v6639
  %v6641 = vpop.f32.mrb[0].mxu0
  %v6642 = vadd.f32 %v5768, %v6641
  %6643 = vmatprep.mubr.bf16.mxu0 %v5608
  %6644 = vmatmul.mubr.bf16.gmra.mrb[0].mxu0 %v5607
  %v6645 = vpop.f32.mrb[0].mxu0
  %v6646 = vadd.f32 %v5764, %v6645
  %v6647 = vpop.f32.mrb[0].mxu0
  %v6648 = vadd.f32 %v5768, %v6647
  %v6649 = vpop.f32.mrb[0].mxu0
  %v6650 = vadd.f32 %v5764, %v6649
  %v6651 = vpop.f32.mrb[0].mxu0
  %v6652 = vadd.f32 %v5768, %v6651
  %6653 = vmatprep.mubr.bf16.mxu0 %v5610
  %6654 = vmatmul.mubr.bf16.gmra.mrb[0].mxu0 %v5609
  %v6655 = vpop.f32.mrb[0].mxu0
  %v6656 = vadd.f32 %v5764, %v6655
  %v6657 = vpop.f32.mrb[0].mxu0
  %v6658 = vadd.f32 %v5768, %v6657
  %v6659 = vpop.f32.mrb[0].mxu0
  %v6660 = vadd.f32 %v5764, %v6659
  %v6661 = vpop.f32.mrb[0].mxu0
  %v6662 = vadd.f32 %v5768, %v6661
  %6663 = vmatprep.mubr.bf16.mxu0 %v5612
  %6664 = vmatmul.mubr.bf16.gmra.mrb[0].mxu0 %v5611
  %v6665 = vpop.f32.mrb[0].mxu0
  %v6666 = vadd.f32 %v5764, %v6665
  %v6667 = vpop.f32.mrb[0].mxu0
  %v6668 = vadd.f32 %v5768, %v6667
  %v6669 = vpop.f32.mrb[0].mxu0
  %v6670 = vadd.f32 %v5764, %v6669
  %v6671 = vpop.f32.mrb[0].mxu0
  %v6672 = vadd.f32 %v5768, %v6671
  %6673 = vmatprep.mubr.bf16.mxu0 %v5614
  %6674 = vmatmul.mubr.bf16.gmra.mrb[0].mxu0 %v5613
  %v6675 = vpop.f32.mrb[0].mxu0
  %v6676 = vadd.f32 %v5764, %v6675
  %v6677 = vpop.f32.mrb[0].mxu0
  %v6678 = vadd.f32 %v5768, %v6677
  %v6679 = vpop.f32.mrb[0].mxu0
  %v6680 = vadd.f32 %v5764, %v6679
  %v6681 = vpop.f32.mrb[0].mxu0
  %v6682 = vadd.f32 %v5768, %v6681
  %6683 = vmatprep.mubr.bf16.mxu0 %v5616
  %6684 = vmatmul.mubr.bf16.gmra.mrb[0].mxu0 %v5615
  %v6685 = vpop.f32.mrb[0].mxu0
  %v6686 = vadd.f32 %v5764, %v6685
  %v6687 = vpop.f32.mrb[0].mxu0
  %v6688 = vadd.f32 %v5768, %v6687
  %v6689 = vpop.f32.mrb[0].mxu0
  %v6690 = vadd.f32 %v5764, %v6689
  %v6691 = vpop.f32.mrb[0].mxu0
  %v6692 = vadd.f32 %v5768, %v6691
  %6693 = vmatprep.mubr.bf16.mxu0 %v5618
  %6694 = vmatmul.mubr.bf16.gmra.mrb[0].mxu0 %v5617
  %v6695 = vpop.f32.mrb[0].mxu0
  %v6696 = vadd.f32 %v5764, %v6695
  %v6697 = vpop.f32.mrb[0].mxu0
  %v6698 = vadd.f32 %v5768, %v6697
  %v6699 = vpop.f32.mrb[0].mxu0
  %v6700 = vadd.f32 %v5764, %v6699
  %v6701 = vpop.f32.mrb[0].mxu0
  %v6702 = vadd.f32 %v5768, %v6701
  %6703 = vmatprep.mubr.bf16.mxu0 %v5620
  %6704 = vmatmul.mubr.bf16.gmra.mrb[0].mxu0 %v5619
  %v6705 = vpop.f32.mrb[0].mxu0
  %v6706 = vadd.f32 %v5764, %v6705
  %v6707 = vpop.f32.mrb[0].mxu0
  %v6708 = vadd.f32 %v5768, %v6707
  %v6709 = vpop.f32.mrb[0].mxu0
  %v6710 = vadd.f32 %v5764, %v6709
  %v6711 = vpop.f32.mrb[0].mxu0
  %v6712 = vadd.f32 %v5768, %v6711
  %6713 = vmatprep.mubr.bf16.mxu0 %v5622
  %6714 = vmatmul.mubr.bf16.gmra.mrb[0].mxu0 %v5621
  %v6715 = vpop.f32.mrb[0].mxu0
  %v6716 = vadd.f32 %v5764, %v6715
  %v6717 = vpop.f32.mrb[0].mxu0
  %v6718 = vadd.f32 %v5768, %v6717
  %v6719 = vpop.f32.mrb[0].mxu0
  %v6720 = vadd.f32 %v5764, %v6719
  %v6721 = vpop.f32.mrb[0].mxu0
  %v6722 = vadd.f32 %v5768, %v6721
  %6723 = vmatprep.mubr.bf16.mxu0 %v5624
  %6724 = vmatmul.mubr.bf16.gmra.mrb[0].mxu0 %v5623
  %v6725 = vpop.f32.mrb[0].mxu0
  %v6726 = vadd.f32 %v5764, %v6725
  %v6727 = vpop.f32.mrb[0].mxu0
  %v6728 = vadd.f32 %v5768, %v6727
  %v6729 = vpop.f32.mrb[0].mxu0
  %v6730 = vadd.f32 %v5764, %v6729
  %v6731 = vpop.f32.mrb[0].mxu0
  %v6732 = vadd.f32 %v5768, %v6731
  %6733 = vmatprep.mubr.bf16.mxu0 %v5626
  %6734 = vmatmul.mubr.bf16.gmra.mrb[0].mxu0 %v5625
  %v6735 = vpop.f32.mrb[0].mxu0
  %v6736 = vadd.f32 %v5764, %v6735
  %v6737 = vpop.f32.mrb[0].mxu0
  %v6738 = vadd.f32 %v5768, %v6737
  %v6739 = vpop.f32.mrb[0].mxu0
  %v6740 = vadd.f32 %v5764, %v6739
  %v6741 = vpop.f32.mrb[0].mxu0
  %v6742 = vadd.f32 %v5768, %v6741
  %6743 = vmatprep.mubr.bf16.mxu0 %v5628
  %6744 = vmatmul.mubr.bf16.gmra.mrb[0].mxu0 %v5627
  %v6745 = vpop.f32.mrb[0].mxu0
  %v6746 = vadd.f32 %v5764, %v6745
  %v6747 = vpop.f32.mrb[0].mxu0
  %v6748 = vadd.f32 %v5768, %v6747
  %v6749 = vpop.f32.mrb[0].mxu0
  %v6750 = vadd.f32 %v5764, %v6749
  %v6751 = vpop.f32.mrb[0].mxu0
  %v6752 = vadd.f32 %v5768, %v6751
  %6753 = vmatprep.mubr.bf16.mxu0 %v5630
  %6754 = vmatmul.mubr.bf16.gmra.mrb[0].mxu0 %v5629
  %v6755 = vpop.f32.mrb[0].mxu0
  %v6756 = vadd.f32 %v5764, %v6755
  %v6757 = vpop.f32.mrb[0].mxu0
  %v6758 = vadd.f32 %v5768, %v6757
  %v6759 = vpop.f32.mrb[0].mxu0
  %v6760 = vadd.f32 %v5764, %v6759
  %v6761 = vpop.f32.mrb[0].mxu0
  %v6762 = vadd.f32 %v5768, %v6761
  %6763 = vmatprep.mubr.bf16.mxu0 %v5632
  %6764 = vmatmul.mubr.bf16.gmra.mrb[0].mxu0 %v5631
  %v6765 = vpop.f32.mrb[0].mxu0
  %v6766 = vadd.f32 %v5764, %v6765
  %v6767 = vpop.f32.mrb[0].mxu0
  %v6768 = vadd.f32 %v5768, %v6767
  %v6769 = vpop.f32.mrb[0].mxu0
  %v6770 = vadd.f32 %v5764, %v6769
  %v6771 = vpop.f32.mrb[0].mxu0
  %v6772 = vadd.f32 %v5768, %v6771
  %6773 = vmatprep.mubr.bf16.mxu0 %v5634
  %6774 = vmatmul.mubr.bf16.gmra.mrb[0].mxu0 %v5633
  %v6775 = vpop.f32.mrb[0].mxu0
  %v6776 = vadd.f32 %v5764, %v6775
  %v6777 = vpop.f32.mrb[0].mxu0
  %v6778 = vadd.f32 %v5768, %v6777
  %v6779 = vpop.f32.mrb[0].mxu0
  %v6780 = vadd.f32 %v5764, %v6779
  %v6781 = vpop.f32.mrb[0].mxu0
  %v6782 = vadd.f32 %v5768, %v6781
  %6783 = vmatprep.mubr.bf16.mxu0 %v5636
  %6784 = vmatmul.mubr.bf16.gmra.mrb[0].mxu0 %v5635
  %v6785 = vpop.f32.mrb[0].mxu0
  %v6786 = vadd.f32 %v5764, %v6785
  %v6787 = vpop.f32.mrb[0].mxu0
  %v6788 = vadd.f32 %v5768, %v6787
  %v6789 = vpop.f32.mrb[0].mxu0
  %v6790 = vadd.f32 %v5764, %v6789
  %v6791 = vpop.f32.mrb[0].mxu0
  %v6792 = vadd.f32 %v5768, %v6791
  %6793 = vmatprep.mubr.bf16.mxu0 %v5638
  %6794 = vmatmul.mubr.bf16.gmra.mrb[0].mxu0 %v5637
  %v6795 = vpop.f32.mrb[0].mxu0
  %v6796 = vadd.f32 %v5764, %v6795
  %v6797 = vpop.f32.mrb[0].mxu0
  %v6798 = vadd.f32 %v5768, %v6797
  %v6799 = vpop.f32.mrb[0].mxu0
  %v6800 = vadd.f32 %v5764, %v6799
  %v6801 = vpop.f32.mrb[0].mxu0
  %v6802 = vadd.f32 %v5768, %v6801
  %6803 = vmatprep.mubr.bf16.mxu0 %v5640
  %6804 = vmatmul.mubr.bf16.gmra.mrb[0].mxu0 %v5639
  %v6805 = vpop.f32.mrb[0].mxu0
  %v6806 = vadd.f32 %v5764, %v6805
  %v6807 = vpop.f32.mrb[0].mxu0
  %v6808 = vadd.f32 %v5768, %v6807
  %v6809 = vpop.f32.mrb[0].mxu0
  %v6810 = vadd.f32 %v5764, %v6809
  %v6811 = vpop.f32.mrb[0].mxu0
  %v6812 = vadd.f32 %v5768, %v6811
  %6813 = vmatprep.mubr.bf16.mxu0 %v5642
  %6814 = vmatmul.mubr.bf16.gmra.mrb[0].mxu0 %v5641
  %v6815 = vpop.f32.mrb[0].mxu0
  %v6816 = vadd.f32 %v5764, %v6815
  %v6817 = vpop.f32.mrb[0].mxu0
  %v6818 = vadd.f32 %v5768, %v6817
  %v6819 = vpop.f32.mrb[0].mxu0
  %v6820 = vadd.f32 %v5764, %v6819
  %v6821 = vpop.f32.mrb[0].mxu0
  %v6822 = vadd.f32 %v5768, %v6821
  %6823 = vmatprep.mubr.bf16.mxu0 %v5644
  %6824 = vmatmul.mubr.bf16.gmra.mrb[0].mxu0 %v5643
  %v6825 = vpop.f32.mrb[0].mxu0
  %v6826 = vadd.f32 %v5764, %v6825
  %v6827 = vpop.f32.mrb[0].mxu0
  %v6828 = vadd.f32 %v5768, %v6827
  %v6829 = vpop.f32.mrb[0].mxu0
  %v6830 = vadd.f32 %v5764, %v6829
  %v6831 = vpop.f32.mrb[0].mxu0
  %v6832 = vadd.f32 %v5768, %v6831
  %6833 = vmatprep.mubr.bf16.mxu0 %v5646
  %6834 = vmatmul.mubr.bf16.gmra.mrb[0].mxu0 %v5645
  %v6835 = vpop.f32.mrb[0].mxu0
  %v6836 = vadd.f32 %v5764, %v6835
  %v6837 = vpop.f32.mrb[0].mxu0
  %v6838 = vadd.f32 %v5768, %v6837
  %v6839 = vpop.f32.mrb[0].mxu0
  %v6840 = vadd.f32 %v5764, %v6839
  %v6841 = vpop.f32.mrb[0].mxu0
  %v6842 = vadd.f32 %v5768, %v6841
  %6843 = vmatprep.mubr.bf16.mxu0 %v5648
  %6844 = vmatmul.mubr.bf16.gmra.mrb[0].mxu0 %v5647
  %v6845 = vpop.f32.mrb[0].mxu0
  %v6846 = vadd.f32 %v5764, %v6845
  %v6847 = vpop.f32.mrb[0].mxu0
  %v6848 = vadd.f32 %v5768, %v6847
  %v6849 = vpop.f32.mrb[0].mxu0
  %v6850 = vadd.f32 %v5764, %v6849
  %v6851 = vpop.f32.mrb[0].mxu0
  %v6852 = vadd.f32 %v5768, %v6851
  %6853 = vmatprep.mubr.bf16.mxu0 %v5650
  %6854 = vmatmul.mubr.bf16.gmra.mrb[0].mxu0 %v5649
  %v6855 = vpop.f32.mrb[0].mxu0
  %v6856 = vadd.f32 %v5764, %v6855
  %v6857 = vpop.f32.mrb[0].mxu0
  %v6858 = vadd.f32 %v5768, %v6857
  %v6859 = vpop.f32.mrb[0].mxu0
  %v6860 = vadd.f32 %v5764, %v6859
  %v6861 = vpop.f32.mrb[0].mxu0
  %v6862 = vadd.f32 %v5768, %v6861
  %6863 = vmatprep.mubr.bf16.mxu0 %v5652
  %6864 = vmatmul.mubr.bf16.gmra.mrb[0].mxu0 %v5651
  %v6865 = vpop.f32.mrb[0].mxu0
  %v6866 = vadd.f32 %v5764, %v6865
  %v6867 = vpop.f32.mrb[0].mxu0
  %v6868 = vadd.f32 %v5768, %v6867
  %v6869 = vpop.f32.mrb[0].mxu0
  %v6870 = vadd.f32 %v5764, %v6869
  %v6871 = vpop.f32.mrb[0].mxu0
  %v6872 = vadd.f32 %v5768, %v6871
  %6873 = vmatprep.mubr.bf16.mxu0 %v5654
  %6874 = vmatmul.mubr.bf16.gmra.mrb[0].mxu0 %v5653
  %v6875 = vpop.f32.mrb[0].mxu0
  %v6876 = vadd.f32 %v5764, %v6875
  %v6877 = vpop.f32.mrb[0].mxu0
  %v6878 = vadd.f32 %v5768, %v6877
  %v6879 = vpop.f32.mrb[0].mxu0
  %v6880 = vadd.f32 %v5764, %v6879
  %v6881 = vpop.f32.mrb[0].mxu0
  %v6882 = vadd.f32 %v5768, %v6881
  %6883 = vmatprep.mubr.bf16.mxu0 %v5656
  %6884 = vmatmul.mubr.bf16.gmra.mrb[0].mxu0 %v5655
  %v6885 = vpop.f32.mrb[0].mxu0
  %v6886 = vadd.f32 %v5764, %v6885
  %v6887 = vpop.f32.mrb[0].mxu0
  %v6888 = vadd.f32 %v5768, %v6887
  %v6889 = vpop.f32.mrb[0].mxu0
  %v6890 = vadd.f32 %v5764, %v6889
  %v6891 = vpop.f32.mrb[0].mxu0
  %v6892 = vadd.f32 %v5768, %v6891
  %6893 = vmatprep.mubr.bf16.mxu0 %v5658
  %6894 = vmatmul.mubr.bf16.gmra.mrb[0].mxu0 %v5657
  %v6895 = vpop.f32.mrb[0].mxu0
  %v6896 = vadd.f32 %v5764, %v6895
  %v6897 = vpop.f32.mrb[0].mxu0
  %v6898 = vadd.f32 %v5768, %v6897
  %v6899 = vpop.f32.mrb[0].mxu0
  %v6900 = vadd.f32 %v5764, %v6899
  %v6901 = vpop.f32.mrb[0].mxu0
  %v6902 = vadd.f32 %v5768, %v6901
  %6903 = vmatprep.mubr.bf16.mxu0 %v5660
  %6904 = vmatmul.mubr.bf16.gmra.mrb[0].mxu0 %v5659
  %v6905 = vpop.f32.mrb[0].mxu0
  %v6906 = vadd.f32 %v5764, %v6905
  %v6907 = vpop.f32.mrb[0].mxu0
  %v6908 = vadd.f32 %v5768, %v6907
  %v6909 = vpop.f32.mrb[0].mxu0
  %v6910 = vadd.f32 %v5764, %v6909
  %v6911 = vpop.f32.mrb[0].mxu0
  %v6912 = vadd.f32 %v5768, %v6911
  %6913 = vmatprep.mubr.bf16.mxu0 %v5662
  %6914 = vmatmul.mubr.bf16.gmra.mrb[0].mxu0 %v5661
  %v6915 = vpop.f32.mrb[0].mxu0
  %v6916 = vadd.f32 %v5764, %v6915
  %v6917 = vpop.f32.mrb[0].mxu0
  %v6918 = vadd.f32 %v5768, %v6917
  %v6919 = vpop.f32.mrb[0].mxu0
  %v6920 = vadd.f32 %v5764, %v6919
  %v6921 = vpop.f32.mrb[0].mxu0
  %v6922 = vadd.f32 %v5768, %v6921
  %6923 = vmatprep.mubr.bf16.mxu0 %v5664
  %6924 = vmatmul.mubr.bf16.gmra.mrb[0].mxu0 %v5663
  %v6925 = vpop.f32.mrb[0].mxu0
  %v6926 = vadd.f32 %v5764, %v6925
  %v6927 = vpop.f32.mrb[0].mxu0
  %v6928 = vadd.f32 %v5768, %v6927
  %v6929 = vpop.f32.mrb[0].mxu0
  %v6930 = vadd.f32 %v5764, %v6929
  %v6931 = vpop.f32.mrb[0].mxu0
  %v6932 = vadd.f32 %v5768, %v6931
  %6933 = vmatprep.mubr.bf16.mxu0 %v5666
  %6934 = vmatmul.mubr.bf16.gmra.mrb[0].mxu0 %v5665
  %v6935 = vpop.f32.mrb[0].mxu0
  %v6936 = vadd.f32 %v5764, %v6935
  %v6937 = vpop.f32.mrb[0].mxu0
  %v6938 = vadd.f32 %v5768, %v6937
  %v6939 = vpop.f32.mrb[0].mxu0
  %v6940 = vadd.f32 %v5764, %v6939
  %v6941 = vpop.f32.mrb[0].mxu0
  %v6942 = vadd.f32 %v5768, %v6941
  %6943 = vmatprep.mubr.bf16.mxu0 %v5668
  %6944 = vmatmul.mubr.bf16.gmra.mrb[0].mxu0 %v5667
  %v6945 = vpop.f32.mrb[0].mxu0
  %v6946 = vadd.f32 %v5764, %v6945
  %v6947 = vpop.f32.mrb[0].mxu0
  %v6948 = vadd.f32 %v5768, %v6947
  %v6949 = vpop.f32.mrb[0].mxu0
  %v6950 = vadd.f32 %v5764, %v6949
  %v6951 = vpop.f32.mrb[0].mxu0
  %v6952 = vadd.f32 %v5768, %v6951
  %6953 = vmatprep.mubr.bf16.mxu0 %v5670
  %6954 = vmatmul.mubr.bf16.gmra.mrb[0].mxu0 %v5669
  %v6955 = vpop.f32.mrb[0].mxu0
  %v6956 = vadd.f32 %v5764, %v6955
  %v6957 = vpop.f32.mrb[0].mxu0
  %v6958 = vadd.f32 %v5768, %v6957
  %v6959 = vpop.f32.mrb[0].mxu0
  %v6960 = vadd.f32 %v5764, %v6959
  %v6961 = vpop.f32.mrb[0].mxu0
  %v6962 = vadd.f32 %v5768, %v6961
  %6963 = vmatprep.mubr.bf16.mxu0 %v5672
  %6964 = vmatmul.mubr.bf16.gmra.mrb[0].mxu0 %v5671
  %v6965 = vpop.f32.mrb[0].mxu0
  %v6966 = vadd.f32 %v5764, %v6965
  %v6967 = vpop.f32.mrb[0].mxu0
  %v6968 = vadd.f32 %v5768, %v6967
  %v6969 = vpop.f32.mrb[0].mxu0
  %v6970 = vadd.f32 %v5764, %v6969
  %v6971 = vpop.f32.mrb[0].mxu0
  %v6972 = vadd.f32 %v5768, %v6971
  %6973 = vmatprep.mubr.bf16.mxu0 %v5674
  %6974 = vmatmul.mubr.bf16.gmra.mrb[0].mxu0 %v5673
  %v6975 = vpop.f32.mrb[0].mxu0
  %v6976 = vadd.f32 %v5764, %v6975
  %v6977 = vpop.f32.mrb[0].mxu0
  %v6978 = vadd.f32 %v5768, %v6977
  %v6979 = vpop.f32.mrb[0].mxu0
  %v6980 = vadd.f32 %v5764, %v6979
  %v6981 = vpop.f32.mrb[0].mxu0
  %v6982 = vadd.f32 %v5768, %v6981
  %6983 = vmatprep.mubr.bf16.mxu0 %v5676
  %6984 = vmatmul.mubr.bf16.gmra.mrb[0].mxu0 %v5675
  %v6985 = vpop.f32.mrb[0].mxu0
  %v6986 = vadd.f32 %v5764, %v6985
  %v6987 = vpop.f32.mrb[0].mxu0
  %v6988 = vadd.f32 %v5768, %v6987
  %v6989 = vpop.f32.mrb[0].mxu0
  %v6990 = vadd.f32 %v5764, %v6989
  %v6991 = vpop.f32.mrb[0].mxu0
  %v6992 = vadd.f32 %v5768, %v6991
  %6993 = vmatprep.mubr.bf16.mxu0 %v5678
  %6994 = vmatmul.mubr.bf16.gmra.mrb[0].mxu0 %v5677
  %v6995 = vpop.f32.mrb[0].mxu0
  %v6996 = vadd.f32 %v5764, %v6995
  %v6997 = vpop.f32.mrb[0].mxu0
  %v6998 = vadd.f32 %v5768, %v6997
  %v6999 = vpop.f32.mrb[0].mxu0
  %v7000 = vadd.f32 %v5764, %v6999
  %v7001 = vpop.f32.mrb[0].mxu0
  %v7002 = vadd.f32 %v5768, %v7001
  %7003 = vmatprep.mubr.bf16.mxu0 %v5680
  %7004 = vmatmul.mubr.bf16.gmra.mrb[0].mxu0 %v5679
  %v7005 = vpop.f32.mrb[0].mxu0
  %v7006 = vadd.f32 %v5764, %v7005
  %v7007 = vpop.f32.mrb[0].mxu0
  %v7008 = vadd.f32 %v5768, %v7007
  %v7009 = vpop.f32.mrb[0].mxu0
  %v7010 = vadd.f32 %v5764, %v7009
  %v7011 = vpop.f32.mrb[0].mxu0
  %v7012 = vadd.f32 %v5768, %v7011
  %7013 = vmatprep.mubr.bf16.mxu0 %v5682
  %7014 = vmatmul.mubr.bf16.gmra.mrb[0].mxu0 %v5681
  %v7015 = vpop.f32.mrb[0].mxu0
  %v7016 = vadd.f32 %v5764, %v7015
  %v7017 = vpop.f32.mrb[0].mxu0
  %v7018 = vadd.f32 %v5768, %v7017
  %v7019 = vpop.f32.mrb[0].mxu0
  %v7020 = vadd.f32 %v5764, %v7019
  %v7021 = vpop.f32.mrb[0].mxu0
  %v7022 = vadd.f32 %v5768, %v7021
  %7023 = vmatprep.mubr.bf16.mxu0 %v5684
  %7024 = vmatmul.mubr.bf16.gmra.mrb[0].mxu0 %v5683
  %v7025 = vpop.f32.mrb[0].mxu0
  %v7026 = vadd.f32 %v5764, %v7025
  %v7027 = vpop.f32.mrb[0].mxu0
  %v7028 = vadd.f32 %v5768, %v7027
  %v7029 = vpop.f32.mrb[0].mxu0
  %v7030 = vadd.f32 %v5764, %v7029
  %v7031 = vpop.f32.mrb[0].mxu0
  %v7032 = vadd.f32 %v5768, %v7031
  %7033 = vmatprep.mubr.bf16.mxu0 %v5686
  %7034 = vmatmul.mubr.bf16.gmra.mrb[0].mxu0 %v5685
  %v7035 = vpop.f32.mrb[0].mxu0
  %v7036 = vadd.f32 %v5764, %v7035
  %v7037 = vpop.f32.mrb[0].mxu0
  %v7038 = vadd.f32 %v5768, %v7037
  %v7039 = vpop.f32.mrb[0].mxu0
  %v7040 = vadd.f32 %v5764, %v7039
  %v7041 = vpop.f32.mrb[0].mxu0
  %v7042 = vadd.f32 %v5768, %v7041
  %7043 = vmatprep.mubr.bf16.mxu0 %v5688
  %7044 = vmatmul.mubr.bf16.gmra.mrb[0].mxu0 %v5687
  %v7045 = vpop.f32.mrb[0].mxu0
  %v7046 = vadd.f32 %v5764, %v7045
  %v7047 = vpop.f32.mrb[0].mxu0
  %v7048 = vadd.f32 %v5768, %v7047
  %v7049 = vpop.f32.mrb[0].mxu0
  %v7050 = vadd.f32 %v5764, %v7049
  %v7051 = vpop.f32.mrb[0].mxu0
  %v7052 = vadd.f32 %v5768, %v7051
  %7053 = vmatprep.mubr.bf16.mxu0 %v5690
  %7054 = vmatmul.mubr.bf16.gmra.mrb[0].mxu0 %v5689
  %v7055 = vpop.f32.mrb[0].mxu0
  %v7056 = vadd.f32 %v5764, %v7055
  %v7057 = vpop.f32.mrb[0].mxu0
  %v7058 = vadd.f32 %v5768, %v7057
  %v7059 = vpop.f32.mrb[0].mxu0
  %v7060 = vadd.f32 %v5764, %v7059
  %v7061 = vpop.f32.mrb[0].mxu0
  %v7062 = vadd.f32 %v5768, %v7061
  %7063 = vmatprep.mubr.bf16.mxu0 %v5692
  %7064 = vmatmul.mubr.bf16.gmra.mrb[0].mxu0 %v5691
  %v7065 = vpop.f32.mrb[0].mxu0
  %v7066 = vadd.f32 %v5764, %v7065
  %v7067 = vpop.f32.mrb[0].mxu0
  %v7068 = vadd.f32 %v5768, %v7067
  %v7069 = vpop.f32.mrb[0].mxu0
  %v7070 = vadd.f32 %v5764, %v7069
  %v7071 = vpop.f32.mrb[0].mxu0
  %v7072 = vadd.f32 %v5768, %v7071
  %7073 = vmatprep.mubr.bf16.mxu0 %v5694
  %7074 = vmatmul.mubr.bf16.gmra.mrb[0].mxu0 %v5693
  %v7075 = vpop.f32.mrb[0].mxu0
  %v7076 = vadd.f32 %v5764, %v7075
  %v7077 = vpop.f32.mrb[0].mxu0
  %v7078 = vadd.f32 %v5768, %v7077
  %v7079 = vpop.f32.mrb[0].mxu0
  %v7080 = vadd.f32 %v5764, %v7079
  %v7081 = vpop.f32.mrb[0].mxu0
  %v7082 = vadd.f32 %v5768, %v7081
  %7083 = vmatprep.mubr.bf16.mxu0 %v5696
  %7084 = vmatmul.mubr.bf16.gmra.mrb[0].mxu0 %v5695
  %v7085 = vpop.f32.mrb[0].mxu0
  %v7086 = vadd.f32 %v5764, %v7085
  %v7087 = vpop.f32.mrb[0].mxu0
  %v7088 = vadd.f32 %v5768, %v7087
  %v7089 = vpop.f32.mrb[0].mxu0
  %v7090 = vadd.f32 %v5764, %v7089
  %v7091 = vpop.f32.mrb[0].mxu0
  %v7092 = vadd.f32 %v5768, %v7091
  %7093 = vmatprep.mubr.bf16.mxu0 %v5698
  %7094 = vmatmul.mubr.bf16.gmra.mrb[0].mxu0 %v5697
  %v7095 = vpop.f32.mrb[0].mxu0
  %v7096 = vadd.f32 %v5764, %v7095
  %v7097 = vpop.f32.mrb[0].mxu0
  %v7098 = vadd.f32 %v5768, %v7097
  %v7099 = vpop.f32.mrb[0].mxu0
  %v7100 = vadd.f32 %v5764, %v7099
  %v7101 = vpop.f32.mrb[0].mxu0
  %v7102 = vadd.f32 %v5768, %v7101
  %7103 = vmatprep.mubr.bf16.mxu0 %v5700
  %7104 = vmatmul.mubr.bf16.gmra.mrb[0].mxu0 %v5699
  %v7105 = vpop.f32.mrb[0].mxu0
  %v7106 = vadd.f32 %v5764, %v7105
  %v7107 = vpop.f32.mrb[0].mxu0
  %v7108 = vadd.f32 %v5768, %v7107
  %v7109 = vpop.f32.mrb[0].mxu0
  %v7110 = vadd.f32 %v5764, %v7109
  %v7111 = vpop.f32.mrb[0].mxu0
  %v7112 = vadd.f32 %v5768, %v7111
  %7113 = vmatprep.mubr.bf16.mxu0 %v5702
  %7114 = vmatmul.mubr.bf16.gmra.mrb[0].mxu0 %v5701
  %v7115 = vpop.f32.mrb[0].mxu0
  %v7116 = vadd.f32 %v5764, %v7115
  %v7117 = vpop.f32.mrb[0].mxu0
  %v7118 = vadd.f32 %v5768, %v7117
  %v7119 = vpop.f32.mrb[0].mxu0
  %v7120 = vadd.f32 %v5764, %v7119
  %v7121 = vpop.f32.mrb[0].mxu0
  %v7122 = vadd.f32 %v5768, %v7121
  %7123 = vmatprep.mubr.bf16.mxu0 %v5704
  %7124 = vmatmul.mubr.bf16.gmra.mrb[0].mxu0 %v5703
  %v7125 = vpop.f32.mrb[0].mxu0
  %v7126 = vadd.f32 %v5764, %v7125
  %v7127 = vpop.f32.mrb[0].mxu0
  %v7128 = vadd.f32 %v5768, %v7127
  %v7129 = vpop.f32.mrb[0].mxu0
  %v7130 = vadd.f32 %v5764, %v7129
  %v7131 = vpop.f32.mrb[0].mxu0
  %v7132 = vadd.f32 %v5768, %v7131
  %7133 = vmatprep.mubr.bf16.mxu0 %v5706
  %7134 = vmatmul.mubr.bf16.gmra.mrb[0].mxu0 %v5705
  %v7135 = vpop.f32.mrb[0].mxu0
  %v7136 = vadd.f32 %v5764, %v7135
  %v7137 = vpop.f32.mrb[0].mxu0
  %v7138 = vadd.f32 %v5768, %v7137
  %v7139 = vpop.f32.mrb[0].mxu0
  %v7140 = vadd.f32 %v5764, %v7139
  %v7141 = vpop.f32.mrb[0].mxu0
  %v7142 = vadd.f32 %v5768, %v7141
  %7143 = vmatprep.mubr.bf16.mxu0 %v5708
  %7144 = vmatmul.mubr.bf16.gmra.mrb[0].mxu0 %v5707
  %v7145 = vpop.f32.mrb[0].mxu0
  %v7146 = vadd.f32 %v5764, %v7145
  %v7147 = vpop.f32.mrb[0].mxu0
  %v7148 = vadd.f32 %v5768, %v7147
  %v7149 = vpop.f32.mrb[0].mxu0
  %v7150 = vadd.f32 %v5764, %v7149
  %v7151 = vpop.f32.mrb[0].mxu0
  %v7152 = vadd.f32 %v5768, %v7151
  %7153 = vmatprep.mubr.bf16.mxu0 %v5710
  %7154 = vmatmul.mubr.bf16.gmra.mrb[0].mxu0 %v5709
  %v7155 = vpop.f32.mrb[0].mxu0
  %v7156 = vadd.f32 %v5764, %v7155
  %v7157 = vpop.f32.mrb[0].mxu0
  %v7158 = vadd.f32 %v5768, %v7157
  %v7159 = vpop.f32.mrb[0].mxu0
  %v7160 = vadd.f32 %v5764, %v7159
  %v7161 = vpop.f32.mrb[0].mxu0
  %v7162 = vadd.f32 %v5768, %v7161
  %7163 = vmatprep.mubr.bf16.mxu0 %v5712
  %7164 = vmatmul.mubr.bf16.gmra.mrb[0].mxu0 %v5711
  %v7165 = vpop.f32.mrb[0].mxu0
  %v7166 = vadd.f32 %v5764, %v7165
  %v7167 = vpop.f32.mrb[0].mxu0
  %v7168 = vadd.f32 %v5768, %v7167
  %v7169 = vpop.f32.mrb[0].mxu0
  %v7170 = vadd.f32 %v5764, %v7169
  %v7171 = vpop.f32.mrb[0].mxu0
  %v7172 = vadd.f32 %v5768, %v7171
  %7173 = vmatprep.mubr.bf16.mxu0 %v5714
  %7174 = vmatmul.mubr.bf16.gmra.mrb[0].mxu0 %v5713
  %v7175 = vpop.f32.mrb[0].mxu0
  %v7176 = vadd.f32 %v5764, %v7175
  %v7177 = vpop.f32.mrb[0].mxu0
  %v7178 = vadd.f32 %v5768, %v7177
  %v7179 = vpop.f32.mrb[0].mxu0
  %v7180 = vadd.f32 %v5764, %v7179
  %v7181 = vpop.f32.mrb[0].mxu0
  %v7182 = vadd.f32 %v5768, %v7181
  %7183 = vmatprep.mubr.bf16.mxu0 %v5716
  %7184 = vmatmul.mubr.bf16.gmra.mrb[0].mxu0 %v5715
  %v7185 = vpop.f32.mrb[0].mxu0
  %v7186 = vadd.f32 %v5764, %v7185
  %v7187 = vpop.f32.mrb[0].mxu0
  %v7188 = vadd.f32 %v5768, %v7187
  %v7189 = vpop.f32.mrb[0].mxu0
  %v7190 = vadd.f32 %v5764, %v7189
  %v7191 = vpop.f32.mrb[0].mxu0
  %v7192 = vadd.f32 %v5768, %v7191
  %7193 = vmatprep.mubr.bf16.mxu0 %v5718
  %7194 = vmatmul.mubr.bf16.gmra.mrb[0].mxu0 %v5717
  %v7195 = vpop.f32.mrb[0].mxu0
  %v7196 = vadd.f32 %v5764, %v7195
  %v7197 = vpop.f32.mrb[0].mxu0
  %v7198 = vadd.f32 %v5768, %v7197
  %v7199 = vpop.f32.mrb[0].mxu0
  %v7200 = vadd.f32 %v5764, %v7199
  %v7201 = vpop.f32.mrb[0].mxu0
  %v7202 = vadd.f32 %v5768, %v7201
  %7203 = vmatprep.mubr.bf16.mxu0 %v5720
  %7204 = vmatmul.mubr.bf16.gmra.mrb[0].mxu0 %v5719
  %v7205 = vpop.f32.mrb[0].mxu0
  %v7206 = vadd.f32 %v5764, %v7205
  %v7207 = vpop.f32.mrb[0].mxu0
  %v7208 = vadd.f32 %v5768, %v7207
  %v7209 = vpop.f32.mrb[0].mxu0
  %v7210 = vadd.f32 %v5764, %v7209
  %v7211 = vpop.f32.mrb[0].mxu0
  %v7212 = vadd.f32 %v5768, %v7211
  %7213 = vmatprep.mubr.bf16.mxu0 %v5722
  %7214 = vmatmul.mubr.bf16.gmra.mrb[0].mxu0 %v5721
  %v7215 = vpop.f32.mrb[0].mxu0
  %v7216 = vadd.f32 %v5764, %v7215
  %v7217 = vpop.f32.mrb[0].mxu0
  %v7218 = vadd.f32 %v5768, %v7217
  %v7219 = vpop.f32.mrb[0].mxu0
  %v7220 = vadd.f32 %v5764, %v7219
  %v7221 = vpop.f32.mrb[0].mxu0
  %v7222 = vadd.f32 %v5768, %v7221
  %7223 = vmatprep.mubr.bf16.mxu0 %v5724
  %7224 = vmatmul.mubr.bf16.gmra.mrb[0].mxu0 %v5723
  %v7225 = vpop.f32.mrb[0].mxu0
  %v7226 = vadd.f32 %v5764, %v7225
  %v7227 = vpop.f32.mrb[0].mxu0
  %v7228 = vadd.f32 %v5768, %v7227
  %v7229 = vpop.f32.mrb[0].mxu0
  %v7230 = vadd.f32 %v5764, %v7229
  %v7231 = vpop.f32.mrb[0].mxu0
  %v7232 = vadd.f32 %v5768, %v7231
  %7233 = vmatprep.mubr.bf16.mxu0 %v5726
  %7234 = vmatmul.mubr.bf16.gmra.mrb[0].mxu0 %v5725
  %v7235 = vpop.f32.mrb[0].mxu0
  %v7236 = vadd.f32 %v5764, %v7235
  %v7237 = vpop.f32.mrb[0].mxu0
  %v7238 = vadd.f32 %v5768, %v7237
  %v7239 = vpop.f32.mrb[0].mxu0
  %v7240 = vadd.f32 %v5764, %v7239
  %v7241 = vpop.f32.mrb[0].mxu0
  %v7242 = vadd.f32 %v5768, %v7241
  %7243 = vdwg.mxu0
  %v7244 = vtanh.pop %v5966
  %v7245 = vtanh.pop %v5968
  %v7246 = vtanh.pop %v5970
  %v7247 = vtanh.pop %v5972
  %v7248 = vtanh.pop %v5976
  %v7249 = vtanh.pop %v5978
  %v7250 = vtanh.pop %v5980
  %v7251 = vtanh.pop %v5982
  %v7252 = vtanh.pop %v5986
  %v7253 = vtanh.pop %v5988
  %v7254 = vtanh.pop %v5990
  %v7255 = vtanh.pop %v5992
  %v7256 = vtanh.pop %v5996
  %v7257 = vtanh.pop %v5998
  %v7258 = vtanh.pop %v6000
  %v7259 = vtanh.pop %v6002
  %v7260 = vtanh.pop %v6006
  %v7261 = vtanh.pop %v6008
  %v7262 = vtanh.pop %v6010
  %v7263 = vtanh.pop %v6012
  %v7264 = vtanh.pop %v6016
  %v7265 = vtanh.pop %v6018
  %v7266 = vtanh.pop %v6020
  %v7267 = vtanh.pop %v6022
  %v7268 = vtanh.pop %v6026
  %v7269 = vtanh.pop %v6028
  %v7270 = vtanh.pop %v6030
  %v7271 = vtanh.pop %v6032
  %v7272 = vtanh.pop %v6036
  %v7273 = vtanh.pop %v6038
  %v7274 = vtanh.pop %v6040
  %v7275 = vtanh.pop %v6042
  %v7276 = vtanh.pop %v6046
  %v7277 = vtanh.pop %v6048
  %v7278 = vtanh.pop %v6050
  %v7279 = vtanh.pop %v6052
  %v7280 = vtanh.pop %v6056
  %v7281 = vtanh.pop %v6058
  %v7282 = vtanh.pop %v6060
  %v7283 = vtanh.pop %v6062
  %v7284 = vtanh.pop %v6066
  %v7285 = vtanh.pop %v6068
  %v7286 = vtanh.pop %v6070
  %v7287 = vtanh.pop %v6072
  %v7288 = vtanh.pop %v6076
  %v7289 = vtanh.pop %v6078
  %v7290 = vtanh.pop %v6080
  %v7291 = vtanh.pop %v6082
  %v7292 = vtanh.pop %v6086
  %v7293 = vtanh.pop %v6088
  %v7294 = vtanh.pop %v6090
  %v7295 = vtanh.pop %v6092
  %v7296 = vtanh.pop %v6096
  %v7297 = vtanh.pop %v6098
  %v7298 = vtanh.pop %v6100
  %v7299 = vtanh.pop %v6102
  %v7300 = vtanh.pop %v6106
  %v7301 = vtanh.pop %v6108
  %v7302 = vtanh.pop %v6110
  %v7303 = vtanh.pop %v6112
  %v7304 = vtanh.pop %v6116
  %v7305 = vtanh.pop %v6118
  %v7306 = vtanh.pop %v6120
  %v7307 = vtanh.pop %v6122
  %v7308 = vtanh.pop %v6126
  %v7309 = vtanh.pop %v6128
  %v7310 = vtanh.pop %v6130
  %v7311 = vtanh.pop %v6132
  %v7312 = vtanh.pop %v6136
  %v7313 = vtanh.pop %v6138
  %v7314 = vtanh.pop %v6140
  %v7315 = vtanh.pop %v6142
  %v7316 = vtanh.pop %v6146
  %v7317 = vtanh.pop %v6148
  %v7318 = vtanh.pop %v6150
  %v7319 = vtanh.pop %v6152
  %v7320 = vtanh.pop %v6156
  %v7321 = vtanh.pop %v6158
  %v7322 = vtanh.pop %v6160
  %v7323 = vtanh.pop %v6162
  %v7324 = vtanh.pop %v6166
  %v7325 = vtanh.pop %v6168
  %v7326 = vtanh.pop %v6170
  %v7327 = vtanh.pop %v6172
  %v7328 = vtanh.pop %v6176
  %v7329 = vtanh.pop %v6178
  %v7330 = vtanh.pop %v6180
  %v7331 = vtanh.pop %v6182
  %v7332 = vtanh.pop %v6186
  %v7333 = vtanh.pop %v6188
  %v7334 = vtanh.pop %v6190
  %v7335 = vtanh.pop %v6192
  %v7336 = vtanh.pop %v6196
  %v7337 = vtanh.pop %v6198
  %v7338 = vtanh.pop %v6200
  %v7339 = vtanh.pop %v6202
  %v7340 = vtanh.pop %v6206
  %v7341 = vtanh.pop %v6208
  %v7342 = vtanh.pop %v6210
  %v7343 = vtanh.pop %v6212
  %v7344 = vtanh.pop %v6216
  %v7345 = vtanh.pop %v6218
  %v7346 = vtanh.pop %v6220
  %v7347 = vtanh.pop %v6222
  %v7348 = vtanh.pop %v6226
  %v7349 = vtanh.pop %v6228
  %v7350 = vtanh.pop %v6230
  %v7351 = vtanh.pop %v6232
  %v7352 = vtanh.pop %v6236
  %v7353 = vtanh.pop %v6238
  %v7354 = vtanh.pop %v6240
  %v7355 = vtanh.pop %v6242
  %v7356 = vtanh.pop %v6246
  %v7357 = vtanh.pop %v6248
  %v7358 = vtanh.pop %v6250
  %v7359 = vtanh.pop %v6252
  %v7360 = vtanh.pop %v6256
  %v7361 = vtanh.pop %v6258
  %v7362 = vtanh.pop %v6260
  %v7363 = vtanh.pop %v6262
  %v7364 = vtanh.pop %v6266
  %v7365 = vtanh.pop %v6268
  %v7366 = vtanh.pop %v6270
  %v7367 = vtanh.pop %v6272
  %v7368 = vtanh.pop %v6276
  %v7369 = vtanh.pop %v6278
  %v7370 = vtanh.pop %v6280
  %v7371 = vtanh.pop %v6282
  %v7372 = vtanh.pop %v6286
  %v7373 = vtanh.pop %v6288
  %v7374 = vtanh.pop %v6290
  %v7375 = vtanh.pop %v6292
  %v7376 = vtanh.pop %v6296
  %v7377 = vtanh.pop %v6298
  %v7378 = vtanh.pop %v6300
  %v7379 = vtanh.pop %v6302
  %v7380 = vtanh.pop %v6306
  %v7381 = vtanh.pop %v6308
  %v7382 = vtanh.pop %v6310
  %v7383 = vtanh.pop %v6312
  %v7384 = vtanh.pop %v6316
  %v7385 = vtanh.pop %v6318
  %v7386 = vtanh.pop %v6320
  %v7387 = vtanh.pop %v6322
  %v7388 = vtanh.pop %v6326
  %v7389 = vtanh.pop %v6328
  %v7390 = vtanh.pop %v6330
  %v7391 = vtanh.pop %v6332
  %v7392 = vtanh.pop %v6336
  %v7393 = vtanh.pop %v6338
  %v7394 = vtanh.pop %v6340
  %v7395 = vtanh.pop %v6342
  %v7396 = vtanh.pop %v6346
  %v7397 = vtanh.pop %v6348
  %v7398 = vtanh.pop %v6350
  %v7399 = vtanh.pop %v6352
  %v7400 = vtanh.pop %v6356
  %v7401 = vtanh.pop %v6358
  %v7402 = vtanh.pop %v6360
  %v7403 = vtanh.pop %v6362
  %v7404 = vtanh.pop %v6366
  %v7405 = vtanh.pop %v6368
  %v7406 = vtanh.pop %v6370
  %v7407 = vtanh.pop %v6372
  %v7408 = vtanh.pop %v6376
  %v7409 = vtanh.pop %v6378
  %v7410 = vtanh.pop %v6380
  %v7411 = vtanh.pop %v6382
  %v7412 = vtanh.pop %v6386
  %v7413 = vtanh.pop %v6388
  %v7414 = vtanh.pop %v6390
  %v7415 = vtanh.pop %v6392
  %v7416 = vtanh.pop %v6396
  %v7417 = vtanh.pop %v6398
  %v7418 = vtanh.pop %v6400
  %v7419 = vtanh.pop %v6402
  %v7420 = vtanh.pop %v6406
  %v7421 = vtanh.pop %v6408
  %v7422 = vtanh.pop %v6410
  %v7423 = vtanh.pop %v6412
  %v7424 = vtanh.pop %v6416
  %v7425 = vtanh.pop %v6418
  %v7426 = vtanh.pop %v6420
  %v7427 = vtanh.pop %v6422
  %v7428 = vtanh.pop %v6426
  %v7429 = vtanh.pop %v6428
  %v7430 = vtanh.pop %v6430
  %v7431 = vtanh.pop %v6432
  %v7432 = vtanh.pop %v6436
  %v7433 = vtanh.pop %v6438
  %v7434 = vtanh.pop %v6440
  %v7435 = vtanh.pop %v6442
  %v7436 = vtanh.pop %v6446
  %v7437 = vtanh.pop %v6448
  %v7438 = vtanh.pop %v6450
  %v7439 = vtanh.pop %v6452
  %v7440 = vtanh.pop %v6456
  %v7441 = vtanh.pop %v6458
  %v7442 = vtanh.pop %v6460
  %v7443 = vtanh.pop %v6462
  %v7444 = vtanh.pop %v6466
  %v7445 = vtanh.pop %v6468
  %v7446 = vtanh.pop %v6470
  %v7447 = vtanh.pop %v6472
  %v7448 = vtanh.pop %v6476
  %v7449 = vtanh.pop %v6478
  %v7450 = vtanh.pop %v6480
  %v7451 = vtanh.pop %v6482
  %v7452 = vtanh.pop %v6486
  %v7453 = vtanh.pop %v6488
  %v7454 = vtanh.pop %v6490
  %v7455 = vtanh.pop %v6492
  %v7456 = vtanh.pop %v6496
  %v7457 = vtanh.pop %v6498
  %v7458 = vtanh.pop %v6500
  %v7459 = vtanh.pop %v6502
  %v7460 = vtanh.pop %v6506
  %v7461 = vtanh.pop %v6508
  %v7462 = vtanh.pop %v6510
  %v7463 = vtanh.pop %v6512
  %v7464 = vtanh.pop %v6516
  %v7465 = vtanh.pop %v6518
  %v7466 = vtanh.pop %v6520
  %v7467 = vtanh.pop %v6522
  %v7468 = vtanh.pop %v6526
  %v7469 = vtanh.pop %v6528
  %v7470 = vtanh.pop %v6530
  %v7471 = vtanh.pop %v6532
  %v7472 = vtanh.pop %v6536
  %v7473 = vtanh.pop %v6538
  %v7474 = vtanh.pop %v6540
  %v7475 = vtanh.pop %v6542
  %v7476 = vtanh.pop %v6546
  %v7477 = vtanh.pop %v6548
  %v7478 = vtanh.pop %v6550
  %v7479 = vtanh.pop %v6552
  %v7480 = vtanh.pop %v6556
  %v7481 = vtanh.pop %v6558
  %v7482 = vtanh.pop %v6560
  %v7483 = vtanh.pop %v6562
  %v7484 = vtanh.pop %v6566
  %v7485 = vtanh.pop %v6568
  %v7486 = vtanh.pop %v6570
  %v7487 = vtanh.pop %v6572
  %v7488 = vtanh.pop %v6576
  %v7489 = vtanh.pop %v6578
  %v7490 = vtanh.pop %v6580
  %v7491 = vtanh.pop %v6582
  %v7492 = vtanh.pop %v6586
  %v7493 = vtanh.pop %v6588
  %v7494 = vtanh.pop %v6590
  %v7495 = vtanh.pop %v6592
  %v7496 = vtanh.pop %v6596
  %v7497 = vtanh.pop %v6598
  %v7498 = vtanh.pop %v6600
  %v7499 = vtanh.pop %v6602
  %v7500 = vtanh.pop %v6606
  %v7501 = vtanh.pop %v6608
  %v7502 = vtanh.pop %v6610
  %v7503 = vtanh.pop %v6612
  %v7504 = vtanh.pop %v6616
  %v7505 = vtanh.pop %v6618
  %v7506 = vtanh.pop %v6620
  %v7507 = vtanh.pop %v6622
  %v7508 = vtanh.pop %v6626
  %v7509 = vtanh.pop %v6628
  %v7510 = vtanh.pop %v6630
  %v7511 = vtanh.pop %v6632
  %v7512 = vtanh.pop %v6636
  %v7513 = vtanh.pop %v6638
  %v7514 = vtanh.pop %v6640
  %v7515 = vtanh.pop %v6642
  %v7516 = vtanh.pop %v6646
  %v7517 = vtanh.pop %v6648
  %v7518 = vtanh.pop %v6650
  %v7519 = vtanh.pop %v6652
  %v7520 = vtanh.pop %v6656
  %v7521 = vtanh.pop %v6658
  %v7522 = vtanh.pop %v6660
  %v7523 = vtanh.pop %v6662
  %v7524 = vtanh.pop %v6666
  %v7525 = vtanh.pop %v6668
  %v7526 = vtanh.pop %v6670
  %v7527 = vtanh.pop %v6672
  %v7528 = vtanh.pop %v6676
  %v7529 = vtanh.pop %v6678
  %v7530 = vtanh.pop %v6680
  %v7531 = vtanh.pop %v6682
  %v7532 = vtanh.pop %v6686
  %v7533 = vtanh.pop %v6688
  %v7534 = vtanh.pop %v6690
  %v7535 = vtanh.pop %v6692
  %v7536 = vtanh.pop %v6696
  %v7537 = vtanh.pop %v6698
  %v7538 = vtanh.pop %v6700
  %v7539 = vtanh.pop %v6702
  %v7540 = vtanh.pop %v6706
  %v7541 = vtanh.pop %v6708
  %v7542 = vtanh.pop %v6710
  %v7543 = vtanh.pop %v6712
  %v7544 = vtanh.pop %v6716
  %v7545 = vtanh.pop %v6718
  %v7546 = vtanh.pop %v6720
  %v7547 = vtanh.pop %v6722
  %v7548 = vtanh.pop %v6726
  %v7549 = vtanh.pop %v6728
  %v7550 = vtanh.pop %v6730
  %v7551 = vtanh.pop %v6732
  %v7552 = vtanh.pop %v6736
  %v7553 = vtanh.pop %v6738
  %v7554 = vtanh.pop %v6740
  %v7555 = vtanh.pop %v6742
  %v7556 = vtanh.pop %v6746
  %v7557 = vtanh.pop %v6748
  %v7558 = vtanh.pop %v6750
  %v7559 = vtanh.pop %v6752
  %v7560 = vtanh.pop %v6756
  %v7561 = vtanh.pop %v6758
  %v7562 = vtanh.pop %v6760
  %v7563 = vtanh.pop %v6762
  %v7564 = vtanh.pop %v6766
  %v7565 = vtanh.pop %v6768
  %v7566 = vtanh.pop %v6770
  %v7567 = vtanh.pop %v6772
  %v7568 = vtanh.pop %v6776
  %v7569 = vtanh.pop %v6778
  %v7570 = vtanh.pop %v6780
  %v7571 = vtanh.pop %v6782
  %v7572 = vtanh.pop %v6786
  %v7573 = vtanh.pop %v6788
  %v7574 = vtanh.pop %v6790
  %v7575 = vtanh.pop %v6792
  %v7576 = vtanh.pop %v6796
  %v7577 = vtanh.pop %v6798
  %v7578 = vtanh.pop %v6800
  %v7579 = vtanh.pop %v6802
  %v7580 = vtanh.pop %v6806
  %v7581 = vtanh.pop %v6808
  %v7582 = vtanh.pop %v6810
  %v7583 = vtanh.pop %v6812
  %v7584 = vtanh.pop %v6816
  %v7585 = vtanh.pop %v6818
  %v7586 = vtanh.pop %v6820
  %v7587 = vtanh.pop %v6822
  %v7588 = vtanh.pop %v6826
  %v7589 = vtanh.pop %v6828
  %v7590 = vtanh.pop %v6830
  %v7591 = vtanh.pop %v6832
  %v7592 = vtanh.pop %v6836
  %v7593 = vtanh.pop %v6838
  %v7594 = vtanh.pop %v6840
  %v7595 = vtanh.pop %v6842
  %v7596 = vtanh.pop %v6846
  %v7597 = vtanh.pop %v6848
  %v7598 = vtanh.pop %v6850
  %v7599 = vtanh.pop %v6852
  %v7600 = vtanh.pop %v6856
  %v7601 = vtanh.pop %v6858
  %v7602 = vtanh.pop %v6860
  %v7603 = vtanh.pop %v6862
  %v7604 = vtanh.pop %v6866
  %v7605 = vtanh.pop %v6868
  %v7606 = vtanh.pop %v6870
  %v7607 = vtanh.pop %v6872
  %v7608 = vtanh.pop %v6876
  %v7609 = vtanh.pop %v6878
  %v7610 = vtanh.pop %v6880
  %v7611 = vtanh.pop %v6882
  %v7612 = vtanh.pop %v6886
  %v7613 = vtanh.pop %v6888
  %v7614 = vtanh.pop %v6890
  %v7615 = vtanh.pop %v6892
  %v7616 = vtanh.pop %v6896
  %v7617 = vtanh.pop %v6898
  %v7618 = vtanh.pop %v6900
  %v7619 = vtanh.pop %v6902
  %v7620 = vtanh.pop %v6906
  %v7621 = vtanh.pop %v6908
  %v7622 = vtanh.pop %v6910
  %v7623 = vtanh.pop %v6912
  %v7624 = vtanh.pop %v6916
  %v7625 = vtanh.pop %v6918
  %v7626 = vtanh.pop %v6920
  %v7627 = vtanh.pop %v6922
  %v7628 = vtanh.pop %v6926
  %v7629 = vtanh.pop %v6928
  %v7630 = vtanh.pop %v6930
  %v7631 = vtanh.pop %v6932
  %v7632 = vtanh.pop %v6936
  %v7633 = vtanh.pop %v6938
  %v7634 = vtanh.pop %v6940
  %v7635 = vtanh.pop %v6942
  %v7636 = vtanh.pop %v6946
  %v7637 = vtanh.pop %v6948
  %v7638 = vtanh.pop %v6950
  %v7639 = vtanh.pop %v6952
  %v7640 = vtanh.pop %v6956
  %v7641 = vtanh.pop %v6958
  %v7642 = vtanh.pop %v6960
  %v7643 = vtanh.pop %v6962
  %v7644 = vtanh.pop %v6966
  %v7645 = vtanh.pop %v6968
  %v7646 = vtanh.pop %v6970
  %v7647 = vtanh.pop %v6972
  %v7648 = vtanh.pop %v6976
  %v7649 = vtanh.pop %v6978
  %v7650 = vtanh.pop %v6980
  %v7651 = vtanh.pop %v6982
  %v7652 = vtanh.pop %v6986
  %v7653 = vtanh.pop %v6988
  %v7654 = vtanh.pop %v6990
  %v7655 = vtanh.pop %v6992
  %v7656 = vtanh.pop %v6996
  %v7657 = vtanh.pop %v6998
  %v7658 = vtanh.pop %v7000
  %v7659 = vtanh.pop %v7002
  %v7660 = vtanh.pop %v7006
  %v7661 = vtanh.pop %v7008
  %v7662 = vtanh.pop %v7010
  %v7663 = vtanh.pop %v7012
  %v7664 = vtanh.pop %v7016
  %v7665 = vtanh.pop %v7018
  %v7666 = vtanh.pop %v7020
  %v7667 = vtanh.pop %v7022
  %v7668 = vtanh.pop %v7026
  %v7669 = vtanh.pop %v7028
  %v7670 = vtanh.pop %v7030
  %v7671 = vtanh.pop %v7032
  %v7672 = vtanh.pop %v7036
  %v7673 = vtanh.pop %v7038
  %v7674 = vtanh.pop %v7040
  %v7675 = vtanh.pop %v7042
  %v7676 = vtanh.pop %v7046
  %v7677 = vtanh.pop %v7048
  %v7678 = vtanh.pop %v7050
  %v7679 = vtanh.pop %v7052
  %v7680 = vtanh.pop %v7056
  %v7681 = vtanh.pop %v7058
  %v7682 = vtanh.pop %v7060
  %v7683 = vtanh.pop %v7062
  %v7684 = vtanh.pop %v7066
  %v7685 = vtanh.pop %v7068
  %v7686 = vtanh.pop %v7070
  %v7687 = vtanh.pop %v7072
  %v7688 = vtanh.pop %v7076
  %v7689 = vtanh.pop %v7078
  %v7690 = vtanh.pop %v7080
  %v7691 = vtanh.pop %v7082
  %v7692 = vtanh.pop %v7086
  %v7693 = vtanh.pop %v7088
  %v7694 = vtanh.pop %v7090
  %v7695 = vtanh.pop %v7092
  %v7696 = vtanh.pop %v7096
  %v7697 = vtanh.pop %v7098
  %v7698 = vtanh.pop %v7100
  %v7699 = vtanh.pop %v7102
  %v7700 = vtanh.pop %v7106
  %v7701 = vtanh.pop %v7108
  %v7702 = vtanh.pop %v7110
  %v7703 = vtanh.pop %v7112
  %v7704 = vtanh.pop %v7116
  %v7705 = vtanh.pop %v7118
  %v7706 = vtanh.pop %v7120
  %v7707 = vtanh.pop %v7122
  %v7708 = vtanh.pop %v7126
  %v7709 = vtanh.pop %v7128
  %v7710 = vtanh.pop %v7130
  %v7711 = vtanh.pop %v7132
  %v7712 = vtanh.pop %v7136
  %v7713 = vtanh.pop %v7138
  %v7714 = vtanh.pop %v7140
  %v7715 = vtanh.pop %v7142
  %v7716 = vtanh.pop %v7146
  %v7717 = vtanh.pop %v7148
  %v7718 = vtanh.pop %v7150
  %v7719 = vtanh.pop %v7152
  %v7720 = vtanh.pop %v7156
  %v7721 = vtanh.pop %v7158
  %v7722 = vtanh.pop %v7160
  %v7723 = vtanh.pop %v7162
  %v7724 = vtanh.pop %v7166
  %v7725 = vtanh.pop %v7168
  %v7726 = vtanh.pop %v7170
  %v7727 = vtanh.pop %v7172
  %v7728 = vtanh.pop %v7176
  %v7729 = vtanh.pop %v7178
  %v7730 = vtanh.pop %v7180
  %v7731 = vtanh.pop %v7182
  %v7732 = vtanh.pop %v7186
  %v7733 = vtanh.pop %v7188
  %v7734 = vtanh.pop %v7190
  %v7735 = vtanh.pop %v7192
  %v7736 = vtanh.pop %v7196
  %v7737 = vtanh.pop %v7198
  %v7738 = vtanh.pop %v7200
  %v7739 = vtanh.pop %v7202
  %v7740 = vtanh.pop %v7206
  %v7741 = vtanh.pop %v7208
  %v7742 = vtanh.pop %v7210
  %v7743 = vtanh.pop %v7212
  %v7744 = vtanh.pop %v7216
  %v7745 = vtanh.pop %v7218
  %v7746 = vtanh.pop %v7220
  %v7747 = vtanh.pop %v7222
  %v7748 = vtanh.pop %v7226
  %v7749 = vtanh.pop %v7228
  %v7750 = vtanh.pop %v7230
  %v7751 = vtanh.pop %v7232
  %v7752 = vtanh.pop %v7236
  %v7753 = vtanh.pop %v7238
  %v7754 = vtanh.pop %v7240
  %v7755 = vtanh.pop %v7242
  %v7756 = vld [vmem:[%s7] sm:$0x3]
  %v7757 = vpack.c.bf16 %v7246, %v7244
  %v7758 = vpack.c.bf16 %v7247, %v7245
  %v7759 = vpack.c.bf16 %v7250, %v7248
  %v7760 = vpack.c.bf16 %v7251, %v7249
  %v7761 = vpack.c.bf16 %v7254, %v7252
  %v7762 = vpack.c.bf16 %v7255, %v7253
  %v7763 = vpack.c.bf16 %v7258, %v7256
  %v7764 = vpack.c.bf16 %v7259, %v7257
  %v7765 = vpack.c.bf16 %v7262, %v7260
  %v7766 = vpack.c.bf16 %v7263, %v7261
  %v7767 = vpack.c.bf16 %v7266, %v7264
  %v7768 = vpack.c.bf16 %v7267, %v7265
  %v7769 = vpack.c.bf16 %v7270, %v7268
  %v7770 = vpack.c.bf16 %v7271, %v7269
  %v7771 = vpack.c.bf16 %v7274, %v7272
  %v7772 = vpack.c.bf16 %v7275, %v7273
  %v7773 = vpack.c.bf16 %v7278, %v7276
  %v7774 = vpack.c.bf16 %v7279, %v7277
  %v7775 = vpack.c.bf16 %v7282, %v7280
  %v7776 = vpack.c.bf16 %v7283, %v7281
  %v7777 = vpack.c.bf16 %v7286, %v7284
  %v7778 = vpack.c.bf16 %v7287, %v7285
  %v7779 = vpack.c.bf16 %v7290, %v7288
  %v7780 = vpack.c.bf16 %v7291, %v7289
  %v7781 = vpack.c.bf16 %v7294, %v7292
  %v7782 = vpack.c.bf16 %v7295, %v7293
  %v7783 = vpack.c.bf16 %v7298, %v7296
  %v7784 = vpack.c.bf16 %v7299, %v7297
  %v7785 = vpack.c.bf16 %v7302, %v7300
  %v7786 = vpack.c.bf16 %v7303, %v7301
  %v7787 = vpack.c.bf16 %v7306, %v7304
  %v7788 = vpack.c.bf16 %v7307, %v7305
  %v7789 = vpack.c.bf16 %v7310, %v7308
  %v7790 = vpack.c.bf16 %v7311, %v7309
  %v7791 = vpack.c.bf16 %v7314, %v7312
  %v7792 = vpack.c.bf16 %v7315, %v7313
  %v7793 = vpack.c.bf16 %v7318, %v7316
  %v7794 = vpack.c.bf16 %v7319, %v7317
  %v7795 = vpack.c.bf16 %v7322, %v7320
  %v7796 = vpack.c.bf16 %v7323, %v7321
  %v7797 = vpack.c.bf16 %v7326, %v7324
  %v7798 = vpack.c.bf16 %v7327, %v7325
  %v7799 = vpack.c.bf16 %v7330, %v7328
  %v7800 = vpack.c.bf16 %v7331, %v7329
  %v7801 = vpack.c.bf16 %v7334, %v7332
  %v7802 = vpack.c.bf16 %v7335, %v7333
  %v7803 = vpack.c.bf16 %v7338, %v7336
  %v7804 = vpack.c.bf16 %v7339, %v7337
  %v7805 = vpack.c.bf16 %v7342, %v7340
  %v7806 = vpack.c.bf16 %v7343, %v7341
  %v7807 = vpack.c.bf16 %v7346, %v7344
  %v7808 = vpack.c.bf16 %v7347, %v7345
  %v7809 = vpack.c.bf16 %v7350, %v7348
  %v7810 = vpack.c.bf16 %v7351, %v7349
  %v7811 = vpack.c.bf16 %v7354, %v7352
  %v7812 = vpack.c.bf16 %v7355, %v7353
  %v7813 = vpack.c.bf16 %v7358, %v7356
  %v7814 = vpack.c.bf16 %v7359, %v7357
  %v7815 = vpack.c.bf16 %v7362, %v7360
  %v7816 = vpack.c.bf16 %v7363, %v7361
  %v7817 = vpack.c.bf16 %v7366, %v7364
  %v7818 = vpack.c.bf16 %v7367, %v7365
  %v7819 = vpack.c.bf16 %v7370, %v7368
  %v7820 = vpack.c.bf16 %v7371, %v7369
  %v7821 = vpack.c.bf16 %v7374, %v7372
  %v7822 = vpack.c.bf16 %v7375, %v7373
  %v7823 = vpack.c.bf16 %v7378, %v7376
  %v7824 = vpack.c.bf16 %v7379, %v7377
  %v7825 = vpack.c.bf16 %v7382, %v7380
  %v7826 = vpack.c.bf16 %v7383, %v7381
  %v7827 = vpack.c.bf16 %v7386, %v7384
  %v7828 = vpack.c.bf16 %v7387, %v7385
  %v7829 = vpack.c.bf16 %v7390, %v7388
  %v7830 = vpack.c.bf16 %v7391, %v7389
  %v7831 = vpack.c.bf16 %v7394, %v7392
  %v7832 = vpack.c.bf16 %v7395, %v7393
  %v7833 = vpack.c.bf16 %v7398, %v7396
  %v7834 = vpack.c.bf16 %v7399, %v7397
  %v7835 = vpack.c.bf16 %v7402, %v7400
  %v7836 = vpack.c.bf16 %v7403, %v7401
  %v7837 = vpack.c.bf16 %v7406, %v7404
  %v7838 = vpack.c.bf16 %v7407, %v7405
  %v7839 = vpack.c.bf16 %v7410, %v7408
  %v7840 = vpack.c.bf16 %v7411, %v7409
  %v7841 = vpack.c.bf16 %v7414, %v7412
  %v7842 = vpack.c.bf16 %v7415, %v7413
  %v7843 = vpack.c.bf16 %v7418, %v7416
  %v7844 = vpack.c.bf16 %v7419, %v7417
  %v7845 = vpack.c.bf16 %v7422, %v7420
  %v7846 = vpack.c.bf16 %v7423, %v7421
  %v7847 = vpack.c.bf16 %v7426, %v7424
  %v7848 = vpack.c.bf16 %v7427, %v7425
  %v7849 = vpack.c.bf16 %v7430, %v7428
  %v7850 = vpack.c.bf16 %v7431, %v7429
  %v7851 = vpack.c.bf16 %v7434, %v7432
  %v7852 = vpack.c.bf16 %v7435, %v7433
  %v7853 = vpack.c.bf16 %v7438, %v7436
  %v7854 = vpack.c.bf16 %v7439, %v7437
  %v7855 = vpack.c.bf16 %v7442, %v7440
  %v7856 = vpack.c.bf16 %v7443, %v7441
  %v7857 = vpack.c.bf16 %v7446, %v7444
  %v7858 = vpack.c.bf16 %v7447, %v7445
  %v7859 = vpack.c.bf16 %v7450, %v7448
  %v7860 = vpack.c.bf16 %v7451, %v7449
  %v7861 = vpack.c.bf16 %v7454, %v7452
  %v7862 = vpack.c.bf16 %v7455, %v7453
  %v7863 = vpack.c.bf16 %v7458, %v7456
  %v7864 = vpack.c.bf16 %v7459, %v7457
  %v7865 = vpack.c.bf16 %v7462, %v7460
  %v7866 = vpack.c.bf16 %v7463, %v7461
  %v7867 = vpack.c.bf16 %v7466, %v7464
  %v7868 = vpack.c.bf16 %v7467, %v7465
  %v7869 = vpack.c.bf16 %v7470, %v7468
  %v7870 = vpack.c.bf16 %v7471, %v7469
  %v7871 = vpack.c.bf16 %v7474, %v7472
  %v7872 = vpack.c.bf16 %v7475, %v7473
  %v7873 = vpack.c.bf16 %v7478, %v7476
  %v7874 = vpack.c.bf16 %v7479, %v7477
  %v7875 = vpack.c.bf16 %v7482, %v7480
  %v7876 = vpack.c.bf16 %v7483, %v7481
  %v7877 = vpack.c.bf16 %v7486, %v7484
  %v7878 = vpack.c.bf16 %v7487, %v7485
  %v7879 = vpack.c.bf16 %v7490, %v7488
  %v7880 = vpack.c.bf16 %v7491, %v7489
  %v7881 = vpack.c.bf16 %v7494, %v7492
  %v7882 = vpack.c.bf16 %v7495, %v7493
  %v7883 = vpack.c.bf16 %v7498, %v7496
  %v7884 = vpack.c.bf16 %v7499, %v7497
  %v7885 = vpack.c.bf16 %v7502, %v7500
  %v7886 = vpack.c.bf16 %v7503, %v7501
  %v7887 = vpack.c.bf16 %v7506, %v7504
  %v7888 = vpack.c.bf16 %v7507, %v7505
  %v7889 = vpack.c.bf16 %v7510, %v7508
  %v7890 = vpack.c.bf16 %v7511, %v7509
  %v7891 = vpack.c.bf16 %v7514, %v7512
  %v7892 = vpack.c.bf16 %v7515, %v7513
  %v7893 = vpack.c.bf16 %v7518, %v7516
  %v7894 = vpack.c.bf16 %v7519, %v7517
  %v7895 = vpack.c.bf16 %v7522, %v7520
  %v7896 = vpack.c.bf16 %v7523, %v7521
  %v7897 = vpack.c.bf16 %v7526, %v7524
  %v7898 = vpack.c.bf16 %v7527, %v7525
  %v7899 = vpack.c.bf16 %v7530, %v7528
  %v7900 = vpack.c.bf16 %v7531, %v7529
  %v7901 = vpack.c.bf16 %v7534, %v7532
  %v7902 = vpack.c.bf16 %v7535, %v7533
  %v7903 = vpack.c.bf16 %v7538, %v7536
  %v7904 = vpack.c.bf16 %v7539, %v7537
  %v7905 = vpack.c.bf16 %v7542, %v7540
  %v7906 = vpack.c.bf16 %v7543, %v7541
  %v7907 = vpack.c.bf16 %v7546, %v7544
  %v7908 = vpack.c.bf16 %v7547, %v7545
  %v7909 = vpack.c.bf16 %v7550, %v7548
  %v7910 = vpack.c.bf16 %v7551, %v7549
  %v7911 = vpack.c.bf16 %v7554, %v7552
  %v7912 = vpack.c.bf16 %v7555, %v7553
  %v7913 = vpack.c.bf16 %v7558, %v7556
  %v7914 = vpack.c.bf16 %v7559, %v7557
  %v7915 = vpack.c.bf16 %v7562, %v7560
  %v7916 = vpack.c.bf16 %v7563, %v7561
  %v7917 = vpack.c.bf16 %v7566, %v7564
  %v7918 = vpack.c.bf16 %v7567, %v7565
  %v7919 = vpack.c.bf16 %v7570, %v7568
  %v7920 = vpack.c.bf16 %v7571, %v7569
  %v7921 = vpack.c.bf16 %v7574, %v7572
  %v7922 = vpack.c.bf16 %v7575, %v7573
  %v7923 = vpack.c.bf16 %v7578, %v7576
  %v7924 = vpack.c.bf16 %v7579, %v7577
  %v7925 = vpack.c.bf16 %v7582, %v7580
  %v7926 = vpack.c.bf16 %v7583, %v7581
  %v7927 = vpack.c.bf16 %v7586, %v7584
  %v7928 = vpack.c.bf16 %v7587, %v7585
  %v7929 = vpack.c.bf16 %v7590, %v7588
  %v7930 = vpack.c.bf16 %v7591, %v7589
  %v7931 = vpack.c.bf16 %v7594, %v7592
  %v7932 = vpack.c.bf16 %v7595, %v7593
  %v7933 = vpack.c.bf16 %v7598, %v7596
  %v7934 = vpack.c.bf16 %v7599, %v7597
  %v7935 = vpack.c.bf16 %v7602, %v7600
  %v7936 = vpack.c.bf16 %v7603, %v7601
  %v7937 = vpack.c.bf16 %v7606, %v7604
  %v7938 = vpack.c.bf16 %v7607, %v7605
  %v7939 = vpack.c.bf16 %v7610, %v7608
  %v7940 = vpack.c.bf16 %v7611, %v7609
  %v7941 = vpack.c.bf16 %v7614, %v7612
  %v7942 = vpack.c.bf16 %v7615, %v7613
  %v7943 = vpack.c.bf16 %v7618, %v7616
  %v7944 = vpack.c.bf16 %v7619, %v7617
  %v7945 = vpack.c.bf16 %v7622, %v7620
  %v7946 = vpack.c.bf16 %v7623, %v7621
  %v7947 = vpack.c.bf16 %v7626, %v7624
  %v7948 = vpack.c.bf16 %v7627, %v7625
  %v7949 = vpack.c.bf16 %v7630, %v7628
  %v7950 = vpack.c.bf16 %v7631, %v7629
  %v7951 = vpack.c.bf16 %v7634, %v7632
  %v7952 = vpack.c.bf16 %v7635, %v7633
  %v7953 = vpack.c.bf16 %v7638, %v7636
  %v7954 = vpack.c.bf16 %v7639, %v7637
  %v7955 = vpack.c.bf16 %v7642, %v7640
  %v7956 = vpack.c.bf16 %v7643, %v7641
  %v7957 = vpack.c.bf16 %v7646, %v7644
  %v7958 = vpack.c.bf16 %v7647, %v7645
  %v7959 = vpack.c.bf16 %v7650, %v7648
  %v7960 = vpack.c.bf16 %v7651, %v7649
  %v7961 = vpack.c.bf16 %v7654, %v7652
  %v7962 = vpack.c.bf16 %v7655, %v7653
  %v7963 = vpack.c.bf16 %v7658, %v7656
  %v7964 = vpack.c.bf16 %v7659, %v7657
  %v7965 = vpack.c.bf16 %v7662, %v7660
  %v7966 = vpack.c.bf16 %v7663, %v7661
  %v7967 = vpack.c.bf16 %v7666, %v7664
  %v7968 = vpack.c.bf16 %v7667, %v7665
  %v7969 = vpack.c.bf16 %v7670, %v7668
  %v7970 = vpack.c.bf16 %v7671, %v7669
  %v7971 = vpack.c.bf16 %v7674, %v7672
  %v7972 = vpack.c.bf16 %v7675, %v7673
  %v7973 = vpack.c.bf16 %v7678, %v7676
  %v7974 = vpack.c.bf16 %v7679, %v7677
  %v7975 = vpack.c.bf16 %v7682, %v7680
  %v7976 = vpack.c.bf16 %v7683, %v7681
  %v7977 = vpack.c.bf16 %v7686, %v7684
  %v7978 = vpack.c.bf16 %v7687, %v7685
  %v7979 = vpack.c.bf16 %v7690, %v7688
  %v7980 = vpack.c.bf16 %v7691, %v7689
  %v7981 = vpack.c.bf16 %v7694, %v7692
  %v7982 = vpack.c.bf16 %v7695, %v7693
  %v7983 = vpack.c.bf16 %v7698, %v7696
  %v7984 = vpack.c.bf16 %v7699, %v7697
  %v7985 = vpack.c.bf16 %v7702, %v7700
  %v7986 = vpack.c.bf16 %v7703, %v7701
  %v7987 = vpack.c.bf16 %v7706, %v7704
  %v7988 = vpack.c.bf16 %v7707, %v7705
  %v7989 = vpack.c.bf16 %v7710, %v7708
  %v7990 = vpack.c.bf16 %v7711, %v7709
  %v7991 = vpack.c.bf16 %v7714, %v7712
  %v7992 = vpack.c.bf16 %v7715, %v7713
  %v7993 = vpack.c.bf16 %v7718, %v7716
  %v7994 = vpack.c.bf16 %v7719, %v7717
  %v7995 = vpack.c.bf16 %v7722, %v7720
  %v7996 = vpack.c.bf16 %v7723, %v7721
  %v7997 = vpack.c.bf16 %v7726, %v7724
  %v7998 = vpack.c.bf16 %v7727, %v7725
  %v7999 = vpack.c.bf16 %v7730, %v7728
  %v8000 = vpack.c.bf16 %v7731, %v7729
  %v8001 = vpack.c.bf16 %v7734, %v7732
  %v8002 = vpack.c.bf16 %v7735, %v7733
  %v8003 = vpack.c.bf16 %v7738, %v7736
  %v8004 = vpack.c.bf16 %v7739, %v7737
  %v8005 = vpack.c.bf16 %v7742, %v7740
  %v8006 = vpack.c.bf16 %v7743, %v7741
  %v8007 = vpack.c.bf16 %v7746, %v7744
  %v8008 = vpack.c.bf16 %v7747, %v7745
  %v8009 = vpack.c.bf16 %v7750, %v7748
  %v8010 = vpack.c.bf16 %v7751, %v7749
  %v8011 = vpack.c.bf16 %v7754, %v7752
  %v8012 = vpack.c.bf16 %v7755, %v7753
  %v8013 = vld [vmem:[#allocation2] sm:$0x1]
  %8015 = vset.pattern.permute.xlu0 0
  %8016 = vperm.xlu0 %8015, %v8013
  %v8017 = vpop.permute.xlu0 %8016
  %v8019 = vlaneseq
  %v8020 = vshrl.u32 %v8019, 7
  %v8021 = vsub.s32 0, %v8020
  %v8022 = vrot.slane %v8017, %v8021
  %v8025 = vunpack.c.l.s4 1966171168
  %v8026 = vunpack.c.0.s8 %v8025
  %v8027 = vlaneseq
  %v8028 = vshrl.u32 %v8027, 7
  %v8029 = vsub.s32 %v8026, %v8028
  %v8030 = vrot.slane %v7756, %v8029
  %v8031 = vcombine.high %v8030, %v8030
  %v8033 = vunpack.c.l.s4 1966171168
  %v8034 = vunpack.c.0.s8 %v8033
  %v8035 = vlaneseq
  %v8036 = vshrl.u32 %v8035, 7
  %v8037 = vsub.s32 %v8034, %v8036
  %v8038 = vrot.slane %v8030, %v8037
  %v8040 = vunpack.c.l.s4 1966171168
  %v8041 = vunpack.c.0.s8 %v8040
  %v8042 = vlaneseq
  %v8043 = vshrl.u32 %v8042, 7
  %v8044 = vsub.s32 %v8041, %v8043
  %v8045 = vrot.slane %v8031, %v8044
  %8048 = vmatprep.subr.bf16.mxu0 %v7758
  %8049 = vmatpush1.bf16.xpose.msra.mxu0 %v7757
  %8050 = vmatprep.subr.bf16.mxu0 %v7760
  %8051 = vmatpush1.bf16.xpose.msra.mxu0 %v7759
  %8052 = vmatprep.subr.bf16.mxu0 %v7762
  %8053 = vmatpush1.bf16.xpose.msra.mxu0 %v7761
  %8054 = vmatprep.subr.bf16.mxu0 %v7764
  %8055 = vmatpush1.bf16.xpose.msra.mxu0 %v7763
  %8056 = vmatprep.subr.bf16.mxu0 %v7766
  %8057 = vmatpush1.bf16.xpose.msra.mxu0 %v7765
  %8058 = vmatprep.subr.bf16.mxu0 %v7768
  %8059 = vmatpush1.bf16.xpose.msra.mxu0 %v7767
  %8060 = vmatprep.subr.bf16.mxu0 %v7770
  %8061 = vmatpush1.bf16.xpose.msra.mxu0 %v7769
  %8062 = vmatprep.subr.bf16.mxu0 %v7772
  %8063 = vmatpush1.bf16.xpose.msra.mxu0 %v7771
  %8064 = vmatprep.subr.bf16.mxu0 %v7774
  %8065 = vmatpush1.bf16.xpose.msra.mxu0 %v7773
  %8066 = vmatprep.subr.bf16.mxu0 %v7776
  %8067 = vmatpush1.bf16.xpose.msra.mxu0 %v7775
  %8068 = vmatprep.subr.bf16.mxu0 %v7778
  %8069 = vmatpush1.bf16.xpose.msra.mxu0 %v7777
  %8070 = vmatprep.subr.bf16.mxu0 %v7780
  %8071 = vmatpush1.bf16.xpose.msra.mxu0 %v7779
  %8072 = vmatprep.subr.bf16.mxu0 %v7782
  %8073 = vmatpush1.bf16.xpose.msra.mxu0 %v7781
  %8074 = vmatprep.subr.bf16.mxu0 %v7784
  %8075 = vmatpush1.bf16.xpose.msra.mxu0 %v7783
  %8076 = vmatprep.subr.bf16.mxu0 %v7786
  %8077 = vmatpush1.bf16.xpose.msra.mxu0 %v7785
  %8078 = vmatprep.subr.bf16.mxu0 %v7788
  %8079 = vmatpush1.bf16.xpose.msra.mxu0 %v7787
  %8080 = vmatprep.mubr.bf16.mxu0 %v8045
  %8081 = vmatmul.mubr.bf16.gmra.mrb[0].mxu0 %v8038
  %v8082 = vpop.f32.mrb[0].mxu0
  %v8083 = vadd.f32 %v8022, %v8082
  %v8084 = vpop.f32.mrb[0].mxu0
  %v8085 = vadd.f32 %v8022, %v8084
  %v8086 = vpop.f32.mrb[0].mxu0
  %v8087 = vpop.f32.mrb[0].mxu0
  %8088 = vdwg.mxu0
  %8089 = vmatprep.subr.bf16.mxu0 %v7790
  %8090 = vmatpush1.bf16.xpose.msra.mxu0 %v7789
  %8091 = vmatprep.subr.bf16.mxu0 %v7792
  %8092 = vmatpush1.bf16.xpose.msra.mxu0 %v7791
  %8093 = vmatprep.subr.bf16.mxu0 %v7794
  %8094 = vmatpush1.bf16.xpose.msra.mxu0 %v7793
  %8095 = vmatprep.subr.bf16.mxu0 %v7796
  %8096 = vmatpush1.bf16.xpose.msra.mxu0 %v7795
  %8097 = vmatprep.subr.bf16.mxu0 %v7798
  %8098 = vmatpush1.bf16.xpose.msra.mxu0 %v7797
  %8099 = vmatprep.subr.bf16.mxu0 %v7800
  %8100 = vmatpush1.bf16.xpose.msra.mxu0 %v7799
  %8101 = vmatprep.subr.bf16.mxu0 %v7802
  %8102 = vmatpush1.bf16.xpose.msra.mxu0 %v7801
  %8103 = vmatprep.subr.bf16.mxu0 %v7804
  %8104 = vmatpush1.bf16.xpose.msra.mxu0 %v7803
  %8105 = vmatprep.subr.bf16.mxu0 %v7806
  %8106 = vmatpush1.bf16.xpose.msra.mxu0 %v7805
  %8107 = vmatprep.subr.bf16.mxu0 %v7808
  %8108 = vmatpush1.bf16.xpose.msra.mxu0 %v7807
  %8109 = vmatprep.subr.bf16.mxu0 %v7810
  %8110 = vmatpush1.bf16.xpose.msra.mxu0 %v7809
  %8111 = vmatprep.subr.bf16.mxu0 %v7812
  %8112 = vmatpush1.bf16.xpose.msra.mxu0 %v7811
  %8113 = vmatprep.subr.bf16.mxu0 %v7814
  %8114 = vmatpush1.bf16.xpose.msra.mxu0 %v7813
  %8115 = vmatprep.subr.bf16.mxu0 %v7816
  %8116 = vmatpush1.bf16.xpose.msra.mxu0 %v7815
  %8117 = vmatprep.subr.bf16.mxu0 %v7818
  %8118 = vmatpush1.bf16.xpose.msra.mxu0 %v7817
  %8119 = vmatprep.subr.bf16.mxu0 %v7820
  %8120 = vmatpush1.bf16.xpose.msra.mxu0 %v7819
  %8121 = vmatprep.mubr.bf16.mxu0 %v8045
  %8122 = vmatmul.mubr.bf16.gmra.mrb[0].mxu0 %v8038
  %v8123 = vpop.f32.mrb[0].mxu0
  %v8124 = vadd.f32 %v8022, %v8123
  %v8125 = vpop.f32.mrb[0].mxu0
  %v8126 = vadd.f32 %v8022, %v8125
  %v8127 = vpop.f32.mrb[0].mxu0
  %v8128 = vpop.f32.mrb[0].mxu0
  %8129 = vdwg.mxu0
  %8130 = vmatprep.subr.bf16.mxu0 %v7822
  %8131 = vmatpush1.bf16.xpose.msra.mxu0 %v7821
  %8132 = vmatprep.subr.bf16.mxu0 %v7824
  %8133 = vmatpush1.bf16.xpose.msra.mxu0 %v7823
  %8134 = vmatprep.subr.bf16.mxu0 %v7826
  %8135 = vmatpush1.bf16.xpose.msra.mxu0 %v7825
  %8136 = vmatprep.subr.bf16.mxu0 %v7828
  %8137 = vmatpush1.bf16.xpose.msra.mxu0 %v7827
  %8138 = vmatprep.subr.bf16.mxu0 %v7830
  %8139 = vmatpush1.bf16.xpose.msra.mxu0 %v7829
  %8140 = vmatprep.subr.bf16.mxu0 %v7832
  %8141 = vmatpush1.bf16.xpose.msra.mxu0 %v7831
  %8142 = vmatprep.subr.bf16.mxu0 %v7834
  %8143 = vmatpush1.bf16.xpose.msra.mxu0 %v7833
  %8144 = vmatprep.subr.bf16.mxu0 %v7836
  %8145 = vmatpush1.bf16.xpose.msra.mxu0 %v7835
  %8146 = vmatprep.subr.bf16.mxu0 %v7838
  %8147 = vmatpush1.bf16.xpose.msra.mxu0 %v7837
  %8148 = vmatprep.subr.bf16.mxu0 %v7840
  %8149 = vmatpush1.bf16.xpose.msra.mxu0 %v7839
  %8150 = vmatprep.subr.bf16.mxu0 %v7842
  %8151 = vmatpush1.bf16.xpose.msra.mxu0 %v7841
  %8152 = vmatprep.subr.bf16.mxu0 %v7844
  %8153 = vmatpush1.bf16.xpose.msra.mxu0 %v7843
  %8154 = vmatprep.subr.bf16.mxu0 %v7846
  %8155 = vmatpush1.bf16.xpose.msra.mxu0 %v7845
  %8156 = vmatprep.subr.bf16.mxu0 %v7848
  %8157 = vmatpush1.bf16.xpose.msra.mxu0 %v7847
  %8158 = vmatprep.subr.bf16.mxu0 %v7850
  %8159 = vmatpush1.bf16.xpose.msra.mxu0 %v7849
  %8160 = vmatprep.subr.bf16.mxu0 %v7852
  %8161 = vmatpush1.bf16.xpose.msra.mxu0 %v7851
  %8162 = vmatprep.mubr.bf16.mxu0 %v8045
  %8163 = vmatmul.mubr.bf16.gmra.mrb[0].mxu0 %v8038
  %v8164 = vpop.f32.mrb[0].mxu0
  %v8165 = vadd.f32 %v8022, %v8164
  %v8166 = vpop.f32.mrb[0].mxu0
  %v8167 = vadd.f32 %v8022, %v8166
  %v8168 = vpop.f32.mrb[0].mxu0
  %v8169 = vpop.f32.mrb[0].mxu0
  %8170 = vdwg.mxu0
  %8171 = vmatprep.subr.bf16.mxu0 %v7854
  %8172 = vmatpush1.bf16.xpose.msra.mxu0 %v7853
  %8173 = vmatprep.subr.bf16.mxu0 %v7856
  %8174 = vmatpush1.bf16.xpose.msra.mxu0 %v7855
  %8175 = vmatprep.subr.bf16.mxu0 %v7858
  %8176 = vmatpush1.bf16.xpose.msra.mxu0 %v7857
  %8177 = vmatprep.subr.bf16.mxu0 %v7860
  %8178 = vmatpush1.bf16.xpose.msra.mxu0 %v7859
  %8179 = vmatprep.subr.bf16.mxu0 %v7862
  %8180 = vmatpush1.bf16.xpose.msra.mxu0 %v7861
  %8181 = vmatprep.subr.bf16.mxu0 %v7864
  %8182 = vmatpush1.bf16.xpose.msra.mxu0 %v7863
  %8183 = vmatprep.subr.bf16.mxu0 %v7866
  %8184 = vmatpush1.bf16.xpose.msra.mxu0 %v7865
  %8185 = vmatprep.subr.bf16.mxu0 %v7868
  %8186 = vmatpush1.bf16.xpose.msra.mxu0 %v7867
  %8187 = vmatprep.subr.bf16.mxu0 %v7870
  %8188 = vmatpush1.bf16.xpose.msra.mxu0 %v7869
  %8189 = vmatprep.subr.bf16.mxu0 %v7872
  %8190 = vmatpush1.bf16.xpose.msra.mxu0 %v7871
  %8191 = vmatprep.subr.bf16.mxu0 %v7874
  %8192 = vmatpush1.bf16.xpose.msra.mxu0 %v7873
  %8193 = vmatprep.subr.bf16.mxu0 %v7876
  %8194 = vmatpush1.bf16.xpose.msra.mxu0 %v7875
  %8195 = vmatprep.subr.bf16.mxu0 %v7878
  %8196 = vmatpush1.bf16.xpose.msra.mxu0 %v7877
  %8197 = vmatprep.subr.bf16.mxu0 %v7880
  %8198 = vmatpush1.bf16.xpose.msra.mxu0 %v7879
  %8199 = vmatprep.subr.bf16.mxu0 %v7882
  %8200 = vmatpush1.bf16.xpose.msra.mxu0 %v7881
  %8201 = vmatprep.subr.bf16.mxu0 %v7884
  %8202 = vmatpush1.bf16.xpose.msra.mxu0 %v7883
  %8203 = vmatprep.mubr.bf16.mxu0 %v8045
  %8204 = vmatmul.mubr.bf16.gmra.mrb[0].mxu0 %v8038
  %v8205 = vpop.f32.mrb[0].mxu0
  %v8206 = vadd.f32 %v8022, %v8205
  %v8207 = vpop.f32.mrb[0].mxu0
  %v8208 = vadd.f32 %v8022, %v8207
  %v8209 = vpop.f32.mrb[0].mxu0
  %v8210 = vpop.f32.mrb[0].mxu0
  %8211 = vdwg.mxu0
  %8212 = vmatprep.subr.bf16.mxu0 %v7886
  %8213 = vmatpush1.bf16.xpose.msra.mxu0 %v7885
  %8214 = vmatprep.subr.bf16.mxu0 %v7888
  %8215 = vmatpush1.bf16.xpose.msra.mxu0 %v7887
  %8216 = vmatprep.subr.bf16.mxu0 %v7890
  %8217 = vmatpush1.bf16.xpose.msra.mxu0 %v7889
  %8218 = vmatprep.subr.bf16.mxu0 %v7892
  %8219 = vmatpush1.bf16.xpose.msra.mxu0 %v7891
  %8220 = vmatprep.subr.bf16.mxu0 %v7894
  %8221 = vmatpush1.bf16.xpose.msra.mxu0 %v7893
  %8222 = vmatprep.subr.bf16.mxu0 %v7896
  %8223 = vmatpush1.bf16.xpose.msra.mxu0 %v7895
  %8224 = vmatprep.subr.bf16.mxu0 %v7898
  %8225 = vmatpush1.bf16.xpose.msra.mxu0 %v7897
  %8226 = vmatprep.subr.bf16.mxu0 %v7900
  %8227 = vmatpush1.bf16.xpose.msra.mxu0 %v7899
  %8228 = vmatprep.subr.bf16.mxu0 %v7902
  %8229 = vmatpush1.bf16.xpose.msra.mxu0 %v7901
  %8230 = vmatprep.subr.bf16.mxu0 %v7904
  %8231 = vmatpush1.bf16.xpose.msra.mxu0 %v7903
  %8232 = vmatprep.subr.bf16.mxu0 %v7906
  %8233 = vmatpush1.bf16.xpose.msra.mxu0 %v7905
  %8234 = vmatprep.subr.bf16.mxu0 %v7908
  %8235 = vmatpush1.bf16.xpose.msra.mxu0 %v7907
  %8236 = vmatprep.subr.bf16.mxu0 %v7910
  %8237 = vmatpush1.bf16.xpose.msra.mxu0 %v7909
  %8238 = vmatprep.subr.bf16.mxu0 %v7912
  %8239 = vmatpush1.bf16.xpose.msra.mxu0 %v7911
  %8240 = vmatprep.subr.bf16.mxu0 %v7914
  %8241 = vmatpush1.bf16.xpose.msra.mxu0 %v7913
  %8242 = vmatprep.subr.bf16.mxu0 %v7916
  %8243 = vmatpush1.bf16.xpose.msra.mxu0 %v7915
  %8244 = vmatprep.mubr.bf16.mxu0 %v8045
  %8245 = vmatmul.mubr.bf16.gmra.mrb[0].mxu0 %v8038
  %v8246 = vpop.f32.mrb[0].mxu0
  %v8247 = vadd.f32 %v8022, %v8246
  %v8248 = vpop.f32.mrb[0].mxu0
  %v8249 = vadd.f32 %v8022, %v8248
  %v8250 = vpop.f32.mrb[0].mxu0
  %v8251 = vpop.f32.mrb[0].mxu0
  %8252 = vdwg.mxu0
  %8253 = vmatprep.subr.bf16.mxu0 %v7918
  %8254 = vmatpush1.bf16.xpose.msra.mxu0 %v7917
  %8255 = vmatprep.subr.bf16.mxu0 %v7920
  %8256 = vmatpush1.bf16.xpose.msra.mxu0 %v7919
  %8257 = vmatprep.subr.bf16.mxu0 %v7922
  %8258 = vmatpush1.bf16.xpose.msra.mxu0 %v7921
  %8259 = vmatprep.subr.bf16.mxu0 %v7924
  %8260 = vmatpush1.bf16.xpose.msra.mxu0 %v7923
  %8261 = vmatprep.subr.bf16.mxu0 %v7926
  %8262 = vmatpush1.bf16.xpose.msra.mxu0 %v7925
  %8263 = vmatprep.subr.bf16.mxu0 %v7928
  %8264 = vmatpush1.bf16.xpose.msra.mxu0 %v7927
  %8265 = vmatprep.subr.bf16.mxu0 %v7930
  %8266 = vmatpush1.bf16.xpose.msra.mxu0 %v7929
  %8267 = vmatprep.subr.bf16.mxu0 %v7932
  %8268 = vmatpush1.bf16.xpose.msra.mxu0 %v7931
  %8269 = vmatprep.subr.bf16.mxu0 %v7934
  %8270 = vmatpush1.bf16.xpose.msra.mxu0 %v7933
  %8271 = vmatprep.subr.bf16.mxu0 %v7936
  %8272 = vmatpush1.bf16.xpose.msra.mxu0 %v7935
  %8273 = vmatprep.subr.bf16.mxu0 %v7938
  %8274 = vmatpush1.bf16.xpose.msra.mxu0 %v7937
  %8275 = vmatprep.subr.bf16.mxu0 %v7940
  %8276 = vmatpush1.bf16.xpose.msra.mxu0 %v7939
  %8277 = vmatprep.subr.bf16.mxu0 %v7942
  %8278 = vmatpush1.bf16.xpose.msra.mxu0 %v7941
  %8279 = vmatprep.subr.bf16.mxu0 %v7944
  %8280 = vmatpush1.bf16.xpose.msra.mxu0 %v7943
  %8281 = vmatprep.subr.bf16.mxu0 %v7946
  %8282 = vmatpush1.bf16.xpose.msra.mxu0 %v7945
  %8283 = vmatprep.subr.bf16.mxu0 %v7948
  %8284 = vmatpush1.bf16.xpose.msra.mxu0 %v7947
  %8285 = vmatprep.mubr.bf16.mxu0 %v8045
  %8286 = vmatmul.mubr.bf16.gmra.mrb[0].mxu0 %v8038
  %v8287 = vpop.f32.mrb[0].mxu0
  %v8288 = vadd.f32 %v8022, %v8287
  %v8289 = vpop.f32.mrb[0].mxu0
  %v8290 = vadd.f32 %v8022, %v8289
  %v8291 = vpop.f32.mrb[0].mxu0
  %v8292 = vpop.f32.mrb[0].mxu0
  %8293 = vdwg.mxu0
  %8294 = vmatprep.subr.bf16.mxu0 %v7950
  %8295 = vmatpush1.bf16.xpose.msra.mxu0 %v7949
  %8296 = vmatprep.subr.bf16.mxu0 %v7952
  %8297 = vmatpush1.bf16.xpose.msra.mxu0 %v7951
  %8298 = vmatprep.subr.bf16.mxu0 %v7954
  %8299 = vmatpush1.bf16.xpose.msra.mxu0 %v7953
  %8300 = vmatprep.subr.bf16.mxu0 %v7956
  %8301 = vmatpush1.bf16.xpose.msra.mxu0 %v7955
  %8302 = vmatprep.subr.bf16.mxu0 %v7958
  %8303 = vmatpush1.bf16.xpose.msra.mxu0 %v7957
  %8304 = vmatprep.subr.bf16.mxu0 %v7960
  %8305 = vmatpush1.bf16.xpose.msra.mxu0 %v7959
  %8306 = vmatprep.subr.bf16.mxu0 %v7962
  %8307 = vmatpush1.bf16.xpose.msra.mxu0 %v7961
  %8308 = vmatprep.subr.bf16.mxu0 %v7964
  %8309 = vmatpush1.bf16.xpose.msra.mxu0 %v7963
  %8310 = vmatprep.subr.bf16.mxu0 %v7966
  %8311 = vmatpush1.bf16.xpose.msra.mxu0 %v7965
  %8312 = vmatprep.subr.bf16.mxu0 %v7968
  %8313 = vmatpush1.bf16.xpose.msra.mxu0 %v7967
  %8314 = vmatprep.subr.bf16.mxu0 %v7970
  %8315 = vmatpush1.bf16.xpose.msra.mxu0 %v7969
  %8316 = vmatprep.subr.bf16.mxu0 %v7972
  %8317 = vmatpush1.bf16.xpose.msra.mxu0 %v7971
  %8318 = vmatprep.subr.bf16.mxu0 %v7974
  %8319 = vmatpush1.bf16.xpose.msra.mxu0 %v7973
  %8320 = vmatprep.subr.bf16.mxu0 %v7976
  %8321 = vmatpush1.bf16.xpose.msra.mxu0 %v7975
  %8322 = vmatprep.subr.bf16.mxu0 %v7978
  %8323 = vmatpush1.bf16.xpose.msra.mxu0 %v7977
  %8324 = vmatprep.subr.bf16.mxu0 %v7980
  %8325 = vmatpush1.bf16.xpose.msra.mxu0 %v7979
  %8326 = vmatprep.mubr.bf16.mxu0 %v8045
  %8327 = vmatmul.mubr.bf16.gmra.mrb[0].mxu0 %v8038
  %v8328 = vpop.f32.mrb[0].mxu0
  %v8329 = vadd.f32 %v8022, %v8328
  %v8330 = vpop.f32.mrb[0].mxu0
  %v8331 = vadd.f32 %v8022, %v8330
  %v8332 = vpop.f32.mrb[0].mxu0
  %v8333 = vpop.f32.mrb[0].mxu0
  %8334 = vdwg.mxu0
  %8335 = vmatprep.subr.bf16.mxu0 %v7982
  %8336 = vmatpush1.bf16.xpose.msra.mxu0 %v7981
  %8337 = vmatprep.subr.bf16.mxu0 %v7984
  %8338 = vmatpush1.bf16.xpose.msra.mxu0 %v7983
  %8339 = vmatprep.subr.bf16.mxu0 %v7986
  %8340 = vmatpush1.bf16.xpose.msra.mxu0 %v7985
  %8341 = vmatprep.subr.bf16.mxu0 %v7988
  %8342 = vmatpush1.bf16.xpose.msra.mxu0 %v7987
  %8343 = vmatprep.subr.bf16.mxu0 %v7990
  %8344 = vmatpush1.bf16.xpose.msra.mxu0 %v7989
  %8345 = vmatprep.subr.bf16.mxu0 %v7992
  %8346 = vmatpush1.bf16.xpose.msra.mxu0 %v7991
  %8347 = vmatprep.subr.bf16.mxu0 %v7994
  %8348 = vmatpush1.bf16.xpose.msra.mxu0 %v7993
  %8349 = vmatprep.subr.bf16.mxu0 %v7996
  %8350 = vmatpush1.bf16.xpose.msra.mxu0 %v7995
  %8351 = vmatprep.subr.bf16.mxu0 %v7998
  %8352 = vmatpush1.bf16.xpose.msra.mxu0 %v7997
  %8353 = vmatprep.subr.bf16.mxu0 %v8000
  %8354 = vmatpush1.bf16.xpose.msra.mxu0 %v7999
  %8355 = vmatprep.subr.bf16.mxu0 %v8002
  %8356 = vmatpush1.bf16.xpose.msra.mxu0 %v8001
  %8357 = vmatprep.subr.bf16.mxu0 %v8004
  %8358 = vmatpush1.bf16.xpose.msra.mxu0 %v8003
  %8359 = vmatprep.subr.bf16.mxu0 %v8006
  %8360 = vmatpush1.bf16.xpose.msra.mxu0 %v8005
  %8361 = vmatprep.subr.bf16.mxu0 %v8008
  %8362 = vmatpush1.bf16.xpose.msra.mxu0 %v8007
  %8363 = vmatprep.subr.bf16.mxu0 %v8010
  %8364 = vmatpush1.bf16.xpose.msra.mxu0 %v8009
  %8365 = vmatprep.subr.bf16.mxu0 %v8012
  %8366 = vmatpush1.bf16.xpose.msra.mxu0 %v8011
  %8367 = vmatprep.mubr.bf16.mxu0 %v8045
  %8368 = vmatmul.mubr.bf16.gmra.mrb[0].mxu0 %v8038
  %v8369 = vpop.f32.mrb[0].mxu0
  %v8370 = vadd.f32 %v8022, %v8369
  %v8371 = vpop.f32.mrb[0].mxu0
  %v8372 = vadd.f32 %v8022, %v8371
  %v8373 = vpop.f32.mrb[0].mxu0
  %v8374 = vpop.f32.mrb[0].mxu0
  %8375 = vdwg.mxu0
  %v8376 = vxor.u32 %v8083, 2147483648
  %v8377 = vxor.u32 %v8085, 2147483648
  %v8378 = vxor.u32 %v8124, 2147483648
  %v8379 = vxor.u32 %v8126, 2147483648
  %v8380 = vxor.u32 %v8165, 2147483648
  %v8381 = vxor.u32 %v8167, 2147483648
  %v8382 = vxor.u32 %v8206, 2147483648
  %v8383 = vxor.u32 %v8208, 2147483648
  %v8384 = vxor.u32 %v8247, 2147483648
  %v8385 = vxor.u32 %v8249, 2147483648
  %v8386 = vxor.u32 %v8288, 2147483648
  %v8387 = vxor.u32 %v8290, 2147483648
  %v8388 = vxor.u32 %v8329, 2147483648
  %v8389 = vxor.u32 %v8331, 2147483648
  %v8390 = vxor.u32 %v8370, 2147483648
  %v8391 = vxor.u32 %v8372, 2147483648
  %v8392 = vmul.f32 %v8376, 1.442695
  %v8393 = vpow.pop %v8392
  %v8394 = vmul.f32 %v8377, 1.442695
  %v8395 = vpow.pop %v8394
  %v8396 = vmul.f32 %v8378, 1.442695
  %v8397 = vpow.pop %v8396
  %v8398 = vmul.f32 %v8379, 1.442695
  %v8399 = vpow.pop %v8398
  %v8400 = vmul.f32 %v8380, 1.442695
  %v8401 = vpow.pop %v8400
  %v8402 = vmul.f32 %v8381, 1.442695
  %v8403 = vpow.pop %v8402
  %v8404 = vmul.f32 %v8382, 1.442695
  %v8405 = vpow.pop %v8404
  %v8406 = vmul.f32 %v8383, 1.442695
  %v8407 = vpow.pop %v8406
  %v8408 = vmul.f32 %v8384, 1.442695
  %v8409 = vpow.pop %v8408
  %v8410 = vmul.f32 %v8385, 1.442695
  %v8411 = vpow.pop %v8410
  %v8412 = vmul.f32 %v8386, 1.442695
  %v8413 = vpow.pop %v8412
  %v8414 = vmul.f32 %v8387, 1.442695
  %v8415 = vpow.pop %v8414
  %v8416 = vmul.f32 %v8388, 1.442695
  %v8417 = vpow.pop %v8416
  %v8418 = vmul.f32 %v8389, 1.442695
  %v8419 = vpow.pop %v8418
  %v8420 = vmul.f32 %v8390, 1.442695
  %v8421 = vpow.pop %v8420
  %v8422 = vmul.f32 %v8391, 1.442695
  %v8423 = vpow.pop %v8422
  %v8424 = vadd.f32 %v8393, 1.0
  %v8425 = vadd.f32 %v8395, 1.0
  %v8426 = vadd.f32 %v8397, 1.0
  %v8427 = vadd.f32 %v8399, 1.0
  %v8428 = vadd.f32 %v8401, 1.0
  %v8429 = vadd.f32 %v8403, 1.0
  %v8430 = vadd.f32 %v8405, 1.0
  %v8431 = vadd.f32 %v8407, 1.0
  %v8432 = vadd.f32 %v8409, 1.0
  %v8433 = vadd.f32 %v8411, 1.0
  %v8434 = vadd.f32 %v8413, 1.0
  %v8435 = vadd.f32 %v8415, 1.0
  %v8436 = vadd.f32 %v8417, 1.0
  %v8437 = vadd.f32 %v8419, 1.0
  %v8438 = vadd.f32 %v8421, 1.0
  %v8439 = vadd.f32 %v8423, 1.0
  %v8440 = vrcp.pop %v8424
  %v8441 = vmul.f32 1.0, %v8440
  %v8442 = vrcp.pop %v8425
  %v8443 = vmul.f32 1.0, %v8442
  %v8444 = vrcp.pop %v8426
  %v8445 = vmul.f32 1.0, %v8444
  %v8446 = vrcp.pop %v8427
  %v8447 = vmul.f32 1.0, %v8446
  %v8448 = vrcp.pop %v8428
  %v8449 = vmul.f32 1.0, %v8448
  %v8450 = vrcp.pop %v8429
  %v8451 = vmul.f32 1.0, %v8450
  %v8452 = vrcp.pop %v8430
  %v8453 = vmul.f32 1.0, %v8452
  %v8454 = vrcp.pop %v8431
  %v8455 = vmul.f32 1.0, %v8454
  %v8456 = vrcp.pop %v8432
  %v8457 = vmul.f32 1.0, %v8456
  %v8458 = vrcp.pop %v8433
  %v8459 = vmul.f32 1.0, %v8458
  %v8460 = vrcp.pop %v8434
  %v8461 = vmul.f32 1.0, %v8460
  %v8462 = vrcp.pop %v8435
  %v8463 = vmul.f32 1.0, %v8462
  %v8464 = vrcp.pop %v8436
  %v8465 = vmul.f32 1.0, %v8464
  %v8466 = vrcp.pop %v8437
  %v8467 = vmul.f32 1.0, %v8466
  %v8468 = vrcp.pop %v8438
  %v8469 = vmul.f32 1.0, %v8468
  %v8470 = vrcp.pop %v8439
  %v8471 = vmul.f32 1.0, %v8470
  %v8488 = vcombine.low %v8441, %v8443
  %v8489 = vcombine.low %v8445, %v8447
  %v8490 = vcombine.low %v8449, %v8451
  %v8491 = vcombine.low %v8453, %v8455
  %v8493 = vunpack.c.l.s4 1966171168
  %v8494 = vunpack.c.0.s8 %v8493
  %v8495 = vlaneseq
  %v8496 = vshrl.u32 %v8495, 7
  %v8497 = vsub.s32 %v8494, %v8496
  %v8498 = vrot.slane %v8488, %v8497
  %v8500 = vunpack.c.l.s4 1966171168
  %v8501 = vunpack.c.0.s8 %v8500
  %v8502 = vlaneseq
  %v8503 = vshrl.u32 %v8502, 7
  %v8504 = vsub.s32 %v8501, %v8503
  %v8505 = vrot.slane %v8489, %v8504
  %v8507 = vunpack.c.l.s4 1966171168
  %v8508 = vunpack.c.0.s8 %v8507
  %v8509 = vlaneseq
  %v8510 = vshrl.u32 %v8509, 7
  %v8511 = vsub.s32 %v8508, %v8510
  %v8512 = vrot.slane %v8490, %v8511
  %v8514 = vunpack.c.l.s4 1966171168
  %v8515 = vunpack.c.0.s8 %v8514
  %v8516 = vlaneseq
  %v8517 = vshrl.u32 %v8516, 7
  %v8518 = vsub.s32 %v8515, %v8517
  %v8519 = vrot.slane %v8491, %v8518
  %v8520 = vcombine.low %v8498, %v8505
  %v8521 = vcombine.low %v8512, %v8519
  %v8523 = vunpack.c.l.s4 1966171168
  %v8524 = vunpack.c.0.s8 %v8523
  %v8525 = vlaneseq
  %v8526 = vshrl.u32 %v8525, 7
  %v8527 = vsub.s32 %v8524, %v8526
  %v8528 = vrot.slane %v8520, %v8527
  %v8530 = vunpack.c.l.s4 1966171168
  %v8531 = vunpack.c.0.s8 %v8530
  %v8532 = vlaneseq
  %v8533 = vshrl.u32 %v8532, 7
  %v8534 = vsub.s32 %v8531, %v8533
  %v8535 = vrot.slane %v8521, %v8534
  %v8536 = vcombine.low %v8528, %v8535
  %v8537 = vcombine.low %v8457, %v8459
  %v8538 = vcombine.low %v8461, %v8463
  %v8539 = vcombine.low %v8465, %v8467
  %v8540 = vcombine.low %v8469, %v8471
  %v8542 = vunpack.c.l.s4 1966171168
  %v8543 = vunpack.c.0.s8 %v8542
  %v8544 = vlaneseq
  %v8545 = vshrl.u32 %v8544, 7
  %v8546 = vsub.s32 %v8543, %v8545
  %v8547 = vrot.slane %v8537, %v8546
  %v8549 = vunpack.c.l.s4 1966171168
  %v8550 = vunpack.c.0.s8 %v8549
  %v8551 = vlaneseq
  %v8552 = vshrl.u32 %v8551, 7
  %v8553 = vsub.s32 %v8550, %v8552
  %v8554 = vrot.slane %v8538, %v8553
  %v8556 = vunpack.c.l.s4 1966171168
  %v8557 = vunpack.c.0.s8 %v8556
  %v8558 = vlaneseq
  %v8559 = vshrl.u32 %v8558, 7
  %v8560 = vsub.s32 %v8557, %v8559
  %v8561 = vrot.slane %v8539, %v8560
  %v8563 = vunpack.c.l.s4 1966171168
  %v8564 = vunpack.c.0.s8 %v8563
  %v8565 = vlaneseq
  %v8566 = vshrl.u32 %v8565, 7
  %v8567 = vsub.s32 %v8564, %v8566
  %v8568 = vrot.slane %v8540, %v8567
  %v8569 = vcombine.low %v8547, %v8554
  %v8570 = vcombine.low %v8561, %v8568
  %v8572 = vunpack.c.l.s4 1966171168
  %v8573 = vunpack.c.0.s8 %v8572
  %v8574 = vlaneseq
  %v8575 = vshrl.u32 %v8574, 7
  %v8576 = vsub.s32 %v8573, %v8575
  %v8577 = vrot.slane %v8569, %v8576
  %v8579 = vunpack.c.l.s4 1966171168
  %v8580 = vunpack.c.0.s8 %v8579
  %v8581 = vlaneseq
  %v8582 = vshrl.u32 %v8581, 7
  %v8583 = vsub.s32 %v8580, %v8582
  %v8584 = vrot.slane %v8570, %v8583
  %v8585 = vcombine.low %v8577, %v8584
  %8588 = vst [vmem:[%s9] sm:$0xff] %v8536
  %8589 = vst [vmem:[%s9 + $0x8] sm:$0xff] %v8585
  // Predicated region
  $region38: #{gnn_forward.1} parent=0 // pred_check
    _
  $region39: #{gnn_forward.1} parent=0 // pred_check_branch
    %8591 = sbr.rel (0) target = $region41
  $region40: #{gnn_forward.1} parent=0 // pred_region
    _
  $region41: #{gnn_forward.1} parent=0 // pred_fallthru
    _
  // Predicated region
  $region42: #{gnn_forward.1} parent=0 // pred_check
    _
  $region43: #{gnn_forward.1} parent=0 // pred_check_branch
    %8593 = sbr.rel (0) target = $region45
  $region44: #{gnn_forward.1} parent=0 // pred_region
    _
  $region45: #{gnn_forward.1} parent=0 // pred_fallthru
    _

</llo_original>
